<compile_context>
chip_gen: v6e
topology: v6e:2x2x1
jax: 0.10.0
libtpu: 0.0.40
codegen_flags: <defaults>
</compile_context>

<pallas_src>
import jax
import jax.numpy as jnp
import numpy as np
from jax.experimental import pallas as pl
from jax.experimental.pallas import tpu as pltpu


# ----------------------------------------------------------------------------
# Host-side helpers: im2col selection matrices + weight re-layout (run once).
# ----------------------------------------------------------------------------
def _conv_selection(h, w, k, stride, pad):
    """0/1 matrices S[t, q, p]: input flat-index q feeds output flat-index p at tap t."""
    oh = (h + 2 * pad - k) // stride + 1
    ow = (w + 2 * pad - k) // stride + 1
    sel = np.zeros((k * k, h * w, oh * ow), np.float32)
    for p_h in range(oh):
        for p_w in range(ow):
            p = p_h * ow + p_w
            for kh in range(k):
                for kw in range(k):
                    ih = p_h * stride + kh - pad
                    iw = p_w * stride + kw - pad
                    if 0 <= ih < h and 0 <= iw < w:
                        sel[kh * k + kw, ih * w + iw, p] = 1.0
    return sel


def prepare_params(params):
    """PyTorch-layout params -> kernel layout (done once, outside the jitted fwd)."""
    f32, bf16 = jnp.float32, jnp.bfloat16
    s1 = _conv_selection(12, 12, 3, 2, 2)      # (9, 144, 49)
    s2 = _conv_selection(7, 7, 3, 2, 2)        # (9, 49, 25)
    s3 = _conv_selection(5, 5, 3, 2, 2)        # (9, 25, 16)

    ct_w = np.asarray(params["ct_w"], np.float32)        # (128, 144)
    ct_b = np.asarray(params["ct_b"], np.float32)        # (144,)
    # Fold ConvTranspose1d with conv1's im2col: per tap t, wct[t] = ct_w @ S1[t].
    wct = np.einsum("io,top->tip", ct_w, s1)             # (9, 128, 49)
    bct = np.einsum("o,top->tp", ct_b, s1)[:, None, :]   # (9, 1, 49)

    w1 = np.asarray(params["w1"], np.float32).reshape(64, 9)                       # (Cout, taps)
    w2 = np.asarray(params["w2"], np.float32).transpose(2, 3, 0, 1).reshape(9, 128, 64)
    w3 = np.asarray(params["w3"], np.float32).transpose(2, 3, 0, 1).reshape(9, 256, 128)
    wq = np.asarray(params["wq"], np.float32).reshape(32, 256)
    wk = np.asarray(params["wk"], np.float32).reshape(32, 256)
    wv = np.asarray(params["wv"], np.float32).reshape(256, 256)
    wqkv = np.concatenate([wq, wk, wv], axis=0)                                    # (320, 256)
    bqkv = np.concatenate([np.asarray(params["bq"], np.float32),
                           np.asarray(params["bk"], np.float32),
                           np.asarray(params["bv"], np.float32)]).reshape(320, 1)
    w4 = np.asarray(params["w4"], np.float32).reshape(256, 16)                     # [c, h*4+w]

    return {
        "wct": jnp.asarray(wct, bf16),
        "bct": jnp.asarray(bct, f32),
        "w1": jnp.asarray(w1, f32),
        "b1": jnp.asarray(params["b1"], f32).reshape(64, 1),
        "s2": jnp.asarray(s2, bf16),
        "w2": jnp.asarray(w2, bf16),
        "b2": jnp.asarray(params["b2"], f32).reshape(128, 1),
        "s3": jnp.asarray(s3, bf16),
        "w3": jnp.asarray(w3, bf16),
        "b3": jnp.asarray(params["b3"], f32).reshape(256, 1),
        "wqkv": jnp.asarray(wqkv, bf16),
        "bqkv": jnp.asarray(bqkv, f32),
        "w4": jnp.asarray(w4, f32),
        "gamma": jnp.asarray(params["gamma"], f32).reshape(1),
        "b4": jnp.asarray(params["b4"], f32).reshape(1),
    }


# ----------------------------------------------------------------------------
# Fused Pallas kernel: one batch element per grid step, all layers in VMEM.
# ----------------------------------------------------------------------------
def _leaky(x):
    return jnp.where(x >= 0, x, 0.01 * x)   # F.leaky_relu default slope


def _disc_sagan_kernel(
    x_ref,       # (1, 1, 128)   f32
    wct_ref,     # (9, 128, 49)  bf16  folded ConvT1d x conv1-im2col
    bct_ref,     # (9, 1, 49)    f32
    w1_ref,      # (64, 9)       f32   conv1 per-tap weights (Cin=1)
    b1_ref,      # (64, 1)       f32
    s2_ref,      # (9, 49, 25)   bf16  conv2 im2col selection
    w2_ref,      # (9, 128, 64)  bf16
    b2_ref,      # (128, 1)      f32
    s3_ref,      # (9, 25, 16)   bf16  conv3 im2col selection
    w3_ref,      # (9, 256, 128) bf16
    b3_ref,      # (256, 1)      f32
    wqkv_ref,    # (320, 256)    bf16  fused q/k/v 1x1 convs
    bqkv_ref,    # (320, 1)      f32
    w4_ref,      # (256, 16)     f32   conv4 (full 4x4 kernel)
    gamma_ref,   # (1,)          f32   SMEM
    b4_ref,      # (1,)          f32   SMEM
    out_ref,     # (1, 1, 1)     f32
    p1_ref,      # (1, 16, 16)   f32
):
    f32, bf16 = jnp.float32, jnp.bfloat16
    x = x_ref[0].astype(bf16)                                             # (1, 128)

    # ---- ConvTranspose1d(128,144,1) folded with Conv2d(1,64,3,2,2) + leaky ----
    w1 = w1_ref[...]                                                      # (64, 9)
    acc1 = jnp.zeros((64, 49), f32)
    for t in range(9):
        g = jnp.dot(x, wct_ref[t], preferred_element_type=f32) + bct_ref[t]   # (1, 49)
        acc1 = acc1 + w1[:, t:t + 1] * g                                  # (64,1)*(1,49)
    act1 = _leaky(acc1 + b1_ref[...]).astype(bf16)                        # (64, 49)

    # ---- Conv2d(64,128,3,2,2) + leaky: per-tap select (MXU) + matmul ----------
    acc2 = jnp.zeros((128, 25), f32)
    for t in range(9):
        p = jnp.dot(act1, s2_ref[t], preferred_element_type=f32).astype(bf16)   # (64, 25)
        acc2 = acc2 + jnp.dot(w2_ref[t], p, preferred_element_type=f32)         # (128, 25)
    act2 = _leaky(acc2 + b2_ref[...]).astype(bf16)                        # (128, 25)

    # ---- Conv2d(128,256,3,2,2) + leaky ----------------------------------------
    acc3 = jnp.zeros((256, 16), f32)
    for t in range(9):
        p = jnp.dot(act2, s3_ref[t], preferred_element_type=f32).astype(bf16)   # (128, 16)
        acc3 = acc3 + jnp.dot(w3_ref[t], p, preferred_element_type=f32)         # (256, 16)
    act3 = _leaky(acc3 + b3_ref[...])                                     # (256, 16) f32

    # ---- SAttn(256): fused q/k/v projection, softmax, gated residual ----------
    qkv = jnp.dot(wqkv_ref[...], act3.astype(bf16),
                  preferred_element_type=f32) + bqkv_ref[...]             # (320, 16)
    q = qkv[0:32, :]                                                      # (32, 16)
    k = qkv[32:64, :]                                                     # (32, 16)
    v = qkv[64:320, :]                                                    # (256, 16)
    s = jnp.dot(q.T, k, preferred_element_type=f32)                       # (16, 16)
    s = s - jnp.max(s, axis=-1, keepdims=True)
    e = jnp.exp(s)
    attn = e / jnp.sum(e, axis=-1, keepdims=True)                         # softmax(dim=-1), f32
    o = jnp.dot(v, attn.T, preferred_element_type=f32)                    # value @ attn^T -> (256,16)
    out_sa = gamma_ref[0] * o + act3                                      # gamma*out + x

    # ---- Conv2d(256,1,4) on the 4x4 map == full dot product -------------------
    r = jnp.sum(out_sa * w4_ref[...], axis=1, keepdims=True)              # (256, 1)
    out_ref[0] = jnp.sum(r, axis=0, keepdims=True) + b4_ref[0]            # (1, 1)
    p1_ref[0] = attn


def disc_sagan_forward(prep, x):
    B = x.shape[0]
    x3 = x.reshape(B, 1, 128)

    in_specs = [
        pl.BlockSpec((1, 1, 128), lambda b: (b, 0, 0)),
        pl.BlockSpec((9, 128, 49), lambda b: (0, 0, 0)),
        pl.BlockSpec((9, 1, 49), lambda b: (0, 0, 0)),
        pl.BlockSpec((64, 9), lambda b: (0, 0)),
        pl.BlockSpec((64, 1), lambda b: (0, 0)),
        pl.BlockSpec((9, 49, 25), lambda b: (0, 0, 0)),
        pl.BlockSpec((9, 128, 64), lambda b: (0, 0, 0)),
        pl.BlockSpec((128, 1), lambda b: (0, 0)),
        pl.BlockSpec((9, 25, 16), lambda b: (0, 0, 0)),
        pl.BlockSpec((9, 256, 128), lambda b: (0, 0, 0)),
        pl.BlockSpec((256, 1), lambda b: (0, 0)),
        pl.BlockSpec((320, 256), lambda b: (0, 0)),
        pl.BlockSpec((320, 1), lambda b: (0, 0)),
        pl.BlockSpec((256, 16), lambda b: (0, 0)),
        pl.BlockSpec(memory_space=pltpu.MemorySpace.SMEM),   # gamma (scalar)
        pl.BlockSpec(memory_space=pltpu.MemorySpace.SMEM),   # b4    (scalar)
    ]
    out_specs = (
        pl.BlockSpec((1, 1, 1), lambda b: (b, 0, 0)),
        pl.BlockSpec((1, 16, 16), lambda b: (b, 0, 0)),
    )
    out_shape = (
        jax.ShapeDtypeStruct((B, 1, 1), jnp.float32),
        jax.ShapeDtypeStruct((B, 16, 16), jnp.float32),
    )

    out, p1 = pl.pallas_call(
        _disc_sagan_kernel,
        grid=(B,),
        in_specs=in_specs,
        out_specs=out_specs,
        out_shape=out_shape,
        compiler_params=pltpu.CompilerParams(
            dimension_semantics=("parallel",),
            vmem_limit_bytes=32 * 1024 * 1024,
        ),
    )(
        x3,
        prep["wct"], prep["bct"], prep["w1"], prep["b1"],
        prep["s2"], prep["w2"], prep["b2"],
        prep["s3"], prep["w3"], prep["b3"],
        prep["wqkv"], prep["bqkv"], prep["w4"],
        prep["gamma"], prep["b4"],
    )
    return out.reshape(B, 1), p1


# ----------------------------------------------------------------------------
# Plain-JAX f32 reference of the PyTorch forward (for validation only).
# ----------------------------------------------------------------------------
def reference_forward(params, x):
    def conv(z, w, b, stride, pad):
        out = jax.lax.conv_general_dilated(
            z, w, (stride, stride), [(pad, pad), (pad, pad)],
            dimension_numbers=("NCHW", "OIHW", "NCHW"))
        return out + b.reshape(1, -1, 1, 1)

    def leaky(z):
        return jnp.where(z >= 0, z, 0.01 * z)

    B = x.shape[0]
    y = x @ params["ct_w"] + params["ct_b"]                  # ConvTranspose1d(k=1)
    img = y.reshape(B, 1, 12, 12)
    o = leaky(conv(img, params["w1"], params["b1"], 2, 2))
    o = leaky(conv(o, params["w2"], params["b2"], 2, 2))
    o = leaky(conv(o, params["w3"], params["b3"], 2, 2))
    Bq, C, H, W = o.shape
    q = conv(o, params["wq"], params["bq"], 1, 0).reshape(Bq, C // 8, H * W)
    k = conv(o, params["wk"], params["bk"], 1, 0).reshape(Bq, C // 8, H * W)
    v = conv(o, params["wv"], params["bv"], 1, 0).reshape(Bq, C, H * W)
    s = jnp.einsum("bci,bcj->bij", q, k)
    attn = jax.nn.softmax(s, axis=-1)
    sa = jnp.einsum("bcj,bij->bci", v, attn).reshape(Bq, C, H, W)
    sa = params["gamma"].reshape(()) * sa + o
    out = conv(sa, params["w4"], params["b4"], 1, 0).reshape(B, -1)
    return out, attn


# ----------------------------------------------------------------------------
# Deterministic synthetic parameters (PyTorch layouts from DiscSAGAN.__init__).
# ----------------------------------------------------------------------------
def init_params(key):
    ks = jax.random.split(key, 16)

    def n(k, shape, scale=0.05):
        return scale * jax.random.normal(k, shape, jnp.float32)

    return {
        "ct_w": n(ks[0], (128, 144)), "ct_b": n(ks[1], (144,)),   # ConvTranspose1d(128,144,1)
        "w1": n(ks[2], (64, 1, 3, 3)), "b1": n(ks[3], (64,)),
        "w2": n(ks[4], (128, 64, 3, 3)), "b2": n(ks[5], (128,)),
        "w3": n(ks[6], (256, 128, 3, 3)), "b3": n(ks[7], (256,)),
        "w4": n(ks[8], (1, 256, 4, 4)), "b4": n(ks[9], (1,)),
        "wq": n(ks[10], (32, 256, 1, 1)), "bq": n(ks[11], (32,)),
        "wk": n(ks[12], (32, 256, 1, 1)), "bk": n(ks[13], (32,)),
        "wv": n(ks[14], (256, 256, 1, 1)), "bv": n(ks[15], (256,)),
        # PyTorch inits gamma to zeros(1); use a nonzero value so the test
        # exercises the attention-output path too.
        "gamma": jnp.full((1,), 0.5, jnp.float32),
    }


if __name__ == "__main__":
    B = 2
    params = init_params(jax.random.PRNGKey(42))
    prep = prepare_params(params)                         # one-time weight re-layout
    x = jax.random.normal(jax.random.PRNGKey(0), (B, 128), jnp.float32)

    fwd = jax.jit(disc_sagan_forward)
    out, p1 = fwd(prep, x)
    jax.block_until_ready((out, p1))

    assert out.shape == (B, 1), out.shape
    assert p1.shape == (B, 16, 16), p1.shape

    # softmax rows must sum to 1 (computed in f32 inside the kernel)
    assert bool(jnp.allclose(jnp.sum(p1, axis=-1), 1.0, atol=1e-4))

    # compare against the plain-JAX f32 reference (kernel uses bf16 matmuls)
    out_r, p1_r = reference_forward(params, x)
    assert bool(jnp.allclose(p1, p1_r, atol=1e-2)), float(jnp.max(jnp.abs(p1 - p1_r)))
    assert bool(jnp.allclose(out, out_r, rtol=0.1, atol=0.05)), (out, out_r)

    print("KERNEL_OK")
</pallas_src>

<mosaic_0001>
module attributes {stable_mosaic.version = 11 : i64} {
  func.func @_disc_sagan_kernel(%arg0: i32, %arg1: memref<1x1x128xf32, #tpu.memory_space<vmem>>, %arg2: memref<9x128x49xbf16, #tpu.memory_space<vmem>>, %arg3: memref<9x1x49xf32, #tpu.memory_space<vmem>>, %arg4: memref<64x9xf32, #tpu.memory_space<vmem>>, %arg5: memref<64x1xf32, #tpu.memory_space<vmem>>, %arg6: memref<9x49x25xbf16, #tpu.memory_space<vmem>>, %arg7: memref<9x128x64xbf16, #tpu.memory_space<vmem>>, %arg8: memref<128x1xf32, #tpu.memory_space<vmem>>, %arg9: memref<9x25x16xbf16, #tpu.memory_space<vmem>>, %arg10: memref<9x256x128xbf16, #tpu.memory_space<vmem>>, %arg11: memref<256x1xf32, #tpu.memory_space<vmem>>, %arg12: memref<320x256xbf16, #tpu.memory_space<vmem>>, %arg13: memref<320x1xf32, #tpu.memory_space<vmem>>, %arg14: memref<256x16xf32, #tpu.memory_space<vmem>>, %arg15: memref<1xf32, #tpu.memory_space<smem>>, %arg16: memref<1xf32, #tpu.memory_space<smem>>, %arg17: memref<1x1x1xf32, #tpu.memory_space<vmem>>, %arg18: memref<1x16x16xf32, #tpu.memory_space<vmem>>) attributes {dimension_semantics = [#tpu.dimension_semantics<parallel>], iteration_bounds = array<i64: 2>, scalar_prefetch = 0 : i64, scratch_operands = 0 : i64, tpu.core_type = #tpu.core_type<tc>, window_params = [{transform_indices = @transform_0, window_bounds = array<i64: 1, 1, 128>}, {pipeline_mode = #tpu.pipeline_mode<synchronous>, transform_indices = @transform_1, window_bounds = array<i64: 9, 128, 49>}, {pipeline_mode = #tpu.pipeline_mode<synchronous>, transform_indices = @transform_2, window_bounds = array<i64: 9, 1, 49>}, {pipeline_mode = #tpu.pipeline_mode<synchronous>, transform_indices = @transform_3, window_bounds = array<i64: 64, 9>}, {pipeline_mode = #tpu.pipeline_mode<synchronous>, transform_indices = @transform_4, window_bounds = array<i64: 64, 1>}, {pipeline_mode = #tpu.pipeline_mode<synchronous>, transform_indices = @transform_5, window_bounds = array<i64: 9, 49, 25>}, {pipeline_mode = #tpu.pipeline_mode<synchronous>, transform_indices = @transform_6, window_bounds = array<i64: 9, 128, 64>}, {pipeline_mode = #tpu.pipeline_mode<synchronous>, transform_indices = @transform_7, window_bounds = array<i64: 128, 1>}, {pipeline_mode = #tpu.pipeline_mode<synchronous>, transform_indices = @transform_8, window_bounds = array<i64: 9, 25, 16>}, {pipeline_mode = #tpu.pipeline_mode<synchronous>, transform_indices = @transform_9, window_bounds = array<i64: 9, 256, 128>}, {pipeline_mode = #tpu.pipeline_mode<synchronous>, transform_indices = @transform_10, window_bounds = array<i64: 256, 1>}, {pipeline_mode = #tpu.pipeline_mode<synchronous>, transform_indices = @transform_11, window_bounds = array<i64: 320, 256>}, {pipeline_mode = #tpu.pipeline_mode<synchronous>, transform_indices = @transform_12, window_bounds = array<i64: 320, 1>}, {pipeline_mode = #tpu.pipeline_mode<synchronous>, transform_indices = @transform_13, window_bounds = array<i64: 256, 16>}, {transform_indices = @transform_14, window_bounds = array<i64: 1>}, {transform_indices = @transform_15, window_bounds = array<i64: 1>}, {transform_indices = @transform_16, window_bounds = array<i64: 1, 1, 1>}, {transform_indices = @transform_17, window_bounds = array<i64: 1, 16, 16>}]} {
    %c0 = arith.constant 0 : index
    %c0_0 = arith.constant 0 : index
    %c0_1 = arith.constant 0 : index
    %0 = vector.load %arg1[%c0, %c0_0, %c0_1] : memref<1x1x128xf32, #tpu.memory_space<vmem>>, vector<1x1x128xf32>
    %1 = vector.shape_cast %0 : vector<1x1x128xf32> to vector<1x128xf32>
    %2 = arith.truncf %1 : vector<1x128xf32> to vector<1x128xbf16>
    %c0_2 = arith.constant 0 : index
    %c0_3 = arith.constant 0 : index
    %3 = vector.load %arg4[%c0_2, %c0_3] : memref<64x9xf32, #tpu.memory_space<vmem>>, vector<64x9xf32>
    %cst = arith.constant 0.000000e+00 : f32
    %4 = vector.broadcast %cst : f32 to vector<64x49xf32>
    %c0_4 = arith.constant 0 : index
    %c0_5 = arith.constant 0 : index
    %c0_6 = arith.constant 0 : index
    %5 = vector.load %arg2[%c0_4, %c0_5, %c0_6] : memref<9x128x49xbf16, #tpu.memory_space<vmem>>, vector<1x128x49xbf16>
    %6 = vector.shape_cast %5 : vector<1x128x49xbf16> to vector<128x49xbf16>
    %cst_7 = arith.constant dense<0.000000e+00> : vector<1x49xf32>
    %7 = tpu.matmul %2, %6, %cst_7 {dimension_numbers = #tpu.dot_dimension_numbers<[1], [0], [0], [1], [0, 0, 1, 1], [], []>} : vector<1x128xbf16>, vector<128x49xbf16>, vector<1x49xf32> -> vector<1x49xf32>
    %c0_8 = arith.constant 0 : index
    %c0_9 = arith.constant 0 : index
    %c0_10 = arith.constant 0 : index
    %8 = vector.load %arg3[%c0_8, %c0_9, %c0_10] : memref<9x1x49xf32, #tpu.memory_space<vmem>>, vector<1x1x49xf32>
    %9 = vector.shape_cast %8 : vector<1x1x49xf32> to vector<1x49xf32>
    %10 = arith.addf %7, %9 : vector<1x49xf32>
    %11 = vector.extract_strided_slice %3 {offsets = [0, 0], sizes = [64, 1], strides = [1, 1]} : vector<64x9xf32> to vector<64x1xf32>
    %12 = vector.broadcast %11 : vector<64x1xf32> to vector<64x49xf32>
    %13 = vector.broadcast %10 : vector<1x49xf32> to vector<64x49xf32>
    %14 = arith.mulf %12, %13 : vector<64x49xf32>
    %15 = arith.addf %4, %14 : vector<64x49xf32>
    %c1 = arith.constant 1 : index
    %c0_11 = arith.constant 0 : index
    %c0_12 = arith.constant 0 : index
    %16 = vector.load %arg2[%c1, %c0_11, %c0_12] : memref<9x128x49xbf16, #tpu.memory_space<vmem>>, vector<1x128x49xbf16>
    %17 = vector.shape_cast %16 : vector<1x128x49xbf16> to vector<128x49xbf16>
    %cst_13 = arith.constant dense<0.000000e+00> : vector<1x49xf32>
    %18 = tpu.matmul %2, %17, %cst_13 {dimension_numbers = #tpu.dot_dimension_numbers<[1], [0], [0], [1], [0, 0, 1, 1], [], []>} : vector<1x128xbf16>, vector<128x49xbf16>, vector<1x49xf32> -> vector<1x49xf32>
    %c1_14 = arith.constant 1 : index
    %c0_15 = arith.constant 0 : index
    %c0_16 = arith.constant 0 : index
    %19 = vector.load %arg3[%c1_14, %c0_15, %c0_16] : memref<9x1x49xf32, #tpu.memory_space<vmem>>, vector<1x1x49xf32>
    %20 = vector.shape_cast %19 : vector<1x1x49xf32> to vector<1x49xf32>
    %21 = arith.addf %18, %20 : vector<1x49xf32>
    %22 = vector.extract_strided_slice %3 {offsets = [0, 1], sizes = [64, 1], strides = [1, 1]} : vector<64x9xf32> to vector<64x1xf32>
    %23 = vector.broadcast %22 : vector<64x1xf32> to vector<64x49xf32>
    %24 = vector.broadcast %21 : vector<1x49xf32> to vector<64x49xf32>
    %25 = arith.mulf %23, %24 : vector<64x49xf32>
    %26 = arith.addf %15, %25 : vector<64x49xf32>
    %c2 = arith.constant 2 : index
    %c0_17 = arith.constant 0 : index
    %c0_18 = arith.constant 0 : index
    %27 = vector.load %arg2[%c2, %c0_17, %c0_18] : memref<9x128x49xbf16, #tpu.memory_space<vmem>>, vector<1x128x49xbf16>
    %28 = vector.shape_cast %27 : vector<1x128x49xbf16> to vector<128x49xbf16>
    %cst_19 = arith.constant dense<0.000000e+00> : vector<1x49xf32>
    %29 = tpu.matmul %2, %28, %cst_19 {dimension_numbers = #tpu.dot_dimension_numbers<[1], [0], [0], [1], [0, 0, 1, 1], [], []>} : vector<1x128xbf16>, vector<128x49xbf16>, vector<1x49xf32> -> vector<1x49xf32>
    %c2_20 = arith.constant 2 : index
    %c0_21 = arith.constant 0 : index
    %c0_22 = arith.constant 0 : index
    %30 = vector.load %arg3[%c2_20, %c0_21, %c0_22] : memref<9x1x49xf32, #tpu.memory_space<vmem>>, vector<1x1x49xf32>
    %31 = vector.shape_cast %30 : vector<1x1x49xf32> to vector<1x49xf32>
    %32 = arith.addf %29, %31 : vector<1x49xf32>
    %33 = vector.extract_strided_slice %3 {offsets = [0, 2], sizes = [64, 1], strides = [1, 1]} : vector<64x9xf32> to vector<64x1xf32>
    %34 = vector.broadcast %33 : vector<64x1xf32> to vector<64x49xf32>
    %35 = vector.broadcast %32 : vector<1x49xf32> to vector<64x49xf32>
    %36 = arith.mulf %34, %35 : vector<64x49xf32>
    %37 = arith.addf %26, %36 : vector<64x49xf32>
    %c3 = arith.constant 3 : index
    %c0_23 = arith.constant 0 : index
    %c0_24 = arith.constant 0 : index
    %38 = vector.load %arg2[%c3, %c0_23, %c0_24] : memref<9x128x49xbf16, #tpu.memory_space<vmem>>, vector<1x128x49xbf16>
    %39 = vector.shape_cast %38 : vector<1x128x49xbf16> to vector<128x49xbf16>
    %cst_25 = arith.constant dense<0.000000e+00> : vector<1x49xf32>
    %40 = tpu.matmul %2, %39, %cst_25 {dimension_numbers = #tpu.dot_dimension_numbers<[1], [0], [0], [1], [0, 0, 1, 1], [], []>} : vector<1x128xbf16>, vector<128x49xbf16>, vector<1x49xf32> -> vector<1x49xf32>
    %c3_26 = arith.constant 3 : index
    %c0_27 = arith.constant 0 : index
    %c0_28 = arith.constant 0 : index
    %41 = vector.load %arg3[%c3_26, %c0_27, %c0_28] : memref<9x1x49xf32, #tpu.memory_space<vmem>>, vector<1x1x49xf32>
    %42 = vector.shape_cast %41 : vector<1x1x49xf32> to vector<1x49xf32>
    %43 = arith.addf %40, %42 : vector<1x49xf32>
    %44 = vector.extract_strided_slice %3 {offsets = [0, 3], sizes = [64, 1], strides = [1, 1]} : vector<64x9xf32> to vector<64x1xf32>
    %45 = vector.broadcast %44 : vector<64x1xf32> to vector<64x49xf32>
    %46 = vector.broadcast %43 : vector<1x49xf32> to vector<64x49xf32>
    %47 = arith.mulf %45, %46 : vector<64x49xf32>
    %48 = arith.addf %37, %47 : vector<64x49xf32>
    %c4 = arith.constant 4 : index
    %c0_29 = arith.constant 0 : index
    %c0_30 = arith.constant 0 : index
    %49 = vector.load %arg2[%c4, %c0_29, %c0_30] : memref<9x128x49xbf16, #tpu.memory_space<vmem>>, vector<1x128x49xbf16>
    %50 = vector.shape_cast %49 : vector<1x128x49xbf16> to vector<128x49xbf16>
    %cst_31 = arith.constant dense<0.000000e+00> : vector<1x49xf32>
    %51 = tpu.matmul %2, %50, %cst_31 {dimension_numbers = #tpu.dot_dimension_numbers<[1], [0], [0], [1], [0, 0, 1, 1], [], []>} : vector<1x128xbf16>, vector<128x49xbf16>, vector<1x49xf32> -> vector<1x49xf32>
    %c4_32 = arith.constant 4 : index
    %c0_33 = arith.constant 0 : index
    %c0_34 = arith.constant 0 : index
    %52 = vector.load %arg3[%c4_32, %c0_33, %c0_34] : memref<9x1x49xf32, #tpu.memory_space<vmem>>, vector<1x1x49xf32>
    %53 = vector.shape_cast %52 : vector<1x1x49xf32> to vector<1x49xf32>
    %54 = arith.addf %51, %53 : vector<1x49xf32>
    %55 = vector.extract_strided_slice %3 {offsets = [0, 4], sizes = [64, 1], strides = [1, 1]} : vector<64x9xf32> to vector<64x1xf32>
    %56 = vector.broadcast %55 : vector<64x1xf32> to vector<64x49xf32>
    %57 = vector.broadcast %54 : vector<1x49xf32> to vector<64x49xf32>
    %58 = arith.mulf %56, %57 : vector<64x49xf32>
    %59 = arith.addf %48, %58 : vector<64x49xf32>
    %c5 = arith.constant 5 : index
    %c0_35 = arith.constant 0 : index
    %c0_36 = arith.constant 0 : index
    %60 = vector.load %arg2[%c5, %c0_35, %c0_36] : memref<9x128x49xbf16, #tpu.memory_space<vmem>>, vector<1x128x49xbf16>
    %61 = vector.shape_cast %60 : vector<1x128x49xbf16> to vector<128x49xbf16>
    %cst_37 = arith.constant dense<0.000000e+00> : vector<1x49xf32>
    %62 = tpu.matmul %2, %61, %cst_37 {dimension_numbers = #tpu.dot_dimension_numbers<[1], [0], [0], [1], [0, 0, 1, 1], [], []>} : vector<1x128xbf16>, vector<128x49xbf16>, vector<1x49xf32> -> vector<1x49xf32>
    %c5_38 = arith.constant 5 : index
    %c0_39 = arith.constant 0 : index
    %c0_40 = arith.constant 0 : index
    %63 = vector.load %arg3[%c5_38, %c0_39, %c0_40] : memref<9x1x49xf32, #tpu.memory_space<vmem>>, vector<1x1x49xf32>
    %64 = vector.shape_cast %63 : vector<1x1x49xf32> to vector<1x49xf32>
    %65 = arith.addf %62, %64 : vector<1x49xf32>
    %66 = vector.extract_strided_slice %3 {offsets = [0, 5], sizes = [64, 1], strides = [1, 1]} : vector<64x9xf32> to vector<64x1xf32>
    %67 = vector.broadcast %66 : vector<64x1xf32> to vector<64x49xf32>
    %68 = vector.broadcast %65 : vector<1x49xf32> to vector<64x49xf32>
    %69 = arith.mulf %67, %68 : vector<64x49xf32>
    %70 = arith.addf %59, %69 : vector<64x49xf32>
    %c6 = arith.constant 6 : index
    %c0_41 = arith.constant 0 : index
    %c0_42 = arith.constant 0 : index
    %71 = vector.load %arg2[%c6, %c0_41, %c0_42] : memref<9x128x49xbf16, #tpu.memory_space<vmem>>, vector<1x128x49xbf16>
    %72 = vector.shape_cast %71 : vector<1x128x49xbf16> to vector<128x49xbf16>
    %cst_43 = arith.constant dense<0.000000e+00> : vector<1x49xf32>
    %73 = tpu.matmul %2, %72, %cst_43 {dimension_numbers = #tpu.dot_dimension_numbers<[1], [0], [0], [1], [0, 0, 1, 1], [], []>} : vector<1x128xbf16>, vector<128x49xbf16>, vector<1x49xf32> -> vector<1x49xf32>
    %c6_44 = arith.constant 6 : index
    %c0_45 = arith.constant 0 : index
    %c0_46 = arith.constant 0 : index
    %74 = vector.load %arg3[%c6_44, %c0_45, %c0_46] : memref<9x1x49xf32, #tpu.memory_space<vmem>>, vector<1x1x49xf32>
    %75 = vector.shape_cast %74 : vector<1x1x49xf32> to vector<1x49xf32>
    %76 = arith.addf %73, %75 : vector<1x49xf32>
    %77 = vector.extract_strided_slice %3 {offsets = [0, 6], sizes = [64, 1], strides = [1, 1]} : vector<64x9xf32> to vector<64x1xf32>
    %78 = vector.broadcast %77 : vector<64x1xf32> to vector<64x49xf32>
    %79 = vector.broadcast %76 : vector<1x49xf32> to vector<64x49xf32>
    %80 = arith.mulf %78, %79 : vector<64x49xf32>
    %81 = arith.addf %70, %80 : vector<64x49xf32>
    %c7 = arith.constant 7 : index
    %c0_47 = arith.constant 0 : index
    %c0_48 = arith.constant 0 : index
    %82 = vector.load %arg2[%c7, %c0_47, %c0_48] : memref<9x128x49xbf16, #tpu.memory_space<vmem>>, vector<1x128x49xbf16>
    %83 = vector.shape_cast %82 : vector<1x128x49xbf16> to vector<128x49xbf16>
    %cst_49 = arith.constant dense<0.000000e+00> : vector<1x49xf32>
    %84 = tpu.matmul %2, %83, %cst_49 {dimension_numbers = #tpu.dot_dimension_numbers<[1], [0], [0], [1], [0, 0, 1, 1], [], []>} : vector<1x128xbf16>, vector<128x49xbf16>, vector<1x49xf32> -> vector<1x49xf32>
    %c7_50 = arith.constant 7 : index
    %c0_51 = arith.constant 0 : index
    %c0_52 = arith.constant 0 : index
    %85 = vector.load %arg3[%c7_50, %c0_51, %c0_52] : memref<9x1x49xf32, #tpu.memory_space<vmem>>, vector<1x1x49xf32>
    %86 = vector.shape_cast %85 : vector<1x1x49xf32> to vector<1x49xf32>
    %87 = arith.addf %84, %86 : vector<1x49xf32>
    %88 = vector.extract_strided_slice %3 {offsets = [0, 7], sizes = [64, 1], strides = [1, 1]} : vector<64x9xf32> to vector<64x1xf32>
    %89 = vector.broadcast %88 : vector<64x1xf32> to vector<64x49xf32>
    %90 = vector.broadcast %87 : vector<1x49xf32> to vector<64x49xf32>
    %91 = arith.mulf %89, %90 : vector<64x49xf32>
    %92 = arith.addf %81, %91 : vector<64x49xf32>
    %c8 = arith.constant 8 : index
    %c0_53 = arith.constant 0 : index
    %c0_54 = arith.constant 0 : index
    %93 = vector.load %arg2[%c8, %c0_53, %c0_54] : memref<9x128x49xbf16, #tpu.memory_space<vmem>>, vector<1x128x49xbf16>
    %94 = vector.shape_cast %93 : vector<1x128x49xbf16> to vector<128x49xbf16>
    %cst_55 = arith.constant dense<0.000000e+00> : vector<1x49xf32>
    %95 = tpu.matmul %2, %94, %cst_55 {dimension_numbers = #tpu.dot_dimension_numbers<[1], [0], [0], [1], [0, 0, 1, 1], [], []>} : vector<1x128xbf16>, vector<128x49xbf16>, vector<1x49xf32> -> vector<1x49xf32>
    %c8_56 = arith.constant 8 : index
    %c0_57 = arith.constant 0 : index
    %c0_58 = arith.constant 0 : index
    %96 = vector.load %arg3[%c8_56, %c0_57, %c0_58] : memref<9x1x49xf32, #tpu.memory_space<vmem>>, vector<1x1x49xf32>
    %97 = vector.shape_cast %96 : vector<1x1x49xf32> to vector<1x49xf32>
    %98 = arith.addf %95, %97 : vector<1x49xf32>
    %99 = vector.extract_strided_slice %3 {offsets = [0, 8], sizes = [64, 1], strides = [1, 1]} : vector<64x9xf32> to vector<64x1xf32>
    %100 = vector.broadcast %99 : vector<64x1xf32> to vector<64x49xf32>
    %101 = vector.broadcast %98 : vector<1x49xf32> to vector<64x49xf32>
    %102 = arith.mulf %100, %101 : vector<64x49xf32>
    %103 = arith.addf %92, %102 : vector<64x49xf32>
    %c0_59 = arith.constant 0 : index
    %c0_60 = arith.constant 0 : index
    %104 = vector.load %arg5[%c0_59, %c0_60] : memref<64x1xf32, #tpu.memory_space<vmem>>, vector<64x1xf32>
    %105 = vector.broadcast %104 : vector<64x1xf32> to vector<64x49xf32>
    %106 = arith.addf %103, %105 : vector<64x49xf32>
    %cst_61 = arith.constant 0.000000e+00 : f32
    %107 = vector.broadcast %cst_61 : f32 to vector<64x49xf32>
    %108 = arith.cmpf oge, %106, %107 : vector<64x49xf32>
    %cst_62 = arith.constant 0.00999999977 : f32
    %109 = vector.broadcast %cst_62 : f32 to vector<64x49xf32>
    %110 = arith.mulf %109, %106 : vector<64x49xf32>
    %111 = arith.select %108, %106, %110 : vector<64x49xi1>, vector<64x49xf32>
    %112 = arith.truncf %111 : vector<64x49xf32> to vector<64x49xbf16>
    %cst_63 = arith.constant 0.000000e+00 : f32
    %113 = vector.broadcast %cst_63 : f32 to vector<128x25xf32>
    %c0_64 = arith.constant 0 : index
    %c0_65 = arith.constant 0 : index
    %c0_66 = arith.constant 0 : index
    %114 = vector.load %arg6[%c0_64, %c0_65, %c0_66] : memref<9x49x25xbf16, #tpu.memory_space<vmem>>, vector<1x49x25xbf16>
    %115 = vector.shape_cast %114 : vector<1x49x25xbf16> to vector<49x25xbf16>
    %cst_67 = arith.constant dense<0.000000e+00> : vector<64x25xf32>
    %116 = tpu.matmul %112, %115, %cst_67 {dimension_numbers = #tpu.dot_dimension_numbers<[1], [0], [0], [1], [0, 0, 1, 1], [], []>} : vector<64x49xbf16>, vector<49x25xbf16>, vector<64x25xf32> -> vector<64x25xf32>
    %117 = arith.truncf %116 : vector<64x25xf32> to vector<64x25xbf16>
    %c0_68 = arith.constant 0 : index
    %c0_69 = arith.constant 0 : index
    %c0_70 = arith.constant 0 : index
    %118 = vector.load %arg7[%c0_68, %c0_69, %c0_70] : memref<9x128x64xbf16, #tpu.memory_space<vmem>>, vector<1x128x64xbf16>
    %119 = vector.shape_cast %118 : vector<1x128x64xbf16> to vector<128x64xbf16>
    %cst_71 = arith.constant dense<0.000000e+00> : vector<128x25xf32>
    %120 = tpu.matmul %119, %117, %cst_71 {dimension_numbers = #tpu.dot_dimension_numbers<[1], [0], [0], [1], [0, 0, 1, 1], [], []>} : vector<128x64xbf16>, vector<64x25xbf16>, vector<128x25xf32> -> vector<128x25xf32>
    %121 = arith.addf %113, %120 : vector<128x25xf32>
    %c1_72 = arith.constant 1 : index
    %c0_73 = arith.constant 0 : index
    %c0_74 = arith.constant 0 : index
    %122 = vector.load %arg6[%c1_72, %c0_73, %c0_74] : memref<9x49x25xbf16, #tpu.memory_space<vmem>>, vector<1x49x25xbf16>
    %123 = vector.shape_cast %122 : vector<1x49x25xbf16> to vector<49x25xbf16>
    %cst_75 = arith.constant dense<0.000000e+00> : vector<64x25xf32>
    %124 = tpu.matmul %112, %123, %cst_75 {dimension_numbers = #tpu.dot_dimension_numbers<[1], [0], [0], [1], [0, 0, 1, 1], [], []>} : vector<64x49xbf16>, vector<49x25xbf16>, vector<64x25xf32> -> vector<64x25xf32>
    %125 = arith.truncf %124 : vector<64x25xf32> to vector<64x25xbf16>
    %c1_76 = arith.constant 1 : index
    %c0_77 = arith.constant 0 : index
    %c0_78 = arith.constant 0 : index
    %126 = vector.load %arg7[%c1_76, %c0_77, %c0_78] : memref<9x128x64xbf16, #tpu.memory_space<vmem>>, vector<1x128x64xbf16>
    %127 = vector.shape_cast %126 : vector<1x128x64xbf16> to vector<128x64xbf16>
    %cst_79 = arith.constant dense<0.000000e+00> : vector<128x25xf32>
    %128 = tpu.matmul %127, %125, %cst_79 {dimension_numbers = #tpu.dot_dimension_numbers<[1], [0], [0], [1], [0, 0, 1, 1], [], []>} : vector<128x64xbf16>, vector<64x25xbf16>, vector<128x25xf32> -> vector<128x25xf32>
    %129 = arith.addf %121, %128 : vector<128x25xf32>
    %c2_80 = arith.constant 2 : index
    %c0_81 = arith.constant 0 : index
    %c0_82 = arith.constant 0 : index
    %130 = vector.load %arg6[%c2_80, %c0_81, %c0_82] : memref<9x49x25xbf16, #tpu.memory_space<vmem>>, vector<1x49x25xbf16>
    %131 = vector.shape_cast %130 : vector<1x49x25xbf16> to vector<49x25xbf16>
    %cst_83 = arith.constant dense<0.000000e+00> : vector<64x25xf32>
    %132 = tpu.matmul %112, %131, %cst_83 {dimension_numbers = #tpu.dot_dimension_numbers<[1], [0], [0], [1], [0, 0, 1, 1], [], []>} : vector<64x49xbf16>, vector<49x25xbf16>, vector<64x25xf32> -> vector<64x25xf32>
    %133 = arith.truncf %132 : vector<64x25xf32> to vector<64x25xbf16>
    %c2_84 = arith.constant 2 : index
    %c0_85 = arith.constant 0 : index
    %c0_86 = arith.constant 0 : index
    %134 = vector.load %arg7[%c2_84, %c0_85, %c0_86] : memref<9x128x64xbf16, #tpu.memory_space<vmem>>, vector<1x128x64xbf16>
    %135 = vector.shape_cast %134 : vector<1x128x64xbf16> to vector<128x64xbf16>
    %cst_87 = arith.constant dense<0.000000e+00> : vector<128x25xf32>
    %136 = tpu.matmul %135, %133, %cst_87 {dimension_numbers = #tpu.dot_dimension_numbers<[1], [0], [0], [1], [0, 0, 1, 1], [], []>} : vector<128x64xbf16>, vector<64x25xbf16>, vector<128x25xf32> -> vector<128x25xf32>
    %137 = arith.addf %129, %136 : vector<128x25xf32>
    %c3_88 = arith.constant 3 : index
    %c0_89 = arith.constant 0 : index
    %c0_90 = arith.constant 0 : index
    %138 = vector.load %arg6[%c3_88, %c0_89, %c0_90] : memref<9x49x25xbf16, #tpu.memory_space<vmem>>, vector<1x49x25xbf16>
    %139 = vector.shape_cast %138 : vector<1x49x25xbf16> to vector<49x25xbf16>
    %cst_91 = arith.constant dense<0.000000e+00> : vector<64x25xf32>
    %140 = tpu.matmul %112, %139, %cst_91 {dimension_numbers = #tpu.dot_dimension_numbers<[1], [0], [0], [1], [0, 0, 1, 1], [], []>} : vector<64x49xbf16>, vector<49x25xbf16>, vector<64x25xf32> -> vector<64x25xf32>
    %141 = arith.truncf %140 : vector<64x25xf32> to vector<64x25xbf16>
    %c3_92 = arith.constant 3 : index
    %c0_93 = arith.constant 0 : index
    %c0_94 = arith.constant 0 : index
    %142 = vector.load %arg7[%c3_92, %c0_93, %c0_94] : memref<9x128x64xbf16, #tpu.memory_space<vmem>>, vector<1x128x64xbf16>
    %143 = vector.shape_cast %142 : vector<1x128x64xbf16> to vector<128x64xbf16>
    %cst_95 = arith.constant dense<0.000000e+00> : vector<128x25xf32>
    %144 = tpu.matmul %143, %141, %cst_95 {dimension_numbers = #tpu.dot_dimension_numbers<[1], [0], [0], [1], [0, 0, 1, 1], [], []>} : vector<128x64xbf16>, vector<64x25xbf16>, vector<128x25xf32> -> vector<128x25xf32>
    %145 = arith.addf %137, %144 : vector<128x25xf32>
    %c4_96 = arith.constant 4 : index
    %c0_97 = arith.constant 0 : index
    %c0_98 = arith.constant 0 : index
    %146 = vector.load %arg6[%c4_96, %c0_97, %c0_98] : memref<9x49x25xbf16, #tpu.memory_space<vmem>>, vector<1x49x25xbf16>
    %147 = vector.shape_cast %146 : vector<1x49x25xbf16> to vector<49x25xbf16>
    %cst_99 = arith.constant dense<0.000000e+00> : vector<64x25xf32>
    %148 = tpu.matmul %112, %147, %cst_99 {dimension_numbers = #tpu.dot_dimension_numbers<[1], [0], [0], [1], [0, 0, 1, 1], [], []>} : vector<64x49xbf16>, vector<49x25xbf16>, vector<64x25xf32> -> vector<64x25xf32>
    %149 = arith.truncf %148 : vector<64x25xf32> to vector<64x25xbf16>
    %c4_100 = arith.constant 4 : index
    %c0_101 = arith.constant 0 : index
    %c0_102 = arith.constant 0 : index
    %150 = vector.load %arg7[%c4_100, %c0_101, %c0_102] : memref<9x128x64xbf16, #tpu.memory_space<vmem>>, vector<1x128x64xbf16>
    %151 = vector.shape_cast %150 : vector<1x128x64xbf16> to vector<128x64xbf16>
    %cst_103 = arith.constant dense<0.000000e+00> : vector<128x25xf32>
    %152 = tpu.matmul %151, %149, %cst_103 {dimension_numbers = #tpu.dot_dimension_numbers<[1], [0], [0], [1], [0, 0, 1, 1], [], []>} : vector<128x64xbf16>, vector<64x25xbf16>, vector<128x25xf32> -> vector<128x25xf32>
    %153 = arith.addf %145, %152 : vector<128x25xf32>
    %c5_104 = arith.constant 5 : index
    %c0_105 = arith.constant 0 : index
    %c0_106 = arith.constant 0 : index
    %154 = vector.load %arg6[%c5_104, %c0_105, %c0_106] : memref<9x49x25xbf16, #tpu.memory_space<vmem>>, vector<1x49x25xbf16>
    %155 = vector.shape_cast %154 : vector<1x49x25xbf16> to vector<49x25xbf16>
    %cst_107 = arith.constant dense<0.000000e+00> : vector<64x25xf32>
    %156 = tpu.matmul %112, %155, %cst_107 {dimension_numbers = #tpu.dot_dimension_numbers<[1], [0], [0], [1], [0, 0, 1, 1], [], []>} : vector<64x49xbf16>, vector<49x25xbf16>, vector<64x25xf32> -> vector<64x25xf32>
    %157 = arith.truncf %156 : vector<64x25xf32> to vector<64x25xbf16>
    %c5_108 = arith.constant 5 : index
    %c0_109 = arith.constant 0 : index
    %c0_110 = arith.constant 0 : index
    %158 = vector.load %arg7[%c5_108, %c0_109, %c0_110] : memref<9x128x64xbf16, #tpu.memory_space<vmem>>, vector<1x128x64xbf16>
    %159 = vector.shape_cast %158 : vector<1x128x64xbf16> to vector<128x64xbf16>
    %cst_111 = arith.constant dense<0.000000e+00> : vector<128x25xf32>
    %160 = tpu.matmul %159, %157, %cst_111 {dimension_numbers = #tpu.dot_dimension_numbers<[1], [0], [0], [1], [0, 0, 1, 1], [], []>} : vector<128x64xbf16>, vector<64x25xbf16>, vector<128x25xf32> -> vector<128x25xf32>
    %161 = arith.addf %153, %160 : vector<128x25xf32>
    %c6_112 = arith.constant 6 : index
    %c0_113 = arith.constant 0 : index
    %c0_114 = arith.constant 0 : index
    %162 = vector.load %arg6[%c6_112, %c0_113, %c0_114] : memref<9x49x25xbf16, #tpu.memory_space<vmem>>, vector<1x49x25xbf16>
    %163 = vector.shape_cast %162 : vector<1x49x25xbf16> to vector<49x25xbf16>
    %cst_115 = arith.constant dense<0.000000e+00> : vector<64x25xf32>
    %164 = tpu.matmul %112, %163, %cst_115 {dimension_numbers = #tpu.dot_dimension_numbers<[1], [0], [0], [1], [0, 0, 1, 1], [], []>} : vector<64x49xbf16>, vector<49x25xbf16>, vector<64x25xf32> -> vector<64x25xf32>
    %165 = arith.truncf %164 : vector<64x25xf32> to vector<64x25xbf16>
    %c6_116 = arith.constant 6 : index
    %c0_117 = arith.constant 0 : index
    %c0_118 = arith.constant 0 : index
    %166 = vector.load %arg7[%c6_116, %c0_117, %c0_118] : memref<9x128x64xbf16, #tpu.memory_space<vmem>>, vector<1x128x64xbf16>
    %167 = vector.shape_cast %166 : vector<1x128x64xbf16> to vector<128x64xbf16>
    %cst_119 = arith.constant dense<0.000000e+00> : vector<128x25xf32>
    %168 = tpu.matmul %167, %165, %cst_119 {dimension_numbers = #tpu.dot_dimension_numbers<[1], [0], [0], [1], [0, 0, 1, 1], [], []>} : vector<128x64xbf16>, vector<64x25xbf16>, vector<128x25xf32> -> vector<128x25xf32>
    %169 = arith.addf %161, %168 : vector<128x25xf32>
    %c7_120 = arith.constant 7 : index
    %c0_121 = arith.constant 0 : index
    %c0_122 = arith.constant 0 : index
    %170 = vector.load %arg6[%c7_120, %c0_121, %c0_122] : memref<9x49x25xbf16, #tpu.memory_space<vmem>>, vector<1x49x25xbf16>
    %171 = vector.shape_cast %170 : vector<1x49x25xbf16> to vector<49x25xbf16>
    %cst_123 = arith.constant dense<0.000000e+00> : vector<64x25xf32>
    %172 = tpu.matmul %112, %171, %cst_123 {dimension_numbers = #tpu.dot_dimension_numbers<[1], [0], [0], [1], [0, 0, 1, 1], [], []>} : vector<64x49xbf16>, vector<49x25xbf16>, vector<64x25xf32> -> vector<64x25xf32>
    %173 = arith.truncf %172 : vector<64x25xf32> to vector<64x25xbf16>
    %c7_124 = arith.constant 7 : index
    %c0_125 = arith.constant 0 : index
    %c0_126 = arith.constant 0 : index
    %174 = vector.load %arg7[%c7_124, %c0_125, %c0_126] : memref<9x128x64xbf16, #tpu.memory_space<vmem>>, vector<1x128x64xbf16>
    %175 = vector.shape_cast %174 : vector<1x128x64xbf16> to vector<128x64xbf16>
    %cst_127 = arith.constant dense<0.000000e+00> : vector<128x25xf32>
    %176 = tpu.matmul %175, %173, %cst_127 {dimension_numbers = #tpu.dot_dimension_numbers<[1], [0], [0], [1], [0, 0, 1, 1], [], []>} : vector<128x64xbf16>, vector<64x25xbf16>, vector<128x25xf32> -> vector<128x25xf32>
    %177 = arith.addf %169, %176 : vector<128x25xf32>
    %c8_128 = arith.constant 8 : index
    %c0_129 = arith.constant 0 : index
    %c0_130 = arith.constant 0 : index
    %178 = vector.load %arg6[%c8_128, %c0_129, %c0_130] : memref<9x49x25xbf16, #tpu.memory_space<vmem>>, vector<1x49x25xbf16>
    %179 = vector.shape_cast %178 : vector<1x49x25xbf16> to vector<49x25xbf16>
    %cst_131 = arith.constant dense<0.000000e+00> : vector<64x25xf32>
    %180 = tpu.matmul %112, %179, %cst_131 {dimension_numbers = #tpu.dot_dimension_numbers<[1], [0], [0], [1], [0, 0, 1, 1], [], []>} : vector<64x49xbf16>, vector<49x25xbf16>, vector<64x25xf32> -> vector<64x25xf32>
    %181 = arith.truncf %180 : vector<64x25xf32> to vector<64x25xbf16>
    %c8_132 = arith.constant 8 : index
    %c0_133 = arith.constant 0 : index
    %c0_134 = arith.constant 0 : index
    %182 = vector.load %arg7[%c8_132, %c0_133, %c0_134] : memref<9x128x64xbf16, #tpu.memory_space<vmem>>, vector<1x128x64xbf16>
    %183 = vector.shape_cast %182 : vector<1x128x64xbf16> to vector<128x64xbf16>
    %cst_135 = arith.constant dense<0.000000e+00> : vector<128x25xf32>
    %184 = tpu.matmul %183, %181, %cst_135 {dimension_numbers = #tpu.dot_dimension_numbers<[1], [0], [0], [1], [0, 0, 1, 1], [], []>} : vector<128x64xbf16>, vector<64x25xbf16>, vector<128x25xf32> -> vector<128x25xf32>
    %185 = arith.addf %177, %184 : vector<128x25xf32>
    %c0_136 = arith.constant 0 : index
    %c0_137 = arith.constant 0 : index
    %186 = vector.load %arg8[%c0_136, %c0_137] : memref<128x1xf32, #tpu.memory_space<vmem>>, vector<128x1xf32>
    %187 = vector.broadcast %186 : vector<128x1xf32> to vector<128x25xf32>
    %188 = arith.addf %185, %187 : vector<128x25xf32>
    %cst_138 = arith.constant 0.000000e+00 : f32
    %189 = vector.broadcast %cst_138 : f32 to vector<128x25xf32>
    %190 = arith.cmpf oge, %188, %189 : vector<128x25xf32>
    %cst_139 = arith.constant 0.00999999977 : f32
    %191 = vector.broadcast %cst_139 : f32 to vector<128x25xf32>
    %192 = arith.mulf %191, %188 : vector<128x25xf32>
    %193 = arith.select %190, %188, %192 : vector<128x25xi1>, vector<128x25xf32>
    %194 = arith.truncf %193 : vector<128x25xf32> to vector<128x25xbf16>
    %cst_140 = arith.constant 0.000000e+00 : f32
    %195 = vector.broadcast %cst_140 : f32 to vector<256x16xf32>
    %c0_141 = arith.constant 0 : index
    %c0_142 = arith.constant 0 : index
    %c0_143 = arith.constant 0 : index
    %196 = vector.load %arg9[%c0_141, %c0_142, %c0_143] : memref<9x25x16xbf16, #tpu.memory_space<vmem>>, vector<1x25x16xbf16>
    %197 = vector.shape_cast %196 : vector<1x25x16xbf16> to vector<25x16xbf16>
    %cst_144 = arith.constant dense<0.000000e+00> : vector<128x16xf32>
    %198 = tpu.matmul %194, %197, %cst_144 {dimension_numbers = #tpu.dot_dimension_numbers<[1], [0], [0], [1], [0, 0, 1, 1], [], []>} : vector<128x25xbf16>, vector<25x16xbf16>, vector<128x16xf32> -> vector<128x16xf32>
    %199 = arith.truncf %198 : vector<128x16xf32> to vector<128x16xbf16>
    %c0_145 = arith.constant 0 : index
    %c0_146 = arith.constant 0 : index
    %c0_147 = arith.constant 0 : index
    %200 = vector.load %arg10[%c0_145, %c0_146, %c0_147] : memref<9x256x128xbf16, #tpu.memory_space<vmem>>, vector<1x256x128xbf16>
    %201 = vector.shape_cast %200 : vector<1x256x128xbf16> to vector<256x128xbf16>
    %cst_148 = arith.constant dense<0.000000e+00> : vector<256x16xf32>
    %202 = tpu.matmul %201, %199, %cst_148 {dimension_numbers = #tpu.dot_dimension_numbers<[1], [0], [0], [1], [0, 0, 1, 1], [], []>} : vector<256x128xbf16>, vector<128x16xbf16>, vector<256x16xf32> -> vector<256x16xf32>
    %203 = arith.addf %195, %202 : vector<256x16xf32>
    %c1_149 = arith.constant 1 : index
    %c0_150 = arith.constant 0 : index
    %c0_151 = arith.constant 0 : index
    %204 = vector.load %arg9[%c1_149, %c0_150, %c0_151] : memref<9x25x16xbf16, #tpu.memory_space<vmem>>, vector<1x25x16xbf16>
    %205 = vector.shape_cast %204 : vector<1x25x16xbf16> to vector<25x16xbf16>
    %cst_152 = arith.constant dense<0.000000e+00> : vector<128x16xf32>
    %206 = tpu.matmul %194, %205, %cst_152 {dimension_numbers = #tpu.dot_dimension_numbers<[1], [0], [0], [1], [0, 0, 1, 1], [], []>} : vector<128x25xbf16>, vector<25x16xbf16>, vector<128x16xf32> -> vector<128x16xf32>
    %207 = arith.truncf %206 : vector<128x16xf32> to vector<128x16xbf16>
    %c1_153 = arith.constant 1 : index
    %c0_154 = arith.constant 0 : index
    %c0_155 = arith.constant 0 : index
    %208 = vector.load %arg10[%c1_153, %c0_154, %c0_155] : memref<9x256x128xbf16, #tpu.memory_space<vmem>>, vector<1x256x128xbf16>
    %209 = vector.shape_cast %208 : vector<1x256x128xbf16> to vector<256x128xbf16>
    %cst_156 = arith.constant dense<0.000000e+00> : vector<256x16xf32>
    %210 = tpu.matmul %209, %207, %cst_156 {dimension_numbers = #tpu.dot_dimension_numbers<[1], [0], [0], [1], [0, 0, 1, 1], [], []>} : vector<256x128xbf16>, vector<128x16xbf16>, vector<256x16xf32> -> vector<256x16xf32>
    %211 = arith.addf %203, %210 : vector<256x16xf32>
    %c2_157 = arith.constant 2 : index
    %c0_158 = arith.constant 0 : index
    %c0_159 = arith.constant 0 : index
    %212 = vector.load %arg9[%c2_157, %c0_158, %c0_159] : memref<9x25x16xbf16, #tpu.memory_space<vmem>>, vector<1x25x16xbf16>
    %213 = vector.shape_cast %212 : vector<1x25x16xbf16> to vector<25x16xbf16>
    %cst_160 = arith.constant dense<0.000000e+00> : vector<128x16xf32>
    %214 = tpu.matmul %194, %213, %cst_160 {dimension_numbers = #tpu.dot_dimension_numbers<[1], [0], [0], [1], [0, 0, 1, 1], [], []>} : vector<128x25xbf16>, vector<25x16xbf16>, vector<128x16xf32> -> vector<128x16xf32>
    %215 = arith.truncf %214 : vector<128x16xf32> to vector<128x16xbf16>
    %c2_161 = arith.constant 2 : index
    %c0_162 = arith.constant 0 : index
    %c0_163 = arith.constant 0 : index
    %216 = vector.load %arg10[%c2_161, %c0_162, %c0_163] : memref<9x256x128xbf16, #tpu.memory_space<vmem>>, vector<1x256x128xbf16>
    %217 = vector.shape_cast %216 : vector<1x256x128xbf16> to vector<256x128xbf16>
    %cst_164 = arith.constant dense<0.000000e+00> : vector<256x16xf32>
    %218 = tpu.matmul %217, %215, %cst_164 {dimension_numbers = #tpu.dot_dimension_numbers<[1], [0], [0], [1], [0, 0, 1, 1], [], []>} : vector<256x128xbf16>, vector<128x16xbf16>, vector<256x16xf32> -> vector<256x16xf32>
    %219 = arith.addf %211, %218 : vector<256x16xf32>
    %c3_165 = arith.constant 3 : index
    %c0_166 = arith.constant 0 : index
    %c0_167 = arith.constant 0 : index
    %220 = vector.load %arg9[%c3_165, %c0_166, %c0_167] : memref<9x25x16xbf16, #tpu.memory_space<vmem>>, vector<1x25x16xbf16>
    %221 = vector.shape_cast %220 : vector<1x25x16xbf16> to vector<25x16xbf16>
    %cst_168 = arith.constant dense<0.000000e+00> : vector<128x16xf32>
    %222 = tpu.matmul %194, %221, %cst_168 {dimension_numbers = #tpu.dot_dimension_numbers<[1], [0], [0], [1], [0, 0, 1, 1], [], []>} : vector<128x25xbf16>, vector<25x16xbf16>, vector<128x16xf32> -> vector<128x16xf32>
    %223 = arith.truncf %222 : vector<128x16xf32> to vector<128x16xbf16>
    %c3_169 = arith.constant 3 : index
    %c0_170 = arith.constant 0 : index
    %c0_171 = arith.constant 0 : index
    %224 = vector.load %arg10[%c3_169, %c0_170, %c0_171] : memref<9x256x128xbf16, #tpu.memory_space<vmem>>, vector<1x256x128xbf16>
    %225 = vector.shape_cast %224 : vector<1x256x128xbf16> to vector<256x128xbf16>
    %cst_172 = arith.constant dense<0.000000e+00> : vector<256x16xf32>
    %226 = tpu.matmul %225, %223, %cst_172 {dimension_numbers = #tpu.dot_dimension_numbers<[1], [0], [0], [1], [0, 0, 1, 1], [], []>} : vector<256x128xbf16>, vector<128x16xbf16>, vector<256x16xf32> -> vector<256x16xf32>
    %227 = arith.addf %219, %226 : vector<256x16xf32>
    %c4_173 = arith.constant 4 : index
    %c0_174 = arith.constant 0 : index
    %c0_175 = arith.constant 0 : index
    %228 = vector.load %arg9[%c4_173, %c0_174, %c0_175] : memref<9x25x16xbf16, #tpu.memory_space<vmem>>, vector<1x25x16xbf16>
    %229 = vector.shape_cast %228 : vector<1x25x16xbf16> to vector<25x16xbf16>
    %cst_176 = arith.constant dense<0.000000e+00> : vector<128x16xf32>
    %230 = tpu.matmul %194, %229, %cst_176 {dimension_numbers = #tpu.dot_dimension_numbers<[1], [0], [0], [1], [0, 0, 1, 1], [], []>} : vector<128x25xbf16>, vector<25x16xbf16>, vector<128x16xf32> -> vector<128x16xf32>
    %231 = arith.truncf %230 : vector<128x16xf32> to vector<128x16xbf16>
    %c4_177 = arith.constant 4 : index
    %c0_178 = arith.constant 0 : index
    %c0_179 = arith.constant 0 : index
    %232 = vector.load %arg10[%c4_177, %c0_178, %c0_179] : memref<9x256x128xbf16, #tpu.memory_space<vmem>>, vector<1x256x128xbf16>
    %233 = vector.shape_cast %232 : vector<1x256x128xbf16> to vector<256x128xbf16>
    %cst_180 = arith.constant dense<0.000000e+00> : vector<256x16xf32>
    %234 = tpu.matmul %233, %231, %cst_180 {dimension_numbers = #tpu.dot_dimension_numbers<[1], [0], [0], [1], [0, 0, 1, 1], [], []>} : vector<256x128xbf16>, vector<128x16xbf16>, vector<256x16xf32> -> vector<256x16xf32>
    %235 = arith.addf %227, %234 : vector<256x16xf32>
    %c5_181 = arith.constant 5 : index
    %c0_182 = arith.constant 0 : index
    %c0_183 = arith.constant 0 : index
    %236 = vector.load %arg9[%c5_181, %c0_182, %c0_183] : memref<9x25x16xbf16, #tpu.memory_space<vmem>>, vector<1x25x16xbf16>
    %237 = vector.shape_cast %236 : vector<1x25x16xbf16> to vector<25x16xbf16>
    %cst_184 = arith.constant dense<0.000000e+00> : vector<128x16xf32>
    %238 = tpu.matmul %194, %237, %cst_184 {dimension_numbers = #tpu.dot_dimension_numbers<[1], [0], [0], [1], [0, 0, 1, 1], [], []>} : vector<128x25xbf16>, vector<25x16xbf16>, vector<128x16xf32> -> vector<128x16xf32>
    %239 = arith.truncf %238 : vector<128x16xf32> to vector<128x16xbf16>
    %c5_185 = arith.constant 5 : index
    %c0_186 = arith.constant 0 : index
    %c0_187 = arith.constant 0 : index
    %240 = vector.load %arg10[%c5_185, %c0_186, %c0_187] : memref<9x256x128xbf16, #tpu.memory_space<vmem>>, vector<1x256x128xbf16>
    %241 = vector.shape_cast %240 : vector<1x256x128xbf16> to vector<256x128xbf16>
    %cst_188 = arith.constant dense<0.000000e+00> : vector<256x16xf32>
    %242 = tpu.matmul %241, %239, %cst_188 {dimension_numbers = #tpu.dot_dimension_numbers<[1], [0], [0], [1], [0, 0, 1, 1], [], []>} : vector<256x128xbf16>, vector<128x16xbf16>, vector<256x16xf32> -> vector<256x16xf32>
    %243 = arith.addf %235, %242 : vector<256x16xf32>
    %c6_189 = arith.constant 6 : index
    %c0_190 = arith.constant 0 : index
    %c0_191 = arith.constant 0 : index
    %244 = vector.load %arg9[%c6_189, %c0_190, %c0_191] : memref<9x25x16xbf16, #tpu.memory_space<vmem>>, vector<1x25x16xbf16>
    %245 = vector.shape_cast %244 : vector<1x25x16xbf16> to vector<25x16xbf16>
    %cst_192 = arith.constant dense<0.000000e+00> : vector<128x16xf32>
    %246 = tpu.matmul %194, %245, %cst_192 {dimension_numbers = #tpu.dot_dimension_numbers<[1], [0], [0], [1], [0, 0, 1, 1], [], []>} : vector<128x25xbf16>, vector<25x16xbf16>, vector<128x16xf32> -> vector<128x16xf32>
    %247 = arith.truncf %246 : vector<128x16xf32> to vector<128x16xbf16>
    %c6_193 = arith.constant 6 : index
    %c0_194 = arith.constant 0 : index
    %c0_195 = arith.constant 0 : index
    %248 = vector.load %arg10[%c6_193, %c0_194, %c0_195] : memref<9x256x128xbf16, #tpu.memory_space<vmem>>, vector<1x256x128xbf16>
    %249 = vector.shape_cast %248 : vector<1x256x128xbf16> to vector<256x128xbf16>
    %cst_196 = arith.constant dense<0.000000e+00> : vector<256x16xf32>
    %250 = tpu.matmul %249, %247, %cst_196 {dimension_numbers = #tpu.dot_dimension_numbers<[1], [0], [0], [1], [0, 0, 1, 1], [], []>} : vector<256x128xbf16>, vector<128x16xbf16>, vector<256x16xf32> -> vector<256x16xf32>
    %251 = arith.addf %243, %250 : vector<256x16xf32>
    %c7_197 = arith.constant 7 : index
    %c0_198 = arith.constant 0 : index
    %c0_199 = arith.constant 0 : index
    %252 = vector.load %arg9[%c7_197, %c0_198, %c0_199] : memref<9x25x16xbf16, #tpu.memory_space<vmem>>, vector<1x25x16xbf16>
    %253 = vector.shape_cast %252 : vector<1x25x16xbf16> to vector<25x16xbf16>
    %cst_200 = arith.constant dense<0.000000e+00> : vector<128x16xf32>
    %254 = tpu.matmul %194, %253, %cst_200 {dimension_numbers = #tpu.dot_dimension_numbers<[1], [0], [0], [1], [0, 0, 1, 1], [], []>} : vector<128x25xbf16>, vector<25x16xbf16>, vector<128x16xf32> -> vector<128x16xf32>
    %255 = arith.truncf %254 : vector<128x16xf32> to vector<128x16xbf16>
    %c7_201 = arith.constant 7 : index
    %c0_202 = arith.constant 0 : index
    %c0_203 = arith.constant 0 : index
    %256 = vector.load %arg10[%c7_201, %c0_202, %c0_203] : memref<9x256x128xbf16, #tpu.memory_space<vmem>>, vector<1x256x128xbf16>
    %257 = vector.shape_cast %256 : vector<1x256x128xbf16> to vector<256x128xbf16>
    %cst_204 = arith.constant dense<0.000000e+00> : vector<256x16xf32>
    %258 = tpu.matmul %257, %255, %cst_204 {dimension_numbers = #tpu.dot_dimension_numbers<[1], [0], [0], [1], [0, 0, 1, 1], [], []>} : vector<256x128xbf16>, vector<128x16xbf16>, vector<256x16xf32> -> vector<256x16xf32>
    %259 = arith.addf %251, %258 : vector<256x16xf32>
    %c8_205 = arith.constant 8 : index
    %c0_206 = arith.constant 0 : index
    %c0_207 = arith.constant 0 : index
    %260 = vector.load %arg9[%c8_205, %c0_206, %c0_207] : memref<9x25x16xbf16, #tpu.memory_space<vmem>>, vector<1x25x16xbf16>
    %261 = vector.shape_cast %260 : vector<1x25x16xbf16> to vector<25x16xbf16>
    %cst_208 = arith.constant dense<0.000000e+00> : vector<128x16xf32>
    %262 = tpu.matmul %194, %261, %cst_208 {dimension_numbers = #tpu.dot_dimension_numbers<[1], [0], [0], [1], [0, 0, 1, 1], [], []>} : vector<128x25xbf16>, vector<25x16xbf16>, vector<128x16xf32> -> vector<128x16xf32>
    %263 = arith.truncf %262 : vector<128x16xf32> to vector<128x16xbf16>
    %c8_209 = arith.constant 8 : index
    %c0_210 = arith.constant 0 : index
    %c0_211 = arith.constant 0 : index
    %264 = vector.load %arg10[%c8_209, %c0_210, %c0_211] : memref<9x256x128xbf16, #tpu.memory_space<vmem>>, vector<1x256x128xbf16>
    %265 = vector.shape_cast %264 : vector<1x256x128xbf16> to vector<256x128xbf16>
    %cst_212 = arith.constant dense<0.000000e+00> : vector<256x16xf32>
    %266 = tpu.matmul %265, %263, %cst_212 {dimension_numbers = #tpu.dot_dimension_numbers<[1], [0], [0], [1], [0, 0, 1, 1], [], []>} : vector<256x128xbf16>, vector<128x16xbf16>, vector<256x16xf32> -> vector<256x16xf32>
    %267 = arith.addf %259, %266 : vector<256x16xf32>
    %c0_213 = arith.constant 0 : index
    %c0_214 = arith.constant 0 : index
    %268 = vector.load %arg11[%c0_213, %c0_214] : memref<256x1xf32, #tpu.memory_space<vmem>>, vector<256x1xf32>
    %269 = vector.broadcast %268 : vector<256x1xf32> to vector<256x16xf32>
    %270 = arith.addf %267, %269 : vector<256x16xf32>
    %cst_215 = arith.constant 0.000000e+00 : f32
    %271 = vector.broadcast %cst_215 : f32 to vector<256x16xf32>
    %272 = arith.cmpf oge, %270, %271 : vector<256x16xf32>
    %cst_216 = arith.constant 0.00999999977 : f32
    %273 = vector.broadcast %cst_216 : f32 to vector<256x16xf32>
    %274 = arith.mulf %273, %270 : vector<256x16xf32>
    %275 = arith.select %272, %270, %274 : vector<256x16xi1>, vector<256x16xf32>
    %c0_217 = arith.constant 0 : index
    %c0_218 = arith.constant 0 : index
    %276 = vector.load %arg12[%c0_217, %c0_218] : memref<320x256xbf16, #tpu.memory_space<vmem>>, vector<320x256xbf16>
    %277 = arith.truncf %275 : vector<256x16xf32> to vector<256x16xbf16>
    %cst_219 = arith.constant dense<0.000000e+00> : vector<320x16xf32>
    %278 = tpu.matmul %276, %277, %cst_219 {dimension_numbers = #tpu.dot_dimension_numbers<[1], [0], [0], [1], [0, 0, 1, 1], [], []>} : vector<320x256xbf16>, vector<256x16xbf16>, vector<320x16xf32> -> vector<320x16xf32>
    %c0_220 = arith.constant 0 : index
    %c0_221 = arith.constant 0 : index
    %279 = vector.load %arg13[%c0_220, %c0_221] : memref<320x1xf32, #tpu.memory_space<vmem>>, vector<320x1xf32>
    %280 = vector.broadcast %279 : vector<320x1xf32> to vector<320x16xf32>
    %281 = arith.addf %278, %280 : vector<320x16xf32>
    %282 = vector.extract_strided_slice %281 {offsets = [0, 0], sizes = [32, 16], strides = [1, 1]} : vector<320x16xf32> to vector<32x16xf32>
    %283 = vector.extract_strided_slice %281 {offsets = [32, 0], sizes = [32, 16], strides = [1, 1]} : vector<320x16xf32> to vector<32x16xf32>
    %284 = vector.extract_strided_slice %281 {offsets = [64, 0], sizes = [256, 16], strides = [1, 1]} : vector<320x16xf32> to vector<256x16xf32>
    %285 = tpu.transpose %282, [1, 0] : vector<32x16xf32> -> vector<16x32xf32>
    %cst_222 = arith.constant dense<0.000000e+00> : vector<16x16xf32>
    %286 = tpu.matmul %285, %283, %cst_222 {dimension_numbers = #tpu.dot_dimension_numbers<[1], [0], [0], [1], [0, 0, 1, 1], [], []>} : vector<16x32xf32>, vector<32x16xf32>, vector<16x16xf32> -> vector<16x16xf32>
    %cst_223 = arith.constant dense<0xFF800000> : vector<16xf32>
    %287 = vector.multi_reduction <maximumf>, %286, %cst_223 [1] : vector<16x16xf32> to vector<16xf32>
    %288 = vector.shape_cast %287 : vector<16xf32> to vector<16x1xf32>
    %289 = vector.broadcast %288 : vector<16x1xf32> to vector<16x16xf32>
    %290 = arith.subf %286, %289 : vector<16x16xf32>
    %291 = math.exp %290 : vector<16x16xf32>
    %cst_224 = arith.constant dense<0.000000e+00> : vector<16xf32>
    %292 = vector.multi_reduction <add>, %291, %cst_224 [1] : vector<16x16xf32> to vector<16xf32>
    %293 = vector.shape_cast %292 : vector<16xf32> to vector<16x1xf32>
    %294 = vector.broadcast %293 : vector<16x1xf32> to vector<16x16xf32>
    %295 = arith.divf %291, %294 : vector<16x16xf32>
    %296 = tpu.transpose %295, [1, 0] : vector<16x16xf32> -> vector<16x16xf32>
    %cst_225 = arith.constant dense<0.000000e+00> : vector<256x16xf32>
    %297 = tpu.matmul %284, %296, %cst_225 {dimension_numbers = #tpu.dot_dimension_numbers<[1], [0], [0], [1], [0, 0, 1, 1], [], []>} : vector<256x16xf32>, vector<16x16xf32>, vector<256x16xf32> -> vector<256x16xf32>
    %c0_226 = arith.constant 0 : index
    %298 = memref.load %arg15[%c0_226] : memref<1xf32, #tpu.memory_space<smem>>
    %299 = vector.broadcast %298 : f32 to vector<256x16xf32>
    %300 = arith.mulf %299, %297 : vector<256x16xf32>
    %301 = arith.addf %300, %275 : vector<256x16xf32>
    %c0_227 = arith.constant 0 : index
    %c0_228 = arith.constant 0 : index
    %302 = vector.load %arg14[%c0_227, %c0_228] : memref<256x16xf32, #tpu.memory_space<vmem>>, vector<256x16xf32>
    %303 = arith.mulf %301, %302 : vector<256x16xf32>
    %cst_229 = arith.constant dense<0.000000e+00> : vector<256xf32>
    %304 = vector.multi_reduction <add>, %303, %cst_229 [1] : vector<256x16xf32> to vector<256xf32>
    %305 = vector.shape_cast %304 : vector<256xf32> to vector<256x1xf32>
    %cst_230 = arith.constant dense<0.000000e+00> : vector<1xf32>
    %306 = vector.multi_reduction <add>, %305, %cst_230 [0] : vector<256x1xf32> to vector<1xf32>
    %307 = vector.shape_cast %306 : vector<1xf32> to vector<1x1xf32>
    %c0_231 = arith.constant 0 : index
    %308 = memref.load %arg16[%c0_231] : memref<1xf32, #tpu.memory_space<smem>>
    %309 = vector.broadcast %308 : f32 to vector<1x1xf32>
    %310 = arith.addf %307, %309 : vector<1x1xf32>
    %c0_232 = arith.constant 0 : index
    %c0_233 = arith.constant 0 : index
    %c0_234 = arith.constant 0 : index
    %311 = vector.load %arg17[%c0_232, %c0_233, %c0_234] : memref<1x1x1xf32, #tpu.memory_space<vmem>>, vector<1x1x1xf32>
    %312 = vector.shape_cast %311 : vector<1x1x1xf32> to vector<1x1xf32>
    %313 = vector.shape_cast %310 : vector<1x1xf32> to vector<1x1x1xf32>
    tpu.vector_store %arg17[%c0_232, %c0_233, %c0_234], %313 {strides = array<i32>} : memref<1x1x1xf32, #tpu.memory_space<vmem>>, vector<1x1x1xf32>,
    %c0_235 = arith.constant 0 : index
    %c0_236 = arith.constant 0 : index
    %c0_237 = arith.constant 0 : index
    %314 = vector.load %arg18[%c0_235, %c0_236, %c0_237] : memref<1x16x16xf32, #tpu.memory_space<vmem>>, vector<1x16x16xf32>
    %315 = vector.shape_cast %314 : vector<1x16x16xf32> to vector<16x16xf32>
    %316 = vector.shape_cast %295 : vector<16x16xf32> to vector<1x16x16xf32>
    tpu.vector_store %arg18[%c0_235, %c0_236, %c0_237], %316 {strides = array<i32>} : memref<1x16x16xf32, #tpu.memory_space<vmem>>, vector<1x16x16xf32>,
    return
  }
  func.func @transform_0(%arg0: i32) -> (i32, i32, i32) {
    %c0_i32 = arith.constant 0 : i32
    %c0_i32_0 = arith.constant 0 : i32
    %c0_i32_1 = arith.constant 0 : i32
    return %arg0, %c0_i32, %c0_i32_0 : i32, i32, i32
  }
  func.func @transform_1(%arg0: i32) -> (i32, i32, i32) {
    %c0_i32 = arith.constant 0 : i32
    %c0_i32_0 = arith.constant 0 : i32
    %c0_i32_1 = arith.constant 0 : i32
    %c0_i32_2 = arith.constant 0 : i32
    return %c0_i32, %c0_i32_0, %c0_i32_1 : i32, i32, i32
  }
  func.func @transform_2(%arg0: i32) -> (i32, i32, i32) {
    %c0_i32 = arith.constant 0 : i32
    %c0_i32_0 = arith.constant 0 : i32
    %c0_i32_1 = arith.constant 0 : i32
    %c0_i32_2 = arith.constant 0 : i32
    return %c0_i32, %c0_i32_0, %c0_i32_1 : i32, i32, i32
  }
  func.func @transform_3(%arg0: i32) -> (i32, i32) {
    %c0_i32 = arith.constant 0 : i32
    %c0_i32_0 = arith.constant 0 : i32
    %c0_i32_1 = arith.constant 0 : i32
    return %c0_i32, %c0_i32_0 : i32, i32
  }
  func.func @transform_4(%arg0: i32) -> (i32, i32) {
    %c0_i32 = arith.constant 0 : i32
    %c0_i32_0 = arith.constant 0 : i32
    %c0_i32_1 = arith.constant 0 : i32
    return %c0_i32, %c0_i32_0 : i32, i32
  }
  func.func @transform_5(%arg0: i32) -> (i32, i32, i32) {
    %c0_i32 = arith.constant 0 : i32
    %c0_i32_0 = arith.constant 0 : i32
    %c0_i32_1 = arith.constant 0 : i32
    %c0_i32_2 = arith.constant 0 : i32
    return %c0_i32, %c0_i32_0, %c0_i32_1 : i32, i32, i32
  }
  func.func @transform_6(%arg0: i32) -> (i32, i32, i32) {
    %c0_i32 = arith.constant 0 : i32
    %c0_i32_0 = arith.constant 0 : i32
    %c0_i32_1 = arith.constant 0 : i32
    %c0_i32_2 = arith.constant 0 : i32
    return %c0_i32, %c0_i32_0, %c0_i32_1 : i32, i32, i32
  }
  func.func @transform_7(%arg0: i32) -> (i32, i32) {
    %c0_i32 = arith.constant 0 : i32
    %c0_i32_0 = arith.constant 0 : i32
    %c0_i32_1 = arith.constant 0 : i32
    return %c0_i32, %c0_i32_0 : i32, i32
  }
  func.func @transform_8(%arg0: i32) -> (i32, i32, i32) {
    %c0_i32 = arith.constant 0 : i32
    %c0_i32_0 = arith.constant 0 : i32
    %c0_i32_1 = arith.constant 0 : i32
    %c0_i32_2 = arith.constant 0 : i32
    return %c0_i32, %c0_i32_0, %c0_i32_1 : i32, i32, i32
  }
  func.func @transform_9(%arg0: i32) -> (i32, i32, i32) {
    %c0_i32 = arith.constant 0 : i32
    %c0_i32_0 = arith.constant 0 : i32
    %c0_i32_1 = arith.constant 0 : i32
    %c0_i32_2 = arith.constant 0 : i32
    return %c0_i32, %c0_i32_0, %c0_i32_1 : i32, i32, i32
  }
  func.func @transform_10(%arg0: i32) -> (i32, i32) {
    %c0_i32 = arith.constant 0 : i32
    %c0_i32_0 = arith.constant 0 : i32
    %c0_i32_1 = arith.constant 0 : i32
    return %c0_i32, %c0_i32_0 : i32, i32
  }
  func.func @transform_11(%arg0: i32) -> (i32, i32) {
    %c0_i32 = arith.constant 0 : i32
    %c0_i32_0 = arith.constant 0 : i32
    %c0_i32_1 = arith.constant 0 : i32
    return %c0_i32, %c0_i32_0 : i32, i32
  }
  func.func @transform_12(%arg0: i32) -> (i32, i32) {
    %c0_i32 = arith.constant 0 : i32
    %c0_i32_0 = arith.constant 0 : i32
    %c0_i32_1 = arith.constant 0 : i32
    return %c0_i32, %c0_i32_0 : i32, i32
  }
  func.func @transform_13(%arg0: i32) -> (i32, i32) {
    %c0_i32 = arith.constant 0 : i32
    %c0_i32_0 = arith.constant 0 : i32
    %c0_i32_1 = arith.constant 0 : i32
    return %c0_i32, %c0_i32_0 : i32, i32
  }
  func.func @transform_14(%arg0: i32) -> i32 {
    %c0_i32 = arith.constant 0 : i32
    %c0_i32_0 = arith.constant 0 : i32
    return %c0_i32 : i32
  }
  func.func @transform_15(%arg0: i32) -> i32 {
    %c0_i32 = arith.constant 0 : i32
    %c0_i32_0 = arith.constant 0 : i32
    return %c0_i32 : i32
  }
  func.func @transform_16(%arg0: i32) -> (i32, i32, i32) {
    %c0_i32 = arith.constant 0 : i32
    %c0_i32_0 = arith.constant 0 : i32
    %c0_i32_1 = arith.constant 0 : i32
    return %arg0, %c0_i32, %c0_i32_0 : i32, i32, i32
  }
  func.func @transform_17(%arg0: i32) -> (i32, i32, i32) {
    %c0_i32 = arith.constant 0 : i32
    %c0_i32_0 = arith.constant 0 : i32
    %c0_i32_1 = arith.constant 0 : i32
    return %arg0, %c0_i32, %c0_i32_0 : i32, i32, i32
  }
}

</mosaic_0001>

<llo_original>
// kernel: disc_sagan_forward.1
$region0: #{disc_sagan_forward.1}
  #allocation0 [shape = 'u32[]', space=smem, size = 0x4, offset = 0x4, fixed_abs, tag = 'smem constant byte address 0x4 - core index']
  #allocation1 [shape = 'u32[144,128]{1,0:T(1,128)}', space=vmem, size = 0x12000, scoped, tag = 'internal scratch']
  #allocation2 [shape = 'f32[1]{0:T(128)S(6)}', space=smem, size = 0x200, scoped, tag = 'scoped memory for disc_sagan_forward.1']
  #allocation3 [shape = 'f32[1]{0:T(128)S(6)}', space=smem, size = 0x200, scoped, tag = 'scoped memory for disc_sagan_forward.1']
  %s0 = inlined_call_operand.vmem [shape: f32[2,1,128], index: 0, kind: input, shape index: {}]
  %s1 = inlined_call_operand.vmem [shape: bf16[9,128,49], index: 1, kind: input, shape index: {}]
  %s2 = inlined_call_operand.vmem [shape: f32[9,1,49], index: 2, kind: input, shape index: {}]
  %s3 = inlined_call_operand.vmem [shape: f32[64,9], index: 3, kind: input, shape index: {}]
  %s4 = inlined_call_operand.vmem [shape: f32[64,1], index: 4, kind: input, shape index: {}]
  %s5 = inlined_call_operand.vmem [shape: bf16[9,49,25], index: 5, kind: input, shape index: {}]
  %s6 = inlined_call_operand.vmem [shape: bf16[9,128,64], index: 6, kind: input, shape index: {}]
  %s7 = inlined_call_operand.vmem [shape: f32[128,1], index: 7, kind: input, shape index: {}]
  %s8 = inlined_call_operand.vmem [shape: bf16[9,25,16], index: 8, kind: input, shape index: {}]
  %s9 = inlined_call_operand.vmem [shape: bf16[9,256,128], index: 9, kind: input, shape index: {}]
  %s10 = inlined_call_operand.vmem [shape: f32[256,1], index: 10, kind: input, shape index: {}]
  %s11 = inlined_call_operand.vmem [shape: bf16[320,256], index: 11, kind: input, shape index: {}]
  %s12 = inlined_call_operand.vmem [shape: f32[320,1], index: 12, kind: input, shape index: {}]
  %s13 = inlined_call_operand.vmem [shape: f32[256,16], index: 13, kind: input, shape index: {}]
  %s14 = inlined_call_operand.<no memory space> [shape: f32[1], index: 14, kind: input, shape index: {}]
  %s15 = inlined_call_operand.<no memory space> [shape: f32[1], index: 15, kind: input, shape index: {}]
  %s16 = inlined_call_operand.vmem [shape: f32[2,1,1], index: 16, kind: output, shape index: {0}]
  %s17 = inlined_call_operand.hbm [shape: f32[2,16,16], index: 17, kind: output, shape index: {1}]
  %18 = xla_tuple %s16, %s17
  %s19 = sld [smem:[#allocation0]]
  $region105: #{disc_sagan_forward.1} parent=0
    _
  %s21 = ssub.s32 1, %s19
  %s22 = scalar_select 0, %s21, %s19
  %23 = sst [smem:[#allocation2]] %s14
  %24 = sst [smem:[#allocation3]] %s15
  $region1: #{disc_sagan_forward.1} parent=0
    #allocation4 [shape = 'u8[16384]{0}', space=vmem, size = 0x4000, scoped, tag = 'output window, operand 1']
    #allocation5 [shape = 's32[2]{0}', space=sflag, size = 0x8, scoped, tag = 'scoped memory for disc_sagan_forward.1']
    %25 = vsyncpa [#allocation5], 0
    %s26 = scalar_lea.sflag [#allocation5], 1
    %27 = vsyncpa %s26, 0
    loop: start=0, step=1, limit=4
    $region2: #{disc_sagan_forward.1} parent=1 // loop_pre_header
      _
    $region3: #{disc_sagan_forward.1} parent=1 // loop_header
      %s29 = sphi 0, %s33
      %p30 = scmp.ge.s32.totalorder %s29, 4
      %s39 = sphi 0, %s41
      %s42 = sphi 0, %s39
      %s43 = sphi 0, %s42
      %s59 = sphi 0, %s43
      %s63 = sphi 0, %s63
      %s65 = sphi 0, %s63
      %s66 = sphi 0, %s65
      %s80 = sphi 0, %s66
      %s84 = sphi 0, %s84
      %s86 = sphi 0, %s84
      %s87 = sphi 0, %s86
      %s101 = sphi 0, %s87
      %s105 = sphi 0, %s105
      %s107 = sphi 0, %s105
      %s108 = sphi 0, %s107
      %s122 = sphi 0, %s108
      %s126 = sphi 0, %s126
      %s128 = sphi 0, %s126
      %s129 = sphi 0, %s128
      %s143 = sphi 0, %s129
      %s147 = sphi 0, %s147
      %s149 = sphi 0, %s147
      %s150 = sphi 0, %s149
      %s164 = sphi 0, %s150
      %s168 = sphi 0, %s168
      %s170 = sphi 0, %s168
      %s171 = sphi 0, %s170
      %s185 = sphi 0, %s171
      %s189 = sphi 0, %s189
      %s191 = sphi 0, %s189
      %s192 = sphi 0, %s191
      %s206 = sphi 0, %s192
      %s210 = sphi 0, %s210
      %s212 = sphi 0, %s210
      %s213 = sphi 0, %s212
      %s227 = sphi 0, %s213
      %s231 = sphi 0, %s231
      %s233 = sphi 0, %s231
      %s234 = sphi 0, %s233
      %s248 = sphi 0, %s234
      %s252 = sphi 0, %s252
      %s254 = sphi 0, %s252
      %s255 = sphi 0, %s254
      %s269 = sphi 0, %s255
      %s273 = sphi 0, %s273
      %s275 = sphi 0, %s273
      %s276 = sphi 0, %s275
      %s290 = sphi 0, %s276
      %s294 = sphi 0, %s294
      %s296 = sphi 0, %s294
      %s297 = sphi 0, %s296
      %s311 = sphi 0, %s297
      %s315 = sphi 0, %s315
      %s317 = sphi 0, %s315
      %s318 = sphi 0, %s317
      %s332 = sphi 0, %s318
      %s336 = sphi 0, %s336
      %s338 = sphi 0, %s336
      %s339 = sphi 0, %s338
      %s353 = sphi 0, %s339
      %s357 = sphi 0, %s357
      %s359 = sphi 0, %s357
      %s360 = sphi 0, %s359
      %s374 = sphi 0, %s360
      %s380 = sphi 0, %s382
      %s383 = sphi 0, %s380
      %s384 = sphi 0, %s383
      %s400 = sphi 0, %s384
      %s406 = sphi 0, %s408
      %s409 = sphi 0, %s406
      %s410 = sphi 0, %s409
      %s426 = sphi 0, %s410
    $region4: #{disc_sagan_forward.1} parent=1 // loop_header_branch
      %32 = sbr.rel (%p30) target = $region8
    $region5: #{disc_sagan_forward.1} parent=1 // loop_body
      %s34 = ssub.s32 %s29, 1
      %s35 = ssub.s32 %s29, 2
      %s36 = sadd.s32 %s29, 1
      %s37 = ssub.s32 %s29, %s36
      %p38 = scmp.eq.s32.totalorder %s37, 0
      %s40 = sadd.s32 %s39, 1
      %s41 = scalar_select %p38, %s39, %s40
      %p44 = pneg %p38
      %p45 = scmp.eq.s32.totalorder %s29, 1
      %p46 = por %p44, %p45
      %p47 = scmp.ne.s32.totalorder %s39, %s42
      %p48 = scmp.eq.s32.totalorder %s29, 0
      %p49 = por %p47, %p48
      %p50 = scmp.ne.s32.totalorder %s39, %s42
      %p51 = scmp.eq.s32.totalorder %s34, 1
      %p52 = por %p50, %p51
      %p53 = scmp.ne.s32.totalorder %s42, %s43
      %p54 = scmp.eq.s32.totalorder %s34, 0
      %p55 = por %p53, %p54
      %p56 = scmp.ne.s32.totalorder %s42, %s43
      %p57 = scmp.eq.s32.totalorder %s35, 1
      %p58 = por %p56, %p57
      %p60 = scmp.ne.s32.totalorder %s43, %s59
      %p61 = scmp.eq.s32.totalorder %s35, 0
      %p62 = por %p60, %p61
      %s64 = sadd.s32 %s63, 1
      %p67 = scmp.eq.s32.totalorder %s29, 1
      %p68 = scmp.ne.s32.totalorder %s63, %s65
      %p69 = scmp.eq.s32.totalorder %s29, 0
      %p70 = por %p68, %p69
      %p71 = scmp.ne.s32.totalorder %s63, %s65
      %p72 = scmp.eq.s32.totalorder %s34, 1
      %p73 = por %p71, %p72
      %p74 = scmp.ne.s32.totalorder %s65, %s66
      %p75 = scmp.eq.s32.totalorder %s34, 0
      %p76 = por %p74, %p75
      %p77 = scmp.ne.s32.totalorder %s65, %s66
      %p78 = scmp.eq.s32.totalorder %s35, 1
      %p79 = por %p77, %p78
      %p81 = scmp.ne.s32.totalorder %s66, %s80
      %p82 = scmp.eq.s32.totalorder %s35, 0
      %p83 = por %p81, %p82
      %s85 = sadd.s32 %s84, 1
      %p88 = scmp.eq.s32.totalorder %s29, 1
      %p89 = scmp.ne.s32.totalorder %s84, %s86
      %p90 = scmp.eq.s32.totalorder %s29, 0
      %p91 = por %p89, %p90
      %p92 = scmp.ne.s32.totalorder %s84, %s86
      %p93 = scmp.eq.s32.totalorder %s34, 1
      %p94 = por %p92, %p93
      %p95 = scmp.ne.s32.totalorder %s86, %s87
      %p96 = scmp.eq.s32.totalorder %s34, 0
      %p97 = por %p95, %p96
      %p98 = scmp.ne.s32.totalorder %s86, %s87
      %p99 = scmp.eq.s32.totalorder %s35, 1
      %p100 = por %p98, %p99
      %p102 = scmp.ne.s32.totalorder %s87, %s101
      %p103 = scmp.eq.s32.totalorder %s35, 0
      %p104 = por %p102, %p103
      %s106 = sadd.s32 %s105, 1
      %p109 = scmp.eq.s32.totalorder %s29, 1
      %p110 = scmp.ne.s32.totalorder %s105, %s107
      %p111 = scmp.eq.s32.totalorder %s29, 0
      %p112 = por %p110, %p111
      %p113 = scmp.ne.s32.totalorder %s105, %s107
      %p114 = scmp.eq.s32.totalorder %s34, 1
      %p115 = por %p113, %p114
      %p116 = scmp.ne.s32.totalorder %s107, %s108
      %p117 = scmp.eq.s32.totalorder %s34, 0
      %p118 = por %p116, %p117
      %p119 = scmp.ne.s32.totalorder %s107, %s108
      %p120 = scmp.eq.s32.totalorder %s35, 1
      %p121 = por %p119, %p120
      %p123 = scmp.ne.s32.totalorder %s108, %s122
      %p124 = scmp.eq.s32.totalorder %s35, 0
      %p125 = por %p123, %p124
      %s127 = sadd.s32 %s126, 1
      %p130 = scmp.eq.s32.totalorder %s29, 1
      %p131 = scmp.ne.s32.totalorder %s126, %s128
      %p132 = scmp.eq.s32.totalorder %s29, 0
      %p133 = por %p131, %p132
      %p134 = scmp.ne.s32.totalorder %s126, %s128
      %p135 = scmp.eq.s32.totalorder %s34, 1
      %p136 = por %p134, %p135
      %p137 = scmp.ne.s32.totalorder %s128, %s129
      %p138 = scmp.eq.s32.totalorder %s34, 0
      %p139 = por %p137, %p138
      %p140 = scmp.ne.s32.totalorder %s128, %s129
      %p141 = scmp.eq.s32.totalorder %s35, 1
      %p142 = por %p140, %p141
      %p144 = scmp.ne.s32.totalorder %s129, %s143
      %p145 = scmp.eq.s32.totalorder %s35, 0
      %p146 = por %p144, %p145
      %s148 = sadd.s32 %s147, 1
      %p151 = scmp.eq.s32.totalorder %s29, 1
      %p152 = scmp.ne.s32.totalorder %s147, %s149
      %p153 = scmp.eq.s32.totalorder %s29, 0
      %p154 = por %p152, %p153
      %p155 = scmp.ne.s32.totalorder %s147, %s149
      %p156 = scmp.eq.s32.totalorder %s34, 1
      %p157 = por %p155, %p156
      %p158 = scmp.ne.s32.totalorder %s149, %s150
      %p159 = scmp.eq.s32.totalorder %s34, 0
      %p160 = por %p158, %p159
      %p161 = scmp.ne.s32.totalorder %s149, %s150
      %p162 = scmp.eq.s32.totalorder %s35, 1
      %p163 = por %p161, %p162
      %p165 = scmp.ne.s32.totalorder %s150, %s164
      %p166 = scmp.eq.s32.totalorder %s35, 0
      %p167 = por %p165, %p166
      %s169 = sadd.s32 %s168, 1
      %p172 = scmp.eq.s32.totalorder %s29, 1
      %p173 = scmp.ne.s32.totalorder %s168, %s170
      %p174 = scmp.eq.s32.totalorder %s29, 0
      %p175 = por %p173, %p174
      %p176 = scmp.ne.s32.totalorder %s168, %s170
      %p177 = scmp.eq.s32.totalorder %s34, 1
      %p178 = por %p176, %p177
      %p179 = scmp.ne.s32.totalorder %s170, %s171
      %p180 = scmp.eq.s32.totalorder %s34, 0
      %p181 = por %p179, %p180
      %p182 = scmp.ne.s32.totalorder %s170, %s171
      %p183 = scmp.eq.s32.totalorder %s35, 1
      %p184 = por %p182, %p183
      %p186 = scmp.ne.s32.totalorder %s171, %s185
      %p187 = scmp.eq.s32.totalorder %s35, 0
      %p188 = por %p186, %p187
      %s190 = sadd.s32 %s189, 1
      %p193 = scmp.eq.s32.totalorder %s29, 1
      %p194 = scmp.ne.s32.totalorder %s189, %s191
      %p195 = scmp.eq.s32.totalorder %s29, 0
      %p196 = por %p194, %p195
      %p197 = scmp.ne.s32.totalorder %s189, %s191
      %p198 = scmp.eq.s32.totalorder %s34, 1
      %p199 = por %p197, %p198
      %p200 = scmp.ne.s32.totalorder %s191, %s192
      %p201 = scmp.eq.s32.totalorder %s34, 0
      %p202 = por %p200, %p201
      %p203 = scmp.ne.s32.totalorder %s191, %s192
      %p204 = scmp.eq.s32.totalorder %s35, 1
      %p205 = por %p203, %p204
      %p207 = scmp.ne.s32.totalorder %s192, %s206
      %p208 = scmp.eq.s32.totalorder %s35, 0
      %p209 = por %p207, %p208
      %s211 = sadd.s32 %s210, 1
      %p214 = scmp.eq.s32.totalorder %s29, 1
      %p215 = scmp.ne.s32.totalorder %s210, %s212
      %p216 = scmp.eq.s32.totalorder %s29, 0
      %p217 = por %p215, %p216
      %p218 = scmp.ne.s32.totalorder %s210, %s212
      %p219 = scmp.eq.s32.totalorder %s34, 1
      %p220 = por %p218, %p219
      %p221 = scmp.ne.s32.totalorder %s212, %s213
      %p222 = scmp.eq.s32.totalorder %s34, 0
      %p223 = por %p221, %p222
      %p224 = scmp.ne.s32.totalorder %s212, %s213
      %p225 = scmp.eq.s32.totalorder %s35, 1
      %p226 = por %p224, %p225
      %p228 = scmp.ne.s32.totalorder %s213, %s227
      %p229 = scmp.eq.s32.totalorder %s35, 0
      %p230 = por %p228, %p229
      %s232 = sadd.s32 %s231, 1
      %p235 = scmp.eq.s32.totalorder %s29, 1
      %p236 = scmp.ne.s32.totalorder %s231, %s233
      %p237 = scmp.eq.s32.totalorder %s29, 0
      %p238 = por %p236, %p237
      %p239 = scmp.ne.s32.totalorder %s231, %s233
      %p240 = scmp.eq.s32.totalorder %s34, 1
      %p241 = por %p239, %p240
      %p242 = scmp.ne.s32.totalorder %s233, %s234
      %p243 = scmp.eq.s32.totalorder %s34, 0
      %p244 = por %p242, %p243
      %p245 = scmp.ne.s32.totalorder %s233, %s234
      %p246 = scmp.eq.s32.totalorder %s35, 1
      %p247 = por %p245, %p246
      %p249 = scmp.ne.s32.totalorder %s234, %s248
      %p250 = scmp.eq.s32.totalorder %s35, 0
      %p251 = por %p249, %p250
      %s253 = sadd.s32 %s252, 1
      %p256 = scmp.eq.s32.totalorder %s29, 1
      %p257 = scmp.ne.s32.totalorder %s252, %s254
      %p258 = scmp.eq.s32.totalorder %s29, 0
      %p259 = por %p257, %p258
      %p260 = scmp.ne.s32.totalorder %s252, %s254
      %p261 = scmp.eq.s32.totalorder %s34, 1
      %p262 = por %p260, %p261
      %p263 = scmp.ne.s32.totalorder %s254, %s255
      %p264 = scmp.eq.s32.totalorder %s34, 0
      %p265 = por %p263, %p264
      %p266 = scmp.ne.s32.totalorder %s254, %s255
      %p267 = scmp.eq.s32.totalorder %s35, 1
      %p268 = por %p266, %p267
      %p270 = scmp.ne.s32.totalorder %s255, %s269
      %p271 = scmp.eq.s32.totalorder %s35, 0
      %p272 = por %p270, %p271
      %s274 = sadd.s32 %s273, 1
      %p277 = scmp.eq.s32.totalorder %s29, 1
      %p278 = scmp.ne.s32.totalorder %s273, %s275
      %p279 = scmp.eq.s32.totalorder %s29, 0
      %p280 = por %p278, %p279
      %p281 = scmp.ne.s32.totalorder %s273, %s275
      %p282 = scmp.eq.s32.totalorder %s34, 1
      %p283 = por %p281, %p282
      %p284 = scmp.ne.s32.totalorder %s275, %s276
      %p285 = scmp.eq.s32.totalorder %s34, 0
      %p286 = por %p284, %p285
      %p287 = scmp.ne.s32.totalorder %s275, %s276
      %p288 = scmp.eq.s32.totalorder %s35, 1
      %p289 = por %p287, %p288
      %p291 = scmp.ne.s32.totalorder %s276, %s290
      %p292 = scmp.eq.s32.totalorder %s35, 0
      %p293 = por %p291, %p292
      %s295 = sadd.s32 %s294, 1
      %p298 = scmp.eq.s32.totalorder %s29, 1
      %p299 = scmp.ne.s32.totalorder %s294, %s296
      %p300 = scmp.eq.s32.totalorder %s29, 0
      %p301 = por %p299, %p300
      %p302 = scmp.ne.s32.totalorder %s294, %s296
      %p303 = scmp.eq.s32.totalorder %s34, 1
      %p304 = por %p302, %p303
      %p305 = scmp.ne.s32.totalorder %s296, %s297
      %p306 = scmp.eq.s32.totalorder %s34, 0
      %p307 = por %p305, %p306
      %p308 = scmp.ne.s32.totalorder %s296, %s297
      %p309 = scmp.eq.s32.totalorder %s35, 1
      %p310 = por %p308, %p309
      %p312 = scmp.ne.s32.totalorder %s297, %s311
      %p313 = scmp.eq.s32.totalorder %s35, 0
      %p314 = por %p312, %p313
      %s316 = sadd.s32 %s315, 1
      %p319 = scmp.eq.s32.totalorder %s29, 1
      %p320 = scmp.ne.s32.totalorder %s315, %s317
      %p321 = scmp.eq.s32.totalorder %s29, 0
      %p322 = por %p320, %p321
      %p323 = scmp.ne.s32.totalorder %s315, %s317
      %p324 = scmp.eq.s32.totalorder %s34, 1
      %p325 = por %p323, %p324
      %p326 = scmp.ne.s32.totalorder %s317, %s318
      %p327 = scmp.eq.s32.totalorder %s34, 0
      %p328 = por %p326, %p327
      %p329 = scmp.ne.s32.totalorder %s317, %s318
      %p330 = scmp.eq.s32.totalorder %s35, 1
      %p331 = por %p329, %p330
      %p333 = scmp.ne.s32.totalorder %s318, %s332
      %p334 = scmp.eq.s32.totalorder %s35, 0
      %p335 = por %p333, %p334
      %s337 = sadd.s32 %s336, 1
      %p340 = scmp.eq.s32.totalorder %s29, 1
      %p341 = scmp.ne.s32.totalorder %s336, %s338
      %p342 = scmp.eq.s32.totalorder %s29, 0
      %p343 = por %p341, %p342
      %p344 = scmp.ne.s32.totalorder %s336, %s338
      %p345 = scmp.eq.s32.totalorder %s34, 1
      %p346 = por %p344, %p345
      %p347 = scmp.ne.s32.totalorder %s338, %s339
      %p348 = scmp.eq.s32.totalorder %s34, 0
      %p349 = por %p347, %p348
      %p350 = scmp.ne.s32.totalorder %s338, %s339
      %p351 = scmp.eq.s32.totalorder %s35, 1
      %p352 = por %p350, %p351
      %p354 = scmp.ne.s32.totalorder %s339, %s353
      %p355 = scmp.eq.s32.totalorder %s35, 0
      %p356 = por %p354, %p355
      %s358 = sadd.s32 %s357, 1
      %p361 = scmp.eq.s32.totalorder %s29, 1
      %p362 = scmp.ne.s32.totalorder %s357, %s359
      %p363 = scmp.eq.s32.totalorder %s29, 0
      %p364 = por %p362, %p363
      %p365 = scmp.ne.s32.totalorder %s357, %s359
      %p366 = scmp.eq.s32.totalorder %s34, 1
      %p367 = por %p365, %p366
      %p368 = scmp.ne.s32.totalorder %s359, %s360
      %p369 = scmp.eq.s32.totalorder %s34, 0
      %p370 = por %p368, %p369
      %p371 = scmp.ne.s32.totalorder %s359, %s360
      %p372 = scmp.eq.s32.totalorder %s35, 1
      %p373 = por %p371, %p372
      %p375 = scmp.ne.s32.totalorder %s360, %s374
      %p376 = scmp.eq.s32.totalorder %s35, 0
      %p377 = por %p375, %p376
      %s378 = ssub.s32 %s29, %s36
      %p379 = scmp.eq.s32.totalorder %s378, 0
      %s381 = sadd.s32 %s380, 1
      %s382 = scalar_select %p379, %s380, %s381
      %p385 = pneg %p379
      %p386 = scmp.eq.s32.totalorder %s29, 1
      %p387 = por %p385, %p386
      %p388 = scmp.ne.s32.totalorder %s380, %s383
      %p389 = scmp.eq.s32.totalorder %s29, 0
      %p390 = por %p388, %p389
      %p391 = scmp.ne.s32.totalorder %s380, %s383
      %p392 = scmp.eq.s32.totalorder %s34, 1
      %p393 = por %p391, %p392
      %p394 = scmp.ne.s32.totalorder %s383, %s384
      %p395 = scmp.eq.s32.totalorder %s34, 0
      %p396 = por %p394, %p395
      %p397 = scmp.ne.s32.totalorder %s383, %s384
      %p398 = scmp.eq.s32.totalorder %s35, 1
      %p399 = por %p397, %p398
      %p401 = scmp.ne.s32.totalorder %s384, %s400
      %p402 = scmp.eq.s32.totalorder %s35, 0
      %p403 = por %p401, %p402
      %s404 = ssub.s32 %s29, %s36
      %p405 = scmp.eq.s32.totalorder %s404, 0
      %s407 = sadd.s32 %s406, 1
      %s408 = scalar_select %p405, %s406, %s407
      %p411 = pneg %p405
      %p412 = scmp.eq.s32.totalorder %s29, 1
      %p413 = por %p411, %p412
      %p414 = scmp.ne.s32.totalorder %s406, %s409
      %p415 = scmp.eq.s32.totalorder %s29, 0
      %p416 = por %p414, %p415
      %p417 = scmp.ne.s32.totalorder %s406, %s409
      %p418 = scmp.eq.s32.totalorder %s34, 1
      %p419 = por %p417, %p418
      %p420 = scmp.ne.s32.totalorder %s409, %s410
      %p421 = scmp.eq.s32.totalorder %s34, 0
      %p422 = por %p420, %p421
      %p423 = scmp.ne.s32.totalorder %s409, %s410
      %p424 = scmp.eq.s32.totalorder %s35, 1
      %p425 = por %p423, %p424
      %p427 = scmp.ne.s32.totalorder %s410, %s426
      %p428 = scmp.eq.s32.totalorder %s35, 0
      %p429 = por %p427, %p428
      %p430 = scmp.le.s32.totalorder 1, %s29
      %p431 = scmp.lt.s32.totalorder %s29, 3
      %p432 = pnand %p430, %p431
      %p433 = pneg %p432
      // Predicated region
      $region9: #{disc_sagan_forward.1} parent=5 // pred_check
        _
      $region10: #{disc_sagan_forward.1} parent=5 // pred_check_branch
        %435 = sbr.rel (%p432) target = $region12
      $region11: #{disc_sagan_forward.1} parent=5 // pred_region
        %s436 = ssub.s32 %s29, 1
        // Predicated region
        $region13: #{disc_sagan_forward.1} parent=11 // pred_check
          %p437 = pneg %p76
        $region14: #{disc_sagan_forward.1} parent=11 // pred_check_branch
          %439 = sbr.rel (%p437) target = $region16
        $region15: #{disc_sagan_forward.1} parent=11 // pred_region
          _
        $region16: #{disc_sagan_forward.1} parent=11 // pred_fallthru
          _
        // Predicated region
        $region17: #{disc_sagan_forward.1} parent=11 // pred_check
          %p440 = pneg %p97
        $region18: #{disc_sagan_forward.1} parent=11 // pred_check_branch
          %442 = sbr.rel (%p440) target = $region20
        $region19: #{disc_sagan_forward.1} parent=11 // pred_region
          _
        $region20: #{disc_sagan_forward.1} parent=11 // pred_fallthru
          _
        // Predicated region
        $region21: #{disc_sagan_forward.1} parent=11 // pred_check
          %p443 = pneg %p118
        $region22: #{disc_sagan_forward.1} parent=11 // pred_check_branch
          %445 = sbr.rel (%p443) target = $region24
        $region23: #{disc_sagan_forward.1} parent=11 // pred_region
          _
        $region24: #{disc_sagan_forward.1} parent=11 // pred_fallthru
          _
        // Predicated region
        $region25: #{disc_sagan_forward.1} parent=11 // pred_check
          %p446 = pneg %p139
        $region26: #{disc_sagan_forward.1} parent=11 // pred_check_branch
          %448 = sbr.rel (%p446) target = $region28
        $region27: #{disc_sagan_forward.1} parent=11 // pred_region
          _
        $region28: #{disc_sagan_forward.1} parent=11 // pred_fallthru
          _
        // Predicated region
        $region29: #{disc_sagan_forward.1} parent=11 // pred_check
          %p449 = pneg %p160
        $region30: #{disc_sagan_forward.1} parent=11 // pred_check_branch
          %451 = sbr.rel (%p449) target = $region32
        $region31: #{disc_sagan_forward.1} parent=11 // pred_region
          _
        $region32: #{disc_sagan_forward.1} parent=11 // pred_fallthru
          _
        // Predicated region
        $region33: #{disc_sagan_forward.1} parent=11 // pred_check
          %p452 = pneg %p181
        $region34: #{disc_sagan_forward.1} parent=11 // pred_check_branch
          %454 = sbr.rel (%p452) target = $region36
        $region35: #{disc_sagan_forward.1} parent=11 // pred_region
          _
        $region36: #{disc_sagan_forward.1} parent=11 // pred_fallthru
          _
        // Predicated region
        $region37: #{disc_sagan_forward.1} parent=11 // pred_check
          %p455 = pneg %p202
        $region38: #{disc_sagan_forward.1} parent=11 // pred_check_branch
          %457 = sbr.rel (%p455) target = $region40
        $region39: #{disc_sagan_forward.1} parent=11 // pred_region
          _
        $region40: #{disc_sagan_forward.1} parent=11 // pred_fallthru
          _
        // Predicated region
        $region41: #{disc_sagan_forward.1} parent=11 // pred_check
          %p458 = pneg %p223
        $region42: #{disc_sagan_forward.1} parent=11 // pred_check_branch
          %460 = sbr.rel (%p458) target = $region44
        $region43: #{disc_sagan_forward.1} parent=11 // pred_region
          _
        $region44: #{disc_sagan_forward.1} parent=11 // pred_fallthru
          _
        // Predicated region
        $region45: #{disc_sagan_forward.1} parent=11 // pred_check
          %p461 = pneg %p244
        $region46: #{disc_sagan_forward.1} parent=11 // pred_check_branch
          %463 = sbr.rel (%p461) target = $region48
        $region47: #{disc_sagan_forward.1} parent=11 // pred_region
          _
        $region48: #{disc_sagan_forward.1} parent=11 // pred_fallthru
          _
        // Predicated region
        $region49: #{disc_sagan_forward.1} parent=11 // pred_check
          %p464 = pneg %p265
        $region50: #{disc_sagan_forward.1} parent=11 // pred_check_branch
          %466 = sbr.rel (%p464) target = $region52
        $region51: #{disc_sagan_forward.1} parent=11 // pred_region
          _
        $region52: #{disc_sagan_forward.1} parent=11 // pred_fallthru
          _
        // Predicated region
        $region53: #{disc_sagan_forward.1} parent=11 // pred_check
          %p467 = pneg %p286
        $region54: #{disc_sagan_forward.1} parent=11 // pred_check_branch
          %469 = sbr.rel (%p467) target = $region56
        $region55: #{disc_sagan_forward.1} parent=11 // pred_region
          _
        $region56: #{disc_sagan_forward.1} parent=11 // pred_fallthru
          _
        // Predicated region
        $region57: #{disc_sagan_forward.1} parent=11 // pred_check
          %p470 = pneg %p307
        $region58: #{disc_sagan_forward.1} parent=11 // pred_check_branch
          %472 = sbr.rel (%p470) target = $region60
        $region59: #{disc_sagan_forward.1} parent=11 // pred_region
          _
        $region60: #{disc_sagan_forward.1} parent=11 // pred_fallthru
          _
        // Predicated region
        $region61: #{disc_sagan_forward.1} parent=11 // pred_check
          %p473 = pneg %p328
        $region62: #{disc_sagan_forward.1} parent=11 // pred_check_branch
          %475 = sbr.rel (%p473) target = $region64
        $region63: #{disc_sagan_forward.1} parent=11 // pred_region
          _
        $region64: #{disc_sagan_forward.1} parent=11 // pred_fallthru
          _
        // Predicated region
        $region65: #{disc_sagan_forward.1} parent=11 // pred_check
          %p476 = pneg %p349
        $region66: #{disc_sagan_forward.1} parent=11 // pred_check_branch
          %478 = sbr.rel (%p476) target = $region68
        $region67: #{disc_sagan_forward.1} parent=11 // pred_region
          _
        $region68: #{disc_sagan_forward.1} parent=11 // pred_fallthru
          _
        // Predicated region
        $region69: #{disc_sagan_forward.1} parent=11 // pred_check
          %p479 = pneg %p370
        $region70: #{disc_sagan_forward.1} parent=11 // pred_check_branch
          %481 = sbr.rel (%p479) target = $region72
        $region71: #{disc_sagan_forward.1} parent=11 // pred_region
          _
        $region72: #{disc_sagan_forward.1} parent=11 // pred_fallthru
          _
      $region12: #{disc_sagan_forward.1} parent=5 // pred_fallthru
        _
      %p482 = scmp.lt.s32.totalorder %s29, 2
      // Predicated region
      $region73: #{disc_sagan_forward.1} parent=5 // pred_check
        %p483 = pneg %p482
      $region74: #{disc_sagan_forward.1} parent=5 // pred_check_branch
        %485 = sbr.rel (%p483) target = $region76
      $region75: #{disc_sagan_forward.1} parent=5 // pred_region
        // Predicated region
        $region77: #{disc_sagan_forward.1} parent=75 // pred_check
          %p486 = pneg %p49
        $region78: #{disc_sagan_forward.1} parent=75 // pred_check_branch
          %488 = sbr.rel (%p486) target = $region80
        $region79: #{disc_sagan_forward.1} parent=75 // pred_region
          %p489 = scmp.lt.s32.totalorder %s29, 1
          %s490 = scalar_select %p489, %s29, 1
          %s491 = scalar_lea.vmem %s0, %s490
        $region80: #{disc_sagan_forward.1} parent=75 // pred_fallthru
          _
      $region76: #{disc_sagan_forward.1} parent=5 // pred_fallthru
        _
      %p492 = scmp.le.s32.totalorder 1, %s29
      %p493 = scmp.lt.s32.totalorder %s29, 3
      %p494 = pnand %p492, %p493
      %p495 = pneg %p494
      // Predicated region
      $region81: #{disc_sagan_forward.1} parent=5 // pred_check
        _
      $region82: #{disc_sagan_forward.1} parent=5 // pred_check_branch
        %497 = sbr.rel (%p494) target = $region84
      $region83: #{disc_sagan_forward.1} parent=5 // pred_region
        %s498 = ssub.s32 %s29, 1
        %p499 = scmp.lt.s32.totalorder %s34, 1
        %s500 = scalar_select %p499, %s34, 1
        %s501 = scalar_lea.vmem %s0, %s500
        %p502 = pneg %p55
        %p503 = pneg %p52
        %p504 = pneg %p76
        %p505 = pneg %p73
        %p506 = pneg %p97
        %p507 = pneg %p94
        %p508 = pneg %p118
        %p509 = pneg %p115
        %p510 = pneg %p139
        %p511 = pneg %p136
        %p512 = pneg %p160
        %p513 = pneg %p157
        %p514 = pneg %p181
        %p515 = pneg %p178
        %p516 = pneg %p202
        %p517 = pneg %p199
        %p518 = pneg %p223
        %p519 = pneg %p220
        %p520 = pneg %p244
        %p521 = pneg %p241
        %p522 = pneg %p265
        %p523 = pneg %p262
        %p524 = pneg %p286
        %p525 = pneg %p283
        %p526 = pneg %p307
        %p527 = pneg %p304
        %p528 = pneg %p328
        %p529 = pneg %p325
        %p530 = pneg %p349
        %p531 = pneg %p346
        %p532 = pneg %p370
        %p533 = pneg %p367
        %p534 = pneg %p396
        %p535 = pneg %p393
        %p536 = scmp.lt.s32.totalorder %s34, 1
        %s537 = scalar_select %p536, %s34, 1
        %s538 = scalar_lea.vmem %s16, %s537
        %p539 = pneg %p422
        %p540 = pneg %p419
        %s541 = sand.u32 %s409, 1
        %s542 = scalar_lea.sflag [#allocation5], %s541
        %s543 = sand.u32 %s409, 1
        %s544 = smul.addr %s543, 16
        %s545 = scalar_lea.vmem [#allocation4], %s544
        %p546 = scmp.lt.s32.totalorder %s34, 1
        %s547 = scalar_select %p546, %s34, 1
        %s548 = scalar_lea.vmem %s0, %s547
        %p549 = scmp.lt.s32.totalorder %s34, 1
        %s550 = scalar_select %p549, %s34, 1
        %s551 = scalar_lea.vmem %s16, %s550
        %v553 = vld [vmem:[%s548] sm:$0x1]
        %v554 = vpack.c.bf16 %v553, %v553
        %v555 = vld [vmem:[%s3] sm:$0xff]
        %v556 = vld [vmem:[%s3 + $0x8] sm:$0xff]
        %v557 = vld [vmem:[%s3 + $0x10] sm:$0xff]
        %v558 = vld [vmem:[%s3 + $0x18] sm:$0xff]
        %v559 = vld [vmem:[%s3 + $0x20] sm:$0xff]
        %v560 = vld [vmem:[%s3 + $0x28] sm:$0xff]
        %v561 = vld [vmem:[%s3 + $0x30] sm:$0xff]
        %v562 = vld [vmem:[%s3 + $0x38] sm:$0xff]
        %v563 = vld [vmem:[%s1] sm:$0xf]
        %v564 = vld [vmem:[%s1 + $0x4] sm:$0xf]
        %v565 = vld [vmem:[%s1 + $0x8] sm:$0xf]
        %v566 = vld [vmem:[%s1 + $0xc] sm:$0xf]
        %v567 = vld [vmem:[%s1 + $0x10] sm:$0xf]
        %v568 = vld [vmem:[%s1 + $0x14] sm:$0xf]
        %v569 = vld [vmem:[%s1 + $0x18] sm:$0xf]
        %v570 = vld [vmem:[%s1 + $0x1c] sm:$0xf]
        %v571 = vld [vmem:[%s1 + $0x20] sm:$0xf]
        %v572 = vld [vmem:[%s1 + $0x24] sm:$0xf]
        %v573 = vld [vmem:[%s1 + $0x28] sm:$0xf]
        %v574 = vld [vmem:[%s1 + $0x2c] sm:$0xf]
        %v575 = vld [vmem:[%s1 + $0x30] sm:$0xf]
        %v576 = vld [vmem:[%s1 + $0x34] sm:$0xf]
        %v577 = vld [vmem:[%s1 + $0x38] sm:$0xf]
        %v578 = vld [vmem:[%s1 + $0x3c] sm:$0xf]
        %v579 = vld [vmem:[%s2] sm:$0x1]
        %v596 = vunpack.c.l.b16 %v563
        %v597 = vunpack.c.l.b16 %v564
        %v598 = vunpack.c.l.b16 %v565
        %v599 = vunpack.c.l.b16 %v566
        %v600 = vunpack.c.l.b16 %v567
        %v601 = vunpack.c.l.b16 %v568
        %v602 = vunpack.c.l.b16 %v569
        %v603 = vunpack.c.l.b16 %v570
        %v604 = vunpack.c.l.b16 %v571
        %v605 = vunpack.c.l.b16 %v572
        %v606 = vunpack.c.l.b16 %v573
        %v607 = vunpack.c.l.b16 %v574
        %v608 = vunpack.c.l.b16 %v575
        %v609 = vunpack.c.l.b16 %v576
        %v610 = vunpack.c.l.b16 %v577
        %v611 = vunpack.c.l.b16 %v578
        %v612 = vpack.c.b16 %v597, %v596
        %v613 = vpack.c.b16 %v599, %v598
        %v614 = vpack.c.b16 %v601, %v600
        %v615 = vpack.c.b16 %v603, %v602
        %v616 = vpack.c.b16 %v605, %v604
        %v617 = vpack.c.b16 %v607, %v606
        %v618 = vpack.c.b16 %v609, %v608
        %v619 = vpack.c.b16 %v611, %v610
        %628 = vmatprep.subr.bf16.mxu0 0
        %629 = vmatpush1.bf16.msra.mxu0 %v619
        %630 = vmatprep.subr.bf16.mxu0 0
        %631 = vmatpush1.bf16.msra.mxu0 %v618
        %632 = vmatprep.subr.bf16.mxu0 0
        %633 = vmatpush1.bf16.msra.mxu0 %v617
        %634 = vmatprep.subr.bf16.mxu0 0
        %635 = vmatpush1.bf16.msra.mxu0 %v616
        %636 = vmatprep.subr.bf16.mxu0 0
        %637 = vmatpush1.bf16.msra.mxu0 %v615
        %638 = vmatprep.subr.bf16.mxu0 0
        %639 = vmatpush1.bf16.msra.mxu0 %v614
        %640 = vmatprep.subr.bf16.mxu0 0
        %641 = vmatpush1.bf16.msra.mxu0 %v613
        %642 = vmatprep.subr.bf16.mxu0 0
        %643 = vmatpush1.bf16.msra.mxu0 %v612
        %644 = vmatprep.subr.bf16.mxu0 0
        %645 = vmatpush2.bf16.msra.mxu0 0
        %646 = vmatprep.subr.bf16.mxu0 0
        %647 = vmatpush2.bf16.msra.mxu0 0
        %648 = vmatprep.subr.bf16.mxu0 0
        %649 = vmatpush2.bf16.msra.mxu0 0
        %650 = vmatprep.subr.bf16.mxu0 0
        %651 = vmatpush2.bf16.msra.mxu0 0
        %652 = vmatprep.subr.bf16.mxu0 0
        %653 = vmatpush2.bf16.msra.mxu0 0
        %654 = vmatprep.subr.bf16.mxu0 0
        %655 = vmatpush2.bf16.msra.mxu0 0
        %656 = vmatprep.subr.bf16.mxu0 0
        %657 = vmatpush2.bf16.msra.mxu0 0
        %658 = vmatprep.subr.bf16.mxu0 0
        %659 = vmatpush2.bf16.msra.mxu0 0
        %660 = vmatprep.mubr.bf16.mxu0 0
        %661 = vmatmul.mubr.bf16.gmra.mxu0 %v554
        %v662 = vpop.f32.mrf.mxu0
        %v663 = vadd.f32 %v579, %v662
        %v664 = vpop.f32.mrf.mxu0
        %v665 = vpop.f32.mrf.mxu0
        %v666 = vpop.f32.mrf.mxu0
        %667 = vdwg.mxu0
        %669 = vset.pattern.permute.xlu0 0
        %670 = vperm.xlu0 %669, %v555
        %v671 = vpop.permute.xlu0 %670
        %674 = vset.pattern.permute.xlu0 0
        %675 = vperm.xlu0 %674, %v556
        %v676 = vpop.permute.xlu0 %675
        %679 = vset.pattern.permute.xlu0 0
        %680 = vperm.xlu0 %679, %v557
        %v681 = vpop.permute.xlu0 %680
        %684 = vset.pattern.permute.xlu0 0
        %685 = vperm.xlu0 %684, %v558
        %v686 = vpop.permute.xlu0 %685
        %689 = vset.pattern.permute.xlu0 0
        %690 = vperm.xlu0 %689, %v559
        %v691 = vpop.permute.xlu0 %690
        %694 = vset.pattern.permute.xlu0 0
        %695 = vperm.xlu0 %694, %v560
        %v696 = vpop.permute.xlu0 %695
        %699 = vset.pattern.permute.xlu0 0
        %700 = vperm.xlu0 %699, %v561
        %v701 = vpop.permute.xlu0 %700
        %704 = vset.pattern.permute.xlu0 0
        %705 = vperm.xlu0 %704, %v562
        %v706 = vpop.permute.xlu0 %705
        %v708 = vlaneseq
        %v709 = vshrl.u32 %v708, 7
        %v710 = vsub.s32 0, %v709
        %v711 = vrot.slane %v663, %v710
        %v712 = vmul.f32 %v671, %v711
        %v713 = vmul.f32 %v676, %v711
        %v714 = vmul.f32 %v681, %v711
        %v715 = vmul.f32 %v686, %v711
        %v716 = vmul.f32 %v691, %v711
        %v717 = vmul.f32 %v696, %v711
        %v718 = vmul.f32 %v701, %v711
        %v719 = vmul.f32 %v706, %v711
        %v720 = vadd.f32 %v712, 0.0
        %v721 = vadd.f32 %v713, 0.0
        %v722 = vadd.f32 %v714, 0.0
        %v723 = vadd.f32 %v715, 0.0
        %v724 = vadd.f32 %v716, 0.0
        %v725 = vadd.f32 %v717, 0.0
        %v726 = vadd.f32 %v718, 0.0
        %v727 = vadd.f32 %v719, 0.0
        %s728 = scalar_lea.vmem %s1, 64
        %v729 = vld [vmem:[%s728] sm:$0xf]
        %v730 = vld [vmem:[%s728 + $0x4] sm:$0xf]
        %v731 = vld [vmem:[%s728 + $0x8] sm:$0xf]
        %v732 = vld [vmem:[%s728 + $0xc] sm:$0xf]
        %v733 = vld [vmem:[%s728 + $0x10] sm:$0xf]
        %v734 = vld [vmem:[%s728 + $0x14] sm:$0xf]
        %v735 = vld [vmem:[%s728 + $0x18] sm:$0xf]
        %v736 = vld [vmem:[%s728 + $0x1c] sm:$0xf]
        %v737 = vld [vmem:[%s728 + $0x20] sm:$0xf]
        %v738 = vld [vmem:[%s728 + $0x24] sm:$0xf]
        %v739 = vld [vmem:[%s728 + $0x28] sm:$0xf]
        %v740 = vld [vmem:[%s728 + $0x2c] sm:$0xf]
        %v741 = vld [vmem:[%s728 + $0x30] sm:$0xf]
        %v742 = vld [vmem:[%s728 + $0x34] sm:$0xf]
        %v743 = vld [vmem:[%s728 + $0x38] sm:$0xf]
        %v744 = vld [vmem:[%s728 + $0x3c] sm:$0xf]
        %s745 = scalar_lea.vmem %s2, 1
        %v746 = vld [vmem:[%s745] sm:$0x1]
        %v763 = vunpack.c.l.b16 %v729
        %v764 = vunpack.c.l.b16 %v730
        %v765 = vunpack.c.l.b16 %v731
        %v766 = vunpack.c.l.b16 %v732
        %v767 = vunpack.c.l.b16 %v733
        %v768 = vunpack.c.l.b16 %v734
        %v769 = vunpack.c.l.b16 %v735
        %v770 = vunpack.c.l.b16 %v736
        %v771 = vunpack.c.l.b16 %v737
        %v772 = vunpack.c.l.b16 %v738
        %v773 = vunpack.c.l.b16 %v739
        %v774 = vunpack.c.l.b16 %v740
        %v775 = vunpack.c.l.b16 %v741
        %v776 = vunpack.c.l.b16 %v742
        %v777 = vunpack.c.l.b16 %v743
        %v778 = vunpack.c.l.b16 %v744
        %v779 = vpack.c.b16 %v764, %v763
        %v780 = vpack.c.b16 %v766, %v765
        %v781 = vpack.c.b16 %v768, %v767
        %v782 = vpack.c.b16 %v770, %v769
        %v783 = vpack.c.b16 %v772, %v771
        %v784 = vpack.c.b16 %v774, %v773
        %v785 = vpack.c.b16 %v776, %v775
        %v786 = vpack.c.b16 %v778, %v777
        %795 = vmatprep.subr.bf16.mxu0 0
        %796 = vmatpush1.bf16.msra.mxu0 %v786
        %797 = vmatprep.subr.bf16.mxu0 0
        %798 = vmatpush1.bf16.msra.mxu0 %v785
        %799 = vmatprep.subr.bf16.mxu0 0
        %800 = vmatpush1.bf16.msra.mxu0 %v784
        %801 = vmatprep.subr.bf16.mxu0 0
        %802 = vmatpush1.bf16.msra.mxu0 %v783
        %803 = vmatprep.subr.bf16.mxu0 0
        %804 = vmatpush1.bf16.msra.mxu0 %v782
        %805 = vmatprep.subr.bf16.mxu0 0
        %806 = vmatpush1.bf16.msra.mxu0 %v781
        %807 = vmatprep.subr.bf16.mxu0 0
        %808 = vmatpush1.bf16.msra.mxu0 %v780
        %809 = vmatprep.subr.bf16.mxu0 0
        %810 = vmatpush1.bf16.msra.mxu0 %v779
        %811 = vmatprep.subr.bf16.mxu0 0
        %812 = vmatpush2.bf16.msra.mxu0 0
        %813 = vmatprep.subr.bf16.mxu0 0
        %814 = vmatpush2.bf16.msra.mxu0 0
        %815 = vmatprep.subr.bf16.mxu0 0
        %816 = vmatpush2.bf16.msra.mxu0 0
        %817 = vmatprep.subr.bf16.mxu0 0
        %818 = vmatpush2.bf16.msra.mxu0 0
        %819 = vmatprep.subr.bf16.mxu0 0
        %820 = vmatpush2.bf16.msra.mxu0 0
        %821 = vmatprep.subr.bf16.mxu0 0
        %822 = vmatpush2.bf16.msra.mxu0 0
        %823 = vmatprep.subr.bf16.mxu0 0
        %824 = vmatpush2.bf16.msra.mxu0 0
        %825 = vmatprep.subr.bf16.mxu0 0
        %826 = vmatpush2.bf16.msra.mxu0 0
        %827 = vmatprep.mubr.bf16.mxu0 0
        %828 = vmatmul.mubr.bf16.gmra.mxu0 %v554
        %v829 = vpop.f32.mrf.mxu0
        %v830 = vadd.f32 %v746, %v829
        %v831 = vpop.f32.mrf.mxu0
        %v832 = vpop.f32.mrf.mxu0
        %v833 = vpop.f32.mrf.mxu0
        %834 = vdwg.mxu0
        %835 = vset.pattern.permute.xlu0 1
        %836 = vperm.xlu0 %835, %v555
        %v837 = vpop.permute.xlu0 %836
        %839 = vset.pattern.permute.xlu0 1
        %840 = vperm.xlu0 %839, %v556
        %v841 = vpop.permute.xlu0 %840
        %843 = vset.pattern.permute.xlu0 1
        %844 = vperm.xlu0 %843, %v557
        %v845 = vpop.permute.xlu0 %844
        %847 = vset.pattern.permute.xlu0 1
        %848 = vperm.xlu0 %847, %v558
        %v849 = vpop.permute.xlu0 %848
        %851 = vset.pattern.permute.xlu0 1
        %852 = vperm.xlu0 %851, %v559
        %v853 = vpop.permute.xlu0 %852
        %855 = vset.pattern.permute.xlu0 1
        %856 = vperm.xlu0 %855, %v560
        %v857 = vpop.permute.xlu0 %856
        %859 = vset.pattern.permute.xlu0 1
        %860 = vperm.xlu0 %859, %v561
        %v861 = vpop.permute.xlu0 %860
        %863 = vset.pattern.permute.xlu0 1
        %864 = vperm.xlu0 %863, %v562
        %v865 = vpop.permute.xlu0 %864
        %v867 = vlaneseq
        %v868 = vshrl.u32 %v867, 7
        %v869 = vsub.s32 0, %v868
        %v870 = vrot.slane %v830, %v869
        %v871 = vmul.f32 %v837, %v870
        %v872 = vmul.f32 %v841, %v870
        %v873 = vmul.f32 %v845, %v870
        %v874 = vmul.f32 %v849, %v870
        %v875 = vmul.f32 %v853, %v870
        %v876 = vmul.f32 %v857, %v870
        %v877 = vmul.f32 %v861, %v870
        %v878 = vmul.f32 %v865, %v870
        %v879 = vadd.f32 %v720, %v871
        %v880 = vadd.f32 %v721, %v872
        %v881 = vadd.f32 %v722, %v873
        %v882 = vadd.f32 %v723, %v874
        %v883 = vadd.f32 %v724, %v875
        %v884 = vadd.f32 %v725, %v876
        %v885 = vadd.f32 %v726, %v877
        %v886 = vadd.f32 %v727, %v878
        %s887 = scalar_lea.vmem %s1, 128
        %v888 = vld [vmem:[%s887] sm:$0xf]
        %v889 = vld [vmem:[%s887 + $0x4] sm:$0xf]
        %v890 = vld [vmem:[%s887 + $0x8] sm:$0xf]
        %v891 = vld [vmem:[%s887 + $0xc] sm:$0xf]
        %v892 = vld [vmem:[%s887 + $0x10] sm:$0xf]
        %v893 = vld [vmem:[%s887 + $0x14] sm:$0xf]
        %v894 = vld [vmem:[%s887 + $0x18] sm:$0xf]
        %v895 = vld [vmem:[%s887 + $0x1c] sm:$0xf]
        %v896 = vld [vmem:[%s887 + $0x20] sm:$0xf]
        %v897 = vld [vmem:[%s887 + $0x24] sm:$0xf]
        %v898 = vld [vmem:[%s887 + $0x28] sm:$0xf]
        %v899 = vld [vmem:[%s887 + $0x2c] sm:$0xf]
        %v900 = vld [vmem:[%s887 + $0x30] sm:$0xf]
        %v901 = vld [vmem:[%s887 + $0x34] sm:$0xf]
        %v902 = vld [vmem:[%s887 + $0x38] sm:$0xf]
        %v903 = vld [vmem:[%s887 + $0x3c] sm:$0xf]
        %s904 = scalar_lea.vmem %s2, 2
        %v905 = vld [vmem:[%s904] sm:$0x1]
        %v922 = vunpack.c.l.b16 %v888
        %v923 = vunpack.c.l.b16 %v889
        %v924 = vunpack.c.l.b16 %v890
        %v925 = vunpack.c.l.b16 %v891
        %v926 = vunpack.c.l.b16 %v892
        %v927 = vunpack.c.l.b16 %v893
        %v928 = vunpack.c.l.b16 %v894
        %v929 = vunpack.c.l.b16 %v895
        %v930 = vunpack.c.l.b16 %v896
        %v931 = vunpack.c.l.b16 %v897
        %v932 = vunpack.c.l.b16 %v898
        %v933 = vunpack.c.l.b16 %v899
        %v934 = vunpack.c.l.b16 %v900
        %v935 = vunpack.c.l.b16 %v901
        %v936 = vunpack.c.l.b16 %v902
        %v937 = vunpack.c.l.b16 %v903
        %v938 = vpack.c.b16 %v923, %v922
        %v939 = vpack.c.b16 %v925, %v924
        %v940 = vpack.c.b16 %v927, %v926
        %v941 = vpack.c.b16 %v929, %v928
        %v942 = vpack.c.b16 %v931, %v930
        %v943 = vpack.c.b16 %v933, %v932
        %v944 = vpack.c.b16 %v935, %v934
        %v945 = vpack.c.b16 %v937, %v936
        %954 = vmatprep.subr.bf16.mxu0 0
        %955 = vmatpush1.bf16.msra.mxu0 %v945
        %956 = vmatprep.subr.bf16.mxu0 0
        %957 = vmatpush1.bf16.msra.mxu0 %v944
        %958 = vmatprep.subr.bf16.mxu0 0
        %959 = vmatpush1.bf16.msra.mxu0 %v943
        %960 = vmatprep.subr.bf16.mxu0 0
        %961 = vmatpush1.bf16.msra.mxu0 %v942
        %962 = vmatprep.subr.bf16.mxu0 0
        %963 = vmatpush1.bf16.msra.mxu0 %v941
        %964 = vmatprep.subr.bf16.mxu0 0
        %965 = vmatpush1.bf16.msra.mxu0 %v940
        %966 = vmatprep.subr.bf16.mxu0 0
        %967 = vmatpush1.bf16.msra.mxu0 %v939
        %968 = vmatprep.subr.bf16.mxu0 0
        %969 = vmatpush1.bf16.msra.mxu0 %v938
        %970 = vmatprep.subr.bf16.mxu0 0
        %971 = vmatpush2.bf16.msra.mxu0 0
        %972 = vmatprep.subr.bf16.mxu0 0
        %973 = vmatpush2.bf16.msra.mxu0 0
        %974 = vmatprep.subr.bf16.mxu0 0
        %975 = vmatpush2.bf16.msra.mxu0 0
        %976 = vmatprep.subr.bf16.mxu0 0
        %977 = vmatpush2.bf16.msra.mxu0 0
        %978 = vmatprep.subr.bf16.mxu0 0
        %979 = vmatpush2.bf16.msra.mxu0 0
        %980 = vmatprep.subr.bf16.mxu0 0
        %981 = vmatpush2.bf16.msra.mxu0 0
        %982 = vmatprep.subr.bf16.mxu0 0
        %983 = vmatpush2.bf16.msra.mxu0 0
        %984 = vmatprep.subr.bf16.mxu0 0
        %985 = vmatpush2.bf16.msra.mxu0 0
        %986 = vmatprep.mubr.bf16.mxu0 0
        %987 = vmatmul.mubr.bf16.gmra.mxu0 %v554
        %v988 = vpop.f32.mrf.mxu0
        %v989 = vadd.f32 %v905, %v988
        %v990 = vpop.f32.mrf.mxu0
        %v991 = vpop.f32.mrf.mxu0
        %v992 = vpop.f32.mrf.mxu0
        %993 = vdwg.mxu0
        %994 = vset.pattern.permute.xlu0 2
        %995 = vperm.xlu0 %994, %v555
        %v996 = vpop.permute.xlu0 %995
        %998 = vset.pattern.permute.xlu0 2
        %999 = vperm.xlu0 %998, %v556
        %v1000 = vpop.permute.xlu0 %999
        %1002 = vset.pattern.permute.xlu0 2
        %1003 = vperm.xlu0 %1002, %v557
        %v1004 = vpop.permute.xlu0 %1003
        %1006 = vset.pattern.permute.xlu0 2
        %1007 = vperm.xlu0 %1006, %v558
        %v1008 = vpop.permute.xlu0 %1007
        %1010 = vset.pattern.permute.xlu0 2
        %1011 = vperm.xlu0 %1010, %v559
        %v1012 = vpop.permute.xlu0 %1011
        %1014 = vset.pattern.permute.xlu0 2
        %1015 = vperm.xlu0 %1014, %v560
        %v1016 = vpop.permute.xlu0 %1015
        %1018 = vset.pattern.permute.xlu0 2
        %1019 = vperm.xlu0 %1018, %v561
        %v1020 = vpop.permute.xlu0 %1019
        %1022 = vset.pattern.permute.xlu0 2
        %1023 = vperm.xlu0 %1022, %v562
        %v1024 = vpop.permute.xlu0 %1023
        %v1026 = vlaneseq
        %v1027 = vshrl.u32 %v1026, 7
        %v1028 = vsub.s32 0, %v1027
        %v1029 = vrot.slane %v989, %v1028
        %v1030 = vmul.f32 %v996, %v1029
        %v1031 = vmul.f32 %v1000, %v1029
        %v1032 = vmul.f32 %v1004, %v1029
        %v1033 = vmul.f32 %v1008, %v1029
        %v1034 = vmul.f32 %v1012, %v1029
        %v1035 = vmul.f32 %v1016, %v1029
        %v1036 = vmul.f32 %v1020, %v1029
        %v1037 = vmul.f32 %v1024, %v1029
        %v1038 = vadd.f32 %v879, %v1030
        %v1039 = vadd.f32 %v880, %v1031
        %v1040 = vadd.f32 %v881, %v1032
        %v1041 = vadd.f32 %v882, %v1033
        %v1042 = vadd.f32 %v883, %v1034
        %v1043 = vadd.f32 %v884, %v1035
        %v1044 = vadd.f32 %v885, %v1036
        %v1045 = vadd.f32 %v886, %v1037
        %s1046 = scalar_lea.vmem %s1, 192
        %v1047 = vld [vmem:[%s1046] sm:$0xf]
        %v1048 = vld [vmem:[%s1046 + $0x4] sm:$0xf]
        %v1049 = vld [vmem:[%s1046 + $0x8] sm:$0xf]
        %v1050 = vld [vmem:[%s1046 + $0xc] sm:$0xf]
        %v1051 = vld [vmem:[%s1046 + $0x10] sm:$0xf]
        %v1052 = vld [vmem:[%s1046 + $0x14] sm:$0xf]
        %v1053 = vld [vmem:[%s1046 + $0x18] sm:$0xf]
        %v1054 = vld [vmem:[%s1046 + $0x1c] sm:$0xf]
        %v1055 = vld [vmem:[%s1046 + $0x20] sm:$0xf]
        %v1056 = vld [vmem:[%s1046 + $0x24] sm:$0xf]
        %v1057 = vld [vmem:[%s1046 + $0x28] sm:$0xf]
        %v1058 = vld [vmem:[%s1046 + $0x2c] sm:$0xf]
        %v1059 = vld [vmem:[%s1046 + $0x30] sm:$0xf]
        %v1060 = vld [vmem:[%s1046 + $0x34] sm:$0xf]
        %v1061 = vld [vmem:[%s1046 + $0x38] sm:$0xf]
        %v1062 = vld [vmem:[%s1046 + $0x3c] sm:$0xf]
        %s1063 = scalar_lea.vmem %s2, 3
        %v1064 = vld [vmem:[%s1063] sm:$0x1]
        %v1081 = vunpack.c.l.b16 %v1047
        %v1082 = vunpack.c.l.b16 %v1048
        %v1083 = vunpack.c.l.b16 %v1049
        %v1084 = vunpack.c.l.b16 %v1050
        %v1085 = vunpack.c.l.b16 %v1051
        %v1086 = vunpack.c.l.b16 %v1052
        %v1087 = vunpack.c.l.b16 %v1053
        %v1088 = vunpack.c.l.b16 %v1054
        %v1089 = vunpack.c.l.b16 %v1055
        %v1090 = vunpack.c.l.b16 %v1056
        %v1091 = vunpack.c.l.b16 %v1057
        %v1092 = vunpack.c.l.b16 %v1058
        %v1093 = vunpack.c.l.b16 %v1059
        %v1094 = vunpack.c.l.b16 %v1060
        %v1095 = vunpack.c.l.b16 %v1061
        %v1096 = vunpack.c.l.b16 %v1062
        %v1097 = vpack.c.b16 %v1082, %v1081
        %v1098 = vpack.c.b16 %v1084, %v1083
        %v1099 = vpack.c.b16 %v1086, %v1085
        %v1100 = vpack.c.b16 %v1088, %v1087
        %v1101 = vpack.c.b16 %v1090, %v1089
        %v1102 = vpack.c.b16 %v1092, %v1091
        %v1103 = vpack.c.b16 %v1094, %v1093
        %v1104 = vpack.c.b16 %v1096, %v1095
        %1113 = vmatprep.subr.bf16.mxu0 0
        %1114 = vmatpush1.bf16.msra.mxu0 %v1104
        %1115 = vmatprep.subr.bf16.mxu0 0
        %1116 = vmatpush1.bf16.msra.mxu0 %v1103
        %1117 = vmatprep.subr.bf16.mxu0 0
        %1118 = vmatpush1.bf16.msra.mxu0 %v1102
        %1119 = vmatprep.subr.bf16.mxu0 0
        %1120 = vmatpush1.bf16.msra.mxu0 %v1101
        %1121 = vmatprep.subr.bf16.mxu0 0
        %1122 = vmatpush1.bf16.msra.mxu0 %v1100
        %1123 = vmatprep.subr.bf16.mxu0 0
        %1124 = vmatpush1.bf16.msra.mxu0 %v1099
        %1125 = vmatprep.subr.bf16.mxu0 0
        %1126 = vmatpush1.bf16.msra.mxu0 %v1098
        %1127 = vmatprep.subr.bf16.mxu0 0
        %1128 = vmatpush1.bf16.msra.mxu0 %v1097
        %1129 = vmatprep.subr.bf16.mxu0 0
        %1130 = vmatpush2.bf16.msra.mxu0 0
        %1131 = vmatprep.subr.bf16.mxu0 0
        %1132 = vmatpush2.bf16.msra.mxu0 0
        %1133 = vmatprep.subr.bf16.mxu0 0
        %1134 = vmatpush2.bf16.msra.mxu0 0
        %1135 = vmatprep.subr.bf16.mxu0 0
        %1136 = vmatpush2.bf16.msra.mxu0 0
        %1137 = vmatprep.subr.bf16.mxu0 0
        %1138 = vmatpush2.bf16.msra.mxu0 0
        %1139 = vmatprep.subr.bf16.mxu0 0
        %1140 = vmatpush2.bf16.msra.mxu0 0
        %1141 = vmatprep.subr.bf16.mxu0 0
        %1142 = vmatpush2.bf16.msra.mxu0 0
        %1143 = vmatprep.subr.bf16.mxu0 0
        %1144 = vmatpush2.bf16.msra.mxu0 0
        %1145 = vmatprep.mubr.bf16.mxu0 0
        %1146 = vmatmul.mubr.bf16.gmra.mxu0 %v554
        %v1147 = vpop.f32.mrf.mxu0
        %v1148 = vadd.f32 %v1064, %v1147
        %v1149 = vpop.f32.mrf.mxu0
        %v1150 = vpop.f32.mrf.mxu0
        %v1151 = vpop.f32.mrf.mxu0
        %1152 = vdwg.mxu0
        %1153 = vset.pattern.permute.xlu0 3
        %1154 = vperm.xlu0 %1153, %v555
        %v1155 = vpop.permute.xlu0 %1154
        %1157 = vset.pattern.permute.xlu0 3
        %1158 = vperm.xlu0 %1157, %v556
        %v1159 = vpop.permute.xlu0 %1158
        %1161 = vset.pattern.permute.xlu0 3
        %1162 = vperm.xlu0 %1161, %v557
        %v1163 = vpop.permute.xlu0 %1162
        %1165 = vset.pattern.permute.xlu0 3
        %1166 = vperm.xlu0 %1165, %v558
        %v1167 = vpop.permute.xlu0 %1166
        %1169 = vset.pattern.permute.xlu0 3
        %1170 = vperm.xlu0 %1169, %v559
        %v1171 = vpop.permute.xlu0 %1170
        %1173 = vset.pattern.permute.xlu0 3
        %1174 = vperm.xlu0 %1173, %v560
        %v1175 = vpop.permute.xlu0 %1174
        %1177 = vset.pattern.permute.xlu0 3
        %1178 = vperm.xlu0 %1177, %v561
        %v1179 = vpop.permute.xlu0 %1178
        %1181 = vset.pattern.permute.xlu0 3
        %1182 = vperm.xlu0 %1181, %v562
        %v1183 = vpop.permute.xlu0 %1182
        %v1185 = vlaneseq
        %v1186 = vshrl.u32 %v1185, 7
        %v1187 = vsub.s32 0, %v1186
        %v1188 = vrot.slane %v1148, %v1187
        %v1189 = vmul.f32 %v1155, %v1188
        %v1190 = vmul.f32 %v1159, %v1188
        %v1191 = vmul.f32 %v1163, %v1188
        %v1192 = vmul.f32 %v1167, %v1188
        %v1193 = vmul.f32 %v1171, %v1188
        %v1194 = vmul.f32 %v1175, %v1188
        %v1195 = vmul.f32 %v1179, %v1188
        %v1196 = vmul.f32 %v1183, %v1188
        %v1197 = vadd.f32 %v1038, %v1189
        %v1198 = vadd.f32 %v1039, %v1190
        %v1199 = vadd.f32 %v1040, %v1191
        %v1200 = vadd.f32 %v1041, %v1192
        %v1201 = vadd.f32 %v1042, %v1193
        %v1202 = vadd.f32 %v1043, %v1194
        %v1203 = vadd.f32 %v1044, %v1195
        %v1204 = vadd.f32 %v1045, %v1196
        %s1205 = scalar_lea.vmem %s1, 256
        %v1206 = vld [vmem:[%s1205] sm:$0xf]
        %v1207 = vld [vmem:[%s1205 + $0x4] sm:$0xf]
        %v1208 = vld [vmem:[%s1205 + $0x8] sm:$0xf]
        %v1209 = vld [vmem:[%s1205 + $0xc] sm:$0xf]
        %v1210 = vld [vmem:[%s1205 + $0x10] sm:$0xf]
        %v1211 = vld [vmem:[%s1205 + $0x14] sm:$0xf]
        %v1212 = vld [vmem:[%s1205 + $0x18] sm:$0xf]
        %v1213 = vld [vmem:[%s1205 + $0x1c] sm:$0xf]
        %v1214 = vld [vmem:[%s1205 + $0x20] sm:$0xf]
        %v1215 = vld [vmem:[%s1205 + $0x24] sm:$0xf]
        %v1216 = vld [vmem:[%s1205 + $0x28] sm:$0xf]
        %v1217 = vld [vmem:[%s1205 + $0x2c] sm:$0xf]
        %v1218 = vld [vmem:[%s1205 + $0x30] sm:$0xf]
        %v1219 = vld [vmem:[%s1205 + $0x34] sm:$0xf]
        %v1220 = vld [vmem:[%s1205 + $0x38] sm:$0xf]
        %v1221 = vld [vmem:[%s1205 + $0x3c] sm:$0xf]
        %s1222 = scalar_lea.vmem %s2, 4
        %v1223 = vld [vmem:[%s1222] sm:$0x1]
        %v1240 = vunpack.c.l.b16 %v1206
        %v1241 = vunpack.c.l.b16 %v1207
        %v1242 = vunpack.c.l.b16 %v1208
        %v1243 = vunpack.c.l.b16 %v1209
        %v1244 = vunpack.c.l.b16 %v1210
        %v1245 = vunpack.c.l.b16 %v1211
        %v1246 = vunpack.c.l.b16 %v1212
        %v1247 = vunpack.c.l.b16 %v1213
        %v1248 = vunpack.c.l.b16 %v1214
        %v1249 = vunpack.c.l.b16 %v1215
        %v1250 = vunpack.c.l.b16 %v1216
        %v1251 = vunpack.c.l.b16 %v1217
        %v1252 = vunpack.c.l.b16 %v1218
        %v1253 = vunpack.c.l.b16 %v1219
        %v1254 = vunpack.c.l.b16 %v1220
        %v1255 = vunpack.c.l.b16 %v1221
        %v1256 = vpack.c.b16 %v1241, %v1240
        %v1257 = vpack.c.b16 %v1243, %v1242
        %v1258 = vpack.c.b16 %v1245, %v1244
        %v1259 = vpack.c.b16 %v1247, %v1246
        %v1260 = vpack.c.b16 %v1249, %v1248
        %v1261 = vpack.c.b16 %v1251, %v1250
        %v1262 = vpack.c.b16 %v1253, %v1252
        %v1263 = vpack.c.b16 %v1255, %v1254
        %1272 = vmatprep.subr.bf16.mxu0 0
        %1273 = vmatpush1.bf16.msra.mxu0 %v1263
        %1274 = vmatprep.subr.bf16.mxu0 0
        %1275 = vmatpush1.bf16.msra.mxu0 %v1262
        %1276 = vmatprep.subr.bf16.mxu0 0
        %1277 = vmatpush1.bf16.msra.mxu0 %v1261
        %1278 = vmatprep.subr.bf16.mxu0 0
        %1279 = vmatpush1.bf16.msra.mxu0 %v1260
        %1280 = vmatprep.subr.bf16.mxu0 0
        %1281 = vmatpush1.bf16.msra.mxu0 %v1259
        %1282 = vmatprep.subr.bf16.mxu0 0
        %1283 = vmatpush1.bf16.msra.mxu0 %v1258
        %1284 = vmatprep.subr.bf16.mxu0 0
        %1285 = vmatpush1.bf16.msra.mxu0 %v1257
        %1286 = vmatprep.subr.bf16.mxu0 0
        %1287 = vmatpush1.bf16.msra.mxu0 %v1256
        %1288 = vmatprep.subr.bf16.mxu0 0
        %1289 = vmatpush2.bf16.msra.mxu0 0
        %1290 = vmatprep.subr.bf16.mxu0 0
        %1291 = vmatpush2.bf16.msra.mxu0 0
        %1292 = vmatprep.subr.bf16.mxu0 0
        %1293 = vmatpush2.bf16.msra.mxu0 0
        %1294 = vmatprep.subr.bf16.mxu0 0
        %1295 = vmatpush2.bf16.msra.mxu0 0
        %1296 = vmatprep.subr.bf16.mxu0 0
        %1297 = vmatpush2.bf16.msra.mxu0 0
        %1298 = vmatprep.subr.bf16.mxu0 0
        %1299 = vmatpush2.bf16.msra.mxu0 0
        %1300 = vmatprep.subr.bf16.mxu0 0
        %1301 = vmatpush2.bf16.msra.mxu0 0
        %1302 = vmatprep.subr.bf16.mxu0 0
        %1303 = vmatpush2.bf16.msra.mxu0 0
        %1304 = vmatprep.mubr.bf16.mxu0 0
        %1305 = vmatmul.mubr.bf16.gmra.mxu0 %v554
        %v1306 = vpop.f32.mrf.mxu0
        %v1307 = vadd.f32 %v1223, %v1306
        %v1308 = vpop.f32.mrf.mxu0
        %v1309 = vpop.f32.mrf.mxu0
        %v1310 = vpop.f32.mrf.mxu0
        %1311 = vdwg.mxu0
        %1312 = vset.pattern.permute.xlu0 4
        %1313 = vperm.xlu0 %1312, %v555
        %v1314 = vpop.permute.xlu0 %1313
        %1316 = vset.pattern.permute.xlu0 4
        %1317 = vperm.xlu0 %1316, %v556
        %v1318 = vpop.permute.xlu0 %1317
        %1320 = vset.pattern.permute.xlu0 4
        %1321 = vperm.xlu0 %1320, %v557
        %v1322 = vpop.permute.xlu0 %1321
        %1324 = vset.pattern.permute.xlu0 4
        %1325 = vperm.xlu0 %1324, %v558
        %v1326 = vpop.permute.xlu0 %1325
        %1328 = vset.pattern.permute.xlu0 4
        %1329 = vperm.xlu0 %1328, %v559
        %v1330 = vpop.permute.xlu0 %1329
        %1332 = vset.pattern.permute.xlu0 4
        %1333 = vperm.xlu0 %1332, %v560
        %v1334 = vpop.permute.xlu0 %1333
        %1336 = vset.pattern.permute.xlu0 4
        %1337 = vperm.xlu0 %1336, %v561
        %v1338 = vpop.permute.xlu0 %1337
        %1340 = vset.pattern.permute.xlu0 4
        %1341 = vperm.xlu0 %1340, %v562
        %v1342 = vpop.permute.xlu0 %1341
        %v1344 = vlaneseq
        %v1345 = vshrl.u32 %v1344, 7
        %v1346 = vsub.s32 0, %v1345
        %v1347 = vrot.slane %v1307, %v1346
        %v1348 = vmul.f32 %v1314, %v1347
        %v1349 = vmul.f32 %v1318, %v1347
        %v1350 = vmul.f32 %v1322, %v1347
        %v1351 = vmul.f32 %v1326, %v1347
        %v1352 = vmul.f32 %v1330, %v1347
        %v1353 = vmul.f32 %v1334, %v1347
        %v1354 = vmul.f32 %v1338, %v1347
        %v1355 = vmul.f32 %v1342, %v1347
        %v1356 = vadd.f32 %v1197, %v1348
        %v1357 = vadd.f32 %v1198, %v1349
        %v1358 = vadd.f32 %v1199, %v1350
        %v1359 = vadd.f32 %v1200, %v1351
        %v1360 = vadd.f32 %v1201, %v1352
        %v1361 = vadd.f32 %v1202, %v1353
        %v1362 = vadd.f32 %v1203, %v1354
        %v1363 = vadd.f32 %v1204, %v1355
        %s1364 = scalar_lea.vmem %s1, 320
        %v1365 = vld [vmem:[%s1364] sm:$0xf]
        %v1366 = vld [vmem:[%s1364 + $0x4] sm:$0xf]
        %v1367 = vld [vmem:[%s1364 + $0x8] sm:$0xf]
        %v1368 = vld [vmem:[%s1364 + $0xc] sm:$0xf]
        %v1369 = vld [vmem:[%s1364 + $0x10] sm:$0xf]
        %v1370 = vld [vmem:[%s1364 + $0x14] sm:$0xf]
        %v1371 = vld [vmem:[%s1364 + $0x18] sm:$0xf]
        %v1372 = vld [vmem:[%s1364 + $0x1c] sm:$0xf]
        %v1373 = vld [vmem:[%s1364 + $0x20] sm:$0xf]
        %v1374 = vld [vmem:[%s1364 + $0x24] sm:$0xf]
        %v1375 = vld [vmem:[%s1364 + $0x28] sm:$0xf]
        %v1376 = vld [vmem:[%s1364 + $0x2c] sm:$0xf]
        %v1377 = vld [vmem:[%s1364 + $0x30] sm:$0xf]
        %v1378 = vld [vmem:[%s1364 + $0x34] sm:$0xf]
        %v1379 = vld [vmem:[%s1364 + $0x38] sm:$0xf]
        %v1380 = vld [vmem:[%s1364 + $0x3c] sm:$0xf]
        %s1381 = scalar_lea.vmem %s2, 5
        %v1382 = vld [vmem:[%s1381] sm:$0x1]
        %v1399 = vunpack.c.l.b16 %v1365
        %v1400 = vunpack.c.l.b16 %v1366
        %v1401 = vunpack.c.l.b16 %v1367
        %v1402 = vunpack.c.l.b16 %v1368
        %v1403 = vunpack.c.l.b16 %v1369
        %v1404 = vunpack.c.l.b16 %v1370
        %v1405 = vunpack.c.l.b16 %v1371
        %v1406 = vunpack.c.l.b16 %v1372
        %v1407 = vunpack.c.l.b16 %v1373
        %v1408 = vunpack.c.l.b16 %v1374
        %v1409 = vunpack.c.l.b16 %v1375
        %v1410 = vunpack.c.l.b16 %v1376
        %v1411 = vunpack.c.l.b16 %v1377
        %v1412 = vunpack.c.l.b16 %v1378
        %v1413 = vunpack.c.l.b16 %v1379
        %v1414 = vunpack.c.l.b16 %v1380
        %v1415 = vpack.c.b16 %v1400, %v1399
        %v1416 = vpack.c.b16 %v1402, %v1401
        %v1417 = vpack.c.b16 %v1404, %v1403
        %v1418 = vpack.c.b16 %v1406, %v1405
        %v1419 = vpack.c.b16 %v1408, %v1407
        %v1420 = vpack.c.b16 %v1410, %v1409
        %v1421 = vpack.c.b16 %v1412, %v1411
        %v1422 = vpack.c.b16 %v1414, %v1413
        %1431 = vmatprep.subr.bf16.mxu0 0
        %1432 = vmatpush1.bf16.msra.mxu0 %v1422
        %1433 = vmatprep.subr.bf16.mxu0 0
        %1434 = vmatpush1.bf16.msra.mxu0 %v1421
        %1435 = vmatprep.subr.bf16.mxu0 0
        %1436 = vmatpush1.bf16.msra.mxu0 %v1420
        %1437 = vmatprep.subr.bf16.mxu0 0
        %1438 = vmatpush1.bf16.msra.mxu0 %v1419
        %1439 = vmatprep.subr.bf16.mxu0 0
        %1440 = vmatpush1.bf16.msra.mxu0 %v1418
        %1441 = vmatprep.subr.bf16.mxu0 0
        %1442 = vmatpush1.bf16.msra.mxu0 %v1417
        %1443 = vmatprep.subr.bf16.mxu0 0
        %1444 = vmatpush1.bf16.msra.mxu0 %v1416
        %1445 = vmatprep.subr.bf16.mxu0 0
        %1446 = vmatpush1.bf16.msra.mxu0 %v1415
        %1447 = vmatprep.subr.bf16.mxu0 0
        %1448 = vmatpush2.bf16.msra.mxu0 0
        %1449 = vmatprep.subr.bf16.mxu0 0
        %1450 = vmatpush2.bf16.msra.mxu0 0
        %1451 = vmatprep.subr.bf16.mxu0 0
        %1452 = vmatpush2.bf16.msra.mxu0 0
        %1453 = vmatprep.subr.bf16.mxu0 0
        %1454 = vmatpush2.bf16.msra.mxu0 0
        %1455 = vmatprep.subr.bf16.mxu0 0
        %1456 = vmatpush2.bf16.msra.mxu0 0
        %1457 = vmatprep.subr.bf16.mxu0 0
        %1458 = vmatpush2.bf16.msra.mxu0 0
        %1459 = vmatprep.subr.bf16.mxu0 0
        %1460 = vmatpush2.bf16.msra.mxu0 0
        %1461 = vmatprep.subr.bf16.mxu0 0
        %1462 = vmatpush2.bf16.msra.mxu0 0
        %1463 = vmatprep.mubr.bf16.mxu0 0
        %1464 = vmatmul.mubr.bf16.gmra.mxu0 %v554
        %v1465 = vpop.f32.mrf.mxu0
        %v1466 = vadd.f32 %v1382, %v1465
        %v1467 = vpop.f32.mrf.mxu0
        %v1468 = vpop.f32.mrf.mxu0
        %v1469 = vpop.f32.mrf.mxu0
        %1470 = vdwg.mxu0
        %1471 = vset.pattern.permute.xlu0 5
        %1472 = vperm.xlu0 %1471, %v555
        %v1473 = vpop.permute.xlu0 %1472
        %1475 = vset.pattern.permute.xlu0 5
        %1476 = vperm.xlu0 %1475, %v556
        %v1477 = vpop.permute.xlu0 %1476
        %1479 = vset.pattern.permute.xlu0 5
        %1480 = vperm.xlu0 %1479, %v557
        %v1481 = vpop.permute.xlu0 %1480
        %1483 = vset.pattern.permute.xlu0 5
        %1484 = vperm.xlu0 %1483, %v558
        %v1485 = vpop.permute.xlu0 %1484
        %1487 = vset.pattern.permute.xlu0 5
        %1488 = vperm.xlu0 %1487, %v559
        %v1489 = vpop.permute.xlu0 %1488
        %1491 = vset.pattern.permute.xlu0 5
        %1492 = vperm.xlu0 %1491, %v560
        %v1493 = vpop.permute.xlu0 %1492
        %1495 = vset.pattern.permute.xlu0 5
        %1496 = vperm.xlu0 %1495, %v561
        %v1497 = vpop.permute.xlu0 %1496
        %1499 = vset.pattern.permute.xlu0 5
        %1500 = vperm.xlu0 %1499, %v562
        %v1501 = vpop.permute.xlu0 %1500
        %v1503 = vlaneseq
        %v1504 = vshrl.u32 %v1503, 7
        %v1505 = vsub.s32 0, %v1504
        %v1506 = vrot.slane %v1466, %v1505
        %v1507 = vmul.f32 %v1473, %v1506
        %v1508 = vmul.f32 %v1477, %v1506
        %v1509 = vmul.f32 %v1481, %v1506
        %v1510 = vmul.f32 %v1485, %v1506
        %v1511 = vmul.f32 %v1489, %v1506
        %v1512 = vmul.f32 %v1493, %v1506
        %v1513 = vmul.f32 %v1497, %v1506
        %v1514 = vmul.f32 %v1501, %v1506
        %v1515 = vadd.f32 %v1356, %v1507
        %v1516 = vadd.f32 %v1357, %v1508
        %v1517 = vadd.f32 %v1358, %v1509
        %v1518 = vadd.f32 %v1359, %v1510
        %v1519 = vadd.f32 %v1360, %v1511
        %v1520 = vadd.f32 %v1361, %v1512
        %v1521 = vadd.f32 %v1362, %v1513
        %v1522 = vadd.f32 %v1363, %v1514
        %s1523 = scalar_lea.vmem %s1, 384
        %v1524 = vld [vmem:[%s1523] sm:$0xf]
        %v1525 = vld [vmem:[%s1523 + $0x4] sm:$0xf]
        %v1526 = vld [vmem:[%s1523 + $0x8] sm:$0xf]
        %v1527 = vld [vmem:[%s1523 + $0xc] sm:$0xf]
        %v1528 = vld [vmem:[%s1523 + $0x10] sm:$0xf]
        %v1529 = vld [vmem:[%s1523 + $0x14] sm:$0xf]
        %v1530 = vld [vmem:[%s1523 + $0x18] sm:$0xf]
        %v1531 = vld [vmem:[%s1523 + $0x1c] sm:$0xf]
        %v1532 = vld [vmem:[%s1523 + $0x20] sm:$0xf]
        %v1533 = vld [vmem:[%s1523 + $0x24] sm:$0xf]
        %v1534 = vld [vmem:[%s1523 + $0x28] sm:$0xf]
        %v1535 = vld [vmem:[%s1523 + $0x2c] sm:$0xf]
        %v1536 = vld [vmem:[%s1523 + $0x30] sm:$0xf]
        %v1537 = vld [vmem:[%s1523 + $0x34] sm:$0xf]
        %v1538 = vld [vmem:[%s1523 + $0x38] sm:$0xf]
        %v1539 = vld [vmem:[%s1523 + $0x3c] sm:$0xf]
        %s1540 = scalar_lea.vmem %s2, 6
        %v1541 = vld [vmem:[%s1540] sm:$0x1]
        %v1558 = vunpack.c.l.b16 %v1524
        %v1559 = vunpack.c.l.b16 %v1525
        %v1560 = vunpack.c.l.b16 %v1526
        %v1561 = vunpack.c.l.b16 %v1527
        %v1562 = vunpack.c.l.b16 %v1528
        %v1563 = vunpack.c.l.b16 %v1529
        %v1564 = vunpack.c.l.b16 %v1530
        %v1565 = vunpack.c.l.b16 %v1531
        %v1566 = vunpack.c.l.b16 %v1532
        %v1567 = vunpack.c.l.b16 %v1533
        %v1568 = vunpack.c.l.b16 %v1534
        %v1569 = vunpack.c.l.b16 %v1535
        %v1570 = vunpack.c.l.b16 %v1536
        %v1571 = vunpack.c.l.b16 %v1537
        %v1572 = vunpack.c.l.b16 %v1538
        %v1573 = vunpack.c.l.b16 %v1539
        %v1574 = vpack.c.b16 %v1559, %v1558
        %v1575 = vpack.c.b16 %v1561, %v1560
        %v1576 = vpack.c.b16 %v1563, %v1562
        %v1577 = vpack.c.b16 %v1565, %v1564
        %v1578 = vpack.c.b16 %v1567, %v1566
        %v1579 = vpack.c.b16 %v1569, %v1568
        %v1580 = vpack.c.b16 %v1571, %v1570
        %v1581 = vpack.c.b16 %v1573, %v1572
        %1590 = vmatprep.subr.bf16.mxu0 0
        %1591 = vmatpush1.bf16.msra.mxu0 %v1581
        %1592 = vmatprep.subr.bf16.mxu0 0
        %1593 = vmatpush1.bf16.msra.mxu0 %v1580
        %1594 = vmatprep.subr.bf16.mxu0 0
        %1595 = vmatpush1.bf16.msra.mxu0 %v1579
        %1596 = vmatprep.subr.bf16.mxu0 0
        %1597 = vmatpush1.bf16.msra.mxu0 %v1578
        %1598 = vmatprep.subr.bf16.mxu0 0
        %1599 = vmatpush1.bf16.msra.mxu0 %v1577
        %1600 = vmatprep.subr.bf16.mxu0 0
        %1601 = vmatpush1.bf16.msra.mxu0 %v1576
        %1602 = vmatprep.subr.bf16.mxu0 0
        %1603 = vmatpush1.bf16.msra.mxu0 %v1575
        %1604 = vmatprep.subr.bf16.mxu0 0
        %1605 = vmatpush1.bf16.msra.mxu0 %v1574
        %1606 = vmatprep.subr.bf16.mxu0 0
        %1607 = vmatpush2.bf16.msra.mxu0 0
        %1608 = vmatprep.subr.bf16.mxu0 0
        %1609 = vmatpush2.bf16.msra.mxu0 0
        %1610 = vmatprep.subr.bf16.mxu0 0
        %1611 = vmatpush2.bf16.msra.mxu0 0
        %1612 = vmatprep.subr.bf16.mxu0 0
        %1613 = vmatpush2.bf16.msra.mxu0 0
        %1614 = vmatprep.subr.bf16.mxu0 0
        %1615 = vmatpush2.bf16.msra.mxu0 0
        %1616 = vmatprep.subr.bf16.mxu0 0
        %1617 = vmatpush2.bf16.msra.mxu0 0
        %1618 = vmatprep.subr.bf16.mxu0 0
        %1619 = vmatpush2.bf16.msra.mxu0 0
        %1620 = vmatprep.subr.bf16.mxu0 0
        %1621 = vmatpush2.bf16.msra.mxu0 0
        %1622 = vmatprep.mubr.bf16.mxu0 0
        %1623 = vmatmul.mubr.bf16.gmra.mxu0 %v554
        %v1624 = vpop.f32.mrf.mxu0
        %v1625 = vadd.f32 %v1541, %v1624
        %v1626 = vpop.f32.mrf.mxu0
        %v1627 = vpop.f32.mrf.mxu0
        %v1628 = vpop.f32.mrf.mxu0
        %1629 = vdwg.mxu0
        %1630 = vset.pattern.permute.xlu0 6
        %1631 = vperm.xlu0 %1630, %v555
        %v1632 = vpop.permute.xlu0 %1631
        %1634 = vset.pattern.permute.xlu0 6
        %1635 = vperm.xlu0 %1634, %v556
        %v1636 = vpop.permute.xlu0 %1635
        %1638 = vset.pattern.permute.xlu0 6
        %1639 = vperm.xlu0 %1638, %v557
        %v1640 = vpop.permute.xlu0 %1639
        %1642 = vset.pattern.permute.xlu0 6
        %1643 = vperm.xlu0 %1642, %v558
        %v1644 = vpop.permute.xlu0 %1643
        %1646 = vset.pattern.permute.xlu0 6
        %1647 = vperm.xlu0 %1646, %v559
        %v1648 = vpop.permute.xlu0 %1647
        %1650 = vset.pattern.permute.xlu0 6
        %1651 = vperm.xlu0 %1650, %v560
        %v1652 = vpop.permute.xlu0 %1651
        %1654 = vset.pattern.permute.xlu0 6
        %1655 = vperm.xlu0 %1654, %v561
        %v1656 = vpop.permute.xlu0 %1655
        %1658 = vset.pattern.permute.xlu0 6
        %1659 = vperm.xlu0 %1658, %v562
        %v1660 = vpop.permute.xlu0 %1659
        %v1662 = vlaneseq
        %v1663 = vshrl.u32 %v1662, 7
        %v1664 = vsub.s32 0, %v1663
        %v1665 = vrot.slane %v1625, %v1664
        %v1666 = vmul.f32 %v1632, %v1665
        %v1667 = vmul.f32 %v1636, %v1665
        %v1668 = vmul.f32 %v1640, %v1665
        %v1669 = vmul.f32 %v1644, %v1665
        %v1670 = vmul.f32 %v1648, %v1665
        %v1671 = vmul.f32 %v1652, %v1665
        %v1672 = vmul.f32 %v1656, %v1665
        %v1673 = vmul.f32 %v1660, %v1665
        %v1674 = vadd.f32 %v1515, %v1666
        %v1675 = vadd.f32 %v1516, %v1667
        %v1676 = vadd.f32 %v1517, %v1668
        %v1677 = vadd.f32 %v1518, %v1669
        %v1678 = vadd.f32 %v1519, %v1670
        %v1679 = vadd.f32 %v1520, %v1671
        %v1680 = vadd.f32 %v1521, %v1672
        %v1681 = vadd.f32 %v1522, %v1673
        %s1682 = scalar_lea.vmem %s1, 448
        %v1683 = vld [vmem:[%s1682] sm:$0xf]
        %v1684 = vld [vmem:[%s1682 + $0x4] sm:$0xf]
        %v1685 = vld [vmem:[%s1682 + $0x8] sm:$0xf]
        %v1686 = vld [vmem:[%s1682 + $0xc] sm:$0xf]
        %v1687 = vld [vmem:[%s1682 + $0x10] sm:$0xf]
        %v1688 = vld [vmem:[%s1682 + $0x14] sm:$0xf]
        %v1689 = vld [vmem:[%s1682 + $0x18] sm:$0xf]
        %v1690 = vld [vmem:[%s1682 + $0x1c] sm:$0xf]
        %v1691 = vld [vmem:[%s1682 + $0x20] sm:$0xf]
        %v1692 = vld [vmem:[%s1682 + $0x24] sm:$0xf]
        %v1693 = vld [vmem:[%s1682 + $0x28] sm:$0xf]
        %v1694 = vld [vmem:[%s1682 + $0x2c] sm:$0xf]
        %v1695 = vld [vmem:[%s1682 + $0x30] sm:$0xf]
        %v1696 = vld [vmem:[%s1682 + $0x34] sm:$0xf]
        %v1697 = vld [vmem:[%s1682 + $0x38] sm:$0xf]
        %v1698 = vld [vmem:[%s1682 + $0x3c] sm:$0xf]
        %s1699 = scalar_lea.vmem %s2, 7
        %v1700 = vld [vmem:[%s1699] sm:$0x1]
        %v1717 = vunpack.c.l.b16 %v1683
        %v1718 = vunpack.c.l.b16 %v1684
        %v1719 = vunpack.c.l.b16 %v1685
        %v1720 = vunpack.c.l.b16 %v1686
        %v1721 = vunpack.c.l.b16 %v1687
        %v1722 = vunpack.c.l.b16 %v1688
        %v1723 = vunpack.c.l.b16 %v1689
        %v1724 = vunpack.c.l.b16 %v1690
        %v1725 = vunpack.c.l.b16 %v1691
        %v1726 = vunpack.c.l.b16 %v1692
        %v1727 = vunpack.c.l.b16 %v1693
        %v1728 = vunpack.c.l.b16 %v1694
        %v1729 = vunpack.c.l.b16 %v1695
        %v1730 = vunpack.c.l.b16 %v1696
        %v1731 = vunpack.c.l.b16 %v1697
        %v1732 = vunpack.c.l.b16 %v1698
        %v1733 = vpack.c.b16 %v1718, %v1717
        %v1734 = vpack.c.b16 %v1720, %v1719
        %v1735 = vpack.c.b16 %v1722, %v1721
        %v1736 = vpack.c.b16 %v1724, %v1723
        %v1737 = vpack.c.b16 %v1726, %v1725
        %v1738 = vpack.c.b16 %v1728, %v1727
        %v1739 = vpack.c.b16 %v1730, %v1729
        %v1740 = vpack.c.b16 %v1732, %v1731
        %1749 = vmatprep.subr.bf16.mxu0 0
        %1750 = vmatpush1.bf16.msra.mxu0 %v1740
        %1751 = vmatprep.subr.bf16.mxu0 0
        %1752 = vmatpush1.bf16.msra.mxu0 %v1739
        %1753 = vmatprep.subr.bf16.mxu0 0
        %1754 = vmatpush1.bf16.msra.mxu0 %v1738
        %1755 = vmatprep.subr.bf16.mxu0 0
        %1756 = vmatpush1.bf16.msra.mxu0 %v1737
        %1757 = vmatprep.subr.bf16.mxu0 0
        %1758 = vmatpush1.bf16.msra.mxu0 %v1736
        %1759 = vmatprep.subr.bf16.mxu0 0
        %1760 = vmatpush1.bf16.msra.mxu0 %v1735
        %1761 = vmatprep.subr.bf16.mxu0 0
        %1762 = vmatpush1.bf16.msra.mxu0 %v1734
        %1763 = vmatprep.subr.bf16.mxu0 0
        %1764 = vmatpush1.bf16.msra.mxu0 %v1733
        %1765 = vmatprep.subr.bf16.mxu0 0
        %1766 = vmatpush2.bf16.msra.mxu0 0
        %1767 = vmatprep.subr.bf16.mxu0 0
        %1768 = vmatpush2.bf16.msra.mxu0 0
        %1769 = vmatprep.subr.bf16.mxu0 0
        %1770 = vmatpush2.bf16.msra.mxu0 0
        %1771 = vmatprep.subr.bf16.mxu0 0
        %1772 = vmatpush2.bf16.msra.mxu0 0
        %1773 = vmatprep.subr.bf16.mxu0 0
        %1774 = vmatpush2.bf16.msra.mxu0 0
        %1775 = vmatprep.subr.bf16.mxu0 0
        %1776 = vmatpush2.bf16.msra.mxu0 0
        %1777 = vmatprep.subr.bf16.mxu0 0
        %1778 = vmatpush2.bf16.msra.mxu0 0
        %1779 = vmatprep.subr.bf16.mxu0 0
        %1780 = vmatpush2.bf16.msra.mxu0 0
        %1781 = vmatprep.mubr.bf16.mxu0 0
        %1782 = vmatmul.mubr.bf16.gmra.mxu0 %v554
        %v1783 = vpop.f32.mrf.mxu0
        %v1784 = vadd.f32 %v1700, %v1783
        %v1785 = vpop.f32.mrf.mxu0
        %v1786 = vpop.f32.mrf.mxu0
        %v1787 = vpop.f32.mrf.mxu0
        %1788 = vdwg.mxu0
        %1789 = vset.pattern.permute.xlu0 7
        %1790 = vperm.xlu0 %1789, %v555
        %v1791 = vpop.permute.xlu0 %1790
        %1793 = vset.pattern.permute.xlu0 7
        %1794 = vperm.xlu0 %1793, %v556
        %v1795 = vpop.permute.xlu0 %1794
        %1797 = vset.pattern.permute.xlu0 7
        %1798 = vperm.xlu0 %1797, %v557
        %v1799 = vpop.permute.xlu0 %1798
        %1801 = vset.pattern.permute.xlu0 7
        %1802 = vperm.xlu0 %1801, %v558
        %v1803 = vpop.permute.xlu0 %1802
        %1805 = vset.pattern.permute.xlu0 7
        %1806 = vperm.xlu0 %1805, %v559
        %v1807 = vpop.permute.xlu0 %1806
        %1809 = vset.pattern.permute.xlu0 7
        %1810 = vperm.xlu0 %1809, %v560
        %v1811 = vpop.permute.xlu0 %1810
        %1813 = vset.pattern.permute.xlu0 7
        %1814 = vperm.xlu0 %1813, %v561
        %v1815 = vpop.permute.xlu0 %1814
        %1817 = vset.pattern.permute.xlu0 7
        %1818 = vperm.xlu0 %1817, %v562
        %v1819 = vpop.permute.xlu0 %1818
        %v1821 = vlaneseq
        %v1822 = vshrl.u32 %v1821, 7
        %v1823 = vsub.s32 0, %v1822
        %v1824 = vrot.slane %v1784, %v1823
        %v1825 = vmul.f32 %v1791, %v1824
        %v1826 = vmul.f32 %v1795, %v1824
        %v1827 = vmul.f32 %v1799, %v1824
        %v1828 = vmul.f32 %v1803, %v1824
        %v1829 = vmul.f32 %v1807, %v1824
        %v1830 = vmul.f32 %v1811, %v1824
        %v1831 = vmul.f32 %v1815, %v1824
        %v1832 = vmul.f32 %v1819, %v1824
        %v1833 = vadd.f32 %v1674, %v1825
        %v1834 = vadd.f32 %v1675, %v1826
        %v1835 = vadd.f32 %v1676, %v1827
        %v1836 = vadd.f32 %v1677, %v1828
        %v1837 = vadd.f32 %v1678, %v1829
        %v1838 = vadd.f32 %v1679, %v1830
        %v1839 = vadd.f32 %v1680, %v1831
        %v1840 = vadd.f32 %v1681, %v1832
        %s1841 = scalar_lea.vmem %s1, 512
        %v1842 = vld [vmem:[%s1841] sm:$0xf]
        %v1843 = vld [vmem:[%s1841 + $0x4] sm:$0xf]
        %v1844 = vld [vmem:[%s1841 + $0x8] sm:$0xf]
        %v1845 = vld [vmem:[%s1841 + $0xc] sm:$0xf]
        %v1846 = vld [vmem:[%s1841 + $0x10] sm:$0xf]
        %v1847 = vld [vmem:[%s1841 + $0x14] sm:$0xf]
        %v1848 = vld [vmem:[%s1841 + $0x18] sm:$0xf]
        %v1849 = vld [vmem:[%s1841 + $0x1c] sm:$0xf]
        %v1850 = vld [vmem:[%s1841 + $0x20] sm:$0xf]
        %v1851 = vld [vmem:[%s1841 + $0x24] sm:$0xf]
        %v1852 = vld [vmem:[%s1841 + $0x28] sm:$0xf]
        %v1853 = vld [vmem:[%s1841 + $0x2c] sm:$0xf]
        %v1854 = vld [vmem:[%s1841 + $0x30] sm:$0xf]
        %v1855 = vld [vmem:[%s1841 + $0x34] sm:$0xf]
        %v1856 = vld [vmem:[%s1841 + $0x38] sm:$0xf]
        %v1857 = vld [vmem:[%s1841 + $0x3c] sm:$0xf]
        %s1858 = scalar_lea.vmem %s2, 8
        %v1859 = vld [vmem:[%s1858] sm:$0x1]
        %v1876 = vunpack.c.l.b16 %v1842
        %v1877 = vunpack.c.l.b16 %v1843
        %v1878 = vunpack.c.l.b16 %v1844
        %v1879 = vunpack.c.l.b16 %v1845
        %v1880 = vunpack.c.l.b16 %v1846
        %v1881 = vunpack.c.l.b16 %v1847
        %v1882 = vunpack.c.l.b16 %v1848
        %v1883 = vunpack.c.l.b16 %v1849
        %v1884 = vunpack.c.l.b16 %v1850
        %v1885 = vunpack.c.l.b16 %v1851
        %v1886 = vunpack.c.l.b16 %v1852
        %v1887 = vunpack.c.l.b16 %v1853
        %v1888 = vunpack.c.l.b16 %v1854
        %v1889 = vunpack.c.l.b16 %v1855
        %v1890 = vunpack.c.l.b16 %v1856
        %v1891 = vunpack.c.l.b16 %v1857
        %v1892 = vpack.c.b16 %v1877, %v1876
        %v1893 = vpack.c.b16 %v1879, %v1878
        %v1894 = vpack.c.b16 %v1881, %v1880
        %v1895 = vpack.c.b16 %v1883, %v1882
        %v1896 = vpack.c.b16 %v1885, %v1884
        %v1897 = vpack.c.b16 %v1887, %v1886
        %v1898 = vpack.c.b16 %v1889, %v1888
        %v1899 = vpack.c.b16 %v1891, %v1890
        %1908 = vmatprep.subr.bf16.mxu0 0
        %1909 = vmatpush1.bf16.msra.mxu0 %v1899
        %1910 = vmatprep.subr.bf16.mxu0 0
        %1911 = vmatpush1.bf16.msra.mxu0 %v1898
        %1912 = vmatprep.subr.bf16.mxu0 0
        %1913 = vmatpush1.bf16.msra.mxu0 %v1897
        %1914 = vmatprep.subr.bf16.mxu0 0
        %1915 = vmatpush1.bf16.msra.mxu0 %v1896
        %1916 = vmatprep.subr.bf16.mxu0 0
        %1917 = vmatpush1.bf16.msra.mxu0 %v1895
        %1918 = vmatprep.subr.bf16.mxu0 0
        %1919 = vmatpush1.bf16.msra.mxu0 %v1894
        %1920 = vmatprep.subr.bf16.mxu0 0
        %1921 = vmatpush1.bf16.msra.mxu0 %v1893
        %1922 = vmatprep.subr.bf16.mxu0 0
        %1923 = vmatpush1.bf16.msra.mxu0 %v1892
        %1924 = vmatprep.subr.bf16.mxu0 0
        %1925 = vmatpush2.bf16.msra.mxu0 0
        %1926 = vmatprep.subr.bf16.mxu0 0
        %1927 = vmatpush2.bf16.msra.mxu0 0
        %1928 = vmatprep.subr.bf16.mxu0 0
        %1929 = vmatpush2.bf16.msra.mxu0 0
        %1930 = vmatprep.subr.bf16.mxu0 0
        %1931 = vmatpush2.bf16.msra.mxu0 0
        %1932 = vmatprep.subr.bf16.mxu0 0
        %1933 = vmatpush2.bf16.msra.mxu0 0
        %1934 = vmatprep.subr.bf16.mxu0 0
        %1935 = vmatpush2.bf16.msra.mxu0 0
        %1936 = vmatprep.subr.bf16.mxu0 0
        %1937 = vmatpush2.bf16.msra.mxu0 0
        %1938 = vmatprep.subr.bf16.mxu0 0
        %1939 = vmatpush2.bf16.msra.mxu0 0
        %1940 = vmatprep.mubr.bf16.mxu0 0
        %1941 = vmatmul.mubr.bf16.gmra.mxu0 %v554
        %v1942 = vpop.f32.mrf.mxu0
        %v1943 = vadd.f32 %v1859, %v1942
        %v1944 = vpop.f32.mrf.mxu0
        %v1945 = vpop.f32.mrf.mxu0
        %v1946 = vpop.f32.mrf.mxu0
        %1947 = vdwg.mxu0
        %1948 = vset.pattern.permute.xlu0 8
        %1949 = vperm.xlu0 %1948, %v555
        %v1950 = vpop.permute.xlu0 %1949
        %1952 = vset.pattern.permute.xlu0 8
        %1953 = vperm.xlu0 %1952, %v556
        %v1954 = vpop.permute.xlu0 %1953
        %1956 = vset.pattern.permute.xlu0 8
        %1957 = vperm.xlu0 %1956, %v557
        %v1958 = vpop.permute.xlu0 %1957
        %1960 = vset.pattern.permute.xlu0 8
        %1961 = vperm.xlu0 %1960, %v558
        %v1962 = vpop.permute.xlu0 %1961
        %1964 = vset.pattern.permute.xlu0 8
        %1965 = vperm.xlu0 %1964, %v559
        %v1966 = vpop.permute.xlu0 %1965
        %1968 = vset.pattern.permute.xlu0 8
        %1969 = vperm.xlu0 %1968, %v560
        %v1970 = vpop.permute.xlu0 %1969
        %1972 = vset.pattern.permute.xlu0 8
        %1973 = vperm.xlu0 %1972, %v561
        %v1974 = vpop.permute.xlu0 %1973
        %1976 = vset.pattern.permute.xlu0 8
        %1977 = vperm.xlu0 %1976, %v562
        %v1978 = vpop.permute.xlu0 %1977
        %v1980 = vlaneseq
        %v1981 = vshrl.u32 %v1980, 7
        %v1982 = vsub.s32 0, %v1981
        %v1983 = vrot.slane %v1943, %v1982
        %v1984 = vmul.f32 %v1950, %v1983
        %v1985 = vmul.f32 %v1954, %v1983
        %v1986 = vmul.f32 %v1958, %v1983
        %v1987 = vmul.f32 %v1962, %v1983
        %v1988 = vmul.f32 %v1966, %v1983
        %v1989 = vmul.f32 %v1970, %v1983
        %v1990 = vmul.f32 %v1974, %v1983
        %v1991 = vmul.f32 %v1978, %v1983
        %v1992 = vadd.f32 %v1833, %v1984
        %v1993 = vadd.f32 %v1834, %v1985
        %v1994 = vadd.f32 %v1835, %v1986
        %v1995 = vadd.f32 %v1836, %v1987
        %v1996 = vadd.f32 %v1837, %v1988
        %v1997 = vadd.f32 %v1838, %v1989
        %v1998 = vadd.f32 %v1839, %v1990
        %v1999 = vadd.f32 %v1840, %v1991
        %v2000 = vld [vmem:[%s4] sm:$0xff]
        %v2001 = vld [vmem:[%s4 + $0x8] sm:$0xff]
        %v2002 = vld [vmem:[%s4 + $0x10] sm:$0xff]
        %v2003 = vld [vmem:[%s4 + $0x18] sm:$0xff]
        %v2004 = vld [vmem:[%s4 + $0x20] sm:$0xff]
        %v2005 = vld [vmem:[%s4 + $0x28] sm:$0xff]
        %v2006 = vld [vmem:[%s4 + $0x30] sm:$0xff]
        %v2007 = vld [vmem:[%s4 + $0x38] sm:$0xff]
        %2009 = vset.pattern.permute.xlu0 0
        %2010 = vperm.xlu0 %2009, %v2000
        %v2011 = vpop.permute.xlu0 %2010
        %2014 = vset.pattern.permute.xlu0 0
        %2015 = vperm.xlu0 %2014, %v2001
        %v2016 = vpop.permute.xlu0 %2015
        %2019 = vset.pattern.permute.xlu0 0
        %2020 = vperm.xlu0 %2019, %v2002
        %v2021 = vpop.permute.xlu0 %2020
        %2024 = vset.pattern.permute.xlu0 0
        %2025 = vperm.xlu0 %2024, %v2003
        %v2026 = vpop.permute.xlu0 %2025
        %2029 = vset.pattern.permute.xlu0 0
        %2030 = vperm.xlu0 %2029, %v2004
        %v2031 = vpop.permute.xlu0 %2030
        %2034 = vset.pattern.permute.xlu0 0
        %2035 = vperm.xlu0 %2034, %v2005
        %v2036 = vpop.permute.xlu0 %2035
        %2039 = vset.pattern.permute.xlu0 0
        %2040 = vperm.xlu0 %2039, %v2006
        %v2041 = vpop.permute.xlu0 %2040
        %2044 = vset.pattern.permute.xlu0 0
        %2045 = vperm.xlu0 %2044, %v2007
        %v2046 = vpop.permute.xlu0 %2045
        %v2048 = vadd.f32 %v1992, %v2011
        %v2049 = vadd.f32 %v1993, %v2016
        %v2050 = vadd.f32 %v1994, %v2021
        %v2051 = vadd.f32 %v1995, %v2026
        %v2052 = vadd.f32 %v1996, %v2031
        %v2053 = vadd.f32 %v1997, %v2036
        %v2054 = vadd.f32 %v1998, %v2041
        %v2055 = vadd.f32 %v1999, %v2046
        %vm2056 = vcmp.ge.f32.partialorder %v2048, 0.0
        %vm2057 = vcmp.ge.f32.partialorder %v2049, 0.0
        %vm2058 = vcmp.ge.f32.partialorder %v2050, 0.0
        %vm2059 = vcmp.ge.f32.partialorder %v2051, 0.0
        %vm2060 = vcmp.ge.f32.partialorder %v2052, 0.0
        %vm2061 = vcmp.ge.f32.partialorder %v2053, 0.0
        %vm2062 = vcmp.ge.f32.partialorder %v2054, 0.0
        %vm2063 = vcmp.ge.f32.partialorder %v2055, 0.0
        %v2064 = vmul.f32 %v2048, 0.01
        %v2065 = vmul.f32 %v2049, 0.01
        %v2066 = vmul.f32 %v2050, 0.01
        %v2067 = vmul.f32 %v2051, 0.01
        %v2068 = vmul.f32 %v2052, 0.01
        %v2069 = vmul.f32 %v2053, 0.01
        %v2070 = vmul.f32 %v2054, 0.01
        %v2071 = vmul.f32 %v2055, 0.01
        %v2072 = vsel %vm2056, %v2048, %v2064
        %v2073 = vsel %vm2057, %v2049, %v2065
        %v2074 = vsel %vm2058, %v2050, %v2066
        %v2075 = vsel %vm2059, %v2051, %v2067
        %v2076 = vsel %vm2060, %v2052, %v2068
        %v2077 = vsel %vm2061, %v2053, %v2069
        %v2078 = vsel %vm2062, %v2054, %v2070
        %v2079 = vsel %vm2063, %v2055, %v2071
        %v2080 = vpack.c.bf16 %v2073, %v2072
        %v2081 = vpack.c.bf16 %v2075, %v2074
        %v2082 = vpack.c.bf16 %v2077, %v2076
        %v2083 = vpack.c.bf16 %v2079, %v2078
        %v2084 = vld [vmem:[%s5] sm:$0xf]
        %v2085 = vld [vmem:[%s5 + $0x4] sm:$0xf]
        %v2086 = vld [vmem:[%s5 + $0x8] sm:$0xf]
        %v2087 = vld [vmem:[%s5 + $0xc] sm:$0xf]
        %v2088 = vld [vmem:[%s5 + $0x10] sm:$0xf]
        %v2089 = vld [vmem:[%s5 + $0x14] sm:$0xf]
        %v2090 = vld [vmem:[%s5 + $0x18] sm:$0x1]
        %v2098 = vunpack.c.l.b16 %v2084
        %v2099 = vunpack.c.l.b16 %v2085
        %v2100 = vunpack.c.l.b16 %v2086
        %v2101 = vunpack.c.l.b16 %v2087
        %v2102 = vunpack.c.l.b16 %v2088
        %v2103 = vunpack.c.l.b16 %v2089
        %v2104 = vunpack.c.l.b16 %v2090
        %v2105 = vpack.c.b16 %v2099, %v2098
        %v2106 = vpack.c.b16 %v2101, %v2100
        %v2107 = vpack.c.b16 %v2103, %v2102
        %v2108 = vpack.c.b16 %v2104, %v2104
        %vm2112 = vcmask 400384
        %v2114 = vsel %vm2112, %v2080, 0
        %v2117 = vsel %vm2112, %v2081, 0
        %v2120 = vsel %vm2112, %v2082, 0
        %v2123 = vsel %vm2112, %v2083, 0
        %vm2125 = vcmask 1040384
        %v2126 = vsel 0, 4294967295, 65535
        %v2127 = vsel %vm2125, %v2126, 0
        %v2129 = vand.u32 %v2108, %v2127
        %2131 = vmatprep.subr.bf16.mxu0 0
        %2132 = vmatpush1.bf16.msra.mxu0 0
        %2133 = vmatprep.subr.bf16.mxu0 0
        %2134 = vmatpush1.bf16.msra.mxu0 0
        %2135 = vmatprep.subr.bf16.mxu0 0
        %2136 = vmatpush1.bf16.msra.mxu0 0
        %2137 = vmatprep.subr.bf16.mxu0 0
        %2138 = vmatpush1.bf16.msra.mxu0 0
        %2139 = vmatprep.subr.bf16.mxu0 0
        %2140 = vmatpush1.bf16.msra.mxu0 %v2129
        %2141 = vmatprep.subr.bf16.mxu0 0
        %2142 = vmatpush1.bf16.msra.mxu0 %v2107
        %2143 = vmatprep.subr.bf16.mxu0 0
        %2144 = vmatpush1.bf16.msra.mxu0 %v2106
        %2145 = vmatprep.subr.bf16.mxu0 0
        %2146 = vmatpush1.bf16.msra.mxu0 %v2105
        %2147 = vmatprep.subr.bf16.mxu0 0
        %2148 = vmatpush2.bf16.msra.mxu0 0
        %2149 = vmatprep.subr.bf16.mxu0 0
        %2150 = vmatpush2.bf16.msra.mxu0 0
        %2151 = vmatprep.subr.bf16.mxu0 0
        %2152 = vmatpush2.bf16.msra.mxu0 0
        %2153 = vmatprep.subr.bf16.mxu0 0
        %2154 = vmatpush2.bf16.msra.mxu0 0
        %2155 = vmatprep.subr.bf16.mxu0 0
        %2156 = vmatpush2.bf16.msra.mxu0 0
        %2157 = vmatprep.subr.bf16.mxu0 0
        %2158 = vmatpush2.bf16.msra.mxu0 0
        %2159 = vmatprep.subr.bf16.mxu0 0
        %2160 = vmatpush2.bf16.msra.mxu0 0
        %2161 = vmatprep.subr.bf16.mxu0 0
        %2162 = vmatpush2.bf16.msra.mxu0 0
        %2163 = vmatprep.mubr.bf16.mxu0 0
        %2164 = vmatmul.mubr.bf16.gmra.mxu0 %v2114
        %v2165 = vpop.f32.mrf.mxu0
        %v2166 = vadd.f32 0.0, %v2165
        %v2167 = vpop.f32.mrf.mxu0
        %v2168 = vpop.f32.mrf.mxu0
        %v2169 = vadd.f32 0.0, %v2168
        %v2170 = vpop.f32.mrf.mxu0
        %2171 = vmatprep.mubr.bf16.mxu0 0
        %2172 = vmatmul.mubr.bf16.gmra.mxu0 %v2117
        %v2173 = vpop.f32.mrf.mxu0
        %v2174 = vadd.f32 0.0, %v2173
        %v2175 = vpop.f32.mrf.mxu0
        %v2176 = vpop.f32.mrf.mxu0
        %v2177 = vadd.f32 0.0, %v2176
        %v2178 = vpop.f32.mrf.mxu0
        %2179 = vmatprep.mubr.bf16.mxu0 0
        %2180 = vmatmul.mubr.bf16.gmra.mxu0 %v2120
        %v2181 = vpop.f32.mrf.mxu0
        %v2182 = vadd.f32 0.0, %v2181
        %v2183 = vpop.f32.mrf.mxu0
        %v2184 = vpop.f32.mrf.mxu0
        %v2185 = vadd.f32 0.0, %v2184
        %v2186 = vpop.f32.mrf.mxu0
        %2187 = vmatprep.mubr.bf16.mxu0 0
        %2188 = vmatmul.mubr.bf16.gmra.mxu0 %v2123
        %v2189 = vpop.f32.mrf.mxu0
        %v2190 = vadd.f32 0.0, %v2189
        %v2191 = vpop.f32.mrf.mxu0
        %v2192 = vpop.f32.mrf.mxu0
        %v2193 = vadd.f32 0.0, %v2192
        %v2194 = vpop.f32.mrf.mxu0
        %2195 = vdwg.mxu0
        %v2196 = vpack.c.bf16 %v2169, %v2166
        %v2197 = vpack.c.bf16 %v2177, %v2174
        %v2198 = vpack.c.bf16 %v2185, %v2182
        %v2199 = vpack.c.bf16 %v2193, %v2190
        %v2200 = vld [vmem:[%s6] sm:$0xf]
        %v2201 = vld [vmem:[%s6 + $0x4] sm:$0xf]
        %v2202 = vld [vmem:[%s6 + $0x8] sm:$0xf]
        %v2203 = vld [vmem:[%s6 + $0xc] sm:$0xf]
        %v2204 = vld [vmem:[%s6 + $0x10] sm:$0xf]
        %v2205 = vld [vmem:[%s6 + $0x14] sm:$0xf]
        %v2206 = vld [vmem:[%s6 + $0x18] sm:$0xf]
        %v2207 = vld [vmem:[%s6 + $0x1c] sm:$0xf]
        %v2208 = vld [vmem:[%s6 + $0x20] sm:$0xf]
        %v2209 = vld [vmem:[%s6 + $0x24] sm:$0xf]
        %v2210 = vld [vmem:[%s6 + $0x28] sm:$0xf]
        %v2211 = vld [vmem:[%s6 + $0x2c] sm:$0xf]
        %v2212 = vld [vmem:[%s6 + $0x30] sm:$0xf]
        %v2213 = vld [vmem:[%s6 + $0x34] sm:$0xf]
        %v2214 = vld [vmem:[%s6 + $0x38] sm:$0xf]
        %v2215 = vld [vmem:[%s6 + $0x3c] sm:$0xf]
        %s2216 = scalar_lea.vmem %s5, 28
        %v2217 = vld [vmem:[%s2216] sm:$0xf]
        %v2218 = vld [vmem:[%s2216 + $0x4] sm:$0xf]
        %v2219 = vld [vmem:[%s2216 + $0x8] sm:$0xf]
        %v2220 = vld [vmem:[%s2216 + $0xc] sm:$0xf]
        %v2221 = vld [vmem:[%s2216 + $0x10] sm:$0xf]
        %v2222 = vld [vmem:[%s2216 + $0x14] sm:$0xf]
        %v2223 = vld [vmem:[%s2216 + $0x18] sm:$0x1]
        %v2231 = vunpack.c.l.b16 %v2217
        %v2232 = vunpack.c.l.b16 %v2218
        %v2233 = vunpack.c.l.b16 %v2219
        %v2234 = vunpack.c.l.b16 %v2220
        %v2235 = vunpack.c.l.b16 %v2221
        %v2236 = vunpack.c.l.b16 %v2222
        %v2237 = vunpack.c.l.b16 %v2223
        %v2238 = vpack.c.b16 %v2232, %v2231
        %v2239 = vpack.c.b16 %v2234, %v2233
        %v2240 = vpack.c.b16 %v2236, %v2235
        %v2241 = vpack.c.b16 %v2237, %v2237
        %v2246 = vand.u32 %v2241, %v2127
        %2248 = vmatprep.subr.bf16.mxu0 0
        %2249 = vmatpush1.bf16.msra.mxu0 0
        %2250 = vmatprep.subr.bf16.mxu0 0
        %2251 = vmatpush1.bf16.msra.mxu0 0
        %2252 = vmatprep.subr.bf16.mxu0 0
        %2253 = vmatpush1.bf16.msra.mxu0 0
        %2254 = vmatprep.subr.bf16.mxu0 0
        %2255 = vmatpush1.bf16.msra.mxu0 0
        %2256 = vmatprep.subr.bf16.mxu0 0
        %2257 = vmatpush1.bf16.msra.mxu0 %v2246
        %2258 = vmatprep.subr.bf16.mxu0 0
        %2259 = vmatpush1.bf16.msra.mxu0 %v2240
        %2260 = vmatprep.subr.bf16.mxu0 0
        %2261 = vmatpush1.bf16.msra.mxu0 %v2239
        %2262 = vmatprep.subr.bf16.mxu0 0
        %2263 = vmatpush1.bf16.msra.mxu0 %v2238
        %2264 = vmatprep.subr.bf16.mxu0 0
        %2265 = vmatpush2.bf16.msra.mxu0 0
        %2266 = vmatprep.subr.bf16.mxu0 0
        %2267 = vmatpush2.bf16.msra.mxu0 0
        %2268 = vmatprep.subr.bf16.mxu0 0
        %2269 = vmatpush2.bf16.msra.mxu0 0
        %2270 = vmatprep.subr.bf16.mxu0 0
        %2271 = vmatpush2.bf16.msra.mxu0 0
        %2272 = vmatprep.subr.bf16.mxu0 0
        %2273 = vmatpush2.bf16.msra.mxu0 0
        %2274 = vmatprep.subr.bf16.mxu0 0
        %2275 = vmatpush2.bf16.msra.mxu0 0
        %2276 = vmatprep.subr.bf16.mxu0 0
        %2277 = vmatpush2.bf16.msra.mxu0 0
        %2278 = vmatprep.subr.bf16.mxu0 0
        %2279 = vmatpush2.bf16.msra.mxu0 0
        %2280 = vmatprep.mubr.bf16.mxu0 0
        %2281 = vmatmul.mubr.bf16.gmra.mxu0 %v2114
        %v2282 = vpop.f32.mrf.mxu0
        %v2283 = vadd.f32 0.0, %v2282
        %v2284 = vpop.f32.mrf.mxu0
        %v2285 = vpop.f32.mrf.mxu0
        %v2286 = vadd.f32 0.0, %v2285
        %v2287 = vpop.f32.mrf.mxu0
        %2288 = vmatprep.mubr.bf16.mxu0 0
        %2289 = vmatmul.mubr.bf16.gmra.mxu0 %v2117
        %v2290 = vpop.f32.mrf.mxu0
        %v2291 = vadd.f32 0.0, %v2290
        %v2292 = vpop.f32.mrf.mxu0
        %v2293 = vpop.f32.mrf.mxu0
        %v2294 = vadd.f32 0.0, %v2293
        %v2295 = vpop.f32.mrf.mxu0
        %2296 = vmatprep.mubr.bf16.mxu0 0
        %2297 = vmatmul.mubr.bf16.gmra.mxu0 %v2120
        %v2298 = vpop.f32.mrf.mxu0
        %v2299 = vadd.f32 0.0, %v2298
        %v2300 = vpop.f32.mrf.mxu0
        %v2301 = vpop.f32.mrf.mxu0
        %v2302 = vadd.f32 0.0, %v2301
        %v2303 = vpop.f32.mrf.mxu0
        %2304 = vmatprep.mubr.bf16.mxu0 0
        %2305 = vmatmul.mubr.bf16.gmra.mxu0 %v2123
        %v2306 = vpop.f32.mrf.mxu0
        %v2307 = vadd.f32 0.0, %v2306
        %v2308 = vpop.f32.mrf.mxu0
        %v2309 = vpop.f32.mrf.mxu0
        %v2310 = vadd.f32 0.0, %v2309
        %v2311 = vpop.f32.mrf.mxu0
        %2312 = vdwg.mxu0
        %v2313 = vpack.c.bf16 %v2286, %v2283
        %v2314 = vpack.c.bf16 %v2294, %v2291
        %v2315 = vpack.c.bf16 %v2302, %v2299
        %v2316 = vpack.c.bf16 %v2310, %v2307
        %s2317 = scalar_lea.vmem %s6, 64
        %v2318 = vld [vmem:[%s2317] sm:$0xf]
        %v2319 = vld [vmem:[%s2317 + $0x4] sm:$0xf]
        %v2320 = vld [vmem:[%s2317 + $0x8] sm:$0xf]
        %v2321 = vld [vmem:[%s2317 + $0xc] sm:$0xf]
        %v2322 = vld [vmem:[%s2317 + $0x10] sm:$0xf]
        %v2323 = vld [vmem:[%s2317 + $0x14] sm:$0xf]
        %v2324 = vld [vmem:[%s2317 + $0x18] sm:$0xf]
        %v2325 = vld [vmem:[%s2317 + $0x1c] sm:$0xf]
        %v2326 = vld [vmem:[%s2317 + $0x20] sm:$0xf]
        %v2327 = vld [vmem:[%s2317 + $0x24] sm:$0xf]
        %v2328 = vld [vmem:[%s2317 + $0x28] sm:$0xf]
        %v2329 = vld [vmem:[%s2317 + $0x2c] sm:$0xf]
        %v2330 = vld [vmem:[%s2317 + $0x30] sm:$0xf]
        %v2331 = vld [vmem:[%s2317 + $0x34] sm:$0xf]
        %v2332 = vld [vmem:[%s2317 + $0x38] sm:$0xf]
        %v2333 = vld [vmem:[%s2317 + $0x3c] sm:$0xf]
        %v2350 = vunpack.c.l.b16 %v2318
        %v2351 = vunpack.c.l.b16 %v2319
        %v2352 = vunpack.c.l.b16 %v2320
        %v2353 = vunpack.c.l.b16 %v2321
        %v2354 = vunpack.c.l.b16 %v2322
        %v2355 = vunpack.c.l.b16 %v2323
        %v2356 = vunpack.c.l.b16 %v2324
        %v2357 = vunpack.c.l.b16 %v2325
        %v2358 = vunpack.c.l.b16 %v2326
        %v2359 = vunpack.c.l.b16 %v2327
        %v2360 = vunpack.c.l.b16 %v2328
        %v2361 = vunpack.c.l.b16 %v2329
        %v2362 = vunpack.c.l.b16 %v2330
        %v2363 = vunpack.c.l.b16 %v2331
        %v2364 = vunpack.c.l.b16 %v2332
        %v2365 = vunpack.c.l.b16 %v2333
        %v2366 = vpack.c.b16 %v2351, %v2350
        %v2367 = vpack.c.b16 %v2353, %v2352
        %v2368 = vpack.c.b16 %v2355, %v2354
        %v2369 = vpack.c.b16 %v2357, %v2356
        %v2370 = vpack.c.b16 %v2359, %v2358
        %v2371 = vpack.c.b16 %v2361, %v2360
        %v2372 = vpack.c.b16 %v2363, %v2362
        %v2373 = vpack.c.b16 %v2365, %v2364
        %vm2374 = vcmask 523264
        %v2376 = vsel %vm2374, %v2366, 0
        %v2379 = vsel %vm2374, %v2367, 0
        %v2382 = vsel %vm2374, %v2368, 0
        %v2385 = vsel %vm2374, %v2369, 0
        %v2388 = vsel %vm2374, %v2370, 0
        %v2391 = vsel %vm2374, %v2371, 0
        %v2394 = vsel %vm2374, %v2372, 0
        %v2397 = vsel %vm2374, %v2373, 0
        %2399 = vmatprep.subr.bf16.mxu0 0
        %2400 = vmatpush1.bf16.msra.mxu0 0
        %2401 = vmatprep.subr.bf16.mxu0 0
        %2402 = vmatpush1.bf16.msra.mxu0 0
        %2403 = vmatprep.subr.bf16.mxu0 0
        %2404 = vmatpush1.bf16.msra.mxu0 0
        %2405 = vmatprep.subr.bf16.mxu0 0
        %2406 = vmatpush1.bf16.msra.mxu0 0
        %2407 = vmatprep.subr.bf16.mxu0 0
        %2408 = vmatpush1.bf16.msra.mxu0 %v2316
        %2409 = vmatprep.subr.bf16.mxu0 0
        %2410 = vmatpush1.bf16.msra.mxu0 %v2315
        %2411 = vmatprep.subr.bf16.mxu0 0
        %2412 = vmatpush1.bf16.msra.mxu0 %v2314
        %2413 = vmatprep.subr.bf16.mxu0 0
        %2414 = vmatpush1.bf16.msra.mxu0 %v2313
        %2415 = vmatprep.subr.bf16.mxu0 0
        %2416 = vmatpush2.bf16.msra.mxu0 0
        %2417 = vmatprep.subr.bf16.mxu0 0
        %2418 = vmatpush2.bf16.msra.mxu0 0
        %2419 = vmatprep.subr.bf16.mxu0 0
        %2420 = vmatpush2.bf16.msra.mxu0 0
        %2421 = vmatprep.subr.bf16.mxu0 0
        %2422 = vmatpush2.bf16.msra.mxu0 0
        %2423 = vmatprep.subr.bf16.mxu0 0
        %2424 = vmatpush2.bf16.msra.mxu0 0
        %2425 = vmatprep.subr.bf16.mxu0 0
        %2426 = vmatpush2.bf16.msra.mxu0 0
        %2427 = vmatprep.subr.bf16.mxu0 0
        %2428 = vmatpush2.bf16.msra.mxu0 0
        %2429 = vmatprep.subr.bf16.mxu0 0
        %2430 = vmatpush2.bf16.msra.mxu0 0
        %2431 = vmatprep.mubr.bf16.mxu0 0
        %2432 = vmatmul.mubr.bf16.gmra.mxu0 %v2376
        %v2433 = vpop.f32.mrf.mxu0
        %v2434 = vadd.f32 0.0, %v2433
        %v2435 = vpop.f32.mrf.mxu0
        %v2436 = vpop.f32.mrf.mxu0
        %v2437 = vadd.f32 0.0, %v2436
        %v2438 = vpop.f32.mrf.mxu0
        %2439 = vmatprep.mubr.bf16.mxu0 0
        %2440 = vmatmul.mubr.bf16.gmra.mxu0 %v2379
        %v2441 = vpop.f32.mrf.mxu0
        %v2442 = vadd.f32 0.0, %v2441
        %v2443 = vpop.f32.mrf.mxu0
        %v2444 = vpop.f32.mrf.mxu0
        %v2445 = vadd.f32 0.0, %v2444
        %v2446 = vpop.f32.mrf.mxu0
        %2447 = vmatprep.mubr.bf16.mxu0 0
        %2448 = vmatmul.mubr.bf16.gmra.mxu0 %v2382
        %v2449 = vpop.f32.mrf.mxu0
        %v2450 = vadd.f32 0.0, %v2449
        %v2451 = vpop.f32.mrf.mxu0
        %v2452 = vpop.f32.mrf.mxu0
        %v2453 = vadd.f32 0.0, %v2452
        %v2454 = vpop.f32.mrf.mxu0
        %2455 = vmatprep.mubr.bf16.mxu0 0
        %2456 = vmatmul.mubr.bf16.gmra.mxu0 %v2385
        %v2457 = vpop.f32.mrf.mxu0
        %v2458 = vadd.f32 0.0, %v2457
        %v2459 = vpop.f32.mrf.mxu0
        %v2460 = vpop.f32.mrf.mxu0
        %v2461 = vadd.f32 0.0, %v2460
        %v2462 = vpop.f32.mrf.mxu0
        %2463 = vmatprep.mubr.bf16.mxu0 0
        %2464 = vmatmul.mubr.bf16.gmra.mxu0 %v2388
        %v2465 = vpop.f32.mrf.mxu0
        %v2466 = vadd.f32 0.0, %v2465
        %v2467 = vpop.f32.mrf.mxu0
        %v2468 = vpop.f32.mrf.mxu0
        %v2469 = vadd.f32 0.0, %v2468
        %v2470 = vpop.f32.mrf.mxu0
        %2471 = vmatprep.mubr.bf16.mxu0 0
        %2472 = vmatmul.mubr.bf16.gmra.mxu0 %v2391
        %v2473 = vpop.f32.mrf.mxu0
        %v2474 = vadd.f32 0.0, %v2473
        %v2475 = vpop.f32.mrf.mxu0
        %v2476 = vpop.f32.mrf.mxu0
        %v2477 = vadd.f32 0.0, %v2476
        %v2478 = vpop.f32.mrf.mxu0
        %2479 = vmatprep.mubr.bf16.mxu0 0
        %2480 = vmatmul.mubr.bf16.gmra.mxu0 %v2394
        %v2481 = vpop.f32.mrf.mxu0
        %v2482 = vadd.f32 0.0, %v2481
        %v2483 = vpop.f32.mrf.mxu0
        %v2484 = vpop.f32.mrf.mxu0
        %v2485 = vadd.f32 0.0, %v2484
        %v2486 = vpop.f32.mrf.mxu0
        %2487 = vmatprep.mubr.bf16.mxu0 0
        %2488 = vmatmul.mubr.bf16.gmra.mxu0 %v2397
        %v2489 = vpop.f32.mrf.mxu0
        %v2490 = vadd.f32 0.0, %v2489
        %v2491 = vpop.f32.mrf.mxu0
        %v2492 = vpop.f32.mrf.mxu0
        %v2493 = vadd.f32 0.0, %v2492
        %v2494 = vpop.f32.mrf.mxu0
        %2495 = vdwg.mxu0
        %v2512 = vunpack.c.l.b16 %v2200
        %v2513 = vunpack.c.l.b16 %v2201
        %v2514 = vunpack.c.l.b16 %v2202
        %v2515 = vunpack.c.l.b16 %v2203
        %v2516 = vunpack.c.l.b16 %v2204
        %v2517 = vunpack.c.l.b16 %v2205
        %v2518 = vunpack.c.l.b16 %v2206
        %v2519 = vunpack.c.l.b16 %v2207
        %v2520 = vunpack.c.l.b16 %v2208
        %v2521 = vunpack.c.l.b16 %v2209
        %v2522 = vunpack.c.l.b16 %v2210
        %v2523 = vunpack.c.l.b16 %v2211
        %v2524 = vunpack.c.l.b16 %v2212
        %v2525 = vunpack.c.l.b16 %v2213
        %v2526 = vunpack.c.l.b16 %v2214
        %v2527 = vunpack.c.l.b16 %v2215
        %v2528 = vpack.c.b16 %v2513, %v2512
        %v2529 = vpack.c.b16 %v2515, %v2514
        %v2530 = vpack.c.b16 %v2517, %v2516
        %v2531 = vpack.c.b16 %v2519, %v2518
        %v2532 = vpack.c.b16 %v2521, %v2520
        %v2533 = vpack.c.b16 %v2523, %v2522
        %v2534 = vpack.c.b16 %v2525, %v2524
        %v2535 = vpack.c.b16 %v2527, %v2526
        %v2537 = vsel %vm2374, %v2528, 0
        %v2540 = vsel %vm2374, %v2529, 0
        %v2543 = vsel %vm2374, %v2530, 0
        %v2546 = vsel %vm2374, %v2531, 0
        %v2549 = vsel %vm2374, %v2532, 0
        %v2552 = vsel %vm2374, %v2533, 0
        %v2555 = vsel %vm2374, %v2534, 0
        %v2558 = vsel %vm2374, %v2535, 0
        %2560 = vmatprep.subr.bf16.mxu0 0
        %2561 = vmatpush1.bf16.msra.mxu0 0
        %2562 = vmatprep.subr.bf16.mxu0 0
        %2563 = vmatpush1.bf16.msra.mxu0 0
        %2564 = vmatprep.subr.bf16.mxu0 0
        %2565 = vmatpush1.bf16.msra.mxu0 0
        %2566 = vmatprep.subr.bf16.mxu0 0
        %2567 = vmatpush1.bf16.msra.mxu0 0
        %2568 = vmatprep.subr.bf16.mxu0 0
        %2569 = vmatpush1.bf16.msra.mxu0 %v2199
        %2570 = vmatprep.subr.bf16.mxu0 0
        %2571 = vmatpush1.bf16.msra.mxu0 %v2198
        %2572 = vmatprep.subr.bf16.mxu0 0
        %2573 = vmatpush1.bf16.msra.mxu0 %v2197
        %2574 = vmatprep.subr.bf16.mxu0 0
        %2575 = vmatpush1.bf16.msra.mxu0 %v2196
        %2576 = vmatprep.subr.bf16.mxu0 0
        %2577 = vmatpush2.bf16.msra.mxu0 0
        %2578 = vmatprep.subr.bf16.mxu0 0
        %2579 = vmatpush2.bf16.msra.mxu0 0
        %2580 = vmatprep.subr.bf16.mxu0 0
        %2581 = vmatpush2.bf16.msra.mxu0 0
        %2582 = vmatprep.subr.bf16.mxu0 0
        %2583 = vmatpush2.bf16.msra.mxu0 0
        %2584 = vmatprep.subr.bf16.mxu0 0
        %2585 = vmatpush2.bf16.msra.mxu0 0
        %2586 = vmatprep.subr.bf16.mxu0 0
        %2587 = vmatpush2.bf16.msra.mxu0 0
        %2588 = vmatprep.subr.bf16.mxu0 0
        %2589 = vmatpush2.bf16.msra.mxu0 0
        %2590 = vmatprep.subr.bf16.mxu0 0
        %2591 = vmatpush2.bf16.msra.mxu0 0
        %2592 = vmatprep.mubr.bf16.mxu0 0
        %2593 = vmatmul.mubr.bf16.gmra.mxu0 %v2537
        %v2594 = vpop.f32.mrf.mxu0
        %v2595 = vadd.f32 %v2434, %v2594
        %v2596 = vpop.f32.mrf.mxu0
        %v2597 = vpop.f32.mrf.mxu0
        %v2598 = vadd.f32 %v2437, %v2597
        %v2599 = vpop.f32.mrf.mxu0
        %2600 = vmatprep.mubr.bf16.mxu0 0
        %2601 = vmatmul.mubr.bf16.gmra.mxu0 %v2540
        %v2602 = vpop.f32.mrf.mxu0
        %v2603 = vadd.f32 %v2442, %v2602
        %v2604 = vpop.f32.mrf.mxu0
        %v2605 = vpop.f32.mrf.mxu0
        %v2606 = vadd.f32 %v2445, %v2605
        %v2607 = vpop.f32.mrf.mxu0
        %2608 = vmatprep.mubr.bf16.mxu0 0
        %2609 = vmatmul.mubr.bf16.gmra.mxu0 %v2543
        %v2610 = vpop.f32.mrf.mxu0
        %v2611 = vadd.f32 %v2450, %v2610
        %v2612 = vpop.f32.mrf.mxu0
        %v2613 = vpop.f32.mrf.mxu0
        %v2614 = vadd.f32 %v2453, %v2613
        %v2615 = vpop.f32.mrf.mxu0
        %2616 = vmatprep.mubr.bf16.mxu0 0
        %2617 = vmatmul.mubr.bf16.gmra.mxu0 %v2546
        %v2618 = vpop.f32.mrf.mxu0
        %v2619 = vadd.f32 %v2458, %v2618
        %v2620 = vpop.f32.mrf.mxu0
        %v2621 = vpop.f32.mrf.mxu0
        %v2622 = vadd.f32 %v2461, %v2621
        %v2623 = vpop.f32.mrf.mxu0
        %2624 = vmatprep.mubr.bf16.mxu0 0
        %2625 = vmatmul.mubr.bf16.gmra.mxu0 %v2549
        %v2626 = vpop.f32.mrf.mxu0
        %v2627 = vadd.f32 %v2466, %v2626
        %v2628 = vpop.f32.mrf.mxu0
        %v2629 = vpop.f32.mrf.mxu0
        %v2630 = vadd.f32 %v2469, %v2629
        %v2631 = vpop.f32.mrf.mxu0
        %2632 = vmatprep.mubr.bf16.mxu0 0
        %2633 = vmatmul.mubr.bf16.gmra.mxu0 %v2552
        %v2634 = vpop.f32.mrf.mxu0
        %v2635 = vadd.f32 %v2474, %v2634
        %v2636 = vpop.f32.mrf.mxu0
        %v2637 = vpop.f32.mrf.mxu0
        %v2638 = vadd.f32 %v2477, %v2637
        %v2639 = vpop.f32.mrf.mxu0
        %2640 = vmatprep.mubr.bf16.mxu0 0
        %2641 = vmatmul.mubr.bf16.gmra.mxu0 %v2555
        %v2642 = vpop.f32.mrf.mxu0
        %v2643 = vadd.f32 %v2482, %v2642
        %v2644 = vpop.f32.mrf.mxu0
        %v2645 = vpop.f32.mrf.mxu0
        %v2646 = vadd.f32 %v2485, %v2645
        %v2647 = vpop.f32.mrf.mxu0
        %2648 = vmatprep.mubr.bf16.mxu0 0
        %2649 = vmatmul.mubr.bf16.gmra.mxu0 %v2558
        %v2650 = vpop.f32.mrf.mxu0
        %v2651 = vadd.f32 %v2490, %v2650
        %v2652 = vpop.f32.mrf.mxu0
        %v2653 = vpop.f32.mrf.mxu0
        %v2654 = vadd.f32 %v2493, %v2653
        %v2655 = vpop.f32.mrf.mxu0
        %2656 = vdwg.mxu0
        %s2657 = scalar_lea.vmem %s5, 56
        %v2658 = vld [vmem:[%s2657] sm:$0xf]
        %v2659 = vld [vmem:[%s2657 + $0x4] sm:$0xf]
        %v2660 = vld [vmem:[%s2657 + $0x8] sm:$0xf]
        %v2661 = vld [vmem:[%s2657 + $0xc] sm:$0xf]
        %v2662 = vld [vmem:[%s2657 + $0x10] sm:$0xf]
        %v2663 = vld [vmem:[%s2657 + $0x14] sm:$0xf]
        %v2664 = vld [vmem:[%s2657 + $0x18] sm:$0x1]
        %v2672 = vunpack.c.l.b16 %v2658
        %v2673 = vunpack.c.l.b16 %v2659
        %v2674 = vunpack.c.l.b16 %v2660
        %v2675 = vunpack.c.l.b16 %v2661
        %v2676 = vunpack.c.l.b16 %v2662
        %v2677 = vunpack.c.l.b16 %v2663
        %v2678 = vunpack.c.l.b16 %v2664
        %v2679 = vpack.c.b16 %v2673, %v2672
        %v2680 = vpack.c.b16 %v2675, %v2674
        %v2681 = vpack.c.b16 %v2677, %v2676
        %v2682 = vpack.c.b16 %v2678, %v2678
        %v2687 = vand.u32 %v2682, %v2127
        %2689 = vmatprep.subr.bf16.mxu0 0
        %2690 = vmatpush1.bf16.msra.mxu0 0
        %2691 = vmatprep.subr.bf16.mxu0 0
        %2692 = vmatpush1.bf16.msra.mxu0 0
        %2693 = vmatprep.subr.bf16.mxu0 0
        %2694 = vmatpush1.bf16.msra.mxu0 0
        %2695 = vmatprep.subr.bf16.mxu0 0
        %2696 = vmatpush1.bf16.msra.mxu0 0
        %2697 = vmatprep.subr.bf16.mxu0 0
        %2698 = vmatpush1.bf16.msra.mxu0 %v2687
        %2699 = vmatprep.subr.bf16.mxu0 0
        %2700 = vmatpush1.bf16.msra.mxu0 %v2681
        %2701 = vmatprep.subr.bf16.mxu0 0
        %2702 = vmatpush1.bf16.msra.mxu0 %v2680
        %2703 = vmatprep.subr.bf16.mxu0 0
        %2704 = vmatpush1.bf16.msra.mxu0 %v2679
        %2705 = vmatprep.subr.bf16.mxu0 0
        %2706 = vmatpush2.bf16.msra.mxu0 0
        %2707 = vmatprep.subr.bf16.mxu0 0
        %2708 = vmatpush2.bf16.msra.mxu0 0
        %2709 = vmatprep.subr.bf16.mxu0 0
        %2710 = vmatpush2.bf16.msra.mxu0 0
        %2711 = vmatprep.subr.bf16.mxu0 0
        %2712 = vmatpush2.bf16.msra.mxu0 0
        %2713 = vmatprep.subr.bf16.mxu0 0
        %2714 = vmatpush2.bf16.msra.mxu0 0
        %2715 = vmatprep.subr.bf16.mxu0 0
        %2716 = vmatpush2.bf16.msra.mxu0 0
        %2717 = vmatprep.subr.bf16.mxu0 0
        %2718 = vmatpush2.bf16.msra.mxu0 0
        %2719 = vmatprep.subr.bf16.mxu0 0
        %2720 = vmatpush2.bf16.msra.mxu0 0
        %2721 = vmatprep.mubr.bf16.mxu0 0
        %2722 = vmatmul.mubr.bf16.gmra.mxu0 %v2114
        %v2723 = vpop.f32.mrf.mxu0
        %v2724 = vadd.f32 0.0, %v2723
        %v2725 = vpop.f32.mrf.mxu0
        %v2726 = vpop.f32.mrf.mxu0
        %v2727 = vadd.f32 0.0, %v2726
        %v2728 = vpop.f32.mrf.mxu0
        %2729 = vmatprep.mubr.bf16.mxu0 0
        %2730 = vmatmul.mubr.bf16.gmra.mxu0 %v2117
        %v2731 = vpop.f32.mrf.mxu0
        %v2732 = vadd.f32 0.0, %v2731
        %v2733 = vpop.f32.mrf.mxu0
        %v2734 = vpop.f32.mrf.mxu0
        %v2735 = vadd.f32 0.0, %v2734
        %v2736 = vpop.f32.mrf.mxu0
        %2737 = vmatprep.mubr.bf16.mxu0 0
        %2738 = vmatmul.mubr.bf16.gmra.mxu0 %v2120
        %v2739 = vpop.f32.mrf.mxu0
        %v2740 = vadd.f32 0.0, %v2739
        %v2741 = vpop.f32.mrf.mxu0
        %v2742 = vpop.f32.mrf.mxu0
        %v2743 = vadd.f32 0.0, %v2742
        %v2744 = vpop.f32.mrf.mxu0
        %2745 = vmatprep.mubr.bf16.mxu0 0
        %2746 = vmatmul.mubr.bf16.gmra.mxu0 %v2123
        %v2747 = vpop.f32.mrf.mxu0
        %v2748 = vadd.f32 0.0, %v2747
        %v2749 = vpop.f32.mrf.mxu0
        %v2750 = vpop.f32.mrf.mxu0
        %v2751 = vadd.f32 0.0, %v2750
        %v2752 = vpop.f32.mrf.mxu0
        %2753 = vdwg.mxu0
        %v2754 = vpack.c.bf16 %v2727, %v2724
        %v2755 = vpack.c.bf16 %v2735, %v2732
        %v2756 = vpack.c.bf16 %v2743, %v2740
        %v2757 = vpack.c.bf16 %v2751, %v2748
        %s2758 = scalar_lea.vmem %s6, 128
        %v2759 = vld [vmem:[%s2758] sm:$0xf]
        %v2760 = vld [vmem:[%s2758 + $0x4] sm:$0xf]
        %v2761 = vld [vmem:[%s2758 + $0x8] sm:$0xf]
        %v2762 = vld [vmem:[%s2758 + $0xc] sm:$0xf]
        %v2763 = vld [vmem:[%s2758 + $0x10] sm:$0xf]
        %v2764 = vld [vmem:[%s2758 + $0x14] sm:$0xf]
        %v2765 = vld [vmem:[%s2758 + $0x18] sm:$0xf]
        %v2766 = vld [vmem:[%s2758 + $0x1c] sm:$0xf]
        %v2767 = vld [vmem:[%s2758 + $0x20] sm:$0xf]
        %v2768 = vld [vmem:[%s2758 + $0x24] sm:$0xf]
        %v2769 = vld [vmem:[%s2758 + $0x28] sm:$0xf]
        %v2770 = vld [vmem:[%s2758 + $0x2c] sm:$0xf]
        %v2771 = vld [vmem:[%s2758 + $0x30] sm:$0xf]
        %v2772 = vld [vmem:[%s2758 + $0x34] sm:$0xf]
        %v2773 = vld [vmem:[%s2758 + $0x38] sm:$0xf]
        %v2774 = vld [vmem:[%s2758 + $0x3c] sm:$0xf]
        %v2791 = vunpack.c.l.b16 %v2759
        %v2792 = vunpack.c.l.b16 %v2760
        %v2793 = vunpack.c.l.b16 %v2761
        %v2794 = vunpack.c.l.b16 %v2762
        %v2795 = vunpack.c.l.b16 %v2763
        %v2796 = vunpack.c.l.b16 %v2764
        %v2797 = vunpack.c.l.b16 %v2765
        %v2798 = vunpack.c.l.b16 %v2766
        %v2799 = vunpack.c.l.b16 %v2767
        %v2800 = vunpack.c.l.b16 %v2768
        %v2801 = vunpack.c.l.b16 %v2769
        %v2802 = vunpack.c.l.b16 %v2770
        %v2803 = vunpack.c.l.b16 %v2771
        %v2804 = vunpack.c.l.b16 %v2772
        %v2805 = vunpack.c.l.b16 %v2773
        %v2806 = vunpack.c.l.b16 %v2774
        %v2807 = vpack.c.b16 %v2792, %v2791
        %v2808 = vpack.c.b16 %v2794, %v2793
        %v2809 = vpack.c.b16 %v2796, %v2795
        %v2810 = vpack.c.b16 %v2798, %v2797
        %v2811 = vpack.c.b16 %v2800, %v2799
        %v2812 = vpack.c.b16 %v2802, %v2801
        %v2813 = vpack.c.b16 %v2804, %v2803
        %v2814 = vpack.c.b16 %v2806, %v2805
        %v2816 = vsel %vm2374, %v2807, 0
        %v2819 = vsel %vm2374, %v2808, 0
        %v2822 = vsel %vm2374, %v2809, 0
        %v2825 = vsel %vm2374, %v2810, 0
        %v2828 = vsel %vm2374, %v2811, 0
        %v2831 = vsel %vm2374, %v2812, 0
        %v2834 = vsel %vm2374, %v2813, 0
        %v2837 = vsel %vm2374, %v2814, 0
        %2839 = vmatprep.subr.bf16.mxu0 0
        %2840 = vmatpush1.bf16.msra.mxu0 0
        %2841 = vmatprep.subr.bf16.mxu0 0
        %2842 = vmatpush1.bf16.msra.mxu0 0
        %2843 = vmatprep.subr.bf16.mxu0 0
        %2844 = vmatpush1.bf16.msra.mxu0 0
        %2845 = vmatprep.subr.bf16.mxu0 0
        %2846 = vmatpush1.bf16.msra.mxu0 0
        %2847 = vmatprep.subr.bf16.mxu0 0
        %2848 = vmatpush1.bf16.msra.mxu0 %v2757
        %2849 = vmatprep.subr.bf16.mxu0 0
        %2850 = vmatpush1.bf16.msra.mxu0 %v2756
        %2851 = vmatprep.subr.bf16.mxu0 0
        %2852 = vmatpush1.bf16.msra.mxu0 %v2755
        %2853 = vmatprep.subr.bf16.mxu0 0
        %2854 = vmatpush1.bf16.msra.mxu0 %v2754
        %2855 = vmatprep.subr.bf16.mxu0 0
        %2856 = vmatpush2.bf16.msra.mxu0 0
        %2857 = vmatprep.subr.bf16.mxu0 0
        %2858 = vmatpush2.bf16.msra.mxu0 0
        %2859 = vmatprep.subr.bf16.mxu0 0
        %2860 = vmatpush2.bf16.msra.mxu0 0
        %2861 = vmatprep.subr.bf16.mxu0 0
        %2862 = vmatpush2.bf16.msra.mxu0 0
        %2863 = vmatprep.subr.bf16.mxu0 0
        %2864 = vmatpush2.bf16.msra.mxu0 0
        %2865 = vmatprep.subr.bf16.mxu0 0
        %2866 = vmatpush2.bf16.msra.mxu0 0
        %2867 = vmatprep.subr.bf16.mxu0 0
        %2868 = vmatpush2.bf16.msra.mxu0 0
        %2869 = vmatprep.subr.bf16.mxu0 0
        %2870 = vmatpush2.bf16.msra.mxu0 0
        %2871 = vmatprep.mubr.bf16.mxu0 0
        %2872 = vmatmul.mubr.bf16.gmra.mxu0 %v2816
        %v2873 = vpop.f32.mrf.mxu0
        %v2874 = vadd.f32 0.0, %v2873
        %v2875 = vpop.f32.mrf.mxu0
        %v2876 = vpop.f32.mrf.mxu0
        %v2877 = vadd.f32 0.0, %v2876
        %v2878 = vpop.f32.mrf.mxu0
        %2879 = vmatprep.mubr.bf16.mxu0 0
        %2880 = vmatmul.mubr.bf16.gmra.mxu0 %v2819
        %v2881 = vpop.f32.mrf.mxu0
        %v2882 = vadd.f32 0.0, %v2881
        %v2883 = vpop.f32.mrf.mxu0
        %v2884 = vpop.f32.mrf.mxu0
        %v2885 = vadd.f32 0.0, %v2884
        %v2886 = vpop.f32.mrf.mxu0
        %2887 = vmatprep.mubr.bf16.mxu0 0
        %2888 = vmatmul.mubr.bf16.gmra.mxu0 %v2822
        %v2889 = vpop.f32.mrf.mxu0
        %v2890 = vadd.f32 0.0, %v2889
        %v2891 = vpop.f32.mrf.mxu0
        %v2892 = vpop.f32.mrf.mxu0
        %v2893 = vadd.f32 0.0, %v2892
        %v2894 = vpop.f32.mrf.mxu0
        %2895 = vmatprep.mubr.bf16.mxu0 0
        %2896 = vmatmul.mubr.bf16.gmra.mxu0 %v2825
        %v2897 = vpop.f32.mrf.mxu0
        %v2898 = vadd.f32 0.0, %v2897
        %v2899 = vpop.f32.mrf.mxu0
        %v2900 = vpop.f32.mrf.mxu0
        %v2901 = vadd.f32 0.0, %v2900
        %v2902 = vpop.f32.mrf.mxu0
        %2903 = vmatprep.mubr.bf16.mxu0 0
        %2904 = vmatmul.mubr.bf16.gmra.mxu0 %v2828
        %v2905 = vpop.f32.mrf.mxu0
        %v2906 = vadd.f32 0.0, %v2905
        %v2907 = vpop.f32.mrf.mxu0
        %v2908 = vpop.f32.mrf.mxu0
        %v2909 = vadd.f32 0.0, %v2908
        %v2910 = vpop.f32.mrf.mxu0
        %2911 = vmatprep.mubr.bf16.mxu0 0
        %2912 = vmatmul.mubr.bf16.gmra.mxu0 %v2831
        %v2913 = vpop.f32.mrf.mxu0
        %v2914 = vadd.f32 0.0, %v2913
        %v2915 = vpop.f32.mrf.mxu0
        %v2916 = vpop.f32.mrf.mxu0
        %v2917 = vadd.f32 0.0, %v2916
        %v2918 = vpop.f32.mrf.mxu0
        %2919 = vmatprep.mubr.bf16.mxu0 0
        %2920 = vmatmul.mubr.bf16.gmra.mxu0 %v2834
        %v2921 = vpop.f32.mrf.mxu0
        %v2922 = vadd.f32 0.0, %v2921
        %v2923 = vpop.f32.mrf.mxu0
        %v2924 = vpop.f32.mrf.mxu0
        %v2925 = vadd.f32 0.0, %v2924
        %v2926 = vpop.f32.mrf.mxu0
        %2927 = vmatprep.mubr.bf16.mxu0 0
        %2928 = vmatmul.mubr.bf16.gmra.mxu0 %v2837
        %v2929 = vpop.f32.mrf.mxu0
        %v2930 = vadd.f32 0.0, %v2929
        %v2931 = vpop.f32.mrf.mxu0
        %v2932 = vpop.f32.mrf.mxu0
        %v2933 = vadd.f32 0.0, %v2932
        %v2934 = vpop.f32.mrf.mxu0
        %2935 = vdwg.mxu0
        %v2936 = vadd.f32 %v2595, %v2874
        %v2937 = vadd.f32 %v2598, %v2877
        %v2938 = vadd.f32 %v2603, %v2882
        %v2939 = vadd.f32 %v2606, %v2885
        %v2940 = vadd.f32 %v2611, %v2890
        %v2941 = vadd.f32 %v2614, %v2893
        %v2942 = vadd.f32 %v2619, %v2898
        %v2943 = vadd.f32 %v2622, %v2901
        %v2944 = vadd.f32 %v2627, %v2906
        %v2945 = vadd.f32 %v2630, %v2909
        %v2946 = vadd.f32 %v2635, %v2914
        %v2947 = vadd.f32 %v2638, %v2917
        %v2948 = vadd.f32 %v2643, %v2922
        %v2949 = vadd.f32 %v2646, %v2925
        %v2950 = vadd.f32 %v2651, %v2930
        %v2951 = vadd.f32 %v2654, %v2933
        %s2952 = scalar_lea.vmem %s5, 84
        %v2953 = vld [vmem:[%s2952] sm:$0xf]
        %v2954 = vld [vmem:[%s2952 + $0x4] sm:$0xf]
        %v2955 = vld [vmem:[%s2952 + $0x8] sm:$0xf]
        %v2956 = vld [vmem:[%s2952 + $0xc] sm:$0xf]
        %v2957 = vld [vmem:[%s2952 + $0x10] sm:$0xf]
        %v2958 = vld [vmem:[%s2952 + $0x14] sm:$0xf]
        %v2959 = vld [vmem:[%s2952 + $0x18] sm:$0x1]
        %v2967 = vunpack.c.l.b16 %v2953
        %v2968 = vunpack.c.l.b16 %v2954
        %v2969 = vunpack.c.l.b16 %v2955
        %v2970 = vunpack.c.l.b16 %v2956
        %v2971 = vunpack.c.l.b16 %v2957
        %v2972 = vunpack.c.l.b16 %v2958
        %v2973 = vunpack.c.l.b16 %v2959
        %v2974 = vpack.c.b16 %v2968, %v2967
        %v2975 = vpack.c.b16 %v2970, %v2969
        %v2976 = vpack.c.b16 %v2972, %v2971
        %v2977 = vpack.c.b16 %v2973, %v2973
        %v2982 = vand.u32 %v2977, %v2127
        %2984 = vmatprep.subr.bf16.mxu0 0
        %2985 = vmatpush1.bf16.msra.mxu0 0
        %2986 = vmatprep.subr.bf16.mxu0 0
        %2987 = vmatpush1.bf16.msra.mxu0 0
        %2988 = vmatprep.subr.bf16.mxu0 0
        %2989 = vmatpush1.bf16.msra.mxu0 0
        %2990 = vmatprep.subr.bf16.mxu0 0
        %2991 = vmatpush1.bf16.msra.mxu0 0
        %2992 = vmatprep.subr.bf16.mxu0 0
        %2993 = vmatpush1.bf16.msra.mxu0 %v2982
        %2994 = vmatprep.subr.bf16.mxu0 0
        %2995 = vmatpush1.bf16.msra.mxu0 %v2976
        %2996 = vmatprep.subr.bf16.mxu0 0
        %2997 = vmatpush1.bf16.msra.mxu0 %v2975
        %2998 = vmatprep.subr.bf16.mxu0 0
        %2999 = vmatpush1.bf16.msra.mxu0 %v2974
        %3000 = vmatprep.subr.bf16.mxu0 0
        %3001 = vmatpush2.bf16.msra.mxu0 0
        %3002 = vmatprep.subr.bf16.mxu0 0
        %3003 = vmatpush2.bf16.msra.mxu0 0
        %3004 = vmatprep.subr.bf16.mxu0 0
        %3005 = vmatpush2.bf16.msra.mxu0 0
        %3006 = vmatprep.subr.bf16.mxu0 0
        %3007 = vmatpush2.bf16.msra.mxu0 0
        %3008 = vmatprep.subr.bf16.mxu0 0
        %3009 = vmatpush2.bf16.msra.mxu0 0
        %3010 = vmatprep.subr.bf16.mxu0 0
        %3011 = vmatpush2.bf16.msra.mxu0 0
        %3012 = vmatprep.subr.bf16.mxu0 0
        %3013 = vmatpush2.bf16.msra.mxu0 0
        %3014 = vmatprep.subr.bf16.mxu0 0
        %3015 = vmatpush2.bf16.msra.mxu0 0
        %3016 = vmatprep.mubr.bf16.mxu0 0
        %3017 = vmatmul.mubr.bf16.gmra.mxu0 %v2114
        %v3018 = vpop.f32.mrf.mxu0
        %v3019 = vadd.f32 0.0, %v3018
        %v3020 = vpop.f32.mrf.mxu0
        %v3021 = vpop.f32.mrf.mxu0
        %v3022 = vadd.f32 0.0, %v3021
        %v3023 = vpop.f32.mrf.mxu0
        %3024 = vmatprep.mubr.bf16.mxu0 0
        %3025 = vmatmul.mubr.bf16.gmra.mxu0 %v2117
        %v3026 = vpop.f32.mrf.mxu0
        %v3027 = vadd.f32 0.0, %v3026
        %v3028 = vpop.f32.mrf.mxu0
        %v3029 = vpop.f32.mrf.mxu0
        %v3030 = vadd.f32 0.0, %v3029
        %v3031 = vpop.f32.mrf.mxu0
        %3032 = vmatprep.mubr.bf16.mxu0 0
        %3033 = vmatmul.mubr.bf16.gmra.mxu0 %v2120
        %v3034 = vpop.f32.mrf.mxu0
        %v3035 = vadd.f32 0.0, %v3034
        %v3036 = vpop.f32.mrf.mxu0
        %v3037 = vpop.f32.mrf.mxu0
        %v3038 = vadd.f32 0.0, %v3037
        %v3039 = vpop.f32.mrf.mxu0
        %3040 = vmatprep.mubr.bf16.mxu0 0
        %3041 = vmatmul.mubr.bf16.gmra.mxu0 %v2123
        %v3042 = vpop.f32.mrf.mxu0
        %v3043 = vadd.f32 0.0, %v3042
        %v3044 = vpop.f32.mrf.mxu0
        %v3045 = vpop.f32.mrf.mxu0
        %v3046 = vadd.f32 0.0, %v3045
        %v3047 = vpop.f32.mrf.mxu0
        %3048 = vdwg.mxu0
        %v3049 = vpack.c.bf16 %v3022, %v3019
        %v3050 = vpack.c.bf16 %v3030, %v3027
        %v3051 = vpack.c.bf16 %v3038, %v3035
        %v3052 = vpack.c.bf16 %v3046, %v3043
        %s3053 = scalar_lea.vmem %s6, 192
        %v3054 = vld [vmem:[%s3053] sm:$0xf]
        %v3055 = vld [vmem:[%s3053 + $0x4] sm:$0xf]
        %v3056 = vld [vmem:[%s3053 + $0x8] sm:$0xf]
        %v3057 = vld [vmem:[%s3053 + $0xc] sm:$0xf]
        %v3058 = vld [vmem:[%s3053 + $0x10] sm:$0xf]
        %v3059 = vld [vmem:[%s3053 + $0x14] sm:$0xf]
        %v3060 = vld [vmem:[%s3053 + $0x18] sm:$0xf]
        %v3061 = vld [vmem:[%s3053 + $0x1c] sm:$0xf]
        %v3062 = vld [vmem:[%s3053 + $0x20] sm:$0xf]
        %v3063 = vld [vmem:[%s3053 + $0x24] sm:$0xf]
        %v3064 = vld [vmem:[%s3053 + $0x28] sm:$0xf]
        %v3065 = vld [vmem:[%s3053 + $0x2c] sm:$0xf]
        %v3066 = vld [vmem:[%s3053 + $0x30] sm:$0xf]
        %v3067 = vld [vmem:[%s3053 + $0x34] sm:$0xf]
        %v3068 = vld [vmem:[%s3053 + $0x38] sm:$0xf]
        %v3069 = vld [vmem:[%s3053 + $0x3c] sm:$0xf]
        %v3086 = vunpack.c.l.b16 %v3054
        %v3087 = vunpack.c.l.b16 %v3055
        %v3088 = vunpack.c.l.b16 %v3056
        %v3089 = vunpack.c.l.b16 %v3057
        %v3090 = vunpack.c.l.b16 %v3058
        %v3091 = vunpack.c.l.b16 %v3059
        %v3092 = vunpack.c.l.b16 %v3060
        %v3093 = vunpack.c.l.b16 %v3061
        %v3094 = vunpack.c.l.b16 %v3062
        %v3095 = vunpack.c.l.b16 %v3063
        %v3096 = vunpack.c.l.b16 %v3064
        %v3097 = vunpack.c.l.b16 %v3065
        %v3098 = vunpack.c.l.b16 %v3066
        %v3099 = vunpack.c.l.b16 %v3067
        %v3100 = vunpack.c.l.b16 %v3068
        %v3101 = vunpack.c.l.b16 %v3069
        %v3102 = vpack.c.b16 %v3087, %v3086
        %v3103 = vpack.c.b16 %v3089, %v3088
        %v3104 = vpack.c.b16 %v3091, %v3090
        %v3105 = vpack.c.b16 %v3093, %v3092
        %v3106 = vpack.c.b16 %v3095, %v3094
        %v3107 = vpack.c.b16 %v3097, %v3096
        %v3108 = vpack.c.b16 %v3099, %v3098
        %v3109 = vpack.c.b16 %v3101, %v3100
        %v3111 = vsel %vm2374, %v3102, 0
        %v3114 = vsel %vm2374, %v3103, 0
        %v3117 = vsel %vm2374, %v3104, 0
        %v3120 = vsel %vm2374, %v3105, 0
        %v3123 = vsel %vm2374, %v3106, 0
        %v3126 = vsel %vm2374, %v3107, 0
        %v3129 = vsel %vm2374, %v3108, 0
        %v3132 = vsel %vm2374, %v3109, 0
        %3134 = vmatprep.subr.bf16.mxu0 0
        %3135 = vmatpush1.bf16.msra.mxu0 0
        %3136 = vmatprep.subr.bf16.mxu0 0
        %3137 = vmatpush1.bf16.msra.mxu0 0
        %3138 = vmatprep.subr.bf16.mxu0 0
        %3139 = vmatpush1.bf16.msra.mxu0 0
        %3140 = vmatprep.subr.bf16.mxu0 0
        %3141 = vmatpush1.bf16.msra.mxu0 0
        %3142 = vmatprep.subr.bf16.mxu0 0
        %3143 = vmatpush1.bf16.msra.mxu0 %v3052
        %3144 = vmatprep.subr.bf16.mxu0 0
        %3145 = vmatpush1.bf16.msra.mxu0 %v3051
        %3146 = vmatprep.subr.bf16.mxu0 0
        %3147 = vmatpush1.bf16.msra.mxu0 %v3050
        %3148 = vmatprep.subr.bf16.mxu0 0
        %3149 = vmatpush1.bf16.msra.mxu0 %v3049
        %3150 = vmatprep.subr.bf16.mxu0 0
        %3151 = vmatpush2.bf16.msra.mxu0 0
        %3152 = vmatprep.subr.bf16.mxu0 0
        %3153 = vmatpush2.bf16.msra.mxu0 0
        %3154 = vmatprep.subr.bf16.mxu0 0
        %3155 = vmatpush2.bf16.msra.mxu0 0
        %3156 = vmatprep.subr.bf16.mxu0 0
        %3157 = vmatpush2.bf16.msra.mxu0 0
        %3158 = vmatprep.subr.bf16.mxu0 0
        %3159 = vmatpush2.bf16.msra.mxu0 0
        %3160 = vmatprep.subr.bf16.mxu0 0
        %3161 = vmatpush2.bf16.msra.mxu0 0
        %3162 = vmatprep.subr.bf16.mxu0 0
        %3163 = vmatpush2.bf16.msra.mxu0 0
        %3164 = vmatprep.subr.bf16.mxu0 0
        %3165 = vmatpush2.bf16.msra.mxu0 0
        %3166 = vmatprep.mubr.bf16.mxu0 0
        %3167 = vmatmul.mubr.bf16.gmra.mxu0 %v3111
        %v3168 = vpop.f32.mrf.mxu0
        %v3169 = vadd.f32 0.0, %v3168
        %v3170 = vpop.f32.mrf.mxu0
        %v3171 = vpop.f32.mrf.mxu0
        %v3172 = vadd.f32 0.0, %v3171
        %v3173 = vpop.f32.mrf.mxu0
        %3174 = vmatprep.mubr.bf16.mxu0 0
        %3175 = vmatmul.mubr.bf16.gmra.mxu0 %v3114
        %v3176 = vpop.f32.mrf.mxu0
        %v3177 = vadd.f32 0.0, %v3176
        %v3178 = vpop.f32.mrf.mxu0
        %v3179 = vpop.f32.mrf.mxu0
        %v3180 = vadd.f32 0.0, %v3179
        %v3181 = vpop.f32.mrf.mxu0
        %3182 = vmatprep.mubr.bf16.mxu0 0
        %3183 = vmatmul.mubr.bf16.gmra.mxu0 %v3117
        %v3184 = vpop.f32.mrf.mxu0
        %v3185 = vadd.f32 0.0, %v3184
        %v3186 = vpop.f32.mrf.mxu0
        %v3187 = vpop.f32.mrf.mxu0
        %v3188 = vadd.f32 0.0, %v3187
        %v3189 = vpop.f32.mrf.mxu0
        %3190 = vmatprep.mubr.bf16.mxu0 0
        %3191 = vmatmul.mubr.bf16.gmra.mxu0 %v3120
        %v3192 = vpop.f32.mrf.mxu0
        %v3193 = vadd.f32 0.0, %v3192
        %v3194 = vpop.f32.mrf.mxu0
        %v3195 = vpop.f32.mrf.mxu0
        %v3196 = vadd.f32 0.0, %v3195
        %v3197 = vpop.f32.mrf.mxu0
        %3198 = vmatprep.mubr.bf16.mxu0 0
        %3199 = vmatmul.mubr.bf16.gmra.mxu0 %v3123
        %v3200 = vpop.f32.mrf.mxu0
        %v3201 = vadd.f32 0.0, %v3200
        %v3202 = vpop.f32.mrf.mxu0
        %v3203 = vpop.f32.mrf.mxu0
        %v3204 = vadd.f32 0.0, %v3203
        %v3205 = vpop.f32.mrf.mxu0
        %3206 = vmatprep.mubr.bf16.mxu0 0
        %3207 = vmatmul.mubr.bf16.gmra.mxu0 %v3126
        %v3208 = vpop.f32.mrf.mxu0
        %v3209 = vadd.f32 0.0, %v3208
        %v3210 = vpop.f32.mrf.mxu0
        %v3211 = vpop.f32.mrf.mxu0
        %v3212 = vadd.f32 0.0, %v3211
        %v3213 = vpop.f32.mrf.mxu0
        %3214 = vmatprep.mubr.bf16.mxu0 0
        %3215 = vmatmul.mubr.bf16.gmra.mxu0 %v3129
        %v3216 = vpop.f32.mrf.mxu0
        %v3217 = vadd.f32 0.0, %v3216
        %v3218 = vpop.f32.mrf.mxu0
        %v3219 = vpop.f32.mrf.mxu0
        %v3220 = vadd.f32 0.0, %v3219
        %v3221 = vpop.f32.mrf.mxu0
        %3222 = vmatprep.mubr.bf16.mxu0 0
        %3223 = vmatmul.mubr.bf16.gmra.mxu0 %v3132
        %v3224 = vpop.f32.mrf.mxu0
        %v3225 = vadd.f32 0.0, %v3224
        %v3226 = vpop.f32.mrf.mxu0
        %v3227 = vpop.f32.mrf.mxu0
        %v3228 = vadd.f32 0.0, %v3227
        %v3229 = vpop.f32.mrf.mxu0
        %3230 = vdwg.mxu0
        %v3231 = vadd.f32 %v2936, %v3169
        %v3232 = vadd.f32 %v2937, %v3172
        %v3233 = vadd.f32 %v2938, %v3177
        %v3234 = vadd.f32 %v2939, %v3180
        %v3235 = vadd.f32 %v2940, %v3185
        %v3236 = vadd.f32 %v2941, %v3188
        %v3237 = vadd.f32 %v2942, %v3193
        %v3238 = vadd.f32 %v2943, %v3196
        %v3239 = vadd.f32 %v2944, %v3201
        %v3240 = vadd.f32 %v2945, %v3204
        %v3241 = vadd.f32 %v2946, %v3209
        %v3242 = vadd.f32 %v2947, %v3212
        %v3243 = vadd.f32 %v2948, %v3217
        %v3244 = vadd.f32 %v2949, %v3220
        %v3245 = vadd.f32 %v2950, %v3225
        %v3246 = vadd.f32 %v2951, %v3228
        %s3247 = scalar_lea.vmem %s5, 112
        %v3248 = vld [vmem:[%s3247] sm:$0xf]
        %v3249 = vld [vmem:[%s3247 + $0x4] sm:$0xf]
        %v3250 = vld [vmem:[%s3247 + $0x8] sm:$0xf]
        %v3251 = vld [vmem:[%s3247 + $0xc] sm:$0xf]
        %v3252 = vld [vmem:[%s3247 + $0x10] sm:$0xf]
        %v3253 = vld [vmem:[%s3247 + $0x14] sm:$0xf]
        %v3254 = vld [vmem:[%s3247 + $0x18] sm:$0x1]
        %v3262 = vunpack.c.l.b16 %v3248
        %v3263 = vunpack.c.l.b16 %v3249
        %v3264 = vunpack.c.l.b16 %v3250
        %v3265 = vunpack.c.l.b16 %v3251
        %v3266 = vunpack.c.l.b16 %v3252
        %v3267 = vunpack.c.l.b16 %v3253
        %v3268 = vunpack.c.l.b16 %v3254
        %v3269 = vpack.c.b16 %v3263, %v3262
        %v3270 = vpack.c.b16 %v3265, %v3264
        %v3271 = vpack.c.b16 %v3267, %v3266
        %v3272 = vpack.c.b16 %v3268, %v3268
        %v3277 = vand.u32 %v3272, %v2127
        %3279 = vmatprep.subr.bf16.mxu0 0
        %3280 = vmatpush1.bf16.msra.mxu0 0
        %3281 = vmatprep.subr.bf16.mxu0 0
        %3282 = vmatpush1.bf16.msra.mxu0 0
        %3283 = vmatprep.subr.bf16.mxu0 0
        %3284 = vmatpush1.bf16.msra.mxu0 0
        %3285 = vmatprep.subr.bf16.mxu0 0
        %3286 = vmatpush1.bf16.msra.mxu0 0
        %3287 = vmatprep.subr.bf16.mxu0 0
        %3288 = vmatpush1.bf16.msra.mxu0 %v3277
        %3289 = vmatprep.subr.bf16.mxu0 0
        %3290 = vmatpush1.bf16.msra.mxu0 %v3271
        %3291 = vmatprep.subr.bf16.mxu0 0
        %3292 = vmatpush1.bf16.msra.mxu0 %v3270
        %3293 = vmatprep.subr.bf16.mxu0 0
        %3294 = vmatpush1.bf16.msra.mxu0 %v3269
        %3295 = vmatprep.subr.bf16.mxu0 0
        %3296 = vmatpush2.bf16.msra.mxu0 0
        %3297 = vmatprep.subr.bf16.mxu0 0
        %3298 = vmatpush2.bf16.msra.mxu0 0
        %3299 = vmatprep.subr.bf16.mxu0 0
        %3300 = vmatpush2.bf16.msra.mxu0 0
        %3301 = vmatprep.subr.bf16.mxu0 0
        %3302 = vmatpush2.bf16.msra.mxu0 0
        %3303 = vmatprep.subr.bf16.mxu0 0
        %3304 = vmatpush2.bf16.msra.mxu0 0
        %3305 = vmatprep.subr.bf16.mxu0 0
        %3306 = vmatpush2.bf16.msra.mxu0 0
        %3307 = vmatprep.subr.bf16.mxu0 0
        %3308 = vmatpush2.bf16.msra.mxu0 0
        %3309 = vmatprep.subr.bf16.mxu0 0
        %3310 = vmatpush2.bf16.msra.mxu0 0
        %3311 = vmatprep.mubr.bf16.mxu0 0
        %3312 = vmatmul.mubr.bf16.gmra.mxu0 %v2114
        %v3313 = vpop.f32.mrf.mxu0
        %v3314 = vadd.f32 0.0, %v3313
        %v3315 = vpop.f32.mrf.mxu0
        %v3316 = vpop.f32.mrf.mxu0
        %v3317 = vadd.f32 0.0, %v3316
        %v3318 = vpop.f32.mrf.mxu0
        %3319 = vmatprep.mubr.bf16.mxu0 0
        %3320 = vmatmul.mubr.bf16.gmra.mxu0 %v2117
        %v3321 = vpop.f32.mrf.mxu0
        %v3322 = vadd.f32 0.0, %v3321
        %v3323 = vpop.f32.mrf.mxu0
        %v3324 = vpop.f32.mrf.mxu0
        %v3325 = vadd.f32 0.0, %v3324
        %v3326 = vpop.f32.mrf.mxu0
        %3327 = vmatprep.mubr.bf16.mxu0 0
        %3328 = vmatmul.mubr.bf16.gmra.mxu0 %v2120
        %v3329 = vpop.f32.mrf.mxu0
        %v3330 = vadd.f32 0.0, %v3329
        %v3331 = vpop.f32.mrf.mxu0
        %v3332 = vpop.f32.mrf.mxu0
        %v3333 = vadd.f32 0.0, %v3332
        %v3334 = vpop.f32.mrf.mxu0
        %3335 = vmatprep.mubr.bf16.mxu0 0
        %3336 = vmatmul.mubr.bf16.gmra.mxu0 %v2123
        %v3337 = vpop.f32.mrf.mxu0
        %v3338 = vadd.f32 0.0, %v3337
        %v3339 = vpop.f32.mrf.mxu0
        %v3340 = vpop.f32.mrf.mxu0
        %v3341 = vadd.f32 0.0, %v3340
        %v3342 = vpop.f32.mrf.mxu0
        %3343 = vdwg.mxu0
        %v3344 = vpack.c.bf16 %v3317, %v3314
        %v3345 = vpack.c.bf16 %v3325, %v3322
        %v3346 = vpack.c.bf16 %v3333, %v3330
        %v3347 = vpack.c.bf16 %v3341, %v3338
        %s3348 = scalar_lea.vmem %s6, 256
        %v3349 = vld [vmem:[%s3348] sm:$0xf]
        %v3350 = vld [vmem:[%s3348 + $0x4] sm:$0xf]
        %v3351 = vld [vmem:[%s3348 + $0x8] sm:$0xf]
        %v3352 = vld [vmem:[%s3348 + $0xc] sm:$0xf]
        %v3353 = vld [vmem:[%s3348 + $0x10] sm:$0xf]
        %v3354 = vld [vmem:[%s3348 + $0x14] sm:$0xf]
        %v3355 = vld [vmem:[%s3348 + $0x18] sm:$0xf]
        %v3356 = vld [vmem:[%s3348 + $0x1c] sm:$0xf]
        %v3357 = vld [vmem:[%s3348 + $0x20] sm:$0xf]
        %v3358 = vld [vmem:[%s3348 + $0x24] sm:$0xf]
        %v3359 = vld [vmem:[%s3348 + $0x28] sm:$0xf]
        %v3360 = vld [vmem:[%s3348 + $0x2c] sm:$0xf]
        %v3361 = vld [vmem:[%s3348 + $0x30] sm:$0xf]
        %v3362 = vld [vmem:[%s3348 + $0x34] sm:$0xf]
        %v3363 = vld [vmem:[%s3348 + $0x38] sm:$0xf]
        %v3364 = vld [vmem:[%s3348 + $0x3c] sm:$0xf]
        %v3381 = vunpack.c.l.b16 %v3349
        %v3382 = vunpack.c.l.b16 %v3350
        %v3383 = vunpack.c.l.b16 %v3351
        %v3384 = vunpack.c.l.b16 %v3352
        %v3385 = vunpack.c.l.b16 %v3353
        %v3386 = vunpack.c.l.b16 %v3354
        %v3387 = vunpack.c.l.b16 %v3355
        %v3388 = vunpack.c.l.b16 %v3356
        %v3389 = vunpack.c.l.b16 %v3357
        %v3390 = vunpack.c.l.b16 %v3358
        %v3391 = vunpack.c.l.b16 %v3359
        %v3392 = vunpack.c.l.b16 %v3360
        %v3393 = vunpack.c.l.b16 %v3361
        %v3394 = vunpack.c.l.b16 %v3362
        %v3395 = vunpack.c.l.b16 %v3363
        %v3396 = vunpack.c.l.b16 %v3364
        %v3397 = vpack.c.b16 %v3382, %v3381
        %v3398 = vpack.c.b16 %v3384, %v3383
        %v3399 = vpack.c.b16 %v3386, %v3385
        %v3400 = vpack.c.b16 %v3388, %v3387
        %v3401 = vpack.c.b16 %v3390, %v3389
        %v3402 = vpack.c.b16 %v3392, %v3391
        %v3403 = vpack.c.b16 %v3394, %v3393
        %v3404 = vpack.c.b16 %v3396, %v3395
        %v3406 = vsel %vm2374, %v3397, 0
        %v3409 = vsel %vm2374, %v3398, 0
        %v3412 = vsel %vm2374, %v3399, 0
        %v3415 = vsel %vm2374, %v3400, 0
        %v3418 = vsel %vm2374, %v3401, 0
        %v3421 = vsel %vm2374, %v3402, 0
        %v3424 = vsel %vm2374, %v3403, 0
        %v3427 = vsel %vm2374, %v3404, 0
        %3429 = vmatprep.subr.bf16.mxu0 0
        %3430 = vmatpush1.bf16.msra.mxu0 0
        %3431 = vmatprep.subr.bf16.mxu0 0
        %3432 = vmatpush1.bf16.msra.mxu0 0
        %3433 = vmatprep.subr.bf16.mxu0 0
        %3434 = vmatpush1.bf16.msra.mxu0 0
        %3435 = vmatprep.subr.bf16.mxu0 0
        %3436 = vmatpush1.bf16.msra.mxu0 0
        %3437 = vmatprep.subr.bf16.mxu0 0
        %3438 = vmatpush1.bf16.msra.mxu0 %v3347
        %3439 = vmatprep.subr.bf16.mxu0 0
        %3440 = vmatpush1.bf16.msra.mxu0 %v3346
        %3441 = vmatprep.subr.bf16.mxu0 0
        %3442 = vmatpush1.bf16.msra.mxu0 %v3345
        %3443 = vmatprep.subr.bf16.mxu0 0
        %3444 = vmatpush1.bf16.msra.mxu0 %v3344
        %3445 = vmatprep.subr.bf16.mxu0 0
        %3446 = vmatpush2.bf16.msra.mxu0 0
        %3447 = vmatprep.subr.bf16.mxu0 0
        %3448 = vmatpush2.bf16.msra.mxu0 0
        %3449 = vmatprep.subr.bf16.mxu0 0
        %3450 = vmatpush2.bf16.msra.mxu0 0
        %3451 = vmatprep.subr.bf16.mxu0 0
        %3452 = vmatpush2.bf16.msra.mxu0 0
        %3453 = vmatprep.subr.bf16.mxu0 0
        %3454 = vmatpush2.bf16.msra.mxu0 0
        %3455 = vmatprep.subr.bf16.mxu0 0
        %3456 = vmatpush2.bf16.msra.mxu0 0
        %3457 = vmatprep.subr.bf16.mxu0 0
        %3458 = vmatpush2.bf16.msra.mxu0 0
        %3459 = vmatprep.subr.bf16.mxu0 0
        %3460 = vmatpush2.bf16.msra.mxu0 0
        %3461 = vmatprep.mubr.bf16.mxu0 0
        %3462 = vmatmul.mubr.bf16.gmra.mxu0 %v3406
        %v3463 = vpop.f32.mrf.mxu0
        %v3464 = vadd.f32 0.0, %v3463
        %v3465 = vpop.f32.mrf.mxu0
        %v3466 = vpop.f32.mrf.mxu0
        %v3467 = vadd.f32 0.0, %v3466
        %v3468 = vpop.f32.mrf.mxu0
        %3469 = vmatprep.mubr.bf16.mxu0 0
        %3470 = vmatmul.mubr.bf16.gmra.mxu0 %v3409
        %v3471 = vpop.f32.mrf.mxu0
        %v3472 = vadd.f32 0.0, %v3471
        %v3473 = vpop.f32.mrf.mxu0
        %v3474 = vpop.f32.mrf.mxu0
        %v3475 = vadd.f32 0.0, %v3474
        %v3476 = vpop.f32.mrf.mxu0
        %3477 = vmatprep.mubr.bf16.mxu0 0
        %3478 = vmatmul.mubr.bf16.gmra.mxu0 %v3412
        %v3479 = vpop.f32.mrf.mxu0
        %v3480 = vadd.f32 0.0, %v3479
        %v3481 = vpop.f32.mrf.mxu0
        %v3482 = vpop.f32.mrf.mxu0
        %v3483 = vadd.f32 0.0, %v3482
        %v3484 = vpop.f32.mrf.mxu0
        %3485 = vmatprep.mubr.bf16.mxu0 0
        %3486 = vmatmul.mubr.bf16.gmra.mxu0 %v3415
        %v3487 = vpop.f32.mrf.mxu0
        %v3488 = vadd.f32 0.0, %v3487
        %v3489 = vpop.f32.mrf.mxu0
        %v3490 = vpop.f32.mrf.mxu0
        %v3491 = vadd.f32 0.0, %v3490
        %v3492 = vpop.f32.mrf.mxu0
        %3493 = vmatprep.mubr.bf16.mxu0 0
        %3494 = vmatmul.mubr.bf16.gmra.mxu0 %v3418
        %v3495 = vpop.f32.mrf.mxu0
        %v3496 = vadd.f32 0.0, %v3495
        %v3497 = vpop.f32.mrf.mxu0
        %v3498 = vpop.f32.mrf.mxu0
        %v3499 = vadd.f32 0.0, %v3498
        %v3500 = vpop.f32.mrf.mxu0
        %3501 = vmatprep.mubr.bf16.mxu0 0
        %3502 = vmatmul.mubr.bf16.gmra.mxu0 %v3421
        %v3503 = vpop.f32.mrf.mxu0
        %v3504 = vadd.f32 0.0, %v3503
        %v3505 = vpop.f32.mrf.mxu0
        %v3506 = vpop.f32.mrf.mxu0
        %v3507 = vadd.f32 0.0, %v3506
        %v3508 = vpop.f32.mrf.mxu0
        %3509 = vmatprep.mubr.bf16.mxu0 0
        %3510 = vmatmul.mubr.bf16.gmra.mxu0 %v3424
        %v3511 = vpop.f32.mrf.mxu0
        %v3512 = vadd.f32 0.0, %v3511
        %v3513 = vpop.f32.mrf.mxu0
        %v3514 = vpop.f32.mrf.mxu0
        %v3515 = vadd.f32 0.0, %v3514
        %v3516 = vpop.f32.mrf.mxu0
        %3517 = vmatprep.mubr.bf16.mxu0 0
        %3518 = vmatmul.mubr.bf16.gmra.mxu0 %v3427
        %v3519 = vpop.f32.mrf.mxu0
        %v3520 = vadd.f32 0.0, %v3519
        %v3521 = vpop.f32.mrf.mxu0
        %v3522 = vpop.f32.mrf.mxu0
        %v3523 = vadd.f32 0.0, %v3522
        %v3524 = vpop.f32.mrf.mxu0
        %3525 = vdwg.mxu0
        %v3526 = vadd.f32 %v3231, %v3464
        %v3527 = vadd.f32 %v3232, %v3467
        %v3528 = vadd.f32 %v3233, %v3472
        %v3529 = vadd.f32 %v3234, %v3475
        %v3530 = vadd.f32 %v3235, %v3480
        %v3531 = vadd.f32 %v3236, %v3483
        %v3532 = vadd.f32 %v3237, %v3488
        %v3533 = vadd.f32 %v3238, %v3491
        %v3534 = vadd.f32 %v3239, %v3496
        %v3535 = vadd.f32 %v3240, %v3499
        %v3536 = vadd.f32 %v3241, %v3504
        %v3537 = vadd.f32 %v3242, %v3507
        %v3538 = vadd.f32 %v3243, %v3512
        %v3539 = vadd.f32 %v3244, %v3515
        %v3540 = vadd.f32 %v3245, %v3520
        %v3541 = vadd.f32 %v3246, %v3523
        %s3542 = scalar_lea.vmem %s5, 140
        %v3543 = vld [vmem:[%s3542] sm:$0xf]
        %v3544 = vld [vmem:[%s3542 + $0x4] sm:$0xf]
        %v3545 = vld [vmem:[%s3542 + $0x8] sm:$0xf]
        %v3546 = vld [vmem:[%s3542 + $0xc] sm:$0xf]
        %v3547 = vld [vmem:[%s3542 + $0x10] sm:$0xf]
        %v3548 = vld [vmem:[%s3542 + $0x14] sm:$0xf]
        %v3549 = vld [vmem:[%s3542 + $0x18] sm:$0x1]
        %v3557 = vunpack.c.l.b16 %v3543
        %v3558 = vunpack.c.l.b16 %v3544
        %v3559 = vunpack.c.l.b16 %v3545
        %v3560 = vunpack.c.l.b16 %v3546
        %v3561 = vunpack.c.l.b16 %v3547
        %v3562 = vunpack.c.l.b16 %v3548
        %v3563 = vunpack.c.l.b16 %v3549
        %v3564 = vpack.c.b16 %v3558, %v3557
        %v3565 = vpack.c.b16 %v3560, %v3559
        %v3566 = vpack.c.b16 %v3562, %v3561
        %v3567 = vpack.c.b16 %v3563, %v3563
        %v3572 = vand.u32 %v3567, %v2127
        %3574 = vmatprep.subr.bf16.mxu0 0
        %3575 = vmatpush1.bf16.msra.mxu0 0
        %3576 = vmatprep.subr.bf16.mxu0 0
        %3577 = vmatpush1.bf16.msra.mxu0 0
        %3578 = vmatprep.subr.bf16.mxu0 0
        %3579 = vmatpush1.bf16.msra.mxu0 0
        %3580 = vmatprep.subr.bf16.mxu0 0
        %3581 = vmatpush1.bf16.msra.mxu0 0
        %3582 = vmatprep.subr.bf16.mxu0 0
        %3583 = vmatpush1.bf16.msra.mxu0 %v3572
        %3584 = vmatprep.subr.bf16.mxu0 0
        %3585 = vmatpush1.bf16.msra.mxu0 %v3566
        %3586 = vmatprep.subr.bf16.mxu0 0
        %3587 = vmatpush1.bf16.msra.mxu0 %v3565
        %3588 = vmatprep.subr.bf16.mxu0 0
        %3589 = vmatpush1.bf16.msra.mxu0 %v3564
        %3590 = vmatprep.subr.bf16.mxu0 0
        %3591 = vmatpush2.bf16.msra.mxu0 0
        %3592 = vmatprep.subr.bf16.mxu0 0
        %3593 = vmatpush2.bf16.msra.mxu0 0
        %3594 = vmatprep.subr.bf16.mxu0 0
        %3595 = vmatpush2.bf16.msra.mxu0 0
        %3596 = vmatprep.subr.bf16.mxu0 0
        %3597 = vmatpush2.bf16.msra.mxu0 0
        %3598 = vmatprep.subr.bf16.mxu0 0
        %3599 = vmatpush2.bf16.msra.mxu0 0
        %3600 = vmatprep.subr.bf16.mxu0 0
        %3601 = vmatpush2.bf16.msra.mxu0 0
        %3602 = vmatprep.subr.bf16.mxu0 0
        %3603 = vmatpush2.bf16.msra.mxu0 0
        %3604 = vmatprep.subr.bf16.mxu0 0
        %3605 = vmatpush2.bf16.msra.mxu0 0
        %3606 = vmatprep.mubr.bf16.mxu0 0
        %3607 = vmatmul.mubr.bf16.gmra.mxu0 %v2114
        %v3608 = vpop.f32.mrf.mxu0
        %v3609 = vadd.f32 0.0, %v3608
        %v3610 = vpop.f32.mrf.mxu0
        %v3611 = vpop.f32.mrf.mxu0
        %v3612 = vadd.f32 0.0, %v3611
        %v3613 = vpop.f32.mrf.mxu0
        %3614 = vmatprep.mubr.bf16.mxu0 0
        %3615 = vmatmul.mubr.bf16.gmra.mxu0 %v2117
        %v3616 = vpop.f32.mrf.mxu0
        %v3617 = vadd.f32 0.0, %v3616
        %v3618 = vpop.f32.mrf.mxu0
        %v3619 = vpop.f32.mrf.mxu0
        %v3620 = vadd.f32 0.0, %v3619
        %v3621 = vpop.f32.mrf.mxu0
        %3622 = vmatprep.mubr.bf16.mxu0 0
        %3623 = vmatmul.mubr.bf16.gmra.mxu0 %v2120
        %v3624 = vpop.f32.mrf.mxu0
        %v3625 = vadd.f32 0.0, %v3624
        %v3626 = vpop.f32.mrf.mxu0
        %v3627 = vpop.f32.mrf.mxu0
        %v3628 = vadd.f32 0.0, %v3627
        %v3629 = vpop.f32.mrf.mxu0
        %3630 = vmatprep.mubr.bf16.mxu0 0
        %3631 = vmatmul.mubr.bf16.gmra.mxu0 %v2123
        %v3632 = vpop.f32.mrf.mxu0
        %v3633 = vadd.f32 0.0, %v3632
        %v3634 = vpop.f32.mrf.mxu0
        %v3635 = vpop.f32.mrf.mxu0
        %v3636 = vadd.f32 0.0, %v3635
        %v3637 = vpop.f32.mrf.mxu0
        %3638 = vdwg.mxu0
        %v3639 = vpack.c.bf16 %v3612, %v3609
        %v3640 = vpack.c.bf16 %v3620, %v3617
        %v3641 = vpack.c.bf16 %v3628, %v3625
        %v3642 = vpack.c.bf16 %v3636, %v3633
        %s3643 = scalar_lea.vmem %s6, 320
        %v3644 = vld [vmem:[%s3643] sm:$0xf]
        %v3645 = vld [vmem:[%s3643 + $0x4] sm:$0xf]
        %v3646 = vld [vmem:[%s3643 + $0x8] sm:$0xf]
        %v3647 = vld [vmem:[%s3643 + $0xc] sm:$0xf]
        %v3648 = vld [vmem:[%s3643 + $0x10] sm:$0xf]
        %v3649 = vld [vmem:[%s3643 + $0x14] sm:$0xf]
        %v3650 = vld [vmem:[%s3643 + $0x18] sm:$0xf]
        %v3651 = vld [vmem:[%s3643 + $0x1c] sm:$0xf]
        %v3652 = vld [vmem:[%s3643 + $0x20] sm:$0xf]
        %v3653 = vld [vmem:[%s3643 + $0x24] sm:$0xf]
        %v3654 = vld [vmem:[%s3643 + $0x28] sm:$0xf]
        %v3655 = vld [vmem:[%s3643 + $0x2c] sm:$0xf]
        %v3656 = vld [vmem:[%s3643 + $0x30] sm:$0xf]
        %v3657 = vld [vmem:[%s3643 + $0x34] sm:$0xf]
        %v3658 = vld [vmem:[%s3643 + $0x38] sm:$0xf]
        %v3659 = vld [vmem:[%s3643 + $0x3c] sm:$0xf]
        %v3676 = vunpack.c.l.b16 %v3644
        %v3677 = vunpack.c.l.b16 %v3645
        %v3678 = vunpack.c.l.b16 %v3646
        %v3679 = vunpack.c.l.b16 %v3647
        %v3680 = vunpack.c.l.b16 %v3648
        %v3681 = vunpack.c.l.b16 %v3649
        %v3682 = vunpack.c.l.b16 %v3650
        %v3683 = vunpack.c.l.b16 %v3651
        %v3684 = vunpack.c.l.b16 %v3652
        %v3685 = vunpack.c.l.b16 %v3653
        %v3686 = vunpack.c.l.b16 %v3654
        %v3687 = vunpack.c.l.b16 %v3655
        %v3688 = vunpack.c.l.b16 %v3656
        %v3689 = vunpack.c.l.b16 %v3657
        %v3690 = vunpack.c.l.b16 %v3658
        %v3691 = vunpack.c.l.b16 %v3659
        %v3692 = vpack.c.b16 %v3677, %v3676
        %v3693 = vpack.c.b16 %v3679, %v3678
        %v3694 = vpack.c.b16 %v3681, %v3680
        %v3695 = vpack.c.b16 %v3683, %v3682
        %v3696 = vpack.c.b16 %v3685, %v3684
        %v3697 = vpack.c.b16 %v3687, %v3686
        %v3698 = vpack.c.b16 %v3689, %v3688
        %v3699 = vpack.c.b16 %v3691, %v3690
        %v3701 = vsel %vm2374, %v3692, 0
        %v3704 = vsel %vm2374, %v3693, 0
        %v3707 = vsel %vm2374, %v3694, 0
        %v3710 = vsel %vm2374, %v3695, 0
        %v3713 = vsel %vm2374, %v3696, 0
        %v3716 = vsel %vm2374, %v3697, 0
        %v3719 = vsel %vm2374, %v3698, 0
        %v3722 = vsel %vm2374, %v3699, 0
        %3724 = vmatprep.subr.bf16.mxu0 0
        %3725 = vmatpush1.bf16.msra.mxu0 0
        %3726 = vmatprep.subr.bf16.mxu0 0
        %3727 = vmatpush1.bf16.msra.mxu0 0
        %3728 = vmatprep.subr.bf16.mxu0 0
        %3729 = vmatpush1.bf16.msra.mxu0 0
        %3730 = vmatprep.subr.bf16.mxu0 0
        %3731 = vmatpush1.bf16.msra.mxu0 0
        %3732 = vmatprep.subr.bf16.mxu0 0
        %3733 = vmatpush1.bf16.msra.mxu0 %v3642
        %3734 = vmatprep.subr.bf16.mxu0 0
        %3735 = vmatpush1.bf16.msra.mxu0 %v3641
        %3736 = vmatprep.subr.bf16.mxu0 0
        %3737 = vmatpush1.bf16.msra.mxu0 %v3640
        %3738 = vmatprep.subr.bf16.mxu0 0
        %3739 = vmatpush1.bf16.msra.mxu0 %v3639
        %3740 = vmatprep.subr.bf16.mxu0 0
        %3741 = vmatpush2.bf16.msra.mxu0 0
        %3742 = vmatprep.subr.bf16.mxu0 0
        %3743 = vmatpush2.bf16.msra.mxu0 0
        %3744 = vmatprep.subr.bf16.mxu0 0
        %3745 = vmatpush2.bf16.msra.mxu0 0
        %3746 = vmatprep.subr.bf16.mxu0 0
        %3747 = vmatpush2.bf16.msra.mxu0 0
        %3748 = vmatprep.subr.bf16.mxu0 0
        %3749 = vmatpush2.bf16.msra.mxu0 0
        %3750 = vmatprep.subr.bf16.mxu0 0
        %3751 = vmatpush2.bf16.msra.mxu0 0
        %3752 = vmatprep.subr.bf16.mxu0 0
        %3753 = vmatpush2.bf16.msra.mxu0 0
        %3754 = vmatprep.subr.bf16.mxu0 0
        %3755 = vmatpush2.bf16.msra.mxu0 0
        %3756 = vmatprep.mubr.bf16.mxu0 0
        %3757 = vmatmul.mubr.bf16.gmra.mxu0 %v3701
        %v3758 = vpop.f32.mrf.mxu0
        %v3759 = vadd.f32 0.0, %v3758
        %v3760 = vpop.f32.mrf.mxu0
        %v3761 = vpop.f32.mrf.mxu0
        %v3762 = vadd.f32 0.0, %v3761
        %v3763 = vpop.f32.mrf.mxu0
        %3764 = vmatprep.mubr.bf16.mxu0 0
        %3765 = vmatmul.mubr.bf16.gmra.mxu0 %v3704
        %v3766 = vpop.f32.mrf.mxu0
        %v3767 = vadd.f32 0.0, %v3766
        %v3768 = vpop.f32.mrf.mxu0
        %v3769 = vpop.f32.mrf.mxu0
        %v3770 = vadd.f32 0.0, %v3769
        %v3771 = vpop.f32.mrf.mxu0
        %3772 = vmatprep.mubr.bf16.mxu0 0
        %3773 = vmatmul.mubr.bf16.gmra.mxu0 %v3707
        %v3774 = vpop.f32.mrf.mxu0
        %v3775 = vadd.f32 0.0, %v3774
        %v3776 = vpop.f32.mrf.mxu0
        %v3777 = vpop.f32.mrf.mxu0
        %v3778 = vadd.f32 0.0, %v3777
        %v3779 = vpop.f32.mrf.mxu0
        %3780 = vmatprep.mubr.bf16.mxu0 0
        %3781 = vmatmul.mubr.bf16.gmra.mxu0 %v3710
        %v3782 = vpop.f32.mrf.mxu0
        %v3783 = vadd.f32 0.0, %v3782
        %v3784 = vpop.f32.mrf.mxu0
        %v3785 = vpop.f32.mrf.mxu0
        %v3786 = vadd.f32 0.0, %v3785
        %v3787 = vpop.f32.mrf.mxu0
        %3788 = vmatprep.mubr.bf16.mxu0 0
        %3789 = vmatmul.mubr.bf16.gmra.mxu0 %v3713
        %v3790 = vpop.f32.mrf.mxu0
        %v3791 = vadd.f32 0.0, %v3790
        %v3792 = vpop.f32.mrf.mxu0
        %v3793 = vpop.f32.mrf.mxu0
        %v3794 = vadd.f32 0.0, %v3793
        %v3795 = vpop.f32.mrf.mxu0
        %3796 = vmatprep.mubr.bf16.mxu0 0
        %3797 = vmatmul.mubr.bf16.gmra.mxu0 %v3716
        %v3798 = vpop.f32.mrf.mxu0
        %v3799 = vadd.f32 0.0, %v3798
        %v3800 = vpop.f32.mrf.mxu0
        %v3801 = vpop.f32.mrf.mxu0
        %v3802 = vadd.f32 0.0, %v3801
        %v3803 = vpop.f32.mrf.mxu0
        %3804 = vmatprep.mubr.bf16.mxu0 0
        %3805 = vmatmul.mubr.bf16.gmra.mxu0 %v3719
        %v3806 = vpop.f32.mrf.mxu0
        %v3807 = vadd.f32 0.0, %v3806
        %v3808 = vpop.f32.mrf.mxu0
        %v3809 = vpop.f32.mrf.mxu0
        %v3810 = vadd.f32 0.0, %v3809
        %v3811 = vpop.f32.mrf.mxu0
        %3812 = vmatprep.mubr.bf16.mxu0 0
        %3813 = vmatmul.mubr.bf16.gmra.mxu0 %v3722
        %v3814 = vpop.f32.mrf.mxu0
        %v3815 = vadd.f32 0.0, %v3814
        %v3816 = vpop.f32.mrf.mxu0
        %v3817 = vpop.f32.mrf.mxu0
        %v3818 = vadd.f32 0.0, %v3817
        %v3819 = vpop.f32.mrf.mxu0
        %3820 = vdwg.mxu0
        %v3821 = vadd.f32 %v3526, %v3759
        %v3822 = vadd.f32 %v3527, %v3762
        %v3823 = vadd.f32 %v3528, %v3767
        %v3824 = vadd.f32 %v3529, %v3770
        %v3825 = vadd.f32 %v3530, %v3775
        %v3826 = vadd.f32 %v3531, %v3778
        %v3827 = vadd.f32 %v3532, %v3783
        %v3828 = vadd.f32 %v3533, %v3786
        %v3829 = vadd.f32 %v3534, %v3791
        %v3830 = vadd.f32 %v3535, %v3794
        %v3831 = vadd.f32 %v3536, %v3799
        %v3832 = vadd.f32 %v3537, %v3802
        %v3833 = vadd.f32 %v3538, %v3807
        %v3834 = vadd.f32 %v3539, %v3810
        %v3835 = vadd.f32 %v3540, %v3815
        %v3836 = vadd.f32 %v3541, %v3818
        %s3837 = scalar_lea.vmem %s5, 168
        %v3838 = vld [vmem:[%s3837] sm:$0xf]
        %v3839 = vld [vmem:[%s3837 + $0x4] sm:$0xf]
        %v3840 = vld [vmem:[%s3837 + $0x8] sm:$0xf]
        %v3841 = vld [vmem:[%s3837 + $0xc] sm:$0xf]
        %v3842 = vld [vmem:[%s3837 + $0x10] sm:$0xf]
        %v3843 = vld [vmem:[%s3837 + $0x14] sm:$0xf]
        %v3844 = vld [vmem:[%s3837 + $0x18] sm:$0x1]
        %v3852 = vunpack.c.l.b16 %v3838
        %v3853 = vunpack.c.l.b16 %v3839
        %v3854 = vunpack.c.l.b16 %v3840
        %v3855 = vunpack.c.l.b16 %v3841
        %v3856 = vunpack.c.l.b16 %v3842
        %v3857 = vunpack.c.l.b16 %v3843
        %v3858 = vunpack.c.l.b16 %v3844
        %v3859 = vpack.c.b16 %v3853, %v3852
        %v3860 = vpack.c.b16 %v3855, %v3854
        %v3861 = vpack.c.b16 %v3857, %v3856
        %v3862 = vpack.c.b16 %v3858, %v3858
        %v3867 = vand.u32 %v3862, %v2127
        %3869 = vmatprep.subr.bf16.mxu0 0
        %3870 = vmatpush1.bf16.msra.mxu0 0
        %3871 = vmatprep.subr.bf16.mxu0 0
        %3872 = vmatpush1.bf16.msra.mxu0 0
        %3873 = vmatprep.subr.bf16.mxu0 0
        %3874 = vmatpush1.bf16.msra.mxu0 0
        %3875 = vmatprep.subr.bf16.mxu0 0
        %3876 = vmatpush1.bf16.msra.mxu0 0
        %3877 = vmatprep.subr.bf16.mxu0 0
        %3878 = vmatpush1.bf16.msra.mxu0 %v3867
        %3879 = vmatprep.subr.bf16.mxu0 0
        %3880 = vmatpush1.bf16.msra.mxu0 %v3861
        %3881 = vmatprep.subr.bf16.mxu0 0
        %3882 = vmatpush1.bf16.msra.mxu0 %v3860
        %3883 = vmatprep.subr.bf16.mxu0 0
        %3884 = vmatpush1.bf16.msra.mxu0 %v3859
        %3885 = vmatprep.subr.bf16.mxu0 0
        %3886 = vmatpush2.bf16.msra.mxu0 0
        %3887 = vmatprep.subr.bf16.mxu0 0
        %3888 = vmatpush2.bf16.msra.mxu0 0
        %3889 = vmatprep.subr.bf16.mxu0 0
        %3890 = vmatpush2.bf16.msra.mxu0 0
        %3891 = vmatprep.subr.bf16.mxu0 0
        %3892 = vmatpush2.bf16.msra.mxu0 0
        %3893 = vmatprep.subr.bf16.mxu0 0
        %3894 = vmatpush2.bf16.msra.mxu0 0
        %3895 = vmatprep.subr.bf16.mxu0 0
        %3896 = vmatpush2.bf16.msra.mxu0 0
        %3897 = vmatprep.subr.bf16.mxu0 0
        %3898 = vmatpush2.bf16.msra.mxu0 0
        %3899 = vmatprep.subr.bf16.mxu0 0
        %3900 = vmatpush2.bf16.msra.mxu0 0
        %3901 = vmatprep.mubr.bf16.mxu0 0
        %3902 = vmatmul.mubr.bf16.gmra.mxu0 %v2114
        %v3903 = vpop.f32.mrf.mxu0
        %v3904 = vadd.f32 0.0, %v3903
        %v3905 = vpop.f32.mrf.mxu0
        %v3906 = vpop.f32.mrf.mxu0
        %v3907 = vadd.f32 0.0, %v3906
        %v3908 = vpop.f32.mrf.mxu0
        %3909 = vmatprep.mubr.bf16.mxu0 0
        %3910 = vmatmul.mubr.bf16.gmra.mxu0 %v2117
        %v3911 = vpop.f32.mrf.mxu0
        %v3912 = vadd.f32 0.0, %v3911
        %v3913 = vpop.f32.mrf.mxu0
        %v3914 = vpop.f32.mrf.mxu0
        %v3915 = vadd.f32 0.0, %v3914
        %v3916 = vpop.f32.mrf.mxu0
        %3917 = vmatprep.mubr.bf16.mxu0 0
        %3918 = vmatmul.mubr.bf16.gmra.mxu0 %v2120
        %v3919 = vpop.f32.mrf.mxu0
        %v3920 = vadd.f32 0.0, %v3919
        %v3921 = vpop.f32.mrf.mxu0
        %v3922 = vpop.f32.mrf.mxu0
        %v3923 = vadd.f32 0.0, %v3922
        %v3924 = vpop.f32.mrf.mxu0
        %3925 = vmatprep.mubr.bf16.mxu0 0
        %3926 = vmatmul.mubr.bf16.gmra.mxu0 %v2123
        %v3927 = vpop.f32.mrf.mxu0
        %v3928 = vadd.f32 0.0, %v3927
        %v3929 = vpop.f32.mrf.mxu0
        %v3930 = vpop.f32.mrf.mxu0
        %v3931 = vadd.f32 0.0, %v3930
        %v3932 = vpop.f32.mrf.mxu0
        %3933 = vdwg.mxu0
        %v3934 = vpack.c.bf16 %v3907, %v3904
        %v3935 = vpack.c.bf16 %v3915, %v3912
        %v3936 = vpack.c.bf16 %v3923, %v3920
        %v3937 = vpack.c.bf16 %v3931, %v3928
        %s3938 = scalar_lea.vmem %s6, 384
        %v3939 = vld [vmem:[%s3938] sm:$0xf]
        %v3940 = vld [vmem:[%s3938 + $0x4] sm:$0xf]
        %v3941 = vld [vmem:[%s3938 + $0x8] sm:$0xf]
        %v3942 = vld [vmem:[%s3938 + $0xc] sm:$0xf]
        %v3943 = vld [vmem:[%s3938 + $0x10] sm:$0xf]
        %v3944 = vld [vmem:[%s3938 + $0x14] sm:$0xf]
        %v3945 = vld [vmem:[%s3938 + $0x18] sm:$0xf]
        %v3946 = vld [vmem:[%s3938 + $0x1c] sm:$0xf]
        %v3947 = vld [vmem:[%s3938 + $0x20] sm:$0xf]
        %v3948 = vld [vmem:[%s3938 + $0x24] sm:$0xf]
        %v3949 = vld [vmem:[%s3938 + $0x28] sm:$0xf]
        %v3950 = vld [vmem:[%s3938 + $0x2c] sm:$0xf]
        %v3951 = vld [vmem:[%s3938 + $0x30] sm:$0xf]
        %v3952 = vld [vmem:[%s3938 + $0x34] sm:$0xf]
        %v3953 = vld [vmem:[%s3938 + $0x38] sm:$0xf]
        %v3954 = vld [vmem:[%s3938 + $0x3c] sm:$0xf]
        %v3971 = vunpack.c.l.b16 %v3939
        %v3972 = vunpack.c.l.b16 %v3940
        %v3973 = vunpack.c.l.b16 %v3941
        %v3974 = vunpack.c.l.b16 %v3942
        %v3975 = vunpack.c.l.b16 %v3943
        %v3976 = vunpack.c.l.b16 %v3944
        %v3977 = vunpack.c.l.b16 %v3945
        %v3978 = vunpack.c.l.b16 %v3946
        %v3979 = vunpack.c.l.b16 %v3947
        %v3980 = vunpack.c.l.b16 %v3948
        %v3981 = vunpack.c.l.b16 %v3949
        %v3982 = vunpack.c.l.b16 %v3950
        %v3983 = vunpack.c.l.b16 %v3951
        %v3984 = vunpack.c.l.b16 %v3952
        %v3985 = vunpack.c.l.b16 %v3953
        %v3986 = vunpack.c.l.b16 %v3954
        %v3987 = vpack.c.b16 %v3972, %v3971
        %v3988 = vpack.c.b16 %v3974, %v3973
        %v3989 = vpack.c.b16 %v3976, %v3975
        %v3990 = vpack.c.b16 %v3978, %v3977
        %v3991 = vpack.c.b16 %v3980, %v3979
        %v3992 = vpack.c.b16 %v3982, %v3981
        %v3993 = vpack.c.b16 %v3984, %v3983
        %v3994 = vpack.c.b16 %v3986, %v3985
        %v3996 = vsel %vm2374, %v3987, 0
        %v3999 = vsel %vm2374, %v3988, 0
        %v4002 = vsel %vm2374, %v3989, 0
        %v4005 = vsel %vm2374, %v3990, 0
        %v4008 = vsel %vm2374, %v3991, 0
        %v4011 = vsel %vm2374, %v3992, 0
        %v4014 = vsel %vm2374, %v3993, 0
        %v4017 = vsel %vm2374, %v3994, 0
        %4019 = vmatprep.subr.bf16.mxu0 0
        %4020 = vmatpush1.bf16.msra.mxu0 0
        %4021 = vmatprep.subr.bf16.mxu0 0
        %4022 = vmatpush1.bf16.msra.mxu0 0
        %4023 = vmatprep.subr.bf16.mxu0 0
        %4024 = vmatpush1.bf16.msra.mxu0 0
        %4025 = vmatprep.subr.bf16.mxu0 0
        %4026 = vmatpush1.bf16.msra.mxu0 0
        %4027 = vmatprep.subr.bf16.mxu0 0
        %4028 = vmatpush1.bf16.msra.mxu0 %v3937
        %4029 = vmatprep.subr.bf16.mxu0 0
        %4030 = vmatpush1.bf16.msra.mxu0 %v3936
        %4031 = vmatprep.subr.bf16.mxu0 0
        %4032 = vmatpush1.bf16.msra.mxu0 %v3935
        %4033 = vmatprep.subr.bf16.mxu0 0
        %4034 = vmatpush1.bf16.msra.mxu0 %v3934
        %4035 = vmatprep.subr.bf16.mxu0 0
        %4036 = vmatpush2.bf16.msra.mxu0 0
        %4037 = vmatprep.subr.bf16.mxu0 0
        %4038 = vmatpush2.bf16.msra.mxu0 0
        %4039 = vmatprep.subr.bf16.mxu0 0
        %4040 = vmatpush2.bf16.msra.mxu0 0
        %4041 = vmatprep.subr.bf16.mxu0 0
        %4042 = vmatpush2.bf16.msra.mxu0 0
        %4043 = vmatprep.subr.bf16.mxu0 0
        %4044 = vmatpush2.bf16.msra.mxu0 0
        %4045 = vmatprep.subr.bf16.mxu0 0
        %4046 = vmatpush2.bf16.msra.mxu0 0
        %4047 = vmatprep.subr.bf16.mxu0 0
        %4048 = vmatpush2.bf16.msra.mxu0 0
        %4049 = vmatprep.subr.bf16.mxu0 0
        %4050 = vmatpush2.bf16.msra.mxu0 0
        %4051 = vmatprep.mubr.bf16.mxu0 0
        %4052 = vmatmul.mubr.bf16.gmra.mxu0 %v3996
        %v4053 = vpop.f32.mrf.mxu0
        %v4054 = vadd.f32 0.0, %v4053
        %v4055 = vpop.f32.mrf.mxu0
        %v4056 = vpop.f32.mrf.mxu0
        %v4057 = vadd.f32 0.0, %v4056
        %v4058 = vpop.f32.mrf.mxu0
        %4059 = vmatprep.mubr.bf16.mxu0 0
        %4060 = vmatmul.mubr.bf16.gmra.mxu0 %v3999
        %v4061 = vpop.f32.mrf.mxu0
        %v4062 = vadd.f32 0.0, %v4061
        %v4063 = vpop.f32.mrf.mxu0
        %v4064 = vpop.f32.mrf.mxu0
        %v4065 = vadd.f32 0.0, %v4064
        %v4066 = vpop.f32.mrf.mxu0
        %4067 = vmatprep.mubr.bf16.mxu0 0
        %4068 = vmatmul.mubr.bf16.gmra.mxu0 %v4002
        %v4069 = vpop.f32.mrf.mxu0
        %v4070 = vadd.f32 0.0, %v4069
        %v4071 = vpop.f32.mrf.mxu0
        %v4072 = vpop.f32.mrf.mxu0
        %v4073 = vadd.f32 0.0, %v4072
        %v4074 = vpop.f32.mrf.mxu0
        %4075 = vmatprep.mubr.bf16.mxu0 0
        %4076 = vmatmul.mubr.bf16.gmra.mxu0 %v4005
        %v4077 = vpop.f32.mrf.mxu0
        %v4078 = vadd.f32 0.0, %v4077
        %v4079 = vpop.f32.mrf.mxu0
        %v4080 = vpop.f32.mrf.mxu0
        %v4081 = vadd.f32 0.0, %v4080
        %v4082 = vpop.f32.mrf.mxu0
        %4083 = vmatprep.mubr.bf16.mxu0 0
        %4084 = vmatmul.mubr.bf16.gmra.mxu0 %v4008
        %v4085 = vpop.f32.mrf.mxu0
        %v4086 = vadd.f32 0.0, %v4085
        %v4087 = vpop.f32.mrf.mxu0
        %v4088 = vpop.f32.mrf.mxu0
        %v4089 = vadd.f32 0.0, %v4088
        %v4090 = vpop.f32.mrf.mxu0
        %4091 = vmatprep.mubr.bf16.mxu0 0
        %4092 = vmatmul.mubr.bf16.gmra.mxu0 %v4011
        %v4093 = vpop.f32.mrf.mxu0
        %v4094 = vadd.f32 0.0, %v4093
        %v4095 = vpop.f32.mrf.mxu0
        %v4096 = vpop.f32.mrf.mxu0
        %v4097 = vadd.f32 0.0, %v4096
        %v4098 = vpop.f32.mrf.mxu0
        %4099 = vmatprep.mubr.bf16.mxu0 0
        %4100 = vmatmul.mubr.bf16.gmra.mxu0 %v4014
        %v4101 = vpop.f32.mrf.mxu0
        %v4102 = vadd.f32 0.0, %v4101
        %v4103 = vpop.f32.mrf.mxu0
        %v4104 = vpop.f32.mrf.mxu0
        %v4105 = vadd.f32 0.0, %v4104
        %v4106 = vpop.f32.mrf.mxu0
        %4107 = vmatprep.mubr.bf16.mxu0 0
        %4108 = vmatmul.mubr.bf16.gmra.mxu0 %v4017
        %v4109 = vpop.f32.mrf.mxu0
        %v4110 = vadd.f32 0.0, %v4109
        %v4111 = vpop.f32.mrf.mxu0
        %v4112 = vpop.f32.mrf.mxu0
        %v4113 = vadd.f32 0.0, %v4112
        %v4114 = vpop.f32.mrf.mxu0
        %4115 = vdwg.mxu0
        %v4116 = vadd.f32 %v3821, %v4054
        %v4117 = vadd.f32 %v3822, %v4057
        %v4118 = vadd.f32 %v3823, %v4062
        %v4119 = vadd.f32 %v3824, %v4065
        %v4120 = vadd.f32 %v3825, %v4070
        %v4121 = vadd.f32 %v3826, %v4073
        %v4122 = vadd.f32 %v3827, %v4078
        %v4123 = vadd.f32 %v3828, %v4081
        %v4124 = vadd.f32 %v3829, %v4086
        %v4125 = vadd.f32 %v3830, %v4089
        %v4126 = vadd.f32 %v3831, %v4094
        %v4127 = vadd.f32 %v3832, %v4097
        %v4128 = vadd.f32 %v3833, %v4102
        %v4129 = vadd.f32 %v3834, %v4105
        %v4130 = vadd.f32 %v3835, %v4110
        %v4131 = vadd.f32 %v3836, %v4113
        %s4132 = scalar_lea.vmem %s5, 196
        %v4133 = vld [vmem:[%s4132] sm:$0xf]
        %v4134 = vld [vmem:[%s4132 + $0x4] sm:$0xf]
        %v4135 = vld [vmem:[%s4132 + $0x8] sm:$0xf]
        %v4136 = vld [vmem:[%s4132 + $0xc] sm:$0xf]
        %v4137 = vld [vmem:[%s4132 + $0x10] sm:$0xf]
        %v4138 = vld [vmem:[%s4132 + $0x14] sm:$0xf]
        %v4139 = vld [vmem:[%s4132 + $0x18] sm:$0x1]
        %v4147 = vunpack.c.l.b16 %v4133
        %v4148 = vunpack.c.l.b16 %v4134
        %v4149 = vunpack.c.l.b16 %v4135
        %v4150 = vunpack.c.l.b16 %v4136
        %v4151 = vunpack.c.l.b16 %v4137
        %v4152 = vunpack.c.l.b16 %v4138
        %v4153 = vunpack.c.l.b16 %v4139
        %v4154 = vpack.c.b16 %v4148, %v4147
        %v4155 = vpack.c.b16 %v4150, %v4149
        %v4156 = vpack.c.b16 %v4152, %v4151
        %v4157 = vpack.c.b16 %v4153, %v4153
        %v4162 = vand.u32 %v4157, %v2127
        %4164 = vmatprep.subr.bf16.mxu0 0
        %4165 = vmatpush1.bf16.msra.mxu0 0
        %4166 = vmatprep.subr.bf16.mxu0 0
        %4167 = vmatpush1.bf16.msra.mxu0 0
        %4168 = vmatprep.subr.bf16.mxu0 0
        %4169 = vmatpush1.bf16.msra.mxu0 0
        %4170 = vmatprep.subr.bf16.mxu0 0
        %4171 = vmatpush1.bf16.msra.mxu0 0
        %4172 = vmatprep.subr.bf16.mxu0 0
        %4173 = vmatpush1.bf16.msra.mxu0 %v4162
        %4174 = vmatprep.subr.bf16.mxu0 0
        %4175 = vmatpush1.bf16.msra.mxu0 %v4156
        %4176 = vmatprep.subr.bf16.mxu0 0
        %4177 = vmatpush1.bf16.msra.mxu0 %v4155
        %4178 = vmatprep.subr.bf16.mxu0 0
        %4179 = vmatpush1.bf16.msra.mxu0 %v4154
        %4180 = vmatprep.subr.bf16.mxu0 0
        %4181 = vmatpush2.bf16.msra.mxu0 0
        %4182 = vmatprep.subr.bf16.mxu0 0
        %4183 = vmatpush2.bf16.msra.mxu0 0
        %4184 = vmatprep.subr.bf16.mxu0 0
        %4185 = vmatpush2.bf16.msra.mxu0 0
        %4186 = vmatprep.subr.bf16.mxu0 0
        %4187 = vmatpush2.bf16.msra.mxu0 0
        %4188 = vmatprep.subr.bf16.mxu0 0
        %4189 = vmatpush2.bf16.msra.mxu0 0
        %4190 = vmatprep.subr.bf16.mxu0 0
        %4191 = vmatpush2.bf16.msra.mxu0 0
        %4192 = vmatprep.subr.bf16.mxu0 0
        %4193 = vmatpush2.bf16.msra.mxu0 0
        %4194 = vmatprep.subr.bf16.mxu0 0
        %4195 = vmatpush2.bf16.msra.mxu0 0
        %4196 = vmatprep.mubr.bf16.mxu0 0
        %4197 = vmatmul.mubr.bf16.gmra.mxu0 %v2114
        %v4198 = vpop.f32.mrf.mxu0
        %v4199 = vadd.f32 0.0, %v4198
        %v4200 = vpop.f32.mrf.mxu0
        %v4201 = vpop.f32.mrf.mxu0
        %v4202 = vadd.f32 0.0, %v4201
        %v4203 = vpop.f32.mrf.mxu0
        %4204 = vmatprep.mubr.bf16.mxu0 0
        %4205 = vmatmul.mubr.bf16.gmra.mxu0 %v2117
        %v4206 = vpop.f32.mrf.mxu0
        %v4207 = vadd.f32 0.0, %v4206
        %v4208 = vpop.f32.mrf.mxu0
        %v4209 = vpop.f32.mrf.mxu0
        %v4210 = vadd.f32 0.0, %v4209
        %v4211 = vpop.f32.mrf.mxu0
        %4212 = vmatprep.mubr.bf16.mxu0 0
        %4213 = vmatmul.mubr.bf16.gmra.mxu0 %v2120
        %v4214 = vpop.f32.mrf.mxu0
        %v4215 = vadd.f32 0.0, %v4214
        %v4216 = vpop.f32.mrf.mxu0
        %v4217 = vpop.f32.mrf.mxu0
        %v4218 = vadd.f32 0.0, %v4217
        %v4219 = vpop.f32.mrf.mxu0
        %4220 = vmatprep.mubr.bf16.mxu0 0
        %4221 = vmatmul.mubr.bf16.gmra.mxu0 %v2123
        %v4222 = vpop.f32.mrf.mxu0
        %v4223 = vadd.f32 0.0, %v4222
        %v4224 = vpop.f32.mrf.mxu0
        %v4225 = vpop.f32.mrf.mxu0
        %v4226 = vadd.f32 0.0, %v4225
        %v4227 = vpop.f32.mrf.mxu0
        %4228 = vdwg.mxu0
        %v4229 = vpack.c.bf16 %v4202, %v4199
        %v4230 = vpack.c.bf16 %v4210, %v4207
        %v4231 = vpack.c.bf16 %v4218, %v4215
        %v4232 = vpack.c.bf16 %v4226, %v4223
        %s4233 = scalar_lea.vmem %s6, 448
        %v4234 = vld [vmem:[%s4233] sm:$0xf]
        %v4235 = vld [vmem:[%s4233 + $0x4] sm:$0xf]
        %v4236 = vld [vmem:[%s4233 + $0x8] sm:$0xf]
        %v4237 = vld [vmem:[%s4233 + $0xc] sm:$0xf]
        %v4238 = vld [vmem:[%s4233 + $0x10] sm:$0xf]
        %v4239 = vld [vmem:[%s4233 + $0x14] sm:$0xf]
        %v4240 = vld [vmem:[%s4233 + $0x18] sm:$0xf]
        %v4241 = vld [vmem:[%s4233 + $0x1c] sm:$0xf]
        %v4242 = vld [vmem:[%s4233 + $0x20] sm:$0xf]
        %v4243 = vld [vmem:[%s4233 + $0x24] sm:$0xf]
        %v4244 = vld [vmem:[%s4233 + $0x28] sm:$0xf]
        %v4245 = vld [vmem:[%s4233 + $0x2c] sm:$0xf]
        %v4246 = vld [vmem:[%s4233 + $0x30] sm:$0xf]
        %v4247 = vld [vmem:[%s4233 + $0x34] sm:$0xf]
        %v4248 = vld [vmem:[%s4233 + $0x38] sm:$0xf]
        %v4249 = vld [vmem:[%s4233 + $0x3c] sm:$0xf]
        %v4266 = vunpack.c.l.b16 %v4234
        %v4267 = vunpack.c.l.b16 %v4235
        %v4268 = vunpack.c.l.b16 %v4236
        %v4269 = vunpack.c.l.b16 %v4237
        %v4270 = vunpack.c.l.b16 %v4238
        %v4271 = vunpack.c.l.b16 %v4239
        %v4272 = vunpack.c.l.b16 %v4240
        %v4273 = vunpack.c.l.b16 %v4241
        %v4274 = vunpack.c.l.b16 %v4242
        %v4275 = vunpack.c.l.b16 %v4243
        %v4276 = vunpack.c.l.b16 %v4244
        %v4277 = vunpack.c.l.b16 %v4245
        %v4278 = vunpack.c.l.b16 %v4246
        %v4279 = vunpack.c.l.b16 %v4247
        %v4280 = vunpack.c.l.b16 %v4248
        %v4281 = vunpack.c.l.b16 %v4249
        %v4282 = vpack.c.b16 %v4267, %v4266
        %v4283 = vpack.c.b16 %v4269, %v4268
        %v4284 = vpack.c.b16 %v4271, %v4270
        %v4285 = vpack.c.b16 %v4273, %v4272
        %v4286 = vpack.c.b16 %v4275, %v4274
        %v4287 = vpack.c.b16 %v4277, %v4276
        %v4288 = vpack.c.b16 %v4279, %v4278
        %v4289 = vpack.c.b16 %v4281, %v4280
        %v4291 = vsel %vm2374, %v4282, 0
        %v4294 = vsel %vm2374, %v4283, 0
        %v4297 = vsel %vm2374, %v4284, 0
        %v4300 = vsel %vm2374, %v4285, 0
        %v4303 = vsel %vm2374, %v4286, 0
        %v4306 = vsel %vm2374, %v4287, 0
        %v4309 = vsel %vm2374, %v4288, 0
        %v4312 = vsel %vm2374, %v4289, 0
        %4314 = vmatprep.subr.bf16.mxu0 0
        %4315 = vmatpush1.bf16.msra.mxu0 0
        %4316 = vmatprep.subr.bf16.mxu0 0
        %4317 = vmatpush1.bf16.msra.mxu0 0
        %4318 = vmatprep.subr.bf16.mxu0 0
        %4319 = vmatpush1.bf16.msra.mxu0 0
        %4320 = vmatprep.subr.bf16.mxu0 0
        %4321 = vmatpush1.bf16.msra.mxu0 0
        %4322 = vmatprep.subr.bf16.mxu0 0
        %4323 = vmatpush1.bf16.msra.mxu0 %v4232
        %4324 = vmatprep.subr.bf16.mxu0 0
        %4325 = vmatpush1.bf16.msra.mxu0 %v4231
        %4326 = vmatprep.subr.bf16.mxu0 0
        %4327 = vmatpush1.bf16.msra.mxu0 %v4230
        %4328 = vmatprep.subr.bf16.mxu0 0
        %4329 = vmatpush1.bf16.msra.mxu0 %v4229
        %4330 = vmatprep.subr.bf16.mxu0 0
        %4331 = vmatpush2.bf16.msra.mxu0 0
        %4332 = vmatprep.subr.bf16.mxu0 0
        %4333 = vmatpush2.bf16.msra.mxu0 0
        %4334 = vmatprep.subr.bf16.mxu0 0
        %4335 = vmatpush2.bf16.msra.mxu0 0
        %4336 = vmatprep.subr.bf16.mxu0 0
        %4337 = vmatpush2.bf16.msra.mxu0 0
        %4338 = vmatprep.subr.bf16.mxu0 0
        %4339 = vmatpush2.bf16.msra.mxu0 0
        %4340 = vmatprep.subr.bf16.mxu0 0
        %4341 = vmatpush2.bf16.msra.mxu0 0
        %4342 = vmatprep.subr.bf16.mxu0 0
        %4343 = vmatpush2.bf16.msra.mxu0 0
        %4344 = vmatprep.subr.bf16.mxu0 0
        %4345 = vmatpush2.bf16.msra.mxu0 0
        %4346 = vmatprep.mubr.bf16.mxu0 0
        %4347 = vmatmul.mubr.bf16.gmra.mxu0 %v4291
        %v4348 = vpop.f32.mrf.mxu0
        %v4349 = vadd.f32 0.0, %v4348
        %v4350 = vpop.f32.mrf.mxu0
        %v4351 = vpop.f32.mrf.mxu0
        %v4352 = vadd.f32 0.0, %v4351
        %v4353 = vpop.f32.mrf.mxu0
        %4354 = vmatprep.mubr.bf16.mxu0 0
        %4355 = vmatmul.mubr.bf16.gmra.mxu0 %v4294
        %v4356 = vpop.f32.mrf.mxu0
        %v4357 = vadd.f32 0.0, %v4356
        %v4358 = vpop.f32.mrf.mxu0
        %v4359 = vpop.f32.mrf.mxu0
        %v4360 = vadd.f32 0.0, %v4359
        %v4361 = vpop.f32.mrf.mxu0
        %4362 = vmatprep.mubr.bf16.mxu0 0
        %4363 = vmatmul.mubr.bf16.gmra.mxu0 %v4297
        %v4364 = vpop.f32.mrf.mxu0
        %v4365 = vadd.f32 0.0, %v4364
        %v4366 = vpop.f32.mrf.mxu0
        %v4367 = vpop.f32.mrf.mxu0
        %v4368 = vadd.f32 0.0, %v4367
        %v4369 = vpop.f32.mrf.mxu0
        %4370 = vmatprep.mubr.bf16.mxu0 0
        %4371 = vmatmul.mubr.bf16.gmra.mxu0 %v4300
        %v4372 = vpop.f32.mrf.mxu0
        %v4373 = vadd.f32 0.0, %v4372
        %v4374 = vpop.f32.mrf.mxu0
        %v4375 = vpop.f32.mrf.mxu0
        %v4376 = vadd.f32 0.0, %v4375
        %v4377 = vpop.f32.mrf.mxu0
        %4378 = vmatprep.mubr.bf16.mxu0 0
        %4379 = vmatmul.mubr.bf16.gmra.mxu0 %v4303
        %v4380 = vpop.f32.mrf.mxu0
        %v4381 = vadd.f32 0.0, %v4380
        %v4382 = vpop.f32.mrf.mxu0
        %v4383 = vpop.f32.mrf.mxu0
        %v4384 = vadd.f32 0.0, %v4383
        %v4385 = vpop.f32.mrf.mxu0
        %4386 = vmatprep.mubr.bf16.mxu0 0
        %4387 = vmatmul.mubr.bf16.gmra.mxu0 %v4306
        %v4388 = vpop.f32.mrf.mxu0
        %v4389 = vadd.f32 0.0, %v4388
        %v4390 = vpop.f32.mrf.mxu0
        %v4391 = vpop.f32.mrf.mxu0
        %v4392 = vadd.f32 0.0, %v4391
        %v4393 = vpop.f32.mrf.mxu0
        %4394 = vmatprep.mubr.bf16.mxu0 0
        %4395 = vmatmul.mubr.bf16.gmra.mxu0 %v4309
        %v4396 = vpop.f32.mrf.mxu0
        %v4397 = vadd.f32 0.0, %v4396
        %v4398 = vpop.f32.mrf.mxu0
        %v4399 = vpop.f32.mrf.mxu0
        %v4400 = vadd.f32 0.0, %v4399
        %v4401 = vpop.f32.mrf.mxu0
        %4402 = vmatprep.mubr.bf16.mxu0 0
        %4403 = vmatmul.mubr.bf16.gmra.mxu0 %v4312
        %v4404 = vpop.f32.mrf.mxu0
        %v4405 = vadd.f32 0.0, %v4404
        %v4406 = vpop.f32.mrf.mxu0
        %v4407 = vpop.f32.mrf.mxu0
        %v4408 = vadd.f32 0.0, %v4407
        %v4409 = vpop.f32.mrf.mxu0
        %4410 = vdwg.mxu0
        %v4411 = vadd.f32 %v4116, %v4349
        %v4412 = vadd.f32 %v4117, %v4352
        %v4413 = vadd.f32 %v4118, %v4357
        %v4414 = vadd.f32 %v4119, %v4360
        %v4415 = vadd.f32 %v4120, %v4365
        %v4416 = vadd.f32 %v4121, %v4368
        %v4417 = vadd.f32 %v4122, %v4373
        %v4418 = vadd.f32 %v4123, %v4376
        %v4419 = vadd.f32 %v4124, %v4381
        %v4420 = vadd.f32 %v4125, %v4384
        %v4421 = vadd.f32 %v4126, %v4389
        %v4422 = vadd.f32 %v4127, %v4392
        %v4423 = vadd.f32 %v4128, %v4397
        %v4424 = vadd.f32 %v4129, %v4400
        %v4425 = vadd.f32 %v4130, %v4405
        %v4426 = vadd.f32 %v4131, %v4408
        %s4427 = scalar_lea.vmem %s5, 224
        %v4428 = vld [vmem:[%s4427] sm:$0xf]
        %v4429 = vld [vmem:[%s4427 + $0x4] sm:$0xf]
        %v4430 = vld [vmem:[%s4427 + $0x8] sm:$0xf]
        %v4431 = vld [vmem:[%s4427 + $0xc] sm:$0xf]
        %v4432 = vld [vmem:[%s4427 + $0x10] sm:$0xf]
        %v4433 = vld [vmem:[%s4427 + $0x14] sm:$0xf]
        %v4434 = vld [vmem:[%s4427 + $0x18] sm:$0x1]
        %v4442 = vunpack.c.l.b16 %v4428
        %v4443 = vunpack.c.l.b16 %v4429
        %v4444 = vunpack.c.l.b16 %v4430
        %v4445 = vunpack.c.l.b16 %v4431
        %v4446 = vunpack.c.l.b16 %v4432
        %v4447 = vunpack.c.l.b16 %v4433
        %v4448 = vunpack.c.l.b16 %v4434
        %v4449 = vpack.c.b16 %v4443, %v4442
        %v4450 = vpack.c.b16 %v4445, %v4444
        %v4451 = vpack.c.b16 %v4447, %v4446
        %v4452 = vpack.c.b16 %v4448, %v4448
        %v4457 = vand.u32 %v4452, %v2127
        %4459 = vmatprep.subr.bf16.mxu0 0
        %4460 = vmatpush1.bf16.msra.mxu0 0
        %4461 = vmatprep.subr.bf16.mxu0 0
        %4462 = vmatpush1.bf16.msra.mxu0 0
        %4463 = vmatprep.subr.bf16.mxu0 0
        %4464 = vmatpush1.bf16.msra.mxu0 0
        %4465 = vmatprep.subr.bf16.mxu0 0
        %4466 = vmatpush1.bf16.msra.mxu0 0
        %4467 = vmatprep.subr.bf16.mxu0 0
        %4468 = vmatpush1.bf16.msra.mxu0 %v4457
        %4469 = vmatprep.subr.bf16.mxu0 0
        %4470 = vmatpush1.bf16.msra.mxu0 %v4451
        %4471 = vmatprep.subr.bf16.mxu0 0
        %4472 = vmatpush1.bf16.msra.mxu0 %v4450
        %4473 = vmatprep.subr.bf16.mxu0 0
        %4474 = vmatpush1.bf16.msra.mxu0 %v4449
        %4475 = vmatprep.subr.bf16.mxu0 0
        %4476 = vmatpush2.bf16.msra.mxu0 0
        %4477 = vmatprep.subr.bf16.mxu0 0
        %4478 = vmatpush2.bf16.msra.mxu0 0
        %4479 = vmatprep.subr.bf16.mxu0 0
        %4480 = vmatpush2.bf16.msra.mxu0 0
        %4481 = vmatprep.subr.bf16.mxu0 0
        %4482 = vmatpush2.bf16.msra.mxu0 0
        %4483 = vmatprep.subr.bf16.mxu0 0
        %4484 = vmatpush2.bf16.msra.mxu0 0
        %4485 = vmatprep.subr.bf16.mxu0 0
        %4486 = vmatpush2.bf16.msra.mxu0 0
        %4487 = vmatprep.subr.bf16.mxu0 0
        %4488 = vmatpush2.bf16.msra.mxu0 0
        %4489 = vmatprep.subr.bf16.mxu0 0
        %4490 = vmatpush2.bf16.msra.mxu0 0
        %4491 = vmatprep.mubr.bf16.mxu0 0
        %4492 = vmatmul.mubr.bf16.gmra.mxu0 %v2114
        %v4493 = vpop.f32.mrf.mxu0
        %v4494 = vadd.f32 0.0, %v4493
        %v4495 = vpop.f32.mrf.mxu0
        %v4496 = vpop.f32.mrf.mxu0
        %v4497 = vadd.f32 0.0, %v4496
        %v4498 = vpop.f32.mrf.mxu0
        %4499 = vmatprep.mubr.bf16.mxu0 0
        %4500 = vmatmul.mubr.bf16.gmra.mxu0 %v2117
        %v4501 = vpop.f32.mrf.mxu0
        %v4502 = vadd.f32 0.0, %v4501
        %v4503 = vpop.f32.mrf.mxu0
        %v4504 = vpop.f32.mrf.mxu0
        %v4505 = vadd.f32 0.0, %v4504
        %v4506 = vpop.f32.mrf.mxu0
        %4507 = vmatprep.mubr.bf16.mxu0 0
        %4508 = vmatmul.mubr.bf16.gmra.mxu0 %v2120
        %v4509 = vpop.f32.mrf.mxu0
        %v4510 = vadd.f32 0.0, %v4509
        %v4511 = vpop.f32.mrf.mxu0
        %v4512 = vpop.f32.mrf.mxu0
        %v4513 = vadd.f32 0.0, %v4512
        %v4514 = vpop.f32.mrf.mxu0
        %4515 = vmatprep.mubr.bf16.mxu0 0
        %4516 = vmatmul.mubr.bf16.gmra.mxu0 %v2123
        %v4517 = vpop.f32.mrf.mxu0
        %v4518 = vadd.f32 0.0, %v4517
        %v4519 = vpop.f32.mrf.mxu0
        %v4520 = vpop.f32.mrf.mxu0
        %v4521 = vadd.f32 0.0, %v4520
        %v4522 = vpop.f32.mrf.mxu0
        %4523 = vdwg.mxu0
        %v4524 = vpack.c.bf16 %v4497, %v4494
        %v4525 = vpack.c.bf16 %v4505, %v4502
        %v4526 = vpack.c.bf16 %v4513, %v4510
        %v4527 = vpack.c.bf16 %v4521, %v4518
        %s4528 = scalar_lea.vmem %s6, 512
        %v4529 = vld [vmem:[%s4528] sm:$0xf]
        %v4530 = vld [vmem:[%s4528 + $0x4] sm:$0xf]
        %v4531 = vld [vmem:[%s4528 + $0x8] sm:$0xf]
        %v4532 = vld [vmem:[%s4528 + $0xc] sm:$0xf]
        %v4533 = vld [vmem:[%s4528 + $0x10] sm:$0xf]
        %v4534 = vld [vmem:[%s4528 + $0x14] sm:$0xf]
        %v4535 = vld [vmem:[%s4528 + $0x18] sm:$0xf]
        %v4536 = vld [vmem:[%s4528 + $0x1c] sm:$0xf]
        %v4537 = vld [vmem:[%s4528 + $0x20] sm:$0xf]
        %v4538 = vld [vmem:[%s4528 + $0x24] sm:$0xf]
        %v4539 = vld [vmem:[%s4528 + $0x28] sm:$0xf]
        %v4540 = vld [vmem:[%s4528 + $0x2c] sm:$0xf]
        %v4541 = vld [vmem:[%s4528 + $0x30] sm:$0xf]
        %v4542 = vld [vmem:[%s4528 + $0x34] sm:$0xf]
        %v4543 = vld [vmem:[%s4528 + $0x38] sm:$0xf]
        %v4544 = vld [vmem:[%s4528 + $0x3c] sm:$0xf]
        %v4561 = vunpack.c.l.b16 %v4529
        %v4562 = vunpack.c.l.b16 %v4530
        %v4563 = vunpack.c.l.b16 %v4531
        %v4564 = vunpack.c.l.b16 %v4532
        %v4565 = vunpack.c.l.b16 %v4533
        %v4566 = vunpack.c.l.b16 %v4534
        %v4567 = vunpack.c.l.b16 %v4535
        %v4568 = vunpack.c.l.b16 %v4536
        %v4569 = vunpack.c.l.b16 %v4537
        %v4570 = vunpack.c.l.b16 %v4538
        %v4571 = vunpack.c.l.b16 %v4539
        %v4572 = vunpack.c.l.b16 %v4540
        %v4573 = vunpack.c.l.b16 %v4541
        %v4574 = vunpack.c.l.b16 %v4542
        %v4575 = vunpack.c.l.b16 %v4543
        %v4576 = vunpack.c.l.b16 %v4544
        %v4577 = vpack.c.b16 %v4562, %v4561
        %v4578 = vpack.c.b16 %v4564, %v4563
        %v4579 = vpack.c.b16 %v4566, %v4565
        %v4580 = vpack.c.b16 %v4568, %v4567
        %v4581 = vpack.c.b16 %v4570, %v4569
        %v4582 = vpack.c.b16 %v4572, %v4571
        %v4583 = vpack.c.b16 %v4574, %v4573
        %v4584 = vpack.c.b16 %v4576, %v4575
        %v4586 = vsel %vm2374, %v4577, 0
        %v4589 = vsel %vm2374, %v4578, 0
        %v4592 = vsel %vm2374, %v4579, 0
        %v4595 = vsel %vm2374, %v4580, 0
        %v4598 = vsel %vm2374, %v4581, 0
        %v4601 = vsel %vm2374, %v4582, 0
        %v4604 = vsel %vm2374, %v4583, 0
        %v4607 = vsel %vm2374, %v4584, 0
        %4609 = vmatprep.subr.bf16.mxu0 0
        %4610 = vmatpush1.bf16.msra.mxu0 0
        %4611 = vmatprep.subr.bf16.mxu0 0
        %4612 = vmatpush1.bf16.msra.mxu0 0
        %4613 = vmatprep.subr.bf16.mxu0 0
        %4614 = vmatpush1.bf16.msra.mxu0 0
        %4615 = vmatprep.subr.bf16.mxu0 0
        %4616 = vmatpush1.bf16.msra.mxu0 0
        %4617 = vmatprep.subr.bf16.mxu0 0
        %4618 = vmatpush1.bf16.msra.mxu0 %v4527
        %4619 = vmatprep.subr.bf16.mxu0 0
        %4620 = vmatpush1.bf16.msra.mxu0 %v4526
        %4621 = vmatprep.subr.bf16.mxu0 0
        %4622 = vmatpush1.bf16.msra.mxu0 %v4525
        %4623 = vmatprep.subr.bf16.mxu0 0
        %4624 = vmatpush1.bf16.msra.mxu0 %v4524
        %4625 = vmatprep.subr.bf16.mxu0 0
        %4626 = vmatpush2.bf16.msra.mxu0 0
        %4627 = vmatprep.subr.bf16.mxu0 0
        %4628 = vmatpush2.bf16.msra.mxu0 0
        %4629 = vmatprep.subr.bf16.mxu0 0
        %4630 = vmatpush2.bf16.msra.mxu0 0
        %4631 = vmatprep.subr.bf16.mxu0 0
        %4632 = vmatpush2.bf16.msra.mxu0 0
        %4633 = vmatprep.subr.bf16.mxu0 0
        %4634 = vmatpush2.bf16.msra.mxu0 0
        %4635 = vmatprep.subr.bf16.mxu0 0
        %4636 = vmatpush2.bf16.msra.mxu0 0
        %4637 = vmatprep.subr.bf16.mxu0 0
        %4638 = vmatpush2.bf16.msra.mxu0 0
        %4639 = vmatprep.subr.bf16.mxu0 0
        %4640 = vmatpush2.bf16.msra.mxu0 0
        %4641 = vmatprep.mubr.bf16.mxu0 0
        %4642 = vmatmul.mubr.bf16.gmra.mxu0 %v4586
        %v4643 = vpop.f32.mrf.mxu0
        %v4644 = vadd.f32 0.0, %v4643
        %v4645 = vpop.f32.mrf.mxu0
        %v4646 = vpop.f32.mrf.mxu0
        %v4647 = vadd.f32 0.0, %v4646
        %v4648 = vpop.f32.mrf.mxu0
        %4649 = vmatprep.mubr.bf16.mxu0 0
        %4650 = vmatmul.mubr.bf16.gmra.mxu0 %v4589
        %v4651 = vpop.f32.mrf.mxu0
        %v4652 = vadd.f32 0.0, %v4651
        %v4653 = vpop.f32.mrf.mxu0
        %v4654 = vpop.f32.mrf.mxu0
        %v4655 = vadd.f32 0.0, %v4654
        %v4656 = vpop.f32.mrf.mxu0
        %4657 = vmatprep.mubr.bf16.mxu0 0
        %4658 = vmatmul.mubr.bf16.gmra.mxu0 %v4592
        %v4659 = vpop.f32.mrf.mxu0
        %v4660 = vadd.f32 0.0, %v4659
        %v4661 = vpop.f32.mrf.mxu0
        %v4662 = vpop.f32.mrf.mxu0
        %v4663 = vadd.f32 0.0, %v4662
        %v4664 = vpop.f32.mrf.mxu0
        %4665 = vmatprep.mubr.bf16.mxu0 0
        %4666 = vmatmul.mubr.bf16.gmra.mxu0 %v4595
        %v4667 = vpop.f32.mrf.mxu0
        %v4668 = vadd.f32 0.0, %v4667
        %v4669 = vpop.f32.mrf.mxu0
        %v4670 = vpop.f32.mrf.mxu0
        %v4671 = vadd.f32 0.0, %v4670
        %v4672 = vpop.f32.mrf.mxu0
        %4673 = vmatprep.mubr.bf16.mxu0 0
        %4674 = vmatmul.mubr.bf16.gmra.mxu0 %v4598
        %v4675 = vpop.f32.mrf.mxu0
        %v4676 = vadd.f32 0.0, %v4675
        %v4677 = vpop.f32.mrf.mxu0
        %v4678 = vpop.f32.mrf.mxu0
        %v4679 = vadd.f32 0.0, %v4678
        %v4680 = vpop.f32.mrf.mxu0
        %4681 = vmatprep.mubr.bf16.mxu0 0
        %4682 = vmatmul.mubr.bf16.gmra.mxu0 %v4601
        %v4683 = vpop.f32.mrf.mxu0
        %v4684 = vadd.f32 0.0, %v4683
        %v4685 = vpop.f32.mrf.mxu0
        %v4686 = vpop.f32.mrf.mxu0
        %v4687 = vadd.f32 0.0, %v4686
        %v4688 = vpop.f32.mrf.mxu0
        %4689 = vmatprep.mubr.bf16.mxu0 0
        %4690 = vmatmul.mubr.bf16.gmra.mxu0 %v4604
        %v4691 = vpop.f32.mrf.mxu0
        %v4692 = vadd.f32 0.0, %v4691
        %v4693 = vpop.f32.mrf.mxu0
        %v4694 = vpop.f32.mrf.mxu0
        %v4695 = vadd.f32 0.0, %v4694
        %v4696 = vpop.f32.mrf.mxu0
        %4697 = vmatprep.mubr.bf16.mxu0 0
        %4698 = vmatmul.mubr.bf16.gmra.mxu0 %v4607
        %v4699 = vpop.f32.mrf.mxu0
        %v4700 = vadd.f32 0.0, %v4699
        %v4701 = vpop.f32.mrf.mxu0
        %v4702 = vpop.f32.mrf.mxu0
        %v4703 = vadd.f32 0.0, %v4702
        %v4704 = vpop.f32.mrf.mxu0
        %4705 = vdwg.mxu0
        %v4706 = vadd.f32 %v4411, %v4644
        %v4707 = vadd.f32 %v4412, %v4647
        %v4708 = vadd.f32 %v4413, %v4652
        %v4709 = vadd.f32 %v4414, %v4655
        %v4710 = vadd.f32 %v4415, %v4660
        %v4711 = vadd.f32 %v4416, %v4663
        %v4712 = vadd.f32 %v4417, %v4668
        %v4713 = vadd.f32 %v4418, %v4671
        %v4714 = vadd.f32 %v4419, %v4676
        %v4715 = vadd.f32 %v4420, %v4679
        %v4716 = vadd.f32 %v4421, %v4684
        %v4717 = vadd.f32 %v4422, %v4687
        %v4718 = vadd.f32 %v4423, %v4692
        %v4719 = vadd.f32 %v4424, %v4695
        %v4720 = vadd.f32 %v4425, %v4700
        %v4721 = vadd.f32 %v4426, %v4703
        %v4722 = vld [vmem:[%s7] sm:$0xff]
        %v4723 = vld [vmem:[%s7 + $0x8] sm:$0xff]
        %v4724 = vld [vmem:[%s7 + $0x10] sm:$0xff]
        %v4725 = vld [vmem:[%s7 + $0x18] sm:$0xff]
        %v4726 = vld [vmem:[%s7 + $0x20] sm:$0xff]
        %v4727 = vld [vmem:[%s7 + $0x28] sm:$0xff]
        %v4728 = vld [vmem:[%s7 + $0x30] sm:$0xff]
        %v4729 = vld [vmem:[%s7 + $0x38] sm:$0xff]
        %v4730 = vld [vmem:[%s7 + $0x40] sm:$0xff]
        %v4731 = vld [vmem:[%s7 + $0x48] sm:$0xff]
        %v4732 = vld [vmem:[%s7 + $0x50] sm:$0xff]
        %v4733 = vld [vmem:[%s7 + $0x58] sm:$0xff]
        %v4734 = vld [vmem:[%s7 + $0x60] sm:$0xff]
        %v4735 = vld [vmem:[%s7 + $0x68] sm:$0xff]
        %v4736 = vld [vmem:[%s7 + $0x70] sm:$0xff]
        %v4737 = vld [vmem:[%s7 + $0x78] sm:$0xff]
        %4739 = vset.pattern.permute.xlu0 0
        %4740 = vperm.xlu0 %4739, %v4722
        %v4741 = vpop.permute.xlu0 %4740
        %4744 = vset.pattern.permute.xlu0 0
        %4745 = vperm.xlu0 %4744, %v4723
        %v4746 = vpop.permute.xlu0 %4745
        %4749 = vset.pattern.permute.xlu0 0
        %4750 = vperm.xlu0 %4749, %v4724
        %v4751 = vpop.permute.xlu0 %4750
        %4754 = vset.pattern.permute.xlu0 0
        %4755 = vperm.xlu0 %4754, %v4725
        %v4756 = vpop.permute.xlu0 %4755
        %4759 = vset.pattern.permute.xlu0 0
        %4760 = vperm.xlu0 %4759, %v4726
        %v4761 = vpop.permute.xlu0 %4760
        %4764 = vset.pattern.permute.xlu0 0
        %4765 = vperm.xlu0 %4764, %v4727
        %v4766 = vpop.permute.xlu0 %4765
        %4769 = vset.pattern.permute.xlu0 0
        %4770 = vperm.xlu0 %4769, %v4728
        %v4771 = vpop.permute.xlu0 %4770
        %4774 = vset.pattern.permute.xlu0 0
        %4775 = vperm.xlu0 %4774, %v4729
        %v4776 = vpop.permute.xlu0 %4775
        %4779 = vset.pattern.permute.xlu0 0
        %4780 = vperm.xlu0 %4779, %v4730
        %v4781 = vpop.permute.xlu0 %4780
        %4784 = vset.pattern.permute.xlu0 0
        %4785 = vperm.xlu0 %4784, %v4731
        %v4786 = vpop.permute.xlu0 %4785
        %4789 = vset.pattern.permute.xlu0 0
        %4790 = vperm.xlu0 %4789, %v4732
        %v4791 = vpop.permute.xlu0 %4790
        %4794 = vset.pattern.permute.xlu0 0
        %4795 = vperm.xlu0 %4794, %v4733
        %v4796 = vpop.permute.xlu0 %4795
        %4799 = vset.pattern.permute.xlu0 0
        %4800 = vperm.xlu0 %4799, %v4734
        %v4801 = vpop.permute.xlu0 %4800
        %4804 = vset.pattern.permute.xlu0 0
        %4805 = vperm.xlu0 %4804, %v4735
        %v4806 = vpop.permute.xlu0 %4805
        %4809 = vset.pattern.permute.xlu0 0
        %4810 = vperm.xlu0 %4809, %v4736
        %v4811 = vpop.permute.xlu0 %4810
        %4814 = vset.pattern.permute.xlu0 0
        %4815 = vperm.xlu0 %4814, %v4737
        %v4816 = vpop.permute.xlu0 %4815
        %v4818 = vadd.f32 %v4706, %v4741
        %v4819 = vadd.f32 %v4707, %v4746
        %v4820 = vadd.f32 %v4708, %v4751
        %v4821 = vadd.f32 %v4709, %v4756
        %v4822 = vadd.f32 %v4710, %v4761
        %v4823 = vadd.f32 %v4711, %v4766
        %v4824 = vadd.f32 %v4712, %v4771
        %v4825 = vadd.f32 %v4713, %v4776
        %v4826 = vadd.f32 %v4714, %v4781
        %v4827 = vadd.f32 %v4715, %v4786
        %v4828 = vadd.f32 %v4716, %v4791
        %v4829 = vadd.f32 %v4717, %v4796
        %v4830 = vadd.f32 %v4718, %v4801
        %v4831 = vadd.f32 %v4719, %v4806
        %v4832 = vadd.f32 %v4720, %v4811
        %v4833 = vadd.f32 %v4721, %v4816
        %vm4834 = vcmp.ge.f32.partialorder %v4818, 0.0
        %vm4835 = vcmp.ge.f32.partialorder %v4819, 0.0
        %vm4836 = vcmp.ge.f32.partialorder %v4820, 0.0
        %vm4837 = vcmp.ge.f32.partialorder %v4821, 0.0
        %vm4838 = vcmp.ge.f32.partialorder %v4822, 0.0
        %vm4839 = vcmp.ge.f32.partialorder %v4823, 0.0
        %vm4840 = vcmp.ge.f32.partialorder %v4824, 0.0
        %vm4841 = vcmp.ge.f32.partialorder %v4825, 0.0
        %vm4842 = vcmp.ge.f32.partialorder %v4826, 0.0
        %vm4843 = vcmp.ge.f32.partialorder %v4827, 0.0
        %vm4844 = vcmp.ge.f32.partialorder %v4828, 0.0
        %vm4845 = vcmp.ge.f32.partialorder %v4829, 0.0
        %vm4846 = vcmp.ge.f32.partialorder %v4830, 0.0
        %vm4847 = vcmp.ge.f32.partialorder %v4831, 0.0
        %vm4848 = vcmp.ge.f32.partialorder %v4832, 0.0
        %vm4849 = vcmp.ge.f32.partialorder %v4833, 0.0
        %v4850 = vmul.f32 %v4818, 0.01
        %v4851 = vmul.f32 %v4819, 0.01
        %v4852 = vmul.f32 %v4820, 0.01
        %v4853 = vmul.f32 %v4821, 0.01
        %v4854 = vmul.f32 %v4822, 0.01
        %v4855 = vmul.f32 %v4823, 0.01
        %v4856 = vmul.f32 %v4824, 0.01
        %v4857 = vmul.f32 %v4825, 0.01
        %v4858 = vmul.f32 %v4826, 0.01
        %v4859 = vmul.f32 %v4827, 0.01
        %v4860 = vmul.f32 %v4828, 0.01
        %v4861 = vmul.f32 %v4829, 0.01
        %v4862 = vmul.f32 %v4830, 0.01
        %v4863 = vmul.f32 %v4831, 0.01
        %v4864 = vmul.f32 %v4832, 0.01
        %v4865 = vmul.f32 %v4833, 0.01
        %v4866 = vsel %vm4834, %v4818, %v4850
        %v4867 = vsel %vm4835, %v4819, %v4851
        %v4868 = vsel %vm4836, %v4820, %v4852
        %v4869 = vsel %vm4837, %v4821, %v4853
        %v4870 = vsel %vm4838, %v4822, %v4854
        %v4871 = vsel %vm4839, %v4823, %v4855
        %v4872 = vsel %vm4840, %v4824, %v4856
        %v4873 = vsel %vm4841, %v4825, %v4857
        %v4874 = vsel %vm4842, %v4826, %v4858
        %v4875 = vsel %vm4843, %v4827, %v4859
        %v4876 = vsel %vm4844, %v4828, %v4860
        %v4877 = vsel %vm4845, %v4829, %v4861
        %v4878 = vsel %vm4846, %v4830, %v4862
        %v4879 = vsel %vm4847, %v4831, %v4863
        %v4880 = vsel %vm4848, %v4832, %v4864
        %v4881 = vsel %vm4849, %v4833, %v4865
        %v4882 = vpack.c.bf16 %v4867, %v4866
        %v4883 = vpack.c.bf16 %v4869, %v4868
        %v4884 = vpack.c.bf16 %v4871, %v4870
        %v4885 = vpack.c.bf16 %v4873, %v4872
        %v4886 = vpack.c.bf16 %v4875, %v4874
        %v4887 = vpack.c.bf16 %v4877, %v4876
        %v4888 = vpack.c.bf16 %v4879, %v4878
        %v4889 = vpack.c.bf16 %v4881, %v4880
        %v4890 = vld [vmem:[%s8] sm:$0xf]
        %v4891 = vld [vmem:[%s8 + $0x4] sm:$0xf]
        %v4892 = vld [vmem:[%s8 + $0x8] sm:$0xf]
        %v4893 = vld [vmem:[%s8 + $0xc] sm:$0x1]
        %v4898 = vunpack.c.l.b16 %v4890
        %v4899 = vunpack.c.l.b16 %v4891
        %v4900 = vunpack.c.l.b16 %v4892
        %v4901 = vunpack.c.l.b16 %v4893
        %v4902 = vpack.c.b16 %v4899, %v4898
        %v4903 = vpack.c.b16 %v4901, %v4900
        %vm4905 = vcmask 203776
        %v4907 = vsel %vm4905, %v4882, 0
        %v4910 = vsel %vm4905, %v4883, 0
        %v4913 = vsel %vm4905, %v4884, 0
        %v4916 = vsel %vm4905, %v4885, 0
        %v4919 = vsel %vm4905, %v4886, 0
        %v4922 = vsel %vm4905, %v4887, 0
        %v4925 = vsel %vm4905, %v4888, 0
        %v4928 = vsel %vm4905, %v4889, 0
        %vm4930 = vcmask 1043456
        %vm4931 = vcmask 1044480
        %v4932 = vsel %vm4930, 4294967295, 65535
        %v4933 = vsel %vm4931, %v4932, 0
        %v4935 = vand.u32 %v4903, %v4933
        %4937 = vmatprep.subr.bf16.mxu0 0
        %4938 = vmatpush1.bf16.msra.mxu0 0
        %4939 = vmatprep.subr.bf16.mxu0 0
        %4940 = vmatpush1.bf16.msra.mxu0 0
        %4941 = vmatprep.subr.bf16.mxu0 0
        %4942 = vmatpush1.bf16.msra.mxu0 0
        %4943 = vmatprep.subr.bf16.mxu0 0
        %4944 = vmatpush1.bf16.msra.mxu0 0
        %4945 = vmatprep.subr.bf16.mxu0 0
        %4946 = vmatpush1.bf16.msra.mxu0 0
        %4947 = vmatprep.subr.bf16.mxu0 0
        %4948 = vmatpush1.bf16.msra.mxu0 0
        %4949 = vmatprep.subr.bf16.mxu0 0
        %4950 = vmatpush1.bf16.msra.mxu0 %v4935
        %4951 = vmatprep.subr.bf16.mxu0 0
        %4952 = vmatpush1.bf16.msra.mxu0 %v4902
        %4953 = vmatprep.subr.bf16.mxu0 0
        %4954 = vmatpush2.bf16.msra.mxu0 0
        %4955 = vmatprep.subr.bf16.mxu0 0
        %4956 = vmatpush2.bf16.msra.mxu0 0
        %4957 = vmatprep.subr.bf16.mxu0 0
        %4958 = vmatpush2.bf16.msra.mxu0 0
        %4959 = vmatprep.subr.bf16.mxu0 0
        %4960 = vmatpush2.bf16.msra.mxu0 0
        %4961 = vmatprep.subr.bf16.mxu0 0
        %4962 = vmatpush2.bf16.msra.mxu0 0
        %4963 = vmatprep.subr.bf16.mxu0 0
        %4964 = vmatpush2.bf16.msra.mxu0 0
        %4965 = vmatprep.subr.bf16.mxu0 0
        %4966 = vmatpush2.bf16.msra.mxu0 0
        %4967 = vmatprep.subr.bf16.mxu0 0
        %4968 = vmatpush2.bf16.msra.mxu0 0
        %4969 = vmatprep.mubr.bf16.mxu0 0
        %4970 = vmatmul.mubr.bf16.gmra.mxu0 %v4907
        %v4971 = vpop.f32.mrf.mxu0
        %v4972 = vadd.f32 0.0, %v4971
        %v4973 = vpop.f32.mrf.mxu0
        %v4974 = vpop.f32.mrf.mxu0
        %v4975 = vadd.f32 0.0, %v4974
        %v4976 = vpop.f32.mrf.mxu0
        %4977 = vmatprep.mubr.bf16.mxu0 0
        %4978 = vmatmul.mubr.bf16.gmra.mxu0 %v4910
        %v4979 = vpop.f32.mrf.mxu0
        %v4980 = vadd.f32 0.0, %v4979
        %v4981 = vpop.f32.mrf.mxu0
        %v4982 = vpop.f32.mrf.mxu0
        %v4983 = vadd.f32 0.0, %v4982
        %v4984 = vpop.f32.mrf.mxu0
        %4985 = vmatprep.mubr.bf16.mxu0 0
        %4986 = vmatmul.mubr.bf16.gmra.mxu0 %v4913
        %v4987 = vpop.f32.mrf.mxu0
        %v4988 = vadd.f32 0.0, %v4987
        %v4989 = vpop.f32.mrf.mxu0
        %v4990 = vpop.f32.mrf.mxu0
        %v4991 = vadd.f32 0.0, %v4990
        %v4992 = vpop.f32.mrf.mxu0
        %4993 = vmatprep.mubr.bf16.mxu0 0
        %4994 = vmatmul.mubr.bf16.gmra.mxu0 %v4916
        %v4995 = vpop.f32.mrf.mxu0
        %v4996 = vadd.f32 0.0, %v4995
        %v4997 = vpop.f32.mrf.mxu0
        %v4998 = vpop.f32.mrf.mxu0
        %v4999 = vadd.f32 0.0, %v4998
        %v5000 = vpop.f32.mrf.mxu0
        %5001 = vmatprep.mubr.bf16.mxu0 0
        %5002 = vmatmul.mubr.bf16.gmra.mxu0 %v4919
        %v5003 = vpop.f32.mrf.mxu0
        %v5004 = vadd.f32 0.0, %v5003
        %v5005 = vpop.f32.mrf.mxu0
        %v5006 = vpop.f32.mrf.mxu0
        %v5007 = vadd.f32 0.0, %v5006
        %v5008 = vpop.f32.mrf.mxu0
        %5009 = vmatprep.mubr.bf16.mxu0 0
        %5010 = vmatmul.mubr.bf16.gmra.mxu0 %v4922
        %v5011 = vpop.f32.mrf.mxu0
        %v5012 = vadd.f32 0.0, %v5011
        %v5013 = vpop.f32.mrf.mxu0
        %v5014 = vpop.f32.mrf.mxu0
        %v5015 = vadd.f32 0.0, %v5014
        %v5016 = vpop.f32.mrf.mxu0
        %5017 = vmatprep.mubr.bf16.mxu0 0
        %5018 = vmatmul.mubr.bf16.gmra.mxu0 %v4925
        %v5019 = vpop.f32.mrf.mxu0
        %v5020 = vadd.f32 0.0, %v5019
        %v5021 = vpop.f32.mrf.mxu0
        %v5022 = vpop.f32.mrf.mxu0
        %v5023 = vadd.f32 0.0, %v5022
        %v5024 = vpop.f32.mrf.mxu0
        %5025 = vmatprep.mubr.bf16.mxu0 0
        %5026 = vmatmul.mubr.bf16.gmra.mxu0 %v4928
        %v5027 = vpop.f32.mrf.mxu0
        %v5028 = vadd.f32 0.0, %v5027
        %v5029 = vpop.f32.mrf.mxu0
        %v5030 = vpop.f32.mrf.mxu0
        %v5031 = vadd.f32 0.0, %v5030
        %v5032 = vpop.f32.mrf.mxu0
        %5033 = vdwg.mxu0
        %v5034 = vpack.c.bf16 %v4975, %v4972
        %v5035 = vpack.c.bf16 %v4983, %v4980
        %v5036 = vpack.c.bf16 %v4991, %v4988
        %v5037 = vpack.c.bf16 %v4999, %v4996
        %v5038 = vpack.c.bf16 %v5007, %v5004
        %v5039 = vpack.c.bf16 %v5015, %v5012
        %v5040 = vpack.c.bf16 %v5023, %v5020
        %v5041 = vpack.c.bf16 %v5031, %v5028
        %v5042 = vld [vmem:[%s9] sm:$0xf]
        %v5043 = vld [vmem:[%s9 + $0x4] sm:$0xf]
        %v5044 = vld [vmem:[%s9 + $0x8] sm:$0xf]
        %v5045 = vld [vmem:[%s9 + $0xc] sm:$0xf]
        %v5046 = vld [vmem:[%s9 + $0x10] sm:$0xf]
        %v5047 = vld [vmem:[%s9 + $0x14] sm:$0xf]
        %v5048 = vld [vmem:[%s9 + $0x18] sm:$0xf]
        %v5049 = vld [vmem:[%s9 + $0x1c] sm:$0xf]
        %v5050 = vld [vmem:[%s9 + $0x20] sm:$0xf]
        %v5051 = vld [vmem:[%s9 + $0x24] sm:$0xf]
        %v5052 = vld [vmem:[%s9 + $0x28] sm:$0xf]
        %v5053 = vld [vmem:[%s9 + $0x2c] sm:$0xf]
        %v5054 = vld [vmem:[%s9 + $0x30] sm:$0xf]
        %v5055 = vld [vmem:[%s9 + $0x34] sm:$0xf]
        %v5056 = vld [vmem:[%s9 + $0x38] sm:$0xf]
        %v5057 = vld [vmem:[%s9 + $0x3c] sm:$0xf]
        %v5058 = vld [vmem:[%s9 + $0x40] sm:$0xf]
        %v5059 = vld [vmem:[%s9 + $0x44] sm:$0xf]
        %v5060 = vld [vmem:[%s9 + $0x48] sm:$0xf]
        %v5061 = vld [vmem:[%s9 + $0x4c] sm:$0xf]
        %v5062 = vld [vmem:[%s9 + $0x50] sm:$0xf]
        %v5063 = vld [vmem:[%s9 + $0x54] sm:$0xf]
        %v5064 = vld [vmem:[%s9 + $0x58] sm:$0xf]
        %v5065 = vld [vmem:[%s9 + $0x5c] sm:$0xf]
        %v5066 = vld [vmem:[%s9 + $0x60] sm:$0xf]
        %v5067 = vld [vmem:[%s9 + $0x64] sm:$0xf]
        %v5068 = vld [vmem:[%s9 + $0x68] sm:$0xf]
        %v5069 = vld [vmem:[%s9 + $0x6c] sm:$0xf]
        %v5070 = vld [vmem:[%s9 + $0x70] sm:$0xf]
        %v5071 = vld [vmem:[%s9 + $0x74] sm:$0xf]
        %v5072 = vld [vmem:[%s9 + $0x78] sm:$0xf]
        %v5073 = vld [vmem:[%s9 + $0x7c] sm:$0xf]
        %s5074 = scalar_lea.vmem %s8, 16
        %v5075 = vld [vmem:[%s5074] sm:$0xf]
        %v5076 = vld [vmem:[%s5074 + $0x4] sm:$0xf]
        %v5077 = vld [vmem:[%s5074 + $0x8] sm:$0xf]
        %v5078 = vld [vmem:[%s5074 + $0xc] sm:$0x1]
        %v5083 = vunpack.c.l.b16 %v5075
        %v5084 = vunpack.c.l.b16 %v5076
        %v5085 = vunpack.c.l.b16 %v5077
        %v5086 = vunpack.c.l.b16 %v5078
        %v5087 = vpack.c.b16 %v5084, %v5083
        %v5088 = vpack.c.b16 %v5086, %v5085
        %v5091 = vand.u32 %v5088, %v4933
        %5093 = vmatprep.subr.bf16.mxu0 0
        %5094 = vmatpush1.bf16.msra.mxu0 0
        %5095 = vmatprep.subr.bf16.mxu0 0
        %5096 = vmatpush1.bf16.msra.mxu0 0
        %5097 = vmatprep.subr.bf16.mxu0 0
        %5098 = vmatpush1.bf16.msra.mxu0 0
        %5099 = vmatprep.subr.bf16.mxu0 0
        %5100 = vmatpush1.bf16.msra.mxu0 0
        %5101 = vmatprep.subr.bf16.mxu0 0
        %5102 = vmatpush1.bf16.msra.mxu0 0
        %5103 = vmatprep.subr.bf16.mxu0 0
        %5104 = vmatpush1.bf16.msra.mxu0 0
        %5105 = vmatprep.subr.bf16.mxu0 0
        %5106 = vmatpush1.bf16.msra.mxu0 %v5091
        %5107 = vmatprep.subr.bf16.mxu0 0
        %5108 = vmatpush1.bf16.msra.mxu0 %v5087
        %5109 = vmatprep.subr.bf16.mxu0 0
        %5110 = vmatpush2.bf16.msra.mxu0 0
        %5111 = vmatprep.subr.bf16.mxu0 0
        %5112 = vmatpush2.bf16.msra.mxu0 0
        %5113 = vmatprep.subr.bf16.mxu0 0
        %5114 = vmatpush2.bf16.msra.mxu0 0
        %5115 = vmatprep.subr.bf16.mxu0 0
        %5116 = vmatpush2.bf16.msra.mxu0 0
        %5117 = vmatprep.subr.bf16.mxu0 0
        %5118 = vmatpush2.bf16.msra.mxu0 0
        %5119 = vmatprep.subr.bf16.mxu0 0
        %5120 = vmatpush2.bf16.msra.mxu0 0
        %5121 = vmatprep.subr.bf16.mxu0 0
        %5122 = vmatpush2.bf16.msra.mxu0 0
        %5123 = vmatprep.subr.bf16.mxu0 0
        %5124 = vmatpush2.bf16.msra.mxu0 0
        %5125 = vmatprep.mubr.bf16.mxu0 0
        %5126 = vmatmul.mubr.bf16.gmra.mxu0 %v4907
        %v5127 = vpop.f32.mrf.mxu0
        %v5128 = vadd.f32 0.0, %v5127
        %v5129 = vpop.f32.mrf.mxu0
        %v5130 = vpop.f32.mrf.mxu0
        %v5131 = vadd.f32 0.0, %v5130
        %v5132 = vpop.f32.mrf.mxu0
        %5133 = vmatprep.mubr.bf16.mxu0 0
        %5134 = vmatmul.mubr.bf16.gmra.mxu0 %v4910
        %v5135 = vpop.f32.mrf.mxu0
        %v5136 = vadd.f32 0.0, %v5135
        %v5137 = vpop.f32.mrf.mxu0
        %v5138 = vpop.f32.mrf.mxu0
        %v5139 = vadd.f32 0.0, %v5138
        %v5140 = vpop.f32.mrf.mxu0
        %5141 = vmatprep.mubr.bf16.mxu0 0
        %5142 = vmatmul.mubr.bf16.gmra.mxu0 %v4913
        %v5143 = vpop.f32.mrf.mxu0
        %v5144 = vadd.f32 0.0, %v5143
        %v5145 = vpop.f32.mrf.mxu0
        %v5146 = vpop.f32.mrf.mxu0
        %v5147 = vadd.f32 0.0, %v5146
        %v5148 = vpop.f32.mrf.mxu0
        %5149 = vmatprep.mubr.bf16.mxu0 0
        %5150 = vmatmul.mubr.bf16.gmra.mxu0 %v4916
        %v5151 = vpop.f32.mrf.mxu0
        %v5152 = vadd.f32 0.0, %v5151
        %v5153 = vpop.f32.mrf.mxu0
        %v5154 = vpop.f32.mrf.mxu0
        %v5155 = vadd.f32 0.0, %v5154
        %v5156 = vpop.f32.mrf.mxu0
        %5157 = vmatprep.mubr.bf16.mxu0 0
        %5158 = vmatmul.mubr.bf16.gmra.mxu0 %v4919
        %v5159 = vpop.f32.mrf.mxu0
        %v5160 = vadd.f32 0.0, %v5159
        %v5161 = vpop.f32.mrf.mxu0
        %v5162 = vpop.f32.mrf.mxu0
        %v5163 = vadd.f32 0.0, %v5162
        %v5164 = vpop.f32.mrf.mxu0
        %5165 = vmatprep.mubr.bf16.mxu0 0
        %5166 = vmatmul.mubr.bf16.gmra.mxu0 %v4922
        %v5167 = vpop.f32.mrf.mxu0
        %v5168 = vadd.f32 0.0, %v5167
        %v5169 = vpop.f32.mrf.mxu0
        %v5170 = vpop.f32.mrf.mxu0
        %v5171 = vadd.f32 0.0, %v5170
        %v5172 = vpop.f32.mrf.mxu0
        %5173 = vmatprep.mubr.bf16.mxu0 0
        %5174 = vmatmul.mubr.bf16.gmra.mxu0 %v4925
        %v5175 = vpop.f32.mrf.mxu0
        %v5176 = vadd.f32 0.0, %v5175
        %v5177 = vpop.f32.mrf.mxu0
        %v5178 = vpop.f32.mrf.mxu0
        %v5179 = vadd.f32 0.0, %v5178
        %v5180 = vpop.f32.mrf.mxu0
        %5181 = vmatprep.mubr.bf16.mxu0 0
        %5182 = vmatmul.mubr.bf16.gmra.mxu0 %v4928
        %v5183 = vpop.f32.mrf.mxu0
        %v5184 = vadd.f32 0.0, %v5183
        %v5185 = vpop.f32.mrf.mxu0
        %v5186 = vpop.f32.mrf.mxu0
        %v5187 = vadd.f32 0.0, %v5186
        %v5188 = vpop.f32.mrf.mxu0
        %5189 = vdwg.mxu0
        %v5190 = vpack.c.bf16 %v5131, %v5128
        %v5191 = vpack.c.bf16 %v5139, %v5136
        %v5192 = vpack.c.bf16 %v5147, %v5144
        %v5193 = vpack.c.bf16 %v5155, %v5152
        %v5194 = vpack.c.bf16 %v5163, %v5160
        %v5195 = vpack.c.bf16 %v5171, %v5168
        %v5196 = vpack.c.bf16 %v5179, %v5176
        %v5197 = vpack.c.bf16 %v5187, %v5184
        %s5198 = scalar_lea.vmem %s9, 128
        %v5199 = vld [vmem:[%s5198] sm:$0xf]
        %v5200 = vld [vmem:[%s5198 + $0x4] sm:$0xf]
        %v5201 = vld [vmem:[%s5198 + $0x8] sm:$0xf]
        %v5202 = vld [vmem:[%s5198 + $0xc] sm:$0xf]
        %v5203 = vld [vmem:[%s5198 + $0x10] sm:$0xf]
        %v5204 = vld [vmem:[%s5198 + $0x14] sm:$0xf]
        %v5205 = vld [vmem:[%s5198 + $0x18] sm:$0xf]
        %v5206 = vld [vmem:[%s5198 + $0x1c] sm:$0xf]
        %v5207 = vld [vmem:[%s5198 + $0x20] sm:$0xf]
        %v5208 = vld [vmem:[%s5198 + $0x24] sm:$0xf]
        %v5209 = vld [vmem:[%s5198 + $0x28] sm:$0xf]
        %v5210 = vld [vmem:[%s5198 + $0x2c] sm:$0xf]
        %v5211 = vld [vmem:[%s5198 + $0x30] sm:$0xf]
        %v5212 = vld [vmem:[%s5198 + $0x34] sm:$0xf]
        %v5213 = vld [vmem:[%s5198 + $0x38] sm:$0xf]
        %v5214 = vld [vmem:[%s5198 + $0x3c] sm:$0xf]
        %v5215 = vld [vmem:[%s5198 + $0x40] sm:$0xf]
        %v5216 = vld [vmem:[%s5198 + $0x44] sm:$0xf]
        %v5217 = vld [vmem:[%s5198 + $0x48] sm:$0xf]
        %v5218 = vld [vmem:[%s5198 + $0x4c] sm:$0xf]
        %v5219 = vld [vmem:[%s5198 + $0x50] sm:$0xf]
        %v5220 = vld [vmem:[%s5198 + $0x54] sm:$0xf]
        %v5221 = vld [vmem:[%s5198 + $0x58] sm:$0xf]
        %v5222 = vld [vmem:[%s5198 + $0x5c] sm:$0xf]
        %v5223 = vld [vmem:[%s5198 + $0x60] sm:$0xf]
        %v5224 = vld [vmem:[%s5198 + $0x64] sm:$0xf]
        %v5225 = vld [vmem:[%s5198 + $0x68] sm:$0xf]
        %v5226 = vld [vmem:[%s5198 + $0x6c] sm:$0xf]
        %v5227 = vld [vmem:[%s5198 + $0x70] sm:$0xf]
        %v5228 = vld [vmem:[%s5198 + $0x74] sm:$0xf]
        %v5229 = vld [vmem:[%s5198 + $0x78] sm:$0xf]
        %v5230 = vld [vmem:[%s5198 + $0x7c] sm:$0xf]
        %v5263 = vunpack.c.l.b16 %v5199
        %v5264 = vunpack.c.l.b16 %v5200
        %v5265 = vunpack.c.l.b16 %v5201
        %v5266 = vunpack.c.l.b16 %v5202
        %v5267 = vunpack.c.l.b16 %v5203
        %v5268 = vunpack.c.l.b16 %v5204
        %v5269 = vunpack.c.l.b16 %v5205
        %v5270 = vunpack.c.l.b16 %v5206
        %v5271 = vunpack.c.l.b16 %v5207
        %v5272 = vunpack.c.l.b16 %v5208
        %v5273 = vunpack.c.l.b16 %v5209
        %v5274 = vunpack.c.l.b16 %v5210
        %v5275 = vunpack.c.l.b16 %v5211
        %v5276 = vunpack.c.l.b16 %v5212
        %v5277 = vunpack.c.l.b16 %v5213
        %v5278 = vunpack.c.l.b16 %v5214
        %v5279 = vunpack.c.l.b16 %v5215
        %v5280 = vunpack.c.l.b16 %v5216
        %v5281 = vunpack.c.l.b16 %v5217
        %v5282 = vunpack.c.l.b16 %v5218
        %v5283 = vunpack.c.l.b16 %v5219
        %v5284 = vunpack.c.l.b16 %v5220
        %v5285 = vunpack.c.l.b16 %v5221
        %v5286 = vunpack.c.l.b16 %v5222
        %v5287 = vunpack.c.l.b16 %v5223
        %v5288 = vunpack.c.l.b16 %v5224
        %v5289 = vunpack.c.l.b16 %v5225
        %v5290 = vunpack.c.l.b16 %v5226
        %v5291 = vunpack.c.l.b16 %v5227
        %v5292 = vunpack.c.l.b16 %v5228
        %v5293 = vunpack.c.l.b16 %v5229
        %v5294 = vunpack.c.l.b16 %v5230
        %v5295 = vpack.c.b16 %v5264, %v5263
        %v5296 = vpack.c.b16 %v5266, %v5265
        %v5297 = vpack.c.b16 %v5268, %v5267
        %v5298 = vpack.c.b16 %v5270, %v5269
        %v5299 = vpack.c.b16 %v5272, %v5271
        %v5300 = vpack.c.b16 %v5274, %v5273
        %v5301 = vpack.c.b16 %v5276, %v5275
        %v5302 = vpack.c.b16 %v5278, %v5277
        %v5303 = vpack.c.b16 %v5280, %v5279
        %v5304 = vpack.c.b16 %v5282, %v5281
        %v5305 = vpack.c.b16 %v5284, %v5283
        %v5306 = vpack.c.b16 %v5286, %v5285
        %v5307 = vpack.c.b16 %v5288, %v5287
        %v5308 = vpack.c.b16 %v5290, %v5289
        %v5309 = vpack.c.b16 %v5292, %v5291
        %v5310 = vpack.c.b16 %v5294, %v5293
        %5327 = vmatprep.subr.bf16.mxu0 0
        %5328 = vmatpush1.bf16.msra.mxu0 %v5197
        %5329 = vmatprep.subr.bf16.mxu0 0
        %5330 = vmatpush1.bf16.msra.mxu0 %v5196
        %5331 = vmatprep.subr.bf16.mxu0 0
        %5332 = vmatpush1.bf16.msra.mxu0 %v5195
        %5333 = vmatprep.subr.bf16.mxu0 0
        %5334 = vmatpush1.bf16.msra.mxu0 %v5194
        %5335 = vmatprep.subr.bf16.mxu0 0
        %5336 = vmatpush1.bf16.msra.mxu0 %v5193
        %5337 = vmatprep.subr.bf16.mxu0 0
        %5338 = vmatpush1.bf16.msra.mxu0 %v5192
        %5339 = vmatprep.subr.bf16.mxu0 0
        %5340 = vmatpush1.bf16.msra.mxu0 %v5191
        %5341 = vmatprep.subr.bf16.mxu0 0
        %5342 = vmatpush1.bf16.msra.mxu0 %v5190
        %5343 = vmatprep.subr.bf16.mxu0 0
        %5344 = vmatpush2.bf16.msra.mxu0 0
        %5345 = vmatprep.subr.bf16.mxu0 0
        %5346 = vmatpush2.bf16.msra.mxu0 0
        %5347 = vmatprep.subr.bf16.mxu0 0
        %5348 = vmatpush2.bf16.msra.mxu0 0
        %5349 = vmatprep.subr.bf16.mxu0 0
        %5350 = vmatpush2.bf16.msra.mxu0 0
        %5351 = vmatprep.subr.bf16.mxu0 0
        %5352 = vmatpush2.bf16.msra.mxu0 0
        %5353 = vmatprep.subr.bf16.mxu0 0
        %5354 = vmatpush2.bf16.msra.mxu0 0
        %5355 = vmatprep.subr.bf16.mxu0 0
        %5356 = vmatpush2.bf16.msra.mxu0 0
        %5357 = vmatprep.subr.bf16.mxu0 0
        %5358 = vmatpush2.bf16.msra.mxu0 0
        %5359 = vmatprep.mubr.bf16.mxu0 0
        %5360 = vmatmul.mubr.bf16.gmra.mxu0 %v5295
        %v5361 = vpop.f32.mrf.mxu0
        %v5362 = vadd.f32 0.0, %v5361
        %v5363 = vpop.f32.mrf.mxu0
        %v5364 = vpop.f32.mrf.mxu0
        %v5365 = vadd.f32 0.0, %v5364
        %v5366 = vpop.f32.mrf.mxu0
        %5367 = vmatprep.mubr.bf16.mxu0 0
        %5368 = vmatmul.mubr.bf16.gmra.mxu0 %v5296
        %v5369 = vpop.f32.mrf.mxu0
        %v5370 = vadd.f32 0.0, %v5369
        %v5371 = vpop.f32.mrf.mxu0
        %v5372 = vpop.f32.mrf.mxu0
        %v5373 = vadd.f32 0.0, %v5372
        %v5374 = vpop.f32.mrf.mxu0
        %5375 = vmatprep.mubr.bf16.mxu0 0
        %5376 = vmatmul.mubr.bf16.gmra.mxu0 %v5297
        %v5377 = vpop.f32.mrf.mxu0
        %v5378 = vadd.f32 0.0, %v5377
        %v5379 = vpop.f32.mrf.mxu0
        %v5380 = vpop.f32.mrf.mxu0
        %v5381 = vadd.f32 0.0, %v5380
        %v5382 = vpop.f32.mrf.mxu0
        %5383 = vmatprep.mubr.bf16.mxu0 0
        %5384 = vmatmul.mubr.bf16.gmra.mxu0 %v5298
        %v5385 = vpop.f32.mrf.mxu0
        %v5386 = vadd.f32 0.0, %v5385
        %v5387 = vpop.f32.mrf.mxu0
        %v5388 = vpop.f32.mrf.mxu0
        %v5389 = vadd.f32 0.0, %v5388
        %v5390 = vpop.f32.mrf.mxu0
        %5391 = vmatprep.mubr.bf16.mxu0 0
        %5392 = vmatmul.mubr.bf16.gmra.mxu0 %v5299
        %v5393 = vpop.f32.mrf.mxu0
        %v5394 = vadd.f32 0.0, %v5393
        %v5395 = vpop.f32.mrf.mxu0
        %v5396 = vpop.f32.mrf.mxu0
        %v5397 = vadd.f32 0.0, %v5396
        %v5398 = vpop.f32.mrf.mxu0
        %5399 = vmatprep.mubr.bf16.mxu0 0
        %5400 = vmatmul.mubr.bf16.gmra.mxu0 %v5300
        %v5401 = vpop.f32.mrf.mxu0
        %v5402 = vadd.f32 0.0, %v5401
        %v5403 = vpop.f32.mrf.mxu0
        %v5404 = vpop.f32.mrf.mxu0
        %v5405 = vadd.f32 0.0, %v5404
        %v5406 = vpop.f32.mrf.mxu0
        %5407 = vmatprep.mubr.bf16.mxu0 0
        %5408 = vmatmul.mubr.bf16.gmra.mxu0 %v5301
        %v5409 = vpop.f32.mrf.mxu0
        %v5410 = vadd.f32 0.0, %v5409
        %v5411 = vpop.f32.mrf.mxu0
        %v5412 = vpop.f32.mrf.mxu0
        %v5413 = vadd.f32 0.0, %v5412
        %v5414 = vpop.f32.mrf.mxu0
        %5415 = vmatprep.mubr.bf16.mxu0 0
        %5416 = vmatmul.mubr.bf16.gmra.mxu0 %v5302
        %v5417 = vpop.f32.mrf.mxu0
        %v5418 = vadd.f32 0.0, %v5417
        %v5419 = vpop.f32.mrf.mxu0
        %v5420 = vpop.f32.mrf.mxu0
        %v5421 = vadd.f32 0.0, %v5420
        %v5422 = vpop.f32.mrf.mxu0
        %5423 = vmatprep.mubr.bf16.mxu0 0
        %5424 = vmatmul.mubr.bf16.gmra.mxu0 %v5303
        %v5425 = vpop.f32.mrf.mxu0
        %v5426 = vadd.f32 0.0, %v5425
        %v5427 = vpop.f32.mrf.mxu0
        %v5428 = vpop.f32.mrf.mxu0
        %v5429 = vadd.f32 0.0, %v5428
        %v5430 = vpop.f32.mrf.mxu0
        %5431 = vmatprep.mubr.bf16.mxu0 0
        %5432 = vmatmul.mubr.bf16.gmra.mxu0 %v5304
        %v5433 = vpop.f32.mrf.mxu0
        %v5434 = vadd.f32 0.0, %v5433
        %v5435 = vpop.f32.mrf.mxu0
        %v5436 = vpop.f32.mrf.mxu0
        %v5437 = vadd.f32 0.0, %v5436
        %v5438 = vpop.f32.mrf.mxu0
        %5439 = vmatprep.mubr.bf16.mxu0 0
        %5440 = vmatmul.mubr.bf16.gmra.mxu0 %v5305
        %v5441 = vpop.f32.mrf.mxu0
        %v5442 = vadd.f32 0.0, %v5441
        %v5443 = vpop.f32.mrf.mxu0
        %v5444 = vpop.f32.mrf.mxu0
        %v5445 = vadd.f32 0.0, %v5444
        %v5446 = vpop.f32.mrf.mxu0
        %5447 = vmatprep.mubr.bf16.mxu0 0
        %5448 = vmatmul.mubr.bf16.gmra.mxu0 %v5306
        %v5449 = vpop.f32.mrf.mxu0
        %v5450 = vadd.f32 0.0, %v5449
        %v5451 = vpop.f32.mrf.mxu0
        %v5452 = vpop.f32.mrf.mxu0
        %v5453 = vadd.f32 0.0, %v5452
        %v5454 = vpop.f32.mrf.mxu0
        %5455 = vmatprep.mubr.bf16.mxu0 0
        %5456 = vmatmul.mubr.bf16.gmra.mxu0 %v5307
        %v5457 = vpop.f32.mrf.mxu0
        %v5458 = vadd.f32 0.0, %v5457
        %v5459 = vpop.f32.mrf.mxu0
        %v5460 = vpop.f32.mrf.mxu0
        %v5461 = vadd.f32 0.0, %v5460
        %v5462 = vpop.f32.mrf.mxu0
        %5463 = vmatprep.mubr.bf16.mxu0 0
        %5464 = vmatmul.mubr.bf16.gmra.mxu0 %v5308
        %v5465 = vpop.f32.mrf.mxu0
        %v5466 = vadd.f32 0.0, %v5465
        %v5467 = vpop.f32.mrf.mxu0
        %v5468 = vpop.f32.mrf.mxu0
        %v5469 = vadd.f32 0.0, %v5468
        %v5470 = vpop.f32.mrf.mxu0
        %5471 = vmatprep.mubr.bf16.mxu0 0
        %5472 = vmatmul.mubr.bf16.gmra.mxu0 %v5309
        %v5473 = vpop.f32.mrf.mxu0
        %v5474 = vadd.f32 0.0, %v5473
        %v5475 = vpop.f32.mrf.mxu0
        %v5476 = vpop.f32.mrf.mxu0
        %v5477 = vadd.f32 0.0, %v5476
        %v5478 = vpop.f32.mrf.mxu0
        %5479 = vmatprep.mubr.bf16.mxu0 0
        %5480 = vmatmul.mubr.bf16.gmra.mxu0 %v5310
        %v5481 = vpop.f32.mrf.mxu0
        %v5482 = vadd.f32 0.0, %v5481
        %v5483 = vpop.f32.mrf.mxu0
        %v5484 = vpop.f32.mrf.mxu0
        %v5485 = vadd.f32 0.0, %v5484
        %v5486 = vpop.f32.mrf.mxu0
        %5487 = vdwg.mxu0
        %v5520 = vunpack.c.l.b16 %v5042
        %v5521 = vunpack.c.l.b16 %v5043
        %v5522 = vunpack.c.l.b16 %v5044
        %v5523 = vunpack.c.l.b16 %v5045
        %v5524 = vunpack.c.l.b16 %v5046
        %v5525 = vunpack.c.l.b16 %v5047
        %v5526 = vunpack.c.l.b16 %v5048
        %v5527 = vunpack.c.l.b16 %v5049
        %v5528 = vunpack.c.l.b16 %v5050
        %v5529 = vunpack.c.l.b16 %v5051
        %v5530 = vunpack.c.l.b16 %v5052
        %v5531 = vunpack.c.l.b16 %v5053
        %v5532 = vunpack.c.l.b16 %v5054
        %v5533 = vunpack.c.l.b16 %v5055
        %v5534 = vunpack.c.l.b16 %v5056
        %v5535 = vunpack.c.l.b16 %v5057
        %v5536 = vunpack.c.l.b16 %v5058
        %v5537 = vunpack.c.l.b16 %v5059
        %v5538 = vunpack.c.l.b16 %v5060
        %v5539 = vunpack.c.l.b16 %v5061
        %v5540 = vunpack.c.l.b16 %v5062
        %v5541 = vunpack.c.l.b16 %v5063
        %v5542 = vunpack.c.l.b16 %v5064
        %v5543 = vunpack.c.l.b16 %v5065
        %v5544 = vunpack.c.l.b16 %v5066
        %v5545 = vunpack.c.l.b16 %v5067
        %v5546 = vunpack.c.l.b16 %v5068
        %v5547 = vunpack.c.l.b16 %v5069
        %v5548 = vunpack.c.l.b16 %v5070
        %v5549 = vunpack.c.l.b16 %v5071
        %v5550 = vunpack.c.l.b16 %v5072
        %v5551 = vunpack.c.l.b16 %v5073
        %v5552 = vpack.c.b16 %v5521, %v5520
        %v5553 = vpack.c.b16 %v5523, %v5522
        %v5554 = vpack.c.b16 %v5525, %v5524
        %v5555 = vpack.c.b16 %v5527, %v5526
        %v5556 = vpack.c.b16 %v5529, %v5528
        %v5557 = vpack.c.b16 %v5531, %v5530
        %v5558 = vpack.c.b16 %v5533, %v5532
        %v5559 = vpack.c.b16 %v5535, %v5534
        %v5560 = vpack.c.b16 %v5537, %v5536
        %v5561 = vpack.c.b16 %v5539, %v5538
        %v5562 = vpack.c.b16 %v5541, %v5540
        %v5563 = vpack.c.b16 %v5543, %v5542
        %v5564 = vpack.c.b16 %v5545, %v5544
        %v5565 = vpack.c.b16 %v5547, %v5546
        %v5566 = vpack.c.b16 %v5549, %v5548
        %v5567 = vpack.c.b16 %v5551, %v5550
        %5584 = vmatprep.subr.bf16.mxu0 0
        %5585 = vmatpush1.bf16.msra.mxu0 %v5041
        %5586 = vmatprep.subr.bf16.mxu0 0
        %5587 = vmatpush1.bf16.msra.mxu0 %v5040
        %5588 = vmatprep.subr.bf16.mxu0 0
        %5589 = vmatpush1.bf16.msra.mxu0 %v5039
        %5590 = vmatprep.subr.bf16.mxu0 0
        %5591 = vmatpush1.bf16.msra.mxu0 %v5038
        %5592 = vmatprep.subr.bf16.mxu0 0
        %5593 = vmatpush1.bf16.msra.mxu0 %v5037
        %5594 = vmatprep.subr.bf16.mxu0 0
        %5595 = vmatpush1.bf16.msra.mxu0 %v5036
        %5596 = vmatprep.subr.bf16.mxu0 0
        %5597 = vmatpush1.bf16.msra.mxu0 %v5035
        %5598 = vmatprep.subr.bf16.mxu0 0
        %5599 = vmatpush1.bf16.msra.mxu0 %v5034
        %5600 = vmatprep.subr.bf16.mxu0 0
        %5601 = vmatpush2.bf16.msra.mxu0 0
        %5602 = vmatprep.subr.bf16.mxu0 0
        %5603 = vmatpush2.bf16.msra.mxu0 0
        %5604 = vmatprep.subr.bf16.mxu0 0
        %5605 = vmatpush2.bf16.msra.mxu0 0
        %5606 = vmatprep.subr.bf16.mxu0 0
        %5607 = vmatpush2.bf16.msra.mxu0 0
        %5608 = vmatprep.subr.bf16.mxu0 0
        %5609 = vmatpush2.bf16.msra.mxu0 0
        %5610 = vmatprep.subr.bf16.mxu0 0
        %5611 = vmatpush2.bf16.msra.mxu0 0
        %5612 = vmatprep.subr.bf16.mxu0 0
        %5613 = vmatpush2.bf16.msra.mxu0 0
        %5614 = vmatprep.subr.bf16.mxu0 0
        %5615 = vmatpush2.bf16.msra.mxu0 0
        %5616 = vmatprep.mubr.bf16.mxu0 0
        %5617 = vmatmul.mubr.bf16.gmra.mxu0 %v5552
        %v5618 = vpop.f32.mrf.mxu0
        %v5619 = vadd.f32 %v5362, %v5618
        %v5620 = vpop.f32.mrf.mxu0
        %v5621 = vpop.f32.mrf.mxu0
        %v5622 = vadd.f32 %v5365, %v5621
        %v5623 = vpop.f32.mrf.mxu0
        %5624 = vmatprep.mubr.bf16.mxu0 0
        %5625 = vmatmul.mubr.bf16.gmra.mxu0 %v5553
        %v5626 = vpop.f32.mrf.mxu0
        %v5627 = vadd.f32 %v5370, %v5626
        %v5628 = vpop.f32.mrf.mxu0
        %v5629 = vpop.f32.mrf.mxu0
        %v5630 = vadd.f32 %v5373, %v5629
        %v5631 = vpop.f32.mrf.mxu0
        %5632 = vmatprep.mubr.bf16.mxu0 0
        %5633 = vmatmul.mubr.bf16.gmra.mxu0 %v5554
        %v5634 = vpop.f32.mrf.mxu0
        %v5635 = vadd.f32 %v5378, %v5634
        %v5636 = vpop.f32.mrf.mxu0
        %v5637 = vpop.f32.mrf.mxu0
        %v5638 = vadd.f32 %v5381, %v5637
        %v5639 = vpop.f32.mrf.mxu0
        %5640 = vmatprep.mubr.bf16.mxu0 0
        %5641 = vmatmul.mubr.bf16.gmra.mxu0 %v5555
        %v5642 = vpop.f32.mrf.mxu0
        %v5643 = vadd.f32 %v5386, %v5642
        %v5644 = vpop.f32.mrf.mxu0
        %v5645 = vpop.f32.mrf.mxu0
        %v5646 = vadd.f32 %v5389, %v5645
        %v5647 = vpop.f32.mrf.mxu0
        %5648 = vmatprep.mubr.bf16.mxu0 0
        %5649 = vmatmul.mubr.bf16.gmra.mxu0 %v5556
        %v5650 = vpop.f32.mrf.mxu0
        %v5651 = vadd.f32 %v5394, %v5650
        %v5652 = vpop.f32.mrf.mxu0
        %v5653 = vpop.f32.mrf.mxu0
        %v5654 = vadd.f32 %v5397, %v5653
        %v5655 = vpop.f32.mrf.mxu0
        %5656 = vmatprep.mubr.bf16.mxu0 0
        %5657 = vmatmul.mubr.bf16.gmra.mxu0 %v5557
        %v5658 = vpop.f32.mrf.mxu0
        %v5659 = vadd.f32 %v5402, %v5658
        %v5660 = vpop.f32.mrf.mxu0
        %v5661 = vpop.f32.mrf.mxu0
        %v5662 = vadd.f32 %v5405, %v5661
        %v5663 = vpop.f32.mrf.mxu0
        %5664 = vmatprep.mubr.bf16.mxu0 0
        %5665 = vmatmul.mubr.bf16.gmra.mxu0 %v5558
        %v5666 = vpop.f32.mrf.mxu0
        %v5667 = vadd.f32 %v5410, %v5666
        %v5668 = vpop.f32.mrf.mxu0
        %v5669 = vpop.f32.mrf.mxu0
        %v5670 = vadd.f32 %v5413, %v5669
        %v5671 = vpop.f32.mrf.mxu0
        %5672 = vmatprep.mubr.bf16.mxu0 0
        %5673 = vmatmul.mubr.bf16.gmra.mxu0 %v5559
        %v5674 = vpop.f32.mrf.mxu0
        %v5675 = vadd.f32 %v5418, %v5674
        %v5676 = vpop.f32.mrf.mxu0
        %v5677 = vpop.f32.mrf.mxu0
        %v5678 = vadd.f32 %v5421, %v5677
        %v5679 = vpop.f32.mrf.mxu0
        %5680 = vmatprep.mubr.bf16.mxu0 0
        %5681 = vmatmul.mubr.bf16.gmra.mxu0 %v5560
        %v5682 = vpop.f32.mrf.mxu0
        %v5683 = vadd.f32 %v5426, %v5682
        %v5684 = vpop.f32.mrf.mxu0
        %v5685 = vpop.f32.mrf.mxu0
        %v5686 = vadd.f32 %v5429, %v5685
        %v5687 = vpop.f32.mrf.mxu0
        %5688 = vmatprep.mubr.bf16.mxu0 0
        %5689 = vmatmul.mubr.bf16.gmra.mxu0 %v5561
        %v5690 = vpop.f32.mrf.mxu0
        %v5691 = vadd.f32 %v5434, %v5690
        %v5692 = vpop.f32.mrf.mxu0
        %v5693 = vpop.f32.mrf.mxu0
        %v5694 = vadd.f32 %v5437, %v5693
        %v5695 = vpop.f32.mrf.mxu0
        %5696 = vmatprep.mubr.bf16.mxu0 0
        %5697 = vmatmul.mubr.bf16.gmra.mxu0 %v5562
        %v5698 = vpop.f32.mrf.mxu0
        %v5699 = vadd.f32 %v5442, %v5698
        %v5700 = vpop.f32.mrf.mxu0
        %v5701 = vpop.f32.mrf.mxu0
        %v5702 = vadd.f32 %v5445, %v5701
        %v5703 = vpop.f32.mrf.mxu0
        %5704 = vmatprep.mubr.bf16.mxu0 0
        %5705 = vmatmul.mubr.bf16.gmra.mxu0 %v5563
        %v5706 = vpop.f32.mrf.mxu0
        %v5707 = vadd.f32 %v5450, %v5706
        %v5708 = vpop.f32.mrf.mxu0
        %v5709 = vpop.f32.mrf.mxu0
        %v5710 = vadd.f32 %v5453, %v5709
        %v5711 = vpop.f32.mrf.mxu0
        %5712 = vmatprep.mubr.bf16.mxu0 0
        %5713 = vmatmul.mubr.bf16.gmra.mxu0 %v5564
        %v5714 = vpop.f32.mrf.mxu0
        %v5715 = vadd.f32 %v5458, %v5714
        %v5716 = vpop.f32.mrf.mxu0
        %v5717 = vpop.f32.mrf.mxu0
        %v5718 = vadd.f32 %v5461, %v5717
        %v5719 = vpop.f32.mrf.mxu0
        %5720 = vmatprep.mubr.bf16.mxu0 0
        %5721 = vmatmul.mubr.bf16.gmra.mxu0 %v5565
        %v5722 = vpop.f32.mrf.mxu0
        %v5723 = vadd.f32 %v5466, %v5722
        %v5724 = vpop.f32.mrf.mxu0
        %v5725 = vpop.f32.mrf.mxu0
        %v5726 = vadd.f32 %v5469, %v5725
        %v5727 = vpop.f32.mrf.mxu0
        %5728 = vmatprep.mubr.bf16.mxu0 0
        %5729 = vmatmul.mubr.bf16.gmra.mxu0 %v5566
        %v5730 = vpop.f32.mrf.mxu0
        %v5731 = vadd.f32 %v5474, %v5730
        %v5732 = vpop.f32.mrf.mxu0
        %v5733 = vpop.f32.mrf.mxu0
        %v5734 = vadd.f32 %v5477, %v5733
        %v5735 = vpop.f32.mrf.mxu0
        %5736 = vmatprep.mubr.bf16.mxu0 0
        %5737 = vmatmul.mubr.bf16.gmra.mxu0 %v5567
        %v5738 = vpop.f32.mrf.mxu0
        %v5739 = vadd.f32 %v5482, %v5738
        %v5740 = vpop.f32.mrf.mxu0
        %v5741 = vpop.f32.mrf.mxu0
        %v5742 = vadd.f32 %v5485, %v5741
        %v5743 = vpop.f32.mrf.mxu0
        %5744 = vdwg.mxu0
        %s5745 = scalar_lea.vmem %s8, 32
        %v5746 = vld [vmem:[%s5745] sm:$0xf]
        %v5747 = vld [vmem:[%s5745 + $0x4] sm:$0xf]
        %v5748 = vld [vmem:[%s5745 + $0x8] sm:$0xf]
        %v5749 = vld [vmem:[%s5745 + $0xc] sm:$0x1]
        %v5754 = vunpack.c.l.b16 %v5746
        %v5755 = vunpack.c.l.b16 %v5747
        %v5756 = vunpack.c.l.b16 %v5748
        %v5757 = vunpack.c.l.b16 %v5749
        %v5758 = vpack.c.b16 %v5755, %v5754
        %v5759 = vpack.c.b16 %v5757, %v5756
        %v5762 = vand.u32 %v5759, %v4933
        %5764 = vmatprep.subr.bf16.mxu0 0
        %5765 = vmatpush1.bf16.msra.mxu0 0
        %5766 = vmatprep.subr.bf16.mxu0 0
        %5767 = vmatpush1.bf16.msra.mxu0 0
        %5768 = vmatprep.subr.bf16.mxu0 0
        %5769 = vmatpush1.bf16.msra.mxu0 0
        %5770 = vmatprep.subr.bf16.mxu0 0
        %5771 = vmatpush1.bf16.msra.mxu0 0
        %5772 = vmatprep.subr.bf16.mxu0 0
        %5773 = vmatpush1.bf16.msra.mxu0 0
        %5774 = vmatprep.subr.bf16.mxu0 0
        %5775 = vmatpush1.bf16.msra.mxu0 0
        %5776 = vmatprep.subr.bf16.mxu0 0
        %5777 = vmatpush1.bf16.msra.mxu0 %v5762
        %5778 = vmatprep.subr.bf16.mxu0 0
        %5779 = vmatpush1.bf16.msra.mxu0 %v5758
        %5780 = vmatprep.subr.bf16.mxu0 0
        %5781 = vmatpush2.bf16.msra.mxu0 0
        %5782 = vmatprep.subr.bf16.mxu0 0
        %5783 = vmatpush2.bf16.msra.mxu0 0
        %5784 = vmatprep.subr.bf16.mxu0 0
        %5785 = vmatpush2.bf16.msra.mxu0 0
        %5786 = vmatprep.subr.bf16.mxu0 0
        %5787 = vmatpush2.bf16.msra.mxu0 0
        %5788 = vmatprep.subr.bf16.mxu0 0
        %5789 = vmatpush2.bf16.msra.mxu0 0
        %5790 = vmatprep.subr.bf16.mxu0 0
        %5791 = vmatpush2.bf16.msra.mxu0 0
        %5792 = vmatprep.subr.bf16.mxu0 0
        %5793 = vmatpush2.bf16.msra.mxu0 0
        %5794 = vmatprep.subr.bf16.mxu0 0
        %5795 = vmatpush2.bf16.msra.mxu0 0
        %5796 = vmatprep.mubr.bf16.mxu0 0
        %5797 = vmatmul.mubr.bf16.gmra.mxu0 %v4907
        %v5798 = vpop.f32.mrf.mxu0
        %v5799 = vadd.f32 0.0, %v5798
        %v5800 = vpop.f32.mrf.mxu0
        %v5801 = vpop.f32.mrf.mxu0
        %v5802 = vadd.f32 0.0, %v5801
        %v5803 = vpop.f32.mrf.mxu0
        %5804 = vmatprep.mubr.bf16.mxu0 0
        %5805 = vmatmul.mubr.bf16.gmra.mxu0 %v4910
        %v5806 = vpop.f32.mrf.mxu0
        %v5807 = vadd.f32 0.0, %v5806
        %v5808 = vpop.f32.mrf.mxu0
        %v5809 = vpop.f32.mrf.mxu0
        %v5810 = vadd.f32 0.0, %v5809
        %v5811 = vpop.f32.mrf.mxu0
        %5812 = vmatprep.mubr.bf16.mxu0 0
        %5813 = vmatmul.mubr.bf16.gmra.mxu0 %v4913
        %v5814 = vpop.f32.mrf.mxu0
        %v5815 = vadd.f32 0.0, %v5814
        %v5816 = vpop.f32.mrf.mxu0
        %v5817 = vpop.f32.mrf.mxu0
        %v5818 = vadd.f32 0.0, %v5817
        %v5819 = vpop.f32.mrf.mxu0
        %5820 = vmatprep.mubr.bf16.mxu0 0
        %5821 = vmatmul.mubr.bf16.gmra.mxu0 %v4916
        %v5822 = vpop.f32.mrf.mxu0
        %v5823 = vadd.f32 0.0, %v5822
        %v5824 = vpop.f32.mrf.mxu0
        %v5825 = vpop.f32.mrf.mxu0
        %v5826 = vadd.f32 0.0, %v5825
        %v5827 = vpop.f32.mrf.mxu0
        %5828 = vmatprep.mubr.bf16.mxu0 0
        %5829 = vmatmul.mubr.bf16.gmra.mxu0 %v4919
        %v5830 = vpop.f32.mrf.mxu0
        %v5831 = vadd.f32 0.0, %v5830
        %v5832 = vpop.f32.mrf.mxu0
        %v5833 = vpop.f32.mrf.mxu0
        %v5834 = vadd.f32 0.0, %v5833
        %v5835 = vpop.f32.mrf.mxu0
        %5836 = vmatprep.mubr.bf16.mxu0 0
        %5837 = vmatmul.mubr.bf16.gmra.mxu0 %v4922
        %v5838 = vpop.f32.mrf.mxu0
        %v5839 = vadd.f32 0.0, %v5838
        %v5840 = vpop.f32.mrf.mxu0
        %v5841 = vpop.f32.mrf.mxu0
        %v5842 = vadd.f32 0.0, %v5841
        %v5843 = vpop.f32.mrf.mxu0
        %5844 = vmatprep.mubr.bf16.mxu0 0
        %5845 = vmatmul.mubr.bf16.gmra.mxu0 %v4925
        %v5846 = vpop.f32.mrf.mxu0
        %v5847 = vadd.f32 0.0, %v5846
        %v5848 = vpop.f32.mrf.mxu0
        %v5849 = vpop.f32.mrf.mxu0
        %v5850 = vadd.f32 0.0, %v5849
        %v5851 = vpop.f32.mrf.mxu0
        %5852 = vmatprep.mubr.bf16.mxu0 0
        %5853 = vmatmul.mubr.bf16.gmra.mxu0 %v4928
        %v5854 = vpop.f32.mrf.mxu0
        %v5855 = vadd.f32 0.0, %v5854
        %v5856 = vpop.f32.mrf.mxu0
        %v5857 = vpop.f32.mrf.mxu0
        %v5858 = vadd.f32 0.0, %v5857
        %v5859 = vpop.f32.mrf.mxu0
        %5860 = vdwg.mxu0
        %v5861 = vpack.c.bf16 %v5802, %v5799
        %v5862 = vpack.c.bf16 %v5810, %v5807
        %v5863 = vpack.c.bf16 %v5818, %v5815
        %v5864 = vpack.c.bf16 %v5826, %v5823
        %v5865 = vpack.c.bf16 %v5834, %v5831
        %v5866 = vpack.c.bf16 %v5842, %v5839
        %v5867 = vpack.c.bf16 %v5850, %v5847
        %v5868 = vpack.c.bf16 %v5858, %v5855
        %s5869 = scalar_lea.vmem %s9, 256
        %v5870 = vld [vmem:[%s5869] sm:$0xf]
        %v5871 = vld [vmem:[%s5869 + $0x4] sm:$0xf]
        %v5872 = vld [vmem:[%s5869 + $0x8] sm:$0xf]
        %v5873 = vld [vmem:[%s5869 + $0xc] sm:$0xf]
        %v5874 = vld [vmem:[%s5869 + $0x10] sm:$0xf]
        %v5875 = vld [vmem:[%s5869 + $0x14] sm:$0xf]
        %v5876 = vld [vmem:[%s5869 + $0x18] sm:$0xf]
        %v5877 = vld [vmem:[%s5869 + $0x1c] sm:$0xf]
        %v5878 = vld [vmem:[%s5869 + $0x20] sm:$0xf]
        %v5879 = vld [vmem:[%s5869 + $0x24] sm:$0xf]
        %v5880 = vld [vmem:[%s5869 + $0x28] sm:$0xf]
        %v5881 = vld [vmem:[%s5869 + $0x2c] sm:$0xf]
        %v5882 = vld [vmem:[%s5869 + $0x30] sm:$0xf]
        %v5883 = vld [vmem:[%s5869 + $0x34] sm:$0xf]
        %v5884 = vld [vmem:[%s5869 + $0x38] sm:$0xf]
        %v5885 = vld [vmem:[%s5869 + $0x3c] sm:$0xf]
        %v5886 = vld [vmem:[%s5869 + $0x40] sm:$0xf]
        %v5887 = vld [vmem:[%s5869 + $0x44] sm:$0xf]
        %v5888 = vld [vmem:[%s5869 + $0x48] sm:$0xf]
        %v5889 = vld [vmem:[%s5869 + $0x4c] sm:$0xf]
        %v5890 = vld [vmem:[%s5869 + $0x50] sm:$0xf]
        %v5891 = vld [vmem:[%s5869 + $0x54] sm:$0xf]
        %v5892 = vld [vmem:[%s5869 + $0x58] sm:$0xf]
        %v5893 = vld [vmem:[%s5869 + $0x5c] sm:$0xf]
        %v5894 = vld [vmem:[%s5869 + $0x60] sm:$0xf]
        %v5895 = vld [vmem:[%s5869 + $0x64] sm:$0xf]
        %v5896 = vld [vmem:[%s5869 + $0x68] sm:$0xf]
        %v5897 = vld [vmem:[%s5869 + $0x6c] sm:$0xf]
        %v5898 = vld [vmem:[%s5869 + $0x70] sm:$0xf]
        %v5899 = vld [vmem:[%s5869 + $0x74] sm:$0xf]
        %v5900 = vld [vmem:[%s5869 + $0x78] sm:$0xf]
        %v5901 = vld [vmem:[%s5869 + $0x7c] sm:$0xf]
        %v5934 = vunpack.c.l.b16 %v5870
        %v5935 = vunpack.c.l.b16 %v5871
        %v5936 = vunpack.c.l.b16 %v5872
        %v5937 = vunpack.c.l.b16 %v5873
        %v5938 = vunpack.c.l.b16 %v5874
        %v5939 = vunpack.c.l.b16 %v5875
        %v5940 = vunpack.c.l.b16 %v5876
        %v5941 = vunpack.c.l.b16 %v5877
        %v5942 = vunpack.c.l.b16 %v5878
        %v5943 = vunpack.c.l.b16 %v5879
        %v5944 = vunpack.c.l.b16 %v5880
        %v5945 = vunpack.c.l.b16 %v5881
        %v5946 = vunpack.c.l.b16 %v5882
        %v5947 = vunpack.c.l.b16 %v5883
        %v5948 = vunpack.c.l.b16 %v5884
        %v5949 = vunpack.c.l.b16 %v5885
        %v5950 = vunpack.c.l.b16 %v5886
        %v5951 = vunpack.c.l.b16 %v5887
        %v5952 = vunpack.c.l.b16 %v5888
        %v5953 = vunpack.c.l.b16 %v5889
        %v5954 = vunpack.c.l.b16 %v5890
        %v5955 = vunpack.c.l.b16 %v5891
        %v5956 = vunpack.c.l.b16 %v5892
        %v5957 = vunpack.c.l.b16 %v5893
        %v5958 = vunpack.c.l.b16 %v5894
        %v5959 = vunpack.c.l.b16 %v5895
        %v5960 = vunpack.c.l.b16 %v5896
        %v5961 = vunpack.c.l.b16 %v5897
        %v5962 = vunpack.c.l.b16 %v5898
        %v5963 = vunpack.c.l.b16 %v5899
        %v5964 = vunpack.c.l.b16 %v5900
        %v5965 = vunpack.c.l.b16 %v5901
        %v5966 = vpack.c.b16 %v5935, %v5934
        %v5967 = vpack.c.b16 %v5937, %v5936
        %v5968 = vpack.c.b16 %v5939, %v5938
        %v5969 = vpack.c.b16 %v5941, %v5940
        %v5970 = vpack.c.b16 %v5943, %v5942
        %v5971 = vpack.c.b16 %v5945, %v5944
        %v5972 = vpack.c.b16 %v5947, %v5946
        %v5973 = vpack.c.b16 %v5949, %v5948
        %v5974 = vpack.c.b16 %v5951, %v5950
        %v5975 = vpack.c.b16 %v5953, %v5952
        %v5976 = vpack.c.b16 %v5955, %v5954
        %v5977 = vpack.c.b16 %v5957, %v5956
        %v5978 = vpack.c.b16 %v5959, %v5958
        %v5979 = vpack.c.b16 %v5961, %v5960
        %v5980 = vpack.c.b16 %v5963, %v5962
        %v5981 = vpack.c.b16 %v5965, %v5964
        %5998 = vmatprep.subr.bf16.mxu0 0
        %5999 = vmatpush1.bf16.msra.mxu0 %v5868
        %6000 = vmatprep.subr.bf16.mxu0 0
        %6001 = vmatpush1.bf16.msra.mxu0 %v5867
        %6002 = vmatprep.subr.bf16.mxu0 0
        %6003 = vmatpush1.bf16.msra.mxu0 %v5866
        %6004 = vmatprep.subr.bf16.mxu0 0
        %6005 = vmatpush1.bf16.msra.mxu0 %v5865
        %6006 = vmatprep.subr.bf16.mxu0 0
        %6007 = vmatpush1.bf16.msra.mxu0 %v5864
        %6008 = vmatprep.subr.bf16.mxu0 0
        %6009 = vmatpush1.bf16.msra.mxu0 %v5863
        %6010 = vmatprep.subr.bf16.mxu0 0
        %6011 = vmatpush1.bf16.msra.mxu0 %v5862
        %6012 = vmatprep.subr.bf16.mxu0 0
        %6013 = vmatpush1.bf16.msra.mxu0 %v5861
        %6014 = vmatprep.subr.bf16.mxu0 0
        %6015 = vmatpush2.bf16.msra.mxu0 0
        %6016 = vmatprep.subr.bf16.mxu0 0
        %6017 = vmatpush2.bf16.msra.mxu0 0
        %6018 = vmatprep.subr.bf16.mxu0 0
        %6019 = vmatpush2.bf16.msra.mxu0 0
        %6020 = vmatprep.subr.bf16.mxu0 0
        %6021 = vmatpush2.bf16.msra.mxu0 0
        %6022 = vmatprep.subr.bf16.mxu0 0
        %6023 = vmatpush2.bf16.msra.mxu0 0
        %6024 = vmatprep.subr.bf16.mxu0 0
        %6025 = vmatpush2.bf16.msra.mxu0 0
        %6026 = vmatprep.subr.bf16.mxu0 0
        %6027 = vmatpush2.bf16.msra.mxu0 0
        %6028 = vmatprep.subr.bf16.mxu0 0
        %6029 = vmatpush2.bf16.msra.mxu0 0
        %6030 = vmatprep.mubr.bf16.mxu0 0
        %6031 = vmatmul.mubr.bf16.gmra.mxu0 %v5966
        %v6032 = vpop.f32.mrf.mxu0
        %v6033 = vadd.f32 0.0, %v6032
        %v6034 = vpop.f32.mrf.mxu0
        %v6035 = vpop.f32.mrf.mxu0
        %v6036 = vadd.f32 0.0, %v6035
        %v6037 = vpop.f32.mrf.mxu0
        %6038 = vmatprep.mubr.bf16.mxu0 0
        %6039 = vmatmul.mubr.bf16.gmra.mxu0 %v5967
        %v6040 = vpop.f32.mrf.mxu0
        %v6041 = vadd.f32 0.0, %v6040
        %v6042 = vpop.f32.mrf.mxu0
        %v6043 = vpop.f32.mrf.mxu0
        %v6044 = vadd.f32 0.0, %v6043
        %v6045 = vpop.f32.mrf.mxu0
        %6046 = vmatprep.mubr.bf16.mxu0 0
        %6047 = vmatmul.mubr.bf16.gmra.mxu0 %v5968
        %v6048 = vpop.f32.mrf.mxu0
        %v6049 = vadd.f32 0.0, %v6048
        %v6050 = vpop.f32.mrf.mxu0
        %v6051 = vpop.f32.mrf.mxu0
        %v6052 = vadd.f32 0.0, %v6051
        %v6053 = vpop.f32.mrf.mxu0
        %6054 = vmatprep.mubr.bf16.mxu0 0
        %6055 = vmatmul.mubr.bf16.gmra.mxu0 %v5969
        %v6056 = vpop.f32.mrf.mxu0
        %v6057 = vadd.f32 0.0, %v6056
        %v6058 = vpop.f32.mrf.mxu0
        %v6059 = vpop.f32.mrf.mxu0
        %v6060 = vadd.f32 0.0, %v6059
        %v6061 = vpop.f32.mrf.mxu0
        %6062 = vmatprep.mubr.bf16.mxu0 0
        %6063 = vmatmul.mubr.bf16.gmra.mxu0 %v5970
        %v6064 = vpop.f32.mrf.mxu0
        %v6065 = vadd.f32 0.0, %v6064
        %v6066 = vpop.f32.mrf.mxu0
        %v6067 = vpop.f32.mrf.mxu0
        %v6068 = vadd.f32 0.0, %v6067
        %v6069 = vpop.f32.mrf.mxu0
        %6070 = vmatprep.mubr.bf16.mxu0 0
        %6071 = vmatmul.mubr.bf16.gmra.mxu0 %v5971
        %v6072 = vpop.f32.mrf.mxu0
        %v6073 = vadd.f32 0.0, %v6072
        %v6074 = vpop.f32.mrf.mxu0
        %v6075 = vpop.f32.mrf.mxu0
        %v6076 = vadd.f32 0.0, %v6075
        %v6077 = vpop.f32.mrf.mxu0
        %6078 = vmatprep.mubr.bf16.mxu0 0
        %6079 = vmatmul.mubr.bf16.gmra.mxu0 %v5972
        %v6080 = vpop.f32.mrf.mxu0
        %v6081 = vadd.f32 0.0, %v6080
        %v6082 = vpop.f32.mrf.mxu0
        %v6083 = vpop.f32.mrf.mxu0
        %v6084 = vadd.f32 0.0, %v6083
        %v6085 = vpop.f32.mrf.mxu0
        %6086 = vmatprep.mubr.bf16.mxu0 0
        %6087 = vmatmul.mubr.bf16.gmra.mxu0 %v5973
        %v6088 = vpop.f32.mrf.mxu0
        %v6089 = vadd.f32 0.0, %v6088
        %v6090 = vpop.f32.mrf.mxu0
        %v6091 = vpop.f32.mrf.mxu0
        %v6092 = vadd.f32 0.0, %v6091
        %v6093 = vpop.f32.mrf.mxu0
        %6094 = vmatprep.mubr.bf16.mxu0 0
        %6095 = vmatmul.mubr.bf16.gmra.mxu0 %v5974
        %v6096 = vpop.f32.mrf.mxu0
        %v6097 = vadd.f32 0.0, %v6096
        %v6098 = vpop.f32.mrf.mxu0
        %v6099 = vpop.f32.mrf.mxu0
        %v6100 = vadd.f32 0.0, %v6099
        %v6101 = vpop.f32.mrf.mxu0
        %6102 = vmatprep.mubr.bf16.mxu0 0
        %6103 = vmatmul.mubr.bf16.gmra.mxu0 %v5975
        %v6104 = vpop.f32.mrf.mxu0
        %v6105 = vadd.f32 0.0, %v6104
        %v6106 = vpop.f32.mrf.mxu0
        %v6107 = vpop.f32.mrf.mxu0
        %v6108 = vadd.f32 0.0, %v6107
        %v6109 = vpop.f32.mrf.mxu0
        %6110 = vmatprep.mubr.bf16.mxu0 0
        %6111 = vmatmul.mubr.bf16.gmra.mxu0 %v5976
        %v6112 = vpop.f32.mrf.mxu0
        %v6113 = vadd.f32 0.0, %v6112
        %v6114 = vpop.f32.mrf.mxu0
        %v6115 = vpop.f32.mrf.mxu0
        %v6116 = vadd.f32 0.0, %v6115
        %v6117 = vpop.f32.mrf.mxu0
        %6118 = vmatprep.mubr.bf16.mxu0 0
        %6119 = vmatmul.mubr.bf16.gmra.mxu0 %v5977
        %v6120 = vpop.f32.mrf.mxu0
        %v6121 = vadd.f32 0.0, %v6120
        %v6122 = vpop.f32.mrf.mxu0
        %v6123 = vpop.f32.mrf.mxu0
        %v6124 = vadd.f32 0.0, %v6123
        %v6125 = vpop.f32.mrf.mxu0
        %6126 = vmatprep.mubr.bf16.mxu0 0
        %6127 = vmatmul.mubr.bf16.gmra.mxu0 %v5978
        %v6128 = vpop.f32.mrf.mxu0
        %v6129 = vadd.f32 0.0, %v6128
        %v6130 = vpop.f32.mrf.mxu0
        %v6131 = vpop.f32.mrf.mxu0
        %v6132 = vadd.f32 0.0, %v6131
        %v6133 = vpop.f32.mrf.mxu0
        %6134 = vmatprep.mubr.bf16.mxu0 0
        %6135 = vmatmul.mubr.bf16.gmra.mxu0 %v5979
        %v6136 = vpop.f32.mrf.mxu0
        %v6137 = vadd.f32 0.0, %v6136
        %v6138 = vpop.f32.mrf.mxu0
        %v6139 = vpop.f32.mrf.mxu0
        %v6140 = vadd.f32 0.0, %v6139
        %v6141 = vpop.f32.mrf.mxu0
        %6142 = vmatprep.mubr.bf16.mxu0 0
        %6143 = vmatmul.mubr.bf16.gmra.mxu0 %v5980
        %v6144 = vpop.f32.mrf.mxu0
        %v6145 = vadd.f32 0.0, %v6144
        %v6146 = vpop.f32.mrf.mxu0
        %v6147 = vpop.f32.mrf.mxu0
        %v6148 = vadd.f32 0.0, %v6147
        %v6149 = vpop.f32.mrf.mxu0
        %6150 = vmatprep.mubr.bf16.mxu0 0
        %6151 = vmatmul.mubr.bf16.gmra.mxu0 %v5981
        %v6152 = vpop.f32.mrf.mxu0
        %v6153 = vadd.f32 0.0, %v6152
        %v6154 = vpop.f32.mrf.mxu0
        %v6155 = vpop.f32.mrf.mxu0
        %v6156 = vadd.f32 0.0, %v6155
        %v6157 = vpop.f32.mrf.mxu0
        %6158 = vdwg.mxu0
        %v6159 = vadd.f32 %v5619, %v6033
        %v6160 = vadd.f32 %v5622, %v6036
        %v6161 = vadd.f32 %v5627, %v6041
        %v6162 = vadd.f32 %v5630, %v6044
        %v6163 = vadd.f32 %v5635, %v6049
        %v6164 = vadd.f32 %v5638, %v6052
        %v6165 = vadd.f32 %v5643, %v6057
        %v6166 = vadd.f32 %v5646, %v6060
        %v6167 = vadd.f32 %v5651, %v6065
        %v6168 = vadd.f32 %v5654, %v6068
        %v6169 = vadd.f32 %v5659, %v6073
        %v6170 = vadd.f32 %v5662, %v6076
        %v6171 = vadd.f32 %v5667, %v6081
        %v6172 = vadd.f32 %v5670, %v6084
        %v6173 = vadd.f32 %v5675, %v6089
        %v6174 = vadd.f32 %v5678, %v6092
        %v6175 = vadd.f32 %v5683, %v6097
        %v6176 = vadd.f32 %v5686, %v6100
        %v6177 = vadd.f32 %v5691, %v6105
        %v6178 = vadd.f32 %v5694, %v6108
        %v6179 = vadd.f32 %v5699, %v6113
        %v6180 = vadd.f32 %v5702, %v6116
        %v6181 = vadd.f32 %v5707, %v6121
        %v6182 = vadd.f32 %v5710, %v6124
        %v6183 = vadd.f32 %v5715, %v6129
        %v6184 = vadd.f32 %v5718, %v6132
        %v6185 = vadd.f32 %v5723, %v6137
        %v6186 = vadd.f32 %v5726, %v6140
        %v6187 = vadd.f32 %v5731, %v6145
        %v6188 = vadd.f32 %v5734, %v6148
        %v6189 = vadd.f32 %v5739, %v6153
        %v6190 = vadd.f32 %v5742, %v6156
        %s6191 = scalar_lea.vmem %s8, 48
        %v6192 = vld [vmem:[%s6191] sm:$0xf]
        %v6193 = vld [vmem:[%s6191 + $0x4] sm:$0xf]
        %v6194 = vld [vmem:[%s6191 + $0x8] sm:$0xf]
        %v6195 = vld [vmem:[%s6191 + $0xc] sm:$0x1]
        %v6200 = vunpack.c.l.b16 %v6192
        %v6201 = vunpack.c.l.b16 %v6193
        %v6202 = vunpack.c.l.b16 %v6194
        %v6203 = vunpack.c.l.b16 %v6195
        %v6204 = vpack.c.b16 %v6201, %v6200
        %v6205 = vpack.c.b16 %v6203, %v6202
        %v6208 = vand.u32 %v6205, %v4933
        %6210 = vmatprep.subr.bf16.mxu0 0
        %6211 = vmatpush1.bf16.msra.mxu0 0
        %6212 = vmatprep.subr.bf16.mxu0 0
        %6213 = vmatpush1.bf16.msra.mxu0 0
        %6214 = vmatprep.subr.bf16.mxu0 0
        %6215 = vmatpush1.bf16.msra.mxu0 0
        %6216 = vmatprep.subr.bf16.mxu0 0
        %6217 = vmatpush1.bf16.msra.mxu0 0
        %6218 = vmatprep.subr.bf16.mxu0 0
        %6219 = vmatpush1.bf16.msra.mxu0 0
        %6220 = vmatprep.subr.bf16.mxu0 0
        %6221 = vmatpush1.bf16.msra.mxu0 0
        %6222 = vmatprep.subr.bf16.mxu0 0
        %6223 = vmatpush1.bf16.msra.mxu0 %v6208
        %6224 = vmatprep.subr.bf16.mxu0 0
        %6225 = vmatpush1.bf16.msra.mxu0 %v6204
        %6226 = vmatprep.subr.bf16.mxu0 0
        %6227 = vmatpush2.bf16.msra.mxu0 0
        %6228 = vmatprep.subr.bf16.mxu0 0
        %6229 = vmatpush2.bf16.msra.mxu0 0
        %6230 = vmatprep.subr.bf16.mxu0 0
        %6231 = vmatpush2.bf16.msra.mxu0 0
        %6232 = vmatprep.subr.bf16.mxu0 0
        %6233 = vmatpush2.bf16.msra.mxu0 0
        %6234 = vmatprep.subr.bf16.mxu0 0
        %6235 = vmatpush2.bf16.msra.mxu0 0
        %6236 = vmatprep.subr.bf16.mxu0 0
        %6237 = vmatpush2.bf16.msra.mxu0 0
        %6238 = vmatprep.subr.bf16.mxu0 0
        %6239 = vmatpush2.bf16.msra.mxu0 0
        %6240 = vmatprep.subr.bf16.mxu0 0
        %6241 = vmatpush2.bf16.msra.mxu0 0
        %6242 = vmatprep.mubr.bf16.mxu0 0
        %6243 = vmatmul.mubr.bf16.gmra.mxu0 %v4907
        %v6244 = vpop.f32.mrf.mxu0
        %v6245 = vadd.f32 0.0, %v6244
        %v6246 = vpop.f32.mrf.mxu0
        %v6247 = vpop.f32.mrf.mxu0
        %v6248 = vadd.f32 0.0, %v6247
        %v6249 = vpop.f32.mrf.mxu0
        %6250 = vmatprep.mubr.bf16.mxu0 0
        %6251 = vmatmul.mubr.bf16.gmra.mxu0 %v4910
        %v6252 = vpop.f32.mrf.mxu0
        %v6253 = vadd.f32 0.0, %v6252
        %v6254 = vpop.f32.mrf.mxu0
        %v6255 = vpop.f32.mrf.mxu0
        %v6256 = vadd.f32 0.0, %v6255
        %v6257 = vpop.f32.mrf.mxu0
        %6258 = vmatprep.mubr.bf16.mxu0 0
        %6259 = vmatmul.mubr.bf16.gmra.mxu0 %v4913
        %v6260 = vpop.f32.mrf.mxu0
        %v6261 = vadd.f32 0.0, %v6260
        %v6262 = vpop.f32.mrf.mxu0
        %v6263 = vpop.f32.mrf.mxu0
        %v6264 = vadd.f32 0.0, %v6263
        %v6265 = vpop.f32.mrf.mxu0
        %6266 = vmatprep.mubr.bf16.mxu0 0
        %6267 = vmatmul.mubr.bf16.gmra.mxu0 %v4916
        %v6268 = vpop.f32.mrf.mxu0
        %v6269 = vadd.f32 0.0, %v6268
        %v6270 = vpop.f32.mrf.mxu0
        %v6271 = vpop.f32.mrf.mxu0
        %v6272 = vadd.f32 0.0, %v6271
        %v6273 = vpop.f32.mrf.mxu0
        %6274 = vmatprep.mubr.bf16.mxu0 0
        %6275 = vmatmul.mubr.bf16.gmra.mxu0 %v4919
        %v6276 = vpop.f32.mrf.mxu0
        %v6277 = vadd.f32 0.0, %v6276
        %v6278 = vpop.f32.mrf.mxu0
        %v6279 = vpop.f32.mrf.mxu0
        %v6280 = vadd.f32 0.0, %v6279
        %v6281 = vpop.f32.mrf.mxu0
        %6282 = vmatprep.mubr.bf16.mxu0 0
        %6283 = vmatmul.mubr.bf16.gmra.mxu0 %v4922
        %v6284 = vpop.f32.mrf.mxu0
        %v6285 = vadd.f32 0.0, %v6284
        %v6286 = vpop.f32.mrf.mxu0
        %v6287 = vpop.f32.mrf.mxu0
        %v6288 = vadd.f32 0.0, %v6287
        %v6289 = vpop.f32.mrf.mxu0
        %6290 = vmatprep.mubr.bf16.mxu0 0
        %6291 = vmatmul.mubr.bf16.gmra.mxu0 %v4925
        %v6292 = vpop.f32.mrf.mxu0
        %v6293 = vadd.f32 0.0, %v6292
        %v6294 = vpop.f32.mrf.mxu0
        %v6295 = vpop.f32.mrf.mxu0
        %v6296 = vadd.f32 0.0, %v6295
        %v6297 = vpop.f32.mrf.mxu0
        %6298 = vmatprep.mubr.bf16.mxu0 0
        %6299 = vmatmul.mubr.bf16.gmra.mxu0 %v4928
        %v6300 = vpop.f32.mrf.mxu0
        %v6301 = vadd.f32 0.0, %v6300
        %v6302 = vpop.f32.mrf.mxu0
        %v6303 = vpop.f32.mrf.mxu0
        %v6304 = vadd.f32 0.0, %v6303
        %v6305 = vpop.f32.mrf.mxu0
        %6306 = vdwg.mxu0
        %v6307 = vpack.c.bf16 %v6248, %v6245
        %v6308 = vpack.c.bf16 %v6256, %v6253
        %v6309 = vpack.c.bf16 %v6264, %v6261
        %v6310 = vpack.c.bf16 %v6272, %v6269
        %v6311 = vpack.c.bf16 %v6280, %v6277
        %v6312 = vpack.c.bf16 %v6288, %v6285
        %v6313 = vpack.c.bf16 %v6296, %v6293
        %v6314 = vpack.c.bf16 %v6304, %v6301
        %s6315 = scalar_lea.vmem %s9, 384
        %v6316 = vld [vmem:[%s6315] sm:$0xf]
        %v6317 = vld [vmem:[%s6315 + $0x4] sm:$0xf]
        %v6318 = vld [vmem:[%s6315 + $0x8] sm:$0xf]
        %v6319 = vld [vmem:[%s6315 + $0xc] sm:$0xf]
        %v6320 = vld [vmem:[%s6315 + $0x10] sm:$0xf]
        %v6321 = vld [vmem:[%s6315 + $0x14] sm:$0xf]
        %v6322 = vld [vmem:[%s6315 + $0x18] sm:$0xf]
        %v6323 = vld [vmem:[%s6315 + $0x1c] sm:$0xf]
        %v6324 = vld [vmem:[%s6315 + $0x20] sm:$0xf]
        %v6325 = vld [vmem:[%s6315 + $0x24] sm:$0xf]
        %v6326 = vld [vmem:[%s6315 + $0x28] sm:$0xf]
        %v6327 = vld [vmem:[%s6315 + $0x2c] sm:$0xf]
        %v6328 = vld [vmem:[%s6315 + $0x30] sm:$0xf]
        %v6329 = vld [vmem:[%s6315 + $0x34] sm:$0xf]
        %v6330 = vld [vmem:[%s6315 + $0x38] sm:$0xf]
        %v6331 = vld [vmem:[%s6315 + $0x3c] sm:$0xf]
        %v6332 = vld [vmem:[%s6315 + $0x40] sm:$0xf]
        %v6333 = vld [vmem:[%s6315 + $0x44] sm:$0xf]
        %v6334 = vld [vmem:[%s6315 + $0x48] sm:$0xf]
        %v6335 = vld [vmem:[%s6315 + $0x4c] sm:$0xf]
        %v6336 = vld [vmem:[%s6315 + $0x50] sm:$0xf]
        %v6337 = vld [vmem:[%s6315 + $0x54] sm:$0xf]
        %v6338 = vld [vmem:[%s6315 + $0x58] sm:$0xf]
        %v6339 = vld [vmem:[%s6315 + $0x5c] sm:$0xf]
        %v6340 = vld [vmem:[%s6315 + $0x60] sm:$0xf]
        %v6341 = vld [vmem:[%s6315 + $0x64] sm:$0xf]
        %v6342 = vld [vmem:[%s6315 + $0x68] sm:$0xf]
        %v6343 = vld [vmem:[%s6315 + $0x6c] sm:$0xf]
        %v6344 = vld [vmem:[%s6315 + $0x70] sm:$0xf]
        %v6345 = vld [vmem:[%s6315 + $0x74] sm:$0xf]
        %v6346 = vld [vmem:[%s6315 + $0x78] sm:$0xf]
        %v6347 = vld [vmem:[%s6315 + $0x7c] sm:$0xf]
        %v6380 = vunpack.c.l.b16 %v6316
        %v6381 = vunpack.c.l.b16 %v6317
        %v6382 = vunpack.c.l.b16 %v6318
        %v6383 = vunpack.c.l.b16 %v6319
        %v6384 = vunpack.c.l.b16 %v6320
        %v6385 = vunpack.c.l.b16 %v6321
        %v6386 = vunpack.c.l.b16 %v6322
        %v6387 = vunpack.c.l.b16 %v6323
        %v6388 = vunpack.c.l.b16 %v6324
        %v6389 = vunpack.c.l.b16 %v6325
        %v6390 = vunpack.c.l.b16 %v6326
        %v6391 = vunpack.c.l.b16 %v6327
        %v6392 = vunpack.c.l.b16 %v6328
        %v6393 = vunpack.c.l.b16 %v6329
        %v6394 = vunpack.c.l.b16 %v6330
        %v6395 = vunpack.c.l.b16 %v6331
        %v6396 = vunpack.c.l.b16 %v6332
        %v6397 = vunpack.c.l.b16 %v6333
        %v6398 = vunpack.c.l.b16 %v6334
        %v6399 = vunpack.c.l.b16 %v6335
        %v6400 = vunpack.c.l.b16 %v6336
        %v6401 = vunpack.c.l.b16 %v6337
        %v6402 = vunpack.c.l.b16 %v6338
        %v6403 = vunpack.c.l.b16 %v6339
        %v6404 = vunpack.c.l.b16 %v6340
        %v6405 = vunpack.c.l.b16 %v6341
        %v6406 = vunpack.c.l.b16 %v6342
        %v6407 = vunpack.c.l.b16 %v6343
        %v6408 = vunpack.c.l.b16 %v6344
        %v6409 = vunpack.c.l.b16 %v6345
        %v6410 = vunpack.c.l.b16 %v6346
        %v6411 = vunpack.c.l.b16 %v6347
        %v6412 = vpack.c.b16 %v6381, %v6380
        %v6413 = vpack.c.b16 %v6383, %v6382
        %v6414 = vpack.c.b16 %v6385, %v6384
        %v6415 = vpack.c.b16 %v6387, %v6386
        %v6416 = vpack.c.b16 %v6389, %v6388
        %v6417 = vpack.c.b16 %v6391, %v6390
        %v6418 = vpack.c.b16 %v6393, %v6392
        %v6419 = vpack.c.b16 %v6395, %v6394
        %v6420 = vpack.c.b16 %v6397, %v6396
        %v6421 = vpack.c.b16 %v6399, %v6398
        %v6422 = vpack.c.b16 %v6401, %v6400
        %v6423 = vpack.c.b16 %v6403, %v6402
        %v6424 = vpack.c.b16 %v6405, %v6404
        %v6425 = vpack.c.b16 %v6407, %v6406
        %v6426 = vpack.c.b16 %v6409, %v6408
        %v6427 = vpack.c.b16 %v6411, %v6410
        %6444 = vmatprep.subr.bf16.mxu0 0
        %6445 = vmatpush1.bf16.msra.mxu0 %v6314
        %6446 = vmatprep.subr.bf16.mxu0 0
        %6447 = vmatpush1.bf16.msra.mxu0 %v6313
        %6448 = vmatprep.subr.bf16.mxu0 0
        %6449 = vmatpush1.bf16.msra.mxu0 %v6312
        %6450 = vmatprep.subr.bf16.mxu0 0
        %6451 = vmatpush1.bf16.msra.mxu0 %v6311
        %6452 = vmatprep.subr.bf16.mxu0 0
        %6453 = vmatpush1.bf16.msra.mxu0 %v6310
        %6454 = vmatprep.subr.bf16.mxu0 0
        %6455 = vmatpush1.bf16.msra.mxu0 %v6309
        %6456 = vmatprep.subr.bf16.mxu0 0
        %6457 = vmatpush1.bf16.msra.mxu0 %v6308
        %6458 = vmatprep.subr.bf16.mxu0 0
        %6459 = vmatpush1.bf16.msra.mxu0 %v6307
        %6460 = vmatprep.subr.bf16.mxu0 0
        %6461 = vmatpush2.bf16.msra.mxu0 0
        %6462 = vmatprep.subr.bf16.mxu0 0
        %6463 = vmatpush2.bf16.msra.mxu0 0
        %6464 = vmatprep.subr.bf16.mxu0 0
        %6465 = vmatpush2.bf16.msra.mxu0 0
        %6466 = vmatprep.subr.bf16.mxu0 0
        %6467 = vmatpush2.bf16.msra.mxu0 0
        %6468 = vmatprep.subr.bf16.mxu0 0
        %6469 = vmatpush2.bf16.msra.mxu0 0
        %6470 = vmatprep.subr.bf16.mxu0 0
        %6471 = vmatpush2.bf16.msra.mxu0 0
        %6472 = vmatprep.subr.bf16.mxu0 0
        %6473 = vmatpush2.bf16.msra.mxu0 0
        %6474 = vmatprep.subr.bf16.mxu0 0
        %6475 = vmatpush2.bf16.msra.mxu0 0
        %6476 = vmatprep.mubr.bf16.mxu0 0
        %6477 = vmatmul.mubr.bf16.gmra.mxu0 %v6412
        %v6478 = vpop.f32.mrf.mxu0
        %v6479 = vadd.f32 0.0, %v6478
        %v6480 = vpop.f32.mrf.mxu0
        %v6481 = vpop.f32.mrf.mxu0
        %v6482 = vadd.f32 0.0, %v6481
        %v6483 = vpop.f32.mrf.mxu0
        %6484 = vmatprep.mubr.bf16.mxu0 0
        %6485 = vmatmul.mubr.bf16.gmra.mxu0 %v6413
        %v6486 = vpop.f32.mrf.mxu0
        %v6487 = vadd.f32 0.0, %v6486
        %v6488 = vpop.f32.mrf.mxu0
        %v6489 = vpop.f32.mrf.mxu0
        %v6490 = vadd.f32 0.0, %v6489
        %v6491 = vpop.f32.mrf.mxu0
        %6492 = vmatprep.mubr.bf16.mxu0 0
        %6493 = vmatmul.mubr.bf16.gmra.mxu0 %v6414
        %v6494 = vpop.f32.mrf.mxu0
        %v6495 = vadd.f32 0.0, %v6494
        %v6496 = vpop.f32.mrf.mxu0
        %v6497 = vpop.f32.mrf.mxu0
        %v6498 = vadd.f32 0.0, %v6497
        %v6499 = vpop.f32.mrf.mxu0
        %6500 = vmatprep.mubr.bf16.mxu0 0
        %6501 = vmatmul.mubr.bf16.gmra.mxu0 %v6415
        %v6502 = vpop.f32.mrf.mxu0
        %v6503 = vadd.f32 0.0, %v6502
        %v6504 = vpop.f32.mrf.mxu0
        %v6505 = vpop.f32.mrf.mxu0
        %v6506 = vadd.f32 0.0, %v6505
        %v6507 = vpop.f32.mrf.mxu0
        %6508 = vmatprep.mubr.bf16.mxu0 0
        %6509 = vmatmul.mubr.bf16.gmra.mxu0 %v6416
        %v6510 = vpop.f32.mrf.mxu0
        %v6511 = vadd.f32 0.0, %v6510
        %v6512 = vpop.f32.mrf.mxu0
        %v6513 = vpop.f32.mrf.mxu0
        %v6514 = vadd.f32 0.0, %v6513
        %v6515 = vpop.f32.mrf.mxu0
        %6516 = vmatprep.mubr.bf16.mxu0 0
        %6517 = vmatmul.mubr.bf16.gmra.mxu0 %v6417
        %v6518 = vpop.f32.mrf.mxu0
        %v6519 = vadd.f32 0.0, %v6518
        %v6520 = vpop.f32.mrf.mxu0
        %v6521 = vpop.f32.mrf.mxu0
        %v6522 = vadd.f32 0.0, %v6521
        %v6523 = vpop.f32.mrf.mxu0
        %6524 = vmatprep.mubr.bf16.mxu0 0
        %6525 = vmatmul.mubr.bf16.gmra.mxu0 %v6418
        %v6526 = vpop.f32.mrf.mxu0
        %v6527 = vadd.f32 0.0, %v6526
        %v6528 = vpop.f32.mrf.mxu0
        %v6529 = vpop.f32.mrf.mxu0
        %v6530 = vadd.f32 0.0, %v6529
        %v6531 = vpop.f32.mrf.mxu0
        %6532 = vmatprep.mubr.bf16.mxu0 0
        %6533 = vmatmul.mubr.bf16.gmra.mxu0 %v6419
        %v6534 = vpop.f32.mrf.mxu0
        %v6535 = vadd.f32 0.0, %v6534
        %v6536 = vpop.f32.mrf.mxu0
        %v6537 = vpop.f32.mrf.mxu0
        %v6538 = vadd.f32 0.0, %v6537
        %v6539 = vpop.f32.mrf.mxu0
        %6540 = vmatprep.mubr.bf16.mxu0 0
        %6541 = vmatmul.mubr.bf16.gmra.mxu0 %v6420
        %v6542 = vpop.f32.mrf.mxu0
        %v6543 = vadd.f32 0.0, %v6542
        %v6544 = vpop.f32.mrf.mxu0
        %v6545 = vpop.f32.mrf.mxu0
        %v6546 = vadd.f32 0.0, %v6545
        %v6547 = vpop.f32.mrf.mxu0
        %6548 = vmatprep.mubr.bf16.mxu0 0
        %6549 = vmatmul.mubr.bf16.gmra.mxu0 %v6421
        %v6550 = vpop.f32.mrf.mxu0
        %v6551 = vadd.f32 0.0, %v6550
        %v6552 = vpop.f32.mrf.mxu0
        %v6553 = vpop.f32.mrf.mxu0
        %v6554 = vadd.f32 0.0, %v6553
        %v6555 = vpop.f32.mrf.mxu0
        %6556 = vmatprep.mubr.bf16.mxu0 0
        %6557 = vmatmul.mubr.bf16.gmra.mxu0 %v6422
        %v6558 = vpop.f32.mrf.mxu0
        %v6559 = vadd.f32 0.0, %v6558
        %v6560 = vpop.f32.mrf.mxu0
        %v6561 = vpop.f32.mrf.mxu0
        %v6562 = vadd.f32 0.0, %v6561
        %v6563 = vpop.f32.mrf.mxu0
        %6564 = vmatprep.mubr.bf16.mxu0 0
        %6565 = vmatmul.mubr.bf16.gmra.mxu0 %v6423
        %v6566 = vpop.f32.mrf.mxu0
        %v6567 = vadd.f32 0.0, %v6566
        %v6568 = vpop.f32.mrf.mxu0
        %v6569 = vpop.f32.mrf.mxu0
        %v6570 = vadd.f32 0.0, %v6569
        %v6571 = vpop.f32.mrf.mxu0
        %6572 = vmatprep.mubr.bf16.mxu0 0
        %6573 = vmatmul.mubr.bf16.gmra.mxu0 %v6424
        %v6574 = vpop.f32.mrf.mxu0
        %v6575 = vadd.f32 0.0, %v6574
        %v6576 = vpop.f32.mrf.mxu0
        %v6577 = vpop.f32.mrf.mxu0
        %v6578 = vadd.f32 0.0, %v6577
        %v6579 = vpop.f32.mrf.mxu0
        %6580 = vmatprep.mubr.bf16.mxu0 0
        %6581 = vmatmul.mubr.bf16.gmra.mxu0 %v6425
        %v6582 = vpop.f32.mrf.mxu0
        %v6583 = vadd.f32 0.0, %v6582
        %v6584 = vpop.f32.mrf.mxu0
        %v6585 = vpop.f32.mrf.mxu0
        %v6586 = vadd.f32 0.0, %v6585
        %v6587 = vpop.f32.mrf.mxu0
        %6588 = vmatprep.mubr.bf16.mxu0 0
        %6589 = vmatmul.mubr.bf16.gmra.mxu0 %v6426
        %v6590 = vpop.f32.mrf.mxu0
        %v6591 = vadd.f32 0.0, %v6590
        %v6592 = vpop.f32.mrf.mxu0
        %v6593 = vpop.f32.mrf.mxu0
        %v6594 = vadd.f32 0.0, %v6593
        %v6595 = vpop.f32.mrf.mxu0
        %6596 = vmatprep.mubr.bf16.mxu0 0
        %6597 = vmatmul.mubr.bf16.gmra.mxu0 %v6427
        %v6598 = vpop.f32.mrf.mxu0
        %v6599 = vadd.f32 0.0, %v6598
        %v6600 = vpop.f32.mrf.mxu0
        %v6601 = vpop.f32.mrf.mxu0
        %v6602 = vadd.f32 0.0, %v6601
        %v6603 = vpop.f32.mrf.mxu0
        %6604 = vdwg.mxu0
        %v6605 = vadd.f32 %v6159, %v6479
        %v6606 = vadd.f32 %v6160, %v6482
        %v6607 = vadd.f32 %v6161, %v6487
        %v6608 = vadd.f32 %v6162, %v6490
        %v6609 = vadd.f32 %v6163, %v6495
        %v6610 = vadd.f32 %v6164, %v6498
        %v6611 = vadd.f32 %v6165, %v6503
        %v6612 = vadd.f32 %v6166, %v6506
        %v6613 = vadd.f32 %v6167, %v6511
        %v6614 = vadd.f32 %v6168, %v6514
        %v6615 = vadd.f32 %v6169, %v6519
        %v6616 = vadd.f32 %v6170, %v6522
        %v6617 = vadd.f32 %v6171, %v6527
        %v6618 = vadd.f32 %v6172, %v6530
        %v6619 = vadd.f32 %v6173, %v6535
        %v6620 = vadd.f32 %v6174, %v6538
        %v6621 = vadd.f32 %v6175, %v6543
        %v6622 = vadd.f32 %v6176, %v6546
        %v6623 = vadd.f32 %v6177, %v6551
        %v6624 = vadd.f32 %v6178, %v6554
        %v6625 = vadd.f32 %v6179, %v6559
        %v6626 = vadd.f32 %v6180, %v6562
        %v6627 = vadd.f32 %v6181, %v6567
        %v6628 = vadd.f32 %v6182, %v6570
        %v6629 = vadd.f32 %v6183, %v6575
        %v6630 = vadd.f32 %v6184, %v6578
        %v6631 = vadd.f32 %v6185, %v6583
        %v6632 = vadd.f32 %v6186, %v6586
        %v6633 = vadd.f32 %v6187, %v6591
        %v6634 = vadd.f32 %v6188, %v6594
        %v6635 = vadd.f32 %v6189, %v6599
        %v6636 = vadd.f32 %v6190, %v6602
        %s6637 = scalar_lea.vmem %s8, 64
        %v6638 = vld [vmem:[%s6637] sm:$0xf]
        %v6639 = vld [vmem:[%s6637 + $0x4] sm:$0xf]
        %v6640 = vld [vmem:[%s6637 + $0x8] sm:$0xf]
        %v6641 = vld [vmem:[%s6637 + $0xc] sm:$0x1]
        %v6646 = vunpack.c.l.b16 %v6638
        %v6647 = vunpack.c.l.b16 %v6639
        %v6648 = vunpack.c.l.b16 %v6640
        %v6649 = vunpack.c.l.b16 %v6641
        %v6650 = vpack.c.b16 %v6647, %v6646
        %v6651 = vpack.c.b16 %v6649, %v6648
        %v6654 = vand.u32 %v6651, %v4933
        %6656 = vmatprep.subr.bf16.mxu0 0
        %6657 = vmatpush1.bf16.msra.mxu0 0
        %6658 = vmatprep.subr.bf16.mxu0 0
        %6659 = vmatpush1.bf16.msra.mxu0 0
        %6660 = vmatprep.subr.bf16.mxu0 0
        %6661 = vmatpush1.bf16.msra.mxu0 0
        %6662 = vmatprep.subr.bf16.mxu0 0
        %6663 = vmatpush1.bf16.msra.mxu0 0
        %6664 = vmatprep.subr.bf16.mxu0 0
        %6665 = vmatpush1.bf16.msra.mxu0 0
        %6666 = vmatprep.subr.bf16.mxu0 0
        %6667 = vmatpush1.bf16.msra.mxu0 0
        %6668 = vmatprep.subr.bf16.mxu0 0
        %6669 = vmatpush1.bf16.msra.mxu0 %v6654
        %6670 = vmatprep.subr.bf16.mxu0 0
        %6671 = vmatpush1.bf16.msra.mxu0 %v6650
        %6672 = vmatprep.subr.bf16.mxu0 0
        %6673 = vmatpush2.bf16.msra.mxu0 0
        %6674 = vmatprep.subr.bf16.mxu0 0
        %6675 = vmatpush2.bf16.msra.mxu0 0
        %6676 = vmatprep.subr.bf16.mxu0 0
        %6677 = vmatpush2.bf16.msra.mxu0 0
        %6678 = vmatprep.subr.bf16.mxu0 0
        %6679 = vmatpush2.bf16.msra.mxu0 0
        %6680 = vmatprep.subr.bf16.mxu0 0
        %6681 = vmatpush2.bf16.msra.mxu0 0
        %6682 = vmatprep.subr.bf16.mxu0 0
        %6683 = vmatpush2.bf16.msra.mxu0 0
        %6684 = vmatprep.subr.bf16.mxu0 0
        %6685 = vmatpush2.bf16.msra.mxu0 0
        %6686 = vmatprep.subr.bf16.mxu0 0
        %6687 = vmatpush2.bf16.msra.mxu0 0
        %6688 = vmatprep.mubr.bf16.mxu0 0
        %6689 = vmatmul.mubr.bf16.gmra.mxu0 %v4907
        %v6690 = vpop.f32.mrf.mxu0
        %v6691 = vadd.f32 0.0, %v6690
        %v6692 = vpop.f32.mrf.mxu0
        %v6693 = vpop.f32.mrf.mxu0
        %v6694 = vadd.f32 0.0, %v6693
        %v6695 = vpop.f32.mrf.mxu0
        %6696 = vmatprep.mubr.bf16.mxu0 0
        %6697 = vmatmul.mubr.bf16.gmra.mxu0 %v4910
        %v6698 = vpop.f32.mrf.mxu0
        %v6699 = vadd.f32 0.0, %v6698
        %v6700 = vpop.f32.mrf.mxu0
        %v6701 = vpop.f32.mrf.mxu0
        %v6702 = vadd.f32 0.0, %v6701
        %v6703 = vpop.f32.mrf.mxu0
        %6704 = vmatprep.mubr.bf16.mxu0 0
        %6705 = vmatmul.mubr.bf16.gmra.mxu0 %v4913
        %v6706 = vpop.f32.mrf.mxu0
        %v6707 = vadd.f32 0.0, %v6706
        %v6708 = vpop.f32.mrf.mxu0
        %v6709 = vpop.f32.mrf.mxu0
        %v6710 = vadd.f32 0.0, %v6709
        %v6711 = vpop.f32.mrf.mxu0
        %6712 = vmatprep.mubr.bf16.mxu0 0
        %6713 = vmatmul.mubr.bf16.gmra.mxu0 %v4916
        %v6714 = vpop.f32.mrf.mxu0
        %v6715 = vadd.f32 0.0, %v6714
        %v6716 = vpop.f32.mrf.mxu0
        %v6717 = vpop.f32.mrf.mxu0
        %v6718 = vadd.f32 0.0, %v6717
        %v6719 = vpop.f32.mrf.mxu0
        %6720 = vmatprep.mubr.bf16.mxu0 0
        %6721 = vmatmul.mubr.bf16.gmra.mxu0 %v4919
        %v6722 = vpop.f32.mrf.mxu0
        %v6723 = vadd.f32 0.0, %v6722
        %v6724 = vpop.f32.mrf.mxu0
        %v6725 = vpop.f32.mrf.mxu0
        %v6726 = vadd.f32 0.0, %v6725
        %v6727 = vpop.f32.mrf.mxu0
        %6728 = vmatprep.mubr.bf16.mxu0 0
        %6729 = vmatmul.mubr.bf16.gmra.mxu0 %v4922
        %v6730 = vpop.f32.mrf.mxu0
        %v6731 = vadd.f32 0.0, %v6730
        %v6732 = vpop.f32.mrf.mxu0
        %v6733 = vpop.f32.mrf.mxu0
        %v6734 = vadd.f32 0.0, %v6733
        %v6735 = vpop.f32.mrf.mxu0
        %6736 = vmatprep.mubr.bf16.mxu0 0
        %6737 = vmatmul.mubr.bf16.gmra.mxu0 %v4925
        %v6738 = vpop.f32.mrf.mxu0
        %v6739 = vadd.f32 0.0, %v6738
        %v6740 = vpop.f32.mrf.mxu0
        %v6741 = vpop.f32.mrf.mxu0
        %v6742 = vadd.f32 0.0, %v6741
        %v6743 = vpop.f32.mrf.mxu0
        %6744 = vmatprep.mubr.bf16.mxu0 0
        %6745 = vmatmul.mubr.bf16.gmra.mxu0 %v4928
        %v6746 = vpop.f32.mrf.mxu0
        %v6747 = vadd.f32 0.0, %v6746
        %v6748 = vpop.f32.mrf.mxu0
        %v6749 = vpop.f32.mrf.mxu0
        %v6750 = vadd.f32 0.0, %v6749
        %v6751 = vpop.f32.mrf.mxu0
        %6752 = vdwg.mxu0
        %v6753 = vpack.c.bf16 %v6694, %v6691
        %v6754 = vpack.c.bf16 %v6702, %v6699
        %v6755 = vpack.c.bf16 %v6710, %v6707
        %v6756 = vpack.c.bf16 %v6718, %v6715
        %v6757 = vpack.c.bf16 %v6726, %v6723
        %v6758 = vpack.c.bf16 %v6734, %v6731
        %v6759 = vpack.c.bf16 %v6742, %v6739
        %v6760 = vpack.c.bf16 %v6750, %v6747
        %s6761 = scalar_lea.vmem %s9, 512
        %v6762 = vld [vmem:[%s6761] sm:$0xf]
        %v6763 = vld [vmem:[%s6761 + $0x4] sm:$0xf]
        %v6764 = vld [vmem:[%s6761 + $0x8] sm:$0xf]
        %v6765 = vld [vmem:[%s6761 + $0xc] sm:$0xf]
        %v6766 = vld [vmem:[%s6761 + $0x10] sm:$0xf]
        %v6767 = vld [vmem:[%s6761 + $0x14] sm:$0xf]
        %v6768 = vld [vmem:[%s6761 + $0x18] sm:$0xf]
        %v6769 = vld [vmem:[%s6761 + $0x1c] sm:$0xf]
        %v6770 = vld [vmem:[%s6761 + $0x20] sm:$0xf]
        %v6771 = vld [vmem:[%s6761 + $0x24] sm:$0xf]
        %v6772 = vld [vmem:[%s6761 + $0x28] sm:$0xf]
        %v6773 = vld [vmem:[%s6761 + $0x2c] sm:$0xf]
        %v6774 = vld [vmem:[%s6761 + $0x30] sm:$0xf]
        %v6775 = vld [vmem:[%s6761 + $0x34] sm:$0xf]
        %v6776 = vld [vmem:[%s6761 + $0x38] sm:$0xf]
        %v6777 = vld [vmem:[%s6761 + $0x3c] sm:$0xf]
        %v6778 = vld [vmem:[%s6761 + $0x40] sm:$0xf]
        %v6779 = vld [vmem:[%s6761 + $0x44] sm:$0xf]
        %v6780 = vld [vmem:[%s6761 + $0x48] sm:$0xf]
        %v6781 = vld [vmem:[%s6761 + $0x4c] sm:$0xf]
        %v6782 = vld [vmem:[%s6761 + $0x50] sm:$0xf]
        %v6783 = vld [vmem:[%s6761 + $0x54] sm:$0xf]
        %v6784 = vld [vmem:[%s6761 + $0x58] sm:$0xf]
        %v6785 = vld [vmem:[%s6761 + $0x5c] sm:$0xf]
        %v6786 = vld [vmem:[%s6761 + $0x60] sm:$0xf]
        %v6787 = vld [vmem:[%s6761 + $0x64] sm:$0xf]
        %v6788 = vld [vmem:[%s6761 + $0x68] sm:$0xf]
        %v6789 = vld [vmem:[%s6761 + $0x6c] sm:$0xf]
        %v6790 = vld [vmem:[%s6761 + $0x70] sm:$0xf]
        %v6791 = vld [vmem:[%s6761 + $0x74] sm:$0xf]
        %v6792 = vld [vmem:[%s6761 + $0x78] sm:$0xf]
        %v6793 = vld [vmem:[%s6761 + $0x7c] sm:$0xf]
        %v6826 = vunpack.c.l.b16 %v6762
        %v6827 = vunpack.c.l.b16 %v6763
        %v6828 = vunpack.c.l.b16 %v6764
        %v6829 = vunpack.c.l.b16 %v6765
        %v6830 = vunpack.c.l.b16 %v6766
        %v6831 = vunpack.c.l.b16 %v6767
        %v6832 = vunpack.c.l.b16 %v6768
        %v6833 = vunpack.c.l.b16 %v6769
        %v6834 = vunpack.c.l.b16 %v6770
        %v6835 = vunpack.c.l.b16 %v6771
        %v6836 = vunpack.c.l.b16 %v6772
        %v6837 = vunpack.c.l.b16 %v6773
        %v6838 = vunpack.c.l.b16 %v6774
        %v6839 = vunpack.c.l.b16 %v6775
        %v6840 = vunpack.c.l.b16 %v6776
        %v6841 = vunpack.c.l.b16 %v6777
        %v6842 = vunpack.c.l.b16 %v6778
        %v6843 = vunpack.c.l.b16 %v6779
        %v6844 = vunpack.c.l.b16 %v6780
        %v6845 = vunpack.c.l.b16 %v6781
        %v6846 = vunpack.c.l.b16 %v6782
        %v6847 = vunpack.c.l.b16 %v6783
        %v6848 = vunpack.c.l.b16 %v6784
        %v6849 = vunpack.c.l.b16 %v6785
        %v6850 = vunpack.c.l.b16 %v6786
        %v6851 = vunpack.c.l.b16 %v6787
        %v6852 = vunpack.c.l.b16 %v6788
        %v6853 = vunpack.c.l.b16 %v6789
        %v6854 = vunpack.c.l.b16 %v6790
        %v6855 = vunpack.c.l.b16 %v6791
        %v6856 = vunpack.c.l.b16 %v6792
        %v6857 = vunpack.c.l.b16 %v6793
        %v6858 = vpack.c.b16 %v6827, %v6826
        %v6859 = vpack.c.b16 %v6829, %v6828
        %v6860 = vpack.c.b16 %v6831, %v6830
        %v6861 = vpack.c.b16 %v6833, %v6832
        %v6862 = vpack.c.b16 %v6835, %v6834
        %v6863 = vpack.c.b16 %v6837, %v6836
        %v6864 = vpack.c.b16 %v6839, %v6838
        %v6865 = vpack.c.b16 %v6841, %v6840
        %v6866 = vpack.c.b16 %v6843, %v6842
        %v6867 = vpack.c.b16 %v6845, %v6844
        %v6868 = vpack.c.b16 %v6847, %v6846
        %v6869 = vpack.c.b16 %v6849, %v6848
        %v6870 = vpack.c.b16 %v6851, %v6850
        %v6871 = vpack.c.b16 %v6853, %v6852
        %v6872 = vpack.c.b16 %v6855, %v6854
        %v6873 = vpack.c.b16 %v6857, %v6856
        %6890 = vmatprep.subr.bf16.mxu0 0
        %6891 = vmatpush1.bf16.msra.mxu0 %v6760
        %6892 = vmatprep.subr.bf16.mxu0 0
        %6893 = vmatpush1.bf16.msra.mxu0 %v6759
        %6894 = vmatprep.subr.bf16.mxu0 0
        %6895 = vmatpush1.bf16.msra.mxu0 %v6758
        %6896 = vmatprep.subr.bf16.mxu0 0
        %6897 = vmatpush1.bf16.msra.mxu0 %v6757
        %6898 = vmatprep.subr.bf16.mxu0 0
        %6899 = vmatpush1.bf16.msra.mxu0 %v6756
        %6900 = vmatprep.subr.bf16.mxu0 0
        %6901 = vmatpush1.bf16.msra.mxu0 %v6755
        %6902 = vmatprep.subr.bf16.mxu0 0
        %6903 = vmatpush1.bf16.msra.mxu0 %v6754
        %6904 = vmatprep.subr.bf16.mxu0 0
        %6905 = vmatpush1.bf16.msra.mxu0 %v6753
        %6906 = vmatprep.subr.bf16.mxu0 0
        %6907 = vmatpush2.bf16.msra.mxu0 0
        %6908 = vmatprep.subr.bf16.mxu0 0
        %6909 = vmatpush2.bf16.msra.mxu0 0
        %6910 = vmatprep.subr.bf16.mxu0 0
        %6911 = vmatpush2.bf16.msra.mxu0 0
        %6912 = vmatprep.subr.bf16.mxu0 0
        %6913 = vmatpush2.bf16.msra.mxu0 0
        %6914 = vmatprep.subr.bf16.mxu0 0
        %6915 = vmatpush2.bf16.msra.mxu0 0
        %6916 = vmatprep.subr.bf16.mxu0 0
        %6917 = vmatpush2.bf16.msra.mxu0 0
        %6918 = vmatprep.subr.bf16.mxu0 0
        %6919 = vmatpush2.bf16.msra.mxu0 0
        %6920 = vmatprep.subr.bf16.mxu0 0
        %6921 = vmatpush2.bf16.msra.mxu0 0
        %6922 = vmatprep.mubr.bf16.mxu0 0
        %6923 = vmatmul.mubr.bf16.gmra.mxu0 %v6858
        %v6924 = vpop.f32.mrf.mxu0
        %v6925 = vadd.f32 0.0, %v6924
        %v6926 = vpop.f32.mrf.mxu0
        %v6927 = vpop.f32.mrf.mxu0
        %v6928 = vadd.f32 0.0, %v6927
        %v6929 = vpop.f32.mrf.mxu0
        %6930 = vmatprep.mubr.bf16.mxu0 0
        %6931 = vmatmul.mubr.bf16.gmra.mxu0 %v6859
        %v6932 = vpop.f32.mrf.mxu0
        %v6933 = vadd.f32 0.0, %v6932
        %v6934 = vpop.f32.mrf.mxu0
        %v6935 = vpop.f32.mrf.mxu0
        %v6936 = vadd.f32 0.0, %v6935
        %v6937 = vpop.f32.mrf.mxu0
        %6938 = vmatprep.mubr.bf16.mxu0 0
        %6939 = vmatmul.mubr.bf16.gmra.mxu0 %v6860
        %v6940 = vpop.f32.mrf.mxu0
        %v6941 = vadd.f32 0.0, %v6940
        %v6942 = vpop.f32.mrf.mxu0
        %v6943 = vpop.f32.mrf.mxu0
        %v6944 = vadd.f32 0.0, %v6943
        %v6945 = vpop.f32.mrf.mxu0
        %6946 = vmatprep.mubr.bf16.mxu0 0
        %6947 = vmatmul.mubr.bf16.gmra.mxu0 %v6861
        %v6948 = vpop.f32.mrf.mxu0
        %v6949 = vadd.f32 0.0, %v6948
        %v6950 = vpop.f32.mrf.mxu0
        %v6951 = vpop.f32.mrf.mxu0
        %v6952 = vadd.f32 0.0, %v6951
        %v6953 = vpop.f32.mrf.mxu0
        %6954 = vmatprep.mubr.bf16.mxu0 0
        %6955 = vmatmul.mubr.bf16.gmra.mxu0 %v6862
        %v6956 = vpop.f32.mrf.mxu0
        %v6957 = vadd.f32 0.0, %v6956
        %v6958 = vpop.f32.mrf.mxu0
        %v6959 = vpop.f32.mrf.mxu0
        %v6960 = vadd.f32 0.0, %v6959
        %v6961 = vpop.f32.mrf.mxu0
        %6962 = vmatprep.mubr.bf16.mxu0 0
        %6963 = vmatmul.mubr.bf16.gmra.mxu0 %v6863
        %v6964 = vpop.f32.mrf.mxu0
        %v6965 = vadd.f32 0.0, %v6964
        %v6966 = vpop.f32.mrf.mxu0
        %v6967 = vpop.f32.mrf.mxu0
        %v6968 = vadd.f32 0.0, %v6967
        %v6969 = vpop.f32.mrf.mxu0
        %6970 = vmatprep.mubr.bf16.mxu0 0
        %6971 = vmatmul.mubr.bf16.gmra.mxu0 %v6864
        %v6972 = vpop.f32.mrf.mxu0
        %v6973 = vadd.f32 0.0, %v6972
        %v6974 = vpop.f32.mrf.mxu0
        %v6975 = vpop.f32.mrf.mxu0
        %v6976 = vadd.f32 0.0, %v6975
        %v6977 = vpop.f32.mrf.mxu0
        %6978 = vmatprep.mubr.bf16.mxu0 0
        %6979 = vmatmul.mubr.bf16.gmra.mxu0 %v6865
        %v6980 = vpop.f32.mrf.mxu0
        %v6981 = vadd.f32 0.0, %v6980
        %v6982 = vpop.f32.mrf.mxu0
        %v6983 = vpop.f32.mrf.mxu0
        %v6984 = vadd.f32 0.0, %v6983
        %v6985 = vpop.f32.mrf.mxu0
        %6986 = vmatprep.mubr.bf16.mxu0 0
        %6987 = vmatmul.mubr.bf16.gmra.mxu0 %v6866
        %v6988 = vpop.f32.mrf.mxu0
        %v6989 = vadd.f32 0.0, %v6988
        %v6990 = vpop.f32.mrf.mxu0
        %v6991 = vpop.f32.mrf.mxu0
        %v6992 = vadd.f32 0.0, %v6991
        %v6993 = vpop.f32.mrf.mxu0
        %6994 = vmatprep.mubr.bf16.mxu0 0
        %6995 = vmatmul.mubr.bf16.gmra.mxu0 %v6867
        %v6996 = vpop.f32.mrf.mxu0
        %v6997 = vadd.f32 0.0, %v6996
        %v6998 = vpop.f32.mrf.mxu0
        %v6999 = vpop.f32.mrf.mxu0
        %v7000 = vadd.f32 0.0, %v6999
        %v7001 = vpop.f32.mrf.mxu0
        %7002 = vmatprep.mubr.bf16.mxu0 0
        %7003 = vmatmul.mubr.bf16.gmra.mxu0 %v6868
        %v7004 = vpop.f32.mrf.mxu0
        %v7005 = vadd.f32 0.0, %v7004
        %v7006 = vpop.f32.mrf.mxu0
        %v7007 = vpop.f32.mrf.mxu0
        %v7008 = vadd.f32 0.0, %v7007
        %v7009 = vpop.f32.mrf.mxu0
        %7010 = vmatprep.mubr.bf16.mxu0 0
        %7011 = vmatmul.mubr.bf16.gmra.mxu0 %v6869
        %v7012 = vpop.f32.mrf.mxu0
        %v7013 = vadd.f32 0.0, %v7012
        %v7014 = vpop.f32.mrf.mxu0
        %v7015 = vpop.f32.mrf.mxu0
        %v7016 = vadd.f32 0.0, %v7015
        %v7017 = vpop.f32.mrf.mxu0
        %7018 = vmatprep.mubr.bf16.mxu0 0
        %7019 = vmatmul.mubr.bf16.gmra.mxu0 %v6870
        %v7020 = vpop.f32.mrf.mxu0
        %v7021 = vadd.f32 0.0, %v7020
        %v7022 = vpop.f32.mrf.mxu0
        %v7023 = vpop.f32.mrf.mxu0
        %v7024 = vadd.f32 0.0, %v7023
        %v7025 = vpop.f32.mrf.mxu0
        %7026 = vmatprep.mubr.bf16.mxu0 0
        %7027 = vmatmul.mubr.bf16.gmra.mxu0 %v6871
        %v7028 = vpop.f32.mrf.mxu0
        %v7029 = vadd.f32 0.0, %v7028
        %v7030 = vpop.f32.mrf.mxu0
        %v7031 = vpop.f32.mrf.mxu0
        %v7032 = vadd.f32 0.0, %v7031
        %v7033 = vpop.f32.mrf.mxu0
        %7034 = vmatprep.mubr.bf16.mxu0 0
        %7035 = vmatmul.mubr.bf16.gmra.mxu0 %v6872
        %v7036 = vpop.f32.mrf.mxu0
        %v7037 = vadd.f32 0.0, %v7036
        %v7038 = vpop.f32.mrf.mxu0
        %v7039 = vpop.f32.mrf.mxu0
        %v7040 = vadd.f32 0.0, %v7039
        %v7041 = vpop.f32.mrf.mxu0
        %7042 = vmatprep.mubr.bf16.mxu0 0
        %7043 = vmatmul.mubr.bf16.gmra.mxu0 %v6873
        %v7044 = vpop.f32.mrf.mxu0
        %v7045 = vadd.f32 0.0, %v7044
        %v7046 = vpop.f32.mrf.mxu0
        %v7047 = vpop.f32.mrf.mxu0
        %v7048 = vadd.f32 0.0, %v7047
        %v7049 = vpop.f32.mrf.mxu0
        %7050 = vdwg.mxu0
        %v7051 = vadd.f32 %v6605, %v6925
        %v7052 = vadd.f32 %v6606, %v6928
        %v7053 = vadd.f32 %v6607, %v6933
        %v7054 = vadd.f32 %v6608, %v6936
        %v7055 = vadd.f32 %v6609, %v6941
        %v7056 = vadd.f32 %v6610, %v6944
        %v7057 = vadd.f32 %v6611, %v6949
        %v7058 = vadd.f32 %v6612, %v6952
        %v7059 = vadd.f32 %v6613, %v6957
        %v7060 = vadd.f32 %v6614, %v6960
        %v7061 = vadd.f32 %v6615, %v6965
        %v7062 = vadd.f32 %v6616, %v6968
        %v7063 = vadd.f32 %v6617, %v6973
        %v7064 = vadd.f32 %v6618, %v6976
        %v7065 = vadd.f32 %v6619, %v6981
        %v7066 = vadd.f32 %v6620, %v6984
        %v7067 = vadd.f32 %v6621, %v6989
        %v7068 = vadd.f32 %v6622, %v6992
        %v7069 = vadd.f32 %v6623, %v6997
        %v7070 = vadd.f32 %v6624, %v7000
        %v7071 = vadd.f32 %v6625, %v7005
        %v7072 = vadd.f32 %v6626, %v7008
        %v7073 = vadd.f32 %v6627, %v7013
        %v7074 = vadd.f32 %v6628, %v7016
        %v7075 = vadd.f32 %v6629, %v7021
        %v7076 = vadd.f32 %v6630, %v7024
        %v7077 = vadd.f32 %v6631, %v7029
        %v7078 = vadd.f32 %v6632, %v7032
        %v7079 = vadd.f32 %v6633, %v7037
        %v7080 = vadd.f32 %v6634, %v7040
        %v7081 = vadd.f32 %v6635, %v7045
        %v7082 = vadd.f32 %v6636, %v7048
        %s7083 = scalar_lea.vmem %s8, 80
        %v7084 = vld [vmem:[%s7083] sm:$0xf]
        %v7085 = vld [vmem:[%s7083 + $0x4] sm:$0xf]
        %v7086 = vld [vmem:[%s7083 + $0x8] sm:$0xf]
        %v7087 = vld [vmem:[%s7083 + $0xc] sm:$0x1]
        %v7092 = vunpack.c.l.b16 %v7084
        %v7093 = vunpack.c.l.b16 %v7085
        %v7094 = vunpack.c.l.b16 %v7086
        %v7095 = vunpack.c.l.b16 %v7087
        %v7096 = vpack.c.b16 %v7093, %v7092
        %v7097 = vpack.c.b16 %v7095, %v7094
        %v7100 = vand.u32 %v7097, %v4933
        %7102 = vmatprep.subr.bf16.mxu0 0
        %7103 = vmatpush1.bf16.msra.mxu0 0
        %7104 = vmatprep.subr.bf16.mxu0 0
        %7105 = vmatpush1.bf16.msra.mxu0 0
        %7106 = vmatprep.subr.bf16.mxu0 0
        %7107 = vmatpush1.bf16.msra.mxu0 0
        %7108 = vmatprep.subr.bf16.mxu0 0
        %7109 = vmatpush1.bf16.msra.mxu0 0
        %7110 = vmatprep.subr.bf16.mxu0 0
        %7111 = vmatpush1.bf16.msra.mxu0 0
        %7112 = vmatprep.subr.bf16.mxu0 0
        %7113 = vmatpush1.bf16.msra.mxu0 0
        %7114 = vmatprep.subr.bf16.mxu0 0
        %7115 = vmatpush1.bf16.msra.mxu0 %v7100
        %7116 = vmatprep.subr.bf16.mxu0 0
        %7117 = vmatpush1.bf16.msra.mxu0 %v7096
        %7118 = vmatprep.subr.bf16.mxu0 0
        %7119 = vmatpush2.bf16.msra.mxu0 0
        %7120 = vmatprep.subr.bf16.mxu0 0
        %7121 = vmatpush2.bf16.msra.mxu0 0
        %7122 = vmatprep.subr.bf16.mxu0 0
        %7123 = vmatpush2.bf16.msra.mxu0 0
        %7124 = vmatprep.subr.bf16.mxu0 0
        %7125 = vmatpush2.bf16.msra.mxu0 0
        %7126 = vmatprep.subr.bf16.mxu0 0
        %7127 = vmatpush2.bf16.msra.mxu0 0
        %7128 = vmatprep.subr.bf16.mxu0 0
        %7129 = vmatpush2.bf16.msra.mxu0 0
        %7130 = vmatprep.subr.bf16.mxu0 0
        %7131 = vmatpush2.bf16.msra.mxu0 0
        %7132 = vmatprep.subr.bf16.mxu0 0
        %7133 = vmatpush2.bf16.msra.mxu0 0
        %7134 = vmatprep.mubr.bf16.mxu0 0
        %7135 = vmatmul.mubr.bf16.gmra.mxu0 %v4907
        %v7136 = vpop.f32.mrf.mxu0
        %v7137 = vadd.f32 0.0, %v7136
        %v7138 = vpop.f32.mrf.mxu0
        %v7139 = vpop.f32.mrf.mxu0
        %v7140 = vadd.f32 0.0, %v7139
        %v7141 = vpop.f32.mrf.mxu0
        %7142 = vmatprep.mubr.bf16.mxu0 0
        %7143 = vmatmul.mubr.bf16.gmra.mxu0 %v4910
        %v7144 = vpop.f32.mrf.mxu0
        %v7145 = vadd.f32 0.0, %v7144
        %v7146 = vpop.f32.mrf.mxu0
        %v7147 = vpop.f32.mrf.mxu0
        %v7148 = vadd.f32 0.0, %v7147
        %v7149 = vpop.f32.mrf.mxu0
        %7150 = vmatprep.mubr.bf16.mxu0 0
        %7151 = vmatmul.mubr.bf16.gmra.mxu0 %v4913
        %v7152 = vpop.f32.mrf.mxu0
        %v7153 = vadd.f32 0.0, %v7152
        %v7154 = vpop.f32.mrf.mxu0
        %v7155 = vpop.f32.mrf.mxu0
        %v7156 = vadd.f32 0.0, %v7155
        %v7157 = vpop.f32.mrf.mxu0
        %7158 = vmatprep.mubr.bf16.mxu0 0
        %7159 = vmatmul.mubr.bf16.gmra.mxu0 %v4916
        %v7160 = vpop.f32.mrf.mxu0
        %v7161 = vadd.f32 0.0, %v7160
        %v7162 = vpop.f32.mrf.mxu0
        %v7163 = vpop.f32.mrf.mxu0
        %v7164 = vadd.f32 0.0, %v7163
        %v7165 = vpop.f32.mrf.mxu0
        %7166 = vmatprep.mubr.bf16.mxu0 0
        %7167 = vmatmul.mubr.bf16.gmra.mxu0 %v4919
        %v7168 = vpop.f32.mrf.mxu0
        %v7169 = vadd.f32 0.0, %v7168
        %v7170 = vpop.f32.mrf.mxu0
        %v7171 = vpop.f32.mrf.mxu0
        %v7172 = vadd.f32 0.0, %v7171
        %v7173 = vpop.f32.mrf.mxu0
        %7174 = vmatprep.mubr.bf16.mxu0 0
        %7175 = vmatmul.mubr.bf16.gmra.mxu0 %v4922
        %v7176 = vpop.f32.mrf.mxu0
        %v7177 = vadd.f32 0.0, %v7176
        %v7178 = vpop.f32.mrf.mxu0
        %v7179 = vpop.f32.mrf.mxu0
        %v7180 = vadd.f32 0.0, %v7179
        %v7181 = vpop.f32.mrf.mxu0
        %7182 = vmatprep.mubr.bf16.mxu0 0
        %7183 = vmatmul.mubr.bf16.gmra.mxu0 %v4925
        %v7184 = vpop.f32.mrf.mxu0
        %v7185 = vadd.f32 0.0, %v7184
        %v7186 = vpop.f32.mrf.mxu0
        %v7187 = vpop.f32.mrf.mxu0
        %v7188 = vadd.f32 0.0, %v7187
        %v7189 = vpop.f32.mrf.mxu0
        %7190 = vmatprep.mubr.bf16.mxu0 0
        %7191 = vmatmul.mubr.bf16.gmra.mxu0 %v4928
        %v7192 = vpop.f32.mrf.mxu0
        %v7193 = vadd.f32 0.0, %v7192
        %v7194 = vpop.f32.mrf.mxu0
        %v7195 = vpop.f32.mrf.mxu0
        %v7196 = vadd.f32 0.0, %v7195
        %v7197 = vpop.f32.mrf.mxu0
        %7198 = vdwg.mxu0
        %v7199 = vpack.c.bf16 %v7140, %v7137
        %v7200 = vpack.c.bf16 %v7148, %v7145
        %v7201 = vpack.c.bf16 %v7156, %v7153
        %v7202 = vpack.c.bf16 %v7164, %v7161
        %v7203 = vpack.c.bf16 %v7172, %v7169
        %v7204 = vpack.c.bf16 %v7180, %v7177
        %v7205 = vpack.c.bf16 %v7188, %v7185
        %v7206 = vpack.c.bf16 %v7196, %v7193
        %s7207 = scalar_lea.vmem %s9, 640
        %v7208 = vld [vmem:[%s7207] sm:$0xf]
        %v7209 = vld [vmem:[%s7207 + $0x4] sm:$0xf]
        %v7210 = vld [vmem:[%s7207 + $0x8] sm:$0xf]
        %v7211 = vld [vmem:[%s7207 + $0xc] sm:$0xf]
        %v7212 = vld [vmem:[%s7207 + $0x10] sm:$0xf]
        %v7213 = vld [vmem:[%s7207 + $0x14] sm:$0xf]
        %v7214 = vld [vmem:[%s7207 + $0x18] sm:$0xf]
        %v7215 = vld [vmem:[%s7207 + $0x1c] sm:$0xf]
        %v7216 = vld [vmem:[%s7207 + $0x20] sm:$0xf]
        %v7217 = vld [vmem:[%s7207 + $0x24] sm:$0xf]
        %v7218 = vld [vmem:[%s7207 + $0x28] sm:$0xf]
        %v7219 = vld [vmem:[%s7207 + $0x2c] sm:$0xf]
        %v7220 = vld [vmem:[%s7207 + $0x30] sm:$0xf]
        %v7221 = vld [vmem:[%s7207 + $0x34] sm:$0xf]
        %v7222 = vld [vmem:[%s7207 + $0x38] sm:$0xf]
        %v7223 = vld [vmem:[%s7207 + $0x3c] sm:$0xf]
        %v7224 = vld [vmem:[%s7207 + $0x40] sm:$0xf]
        %v7225 = vld [vmem:[%s7207 + $0x44] sm:$0xf]
        %v7226 = vld [vmem:[%s7207 + $0x48] sm:$0xf]
        %v7227 = vld [vmem:[%s7207 + $0x4c] sm:$0xf]
        %v7228 = vld [vmem:[%s7207 + $0x50] sm:$0xf]
        %v7229 = vld [vmem:[%s7207 + $0x54] sm:$0xf]
        %v7230 = vld [vmem:[%s7207 + $0x58] sm:$0xf]
        %v7231 = vld [vmem:[%s7207 + $0x5c] sm:$0xf]
        %v7232 = vld [vmem:[%s7207 + $0x60] sm:$0xf]
        %v7233 = vld [vmem:[%s7207 + $0x64] sm:$0xf]
        %v7234 = vld [vmem:[%s7207 + $0x68] sm:$0xf]
        %v7235 = vld [vmem:[%s7207 + $0x6c] sm:$0xf]
        %v7236 = vld [vmem:[%s7207 + $0x70] sm:$0xf]
        %v7237 = vld [vmem:[%s7207 + $0x74] sm:$0xf]
        %v7238 = vld [vmem:[%s7207 + $0x78] sm:$0xf]
        %v7239 = vld [vmem:[%s7207 + $0x7c] sm:$0xf]
        %v7272 = vunpack.c.l.b16 %v7208
        %v7273 = vunpack.c.l.b16 %v7209
        %v7274 = vunpack.c.l.b16 %v7210
        %v7275 = vunpack.c.l.b16 %v7211
        %v7276 = vunpack.c.l.b16 %v7212
        %v7277 = vunpack.c.l.b16 %v7213
        %v7278 = vunpack.c.l.b16 %v7214
        %v7279 = vunpack.c.l.b16 %v7215
        %v7280 = vunpack.c.l.b16 %v7216
        %v7281 = vunpack.c.l.b16 %v7217
        %v7282 = vunpack.c.l.b16 %v7218
        %v7283 = vunpack.c.l.b16 %v7219
        %v7284 = vunpack.c.l.b16 %v7220
        %v7285 = vunpack.c.l.b16 %v7221
        %v7286 = vunpack.c.l.b16 %v7222
        %v7287 = vunpack.c.l.b16 %v7223
        %v7288 = vunpack.c.l.b16 %v7224
        %v7289 = vunpack.c.l.b16 %v7225
        %v7290 = vunpack.c.l.b16 %v7226
        %v7291 = vunpack.c.l.b16 %v7227
        %v7292 = vunpack.c.l.b16 %v7228
        %v7293 = vunpack.c.l.b16 %v7229
        %v7294 = vunpack.c.l.b16 %v7230
        %v7295 = vunpack.c.l.b16 %v7231
        %v7296 = vunpack.c.l.b16 %v7232
        %v7297 = vunpack.c.l.b16 %v7233
        %v7298 = vunpack.c.l.b16 %v7234
        %v7299 = vunpack.c.l.b16 %v7235
        %v7300 = vunpack.c.l.b16 %v7236
        %v7301 = vunpack.c.l.b16 %v7237
        %v7302 = vunpack.c.l.b16 %v7238
        %v7303 = vunpack.c.l.b16 %v7239
        %v7304 = vpack.c.b16 %v7273, %v7272
        %v7305 = vpack.c.b16 %v7275, %v7274
        %v7306 = vpack.c.b16 %v7277, %v7276
        %v7307 = vpack.c.b16 %v7279, %v7278
        %v7308 = vpack.c.b16 %v7281, %v7280
        %v7309 = vpack.c.b16 %v7283, %v7282
        %v7310 = vpack.c.b16 %v7285, %v7284
        %v7311 = vpack.c.b16 %v7287, %v7286
        %v7312 = vpack.c.b16 %v7289, %v7288
        %v7313 = vpack.c.b16 %v7291, %v7290
        %v7314 = vpack.c.b16 %v7293, %v7292
        %v7315 = vpack.c.b16 %v7295, %v7294
        %v7316 = vpack.c.b16 %v7297, %v7296
        %v7317 = vpack.c.b16 %v7299, %v7298
        %v7318 = vpack.c.b16 %v7301, %v7300
        %v7319 = vpack.c.b16 %v7303, %v7302
        %7336 = vmatprep.subr.bf16.mxu0 0
        %7337 = vmatpush1.bf16.msra.mxu0 %v7206
        %7338 = vmatprep.subr.bf16.mxu0 0
        %7339 = vmatpush1.bf16.msra.mxu0 %v7205
        %7340 = vmatprep.subr.bf16.mxu0 0
        %7341 = vmatpush1.bf16.msra.mxu0 %v7204
        %7342 = vmatprep.subr.bf16.mxu0 0
        %7343 = vmatpush1.bf16.msra.mxu0 %v7203
        %7344 = vmatprep.subr.bf16.mxu0 0
        %7345 = vmatpush1.bf16.msra.mxu0 %v7202
        %7346 = vmatprep.subr.bf16.mxu0 0
        %7347 = vmatpush1.bf16.msra.mxu0 %v7201
        %7348 = vmatprep.subr.bf16.mxu0 0
        %7349 = vmatpush1.bf16.msra.mxu0 %v7200
        %7350 = vmatprep.subr.bf16.mxu0 0
        %7351 = vmatpush1.bf16.msra.mxu0 %v7199
        %7352 = vmatprep.subr.bf16.mxu0 0
        %7353 = vmatpush2.bf16.msra.mxu0 0
        %7354 = vmatprep.subr.bf16.mxu0 0
        %7355 = vmatpush2.bf16.msra.mxu0 0
        %7356 = vmatprep.subr.bf16.mxu0 0
        %7357 = vmatpush2.bf16.msra.mxu0 0
        %7358 = vmatprep.subr.bf16.mxu0 0
        %7359 = vmatpush2.bf16.msra.mxu0 0
        %7360 = vmatprep.subr.bf16.mxu0 0
        %7361 = vmatpush2.bf16.msra.mxu0 0
        %7362 = vmatprep.subr.bf16.mxu0 0
        %7363 = vmatpush2.bf16.msra.mxu0 0
        %7364 = vmatprep.subr.bf16.mxu0 0
        %7365 = vmatpush2.bf16.msra.mxu0 0
        %7366 = vmatprep.subr.bf16.mxu0 0
        %7367 = vmatpush2.bf16.msra.mxu0 0
        %7368 = vmatprep.mubr.bf16.mxu0 0
        %7369 = vmatmul.mubr.bf16.gmra.mxu0 %v7304
        %v7370 = vpop.f32.mrf.mxu0
        %v7371 = vadd.f32 0.0, %v7370
        %v7372 = vpop.f32.mrf.mxu0
        %v7373 = vpop.f32.mrf.mxu0
        %v7374 = vadd.f32 0.0, %v7373
        %v7375 = vpop.f32.mrf.mxu0
        %7376 = vmatprep.mubr.bf16.mxu0 0
        %7377 = vmatmul.mubr.bf16.gmra.mxu0 %v7305
        %v7378 = vpop.f32.mrf.mxu0
        %v7379 = vadd.f32 0.0, %v7378
        %v7380 = vpop.f32.mrf.mxu0
        %v7381 = vpop.f32.mrf.mxu0
        %v7382 = vadd.f32 0.0, %v7381
        %v7383 = vpop.f32.mrf.mxu0
        %7384 = vmatprep.mubr.bf16.mxu0 0
        %7385 = vmatmul.mubr.bf16.gmra.mxu0 %v7306
        %v7386 = vpop.f32.mrf.mxu0
        %v7387 = vadd.f32 0.0, %v7386
        %v7388 = vpop.f32.mrf.mxu0
        %v7389 = vpop.f32.mrf.mxu0
        %v7390 = vadd.f32 0.0, %v7389
        %v7391 = vpop.f32.mrf.mxu0
        %7392 = vmatprep.mubr.bf16.mxu0 0
        %7393 = vmatmul.mubr.bf16.gmra.mxu0 %v7307
        %v7394 = vpop.f32.mrf.mxu0
        %v7395 = vadd.f32 0.0, %v7394
        %v7396 = vpop.f32.mrf.mxu0
        %v7397 = vpop.f32.mrf.mxu0
        %v7398 = vadd.f32 0.0, %v7397
        %v7399 = vpop.f32.mrf.mxu0
        %7400 = vmatprep.mubr.bf16.mxu0 0
        %7401 = vmatmul.mubr.bf16.gmra.mxu0 %v7308
        %v7402 = vpop.f32.mrf.mxu0
        %v7403 = vadd.f32 0.0, %v7402
        %v7404 = vpop.f32.mrf.mxu0
        %v7405 = vpop.f32.mrf.mxu0
        %v7406 = vadd.f32 0.0, %v7405
        %v7407 = vpop.f32.mrf.mxu0
        %7408 = vmatprep.mubr.bf16.mxu0 0
        %7409 = vmatmul.mubr.bf16.gmra.mxu0 %v7309
        %v7410 = vpop.f32.mrf.mxu0
        %v7411 = vadd.f32 0.0, %v7410
        %v7412 = vpop.f32.mrf.mxu0
        %v7413 = vpop.f32.mrf.mxu0
        %v7414 = vadd.f32 0.0, %v7413
        %v7415 = vpop.f32.mrf.mxu0
        %7416 = vmatprep.mubr.bf16.mxu0 0
        %7417 = vmatmul.mubr.bf16.gmra.mxu0 %v7310
        %v7418 = vpop.f32.mrf.mxu0
        %v7419 = vadd.f32 0.0, %v7418
        %v7420 = vpop.f32.mrf.mxu0
        %v7421 = vpop.f32.mrf.mxu0
        %v7422 = vadd.f32 0.0, %v7421
        %v7423 = vpop.f32.mrf.mxu0
        %7424 = vmatprep.mubr.bf16.mxu0 0
        %7425 = vmatmul.mubr.bf16.gmra.mxu0 %v7311
        %v7426 = vpop.f32.mrf.mxu0
        %v7427 = vadd.f32 0.0, %v7426
        %v7428 = vpop.f32.mrf.mxu0
        %v7429 = vpop.f32.mrf.mxu0
        %v7430 = vadd.f32 0.0, %v7429
        %v7431 = vpop.f32.mrf.mxu0
        %7432 = vmatprep.mubr.bf16.mxu0 0
        %7433 = vmatmul.mubr.bf16.gmra.mxu0 %v7312
        %v7434 = vpop.f32.mrf.mxu0
        %v7435 = vadd.f32 0.0, %v7434
        %v7436 = vpop.f32.mrf.mxu0
        %v7437 = vpop.f32.mrf.mxu0
        %v7438 = vadd.f32 0.0, %v7437
        %v7439 = vpop.f32.mrf.mxu0
        %7440 = vmatprep.mubr.bf16.mxu0 0
        %7441 = vmatmul.mubr.bf16.gmra.mxu0 %v7313
        %v7442 = vpop.f32.mrf.mxu0
        %v7443 = vadd.f32 0.0, %v7442
        %v7444 = vpop.f32.mrf.mxu0
        %v7445 = vpop.f32.mrf.mxu0
        %v7446 = vadd.f32 0.0, %v7445
        %v7447 = vpop.f32.mrf.mxu0
        %7448 = vmatprep.mubr.bf16.mxu0 0
        %7449 = vmatmul.mubr.bf16.gmra.mxu0 %v7314
        %v7450 = vpop.f32.mrf.mxu0
        %v7451 = vadd.f32 0.0, %v7450
        %v7452 = vpop.f32.mrf.mxu0
        %v7453 = vpop.f32.mrf.mxu0
        %v7454 = vadd.f32 0.0, %v7453
        %v7455 = vpop.f32.mrf.mxu0
        %7456 = vmatprep.mubr.bf16.mxu0 0
        %7457 = vmatmul.mubr.bf16.gmra.mxu0 %v7315
        %v7458 = vpop.f32.mrf.mxu0
        %v7459 = vadd.f32 0.0, %v7458
        %v7460 = vpop.f32.mrf.mxu0
        %v7461 = vpop.f32.mrf.mxu0
        %v7462 = vadd.f32 0.0, %v7461
        %v7463 = vpop.f32.mrf.mxu0
        %7464 = vmatprep.mubr.bf16.mxu0 0
        %7465 = vmatmul.mubr.bf16.gmra.mxu0 %v7316
        %v7466 = vpop.f32.mrf.mxu0
        %v7467 = vadd.f32 0.0, %v7466
        %v7468 = vpop.f32.mrf.mxu0
        %v7469 = vpop.f32.mrf.mxu0
        %v7470 = vadd.f32 0.0, %v7469
        %v7471 = vpop.f32.mrf.mxu0
        %7472 = vmatprep.mubr.bf16.mxu0 0
        %7473 = vmatmul.mubr.bf16.gmra.mxu0 %v7317
        %v7474 = vpop.f32.mrf.mxu0
        %v7475 = vadd.f32 0.0, %v7474
        %v7476 = vpop.f32.mrf.mxu0
        %v7477 = vpop.f32.mrf.mxu0
        %v7478 = vadd.f32 0.0, %v7477
        %v7479 = vpop.f32.mrf.mxu0
        %7480 = vmatprep.mubr.bf16.mxu0 0
        %7481 = vmatmul.mubr.bf16.gmra.mxu0 %v7318
        %v7482 = vpop.f32.mrf.mxu0
        %v7483 = vadd.f32 0.0, %v7482
        %v7484 = vpop.f32.mrf.mxu0
        %v7485 = vpop.f32.mrf.mxu0
        %v7486 = vadd.f32 0.0, %v7485
        %v7487 = vpop.f32.mrf.mxu0
        %7488 = vmatprep.mubr.bf16.mxu0 0
        %7489 = vmatmul.mubr.bf16.gmra.mxu0 %v7319
        %v7490 = vpop.f32.mrf.mxu0
        %v7491 = vadd.f32 0.0, %v7490
        %v7492 = vpop.f32.mrf.mxu0
        %v7493 = vpop.f32.mrf.mxu0
        %v7494 = vadd.f32 0.0, %v7493
        %v7495 = vpop.f32.mrf.mxu0
        %7496 = vdwg.mxu0
        %v7497 = vadd.f32 %v7051, %v7371
        %v7498 = vadd.f32 %v7052, %v7374
        %v7499 = vadd.f32 %v7053, %v7379
        %v7500 = vadd.f32 %v7054, %v7382
        %v7501 = vadd.f32 %v7055, %v7387
        %v7502 = vadd.f32 %v7056, %v7390
        %v7503 = vadd.f32 %v7057, %v7395
        %v7504 = vadd.f32 %v7058, %v7398
        %v7505 = vadd.f32 %v7059, %v7403
        %v7506 = vadd.f32 %v7060, %v7406
        %v7507 = vadd.f32 %v7061, %v7411
        %v7508 = vadd.f32 %v7062, %v7414
        %v7509 = vadd.f32 %v7063, %v7419
        %v7510 = vadd.f32 %v7064, %v7422
        %v7511 = vadd.f32 %v7065, %v7427
        %v7512 = vadd.f32 %v7066, %v7430
        %v7513 = vadd.f32 %v7067, %v7435
        %v7514 = vadd.f32 %v7068, %v7438
        %v7515 = vadd.f32 %v7069, %v7443
        %v7516 = vadd.f32 %v7070, %v7446
        %v7517 = vadd.f32 %v7071, %v7451
        %v7518 = vadd.f32 %v7072, %v7454
        %v7519 = vadd.f32 %v7073, %v7459
        %v7520 = vadd.f32 %v7074, %v7462
        %v7521 = vadd.f32 %v7075, %v7467
        %v7522 = vadd.f32 %v7076, %v7470
        %v7523 = vadd.f32 %v7077, %v7475
        %v7524 = vadd.f32 %v7078, %v7478
        %v7525 = vadd.f32 %v7079, %v7483
        %v7526 = vadd.f32 %v7080, %v7486
        %v7527 = vadd.f32 %v7081, %v7491
        %v7528 = vadd.f32 %v7082, %v7494
        %s7529 = scalar_lea.vmem %s8, 96
        %v7530 = vld [vmem:[%s7529] sm:$0xf]
        %v7531 = vld [vmem:[%s7529 + $0x4] sm:$0xf]
        %v7532 = vld [vmem:[%s7529 + $0x8] sm:$0xf]
        %v7533 = vld [vmem:[%s7529 + $0xc] sm:$0x1]
        %v7538 = vunpack.c.l.b16 %v7530
        %v7539 = vunpack.c.l.b16 %v7531
        %v7540 = vunpack.c.l.b16 %v7532
        %v7541 = vunpack.c.l.b16 %v7533
        %v7542 = vpack.c.b16 %v7539, %v7538
        %v7543 = vpack.c.b16 %v7541, %v7540
        %v7546 = vand.u32 %v7543, %v4933
        %7548 = vmatprep.subr.bf16.mxu0 0
        %7549 = vmatpush1.bf16.msra.mxu0 0
        %7550 = vmatprep.subr.bf16.mxu0 0
        %7551 = vmatpush1.bf16.msra.mxu0 0
        %7552 = vmatprep.subr.bf16.mxu0 0
        %7553 = vmatpush1.bf16.msra.mxu0 0
        %7554 = vmatprep.subr.bf16.mxu0 0
        %7555 = vmatpush1.bf16.msra.mxu0 0
        %7556 = vmatprep.subr.bf16.mxu0 0
        %7557 = vmatpush1.bf16.msra.mxu0 0
        %7558 = vmatprep.subr.bf16.mxu0 0
        %7559 = vmatpush1.bf16.msra.mxu0 0
        %7560 = vmatprep.subr.bf16.mxu0 0
        %7561 = vmatpush1.bf16.msra.mxu0 %v7546
        %7562 = vmatprep.subr.bf16.mxu0 0
        %7563 = vmatpush1.bf16.msra.mxu0 %v7542
        %7564 = vmatprep.subr.bf16.mxu0 0
        %7565 = vmatpush2.bf16.msra.mxu0 0
        %7566 = vmatprep.subr.bf16.mxu0 0
        %7567 = vmatpush2.bf16.msra.mxu0 0
        %7568 = vmatprep.subr.bf16.mxu0 0
        %7569 = vmatpush2.bf16.msra.mxu0 0
        %7570 = vmatprep.subr.bf16.mxu0 0
        %7571 = vmatpush2.bf16.msra.mxu0 0
        %7572 = vmatprep.subr.bf16.mxu0 0
        %7573 = vmatpush2.bf16.msra.mxu0 0
        %7574 = vmatprep.subr.bf16.mxu0 0
        %7575 = vmatpush2.bf16.msra.mxu0 0
        %7576 = vmatprep.subr.bf16.mxu0 0
        %7577 = vmatpush2.bf16.msra.mxu0 0
        %7578 = vmatprep.subr.bf16.mxu0 0
        %7579 = vmatpush2.bf16.msra.mxu0 0
        %7580 = vmatprep.mubr.bf16.mxu0 0
        %7581 = vmatmul.mubr.bf16.gmra.mxu0 %v4907
        %v7582 = vpop.f32.mrf.mxu0
        %v7583 = vadd.f32 0.0, %v7582
        %v7584 = vpop.f32.mrf.mxu0
        %v7585 = vpop.f32.mrf.mxu0
        %v7586 = vadd.f32 0.0, %v7585
        %v7587 = vpop.f32.mrf.mxu0
        %7588 = vmatprep.mubr.bf16.mxu0 0
        %7589 = vmatmul.mubr.bf16.gmra.mxu0 %v4910
        %v7590 = vpop.f32.mrf.mxu0
        %v7591 = vadd.f32 0.0, %v7590
        %v7592 = vpop.f32.mrf.mxu0
        %v7593 = vpop.f32.mrf.mxu0
        %v7594 = vadd.f32 0.0, %v7593
        %v7595 = vpop.f32.mrf.mxu0
        %7596 = vmatprep.mubr.bf16.mxu0 0
        %7597 = vmatmul.mubr.bf16.gmra.mxu0 %v4913
        %v7598 = vpop.f32.mrf.mxu0
        %v7599 = vadd.f32 0.0, %v7598
        %v7600 = vpop.f32.mrf.mxu0
        %v7601 = vpop.f32.mrf.mxu0
        %v7602 = vadd.f32 0.0, %v7601
        %v7603 = vpop.f32.mrf.mxu0
        %7604 = vmatprep.mubr.bf16.mxu0 0
        %7605 = vmatmul.mubr.bf16.gmra.mxu0 %v4916
        %v7606 = vpop.f32.mrf.mxu0
        %v7607 = vadd.f32 0.0, %v7606
        %v7608 = vpop.f32.mrf.mxu0
        %v7609 = vpop.f32.mrf.mxu0
        %v7610 = vadd.f32 0.0, %v7609
        %v7611 = vpop.f32.mrf.mxu0
        %7612 = vmatprep.mubr.bf16.mxu0 0
        %7613 = vmatmul.mubr.bf16.gmra.mxu0 %v4919
        %v7614 = vpop.f32.mrf.mxu0
        %v7615 = vadd.f32 0.0, %v7614
        %v7616 = vpop.f32.mrf.mxu0
        %v7617 = vpop.f32.mrf.mxu0
        %v7618 = vadd.f32 0.0, %v7617
        %v7619 = vpop.f32.mrf.mxu0
        %7620 = vmatprep.mubr.bf16.mxu0 0
        %7621 = vmatmul.mubr.bf16.gmra.mxu0 %v4922
        %v7622 = vpop.f32.mrf.mxu0
        %v7623 = vadd.f32 0.0, %v7622
        %v7624 = vpop.f32.mrf.mxu0
        %v7625 = vpop.f32.mrf.mxu0
        %v7626 = vadd.f32 0.0, %v7625
        %v7627 = vpop.f32.mrf.mxu0
        %7628 = vmatprep.mubr.bf16.mxu0 0
        %7629 = vmatmul.mubr.bf16.gmra.mxu0 %v4925
        %v7630 = vpop.f32.mrf.mxu0
        %v7631 = vadd.f32 0.0, %v7630
        %v7632 = vpop.f32.mrf.mxu0
        %v7633 = vpop.f32.mrf.mxu0
        %v7634 = vadd.f32 0.0, %v7633
        %v7635 = vpop.f32.mrf.mxu0
        %7636 = vmatprep.mubr.bf16.mxu0 0
        %7637 = vmatmul.mubr.bf16.gmra.mxu0 %v4928
        %v7638 = vpop.f32.mrf.mxu0
        %v7639 = vadd.f32 0.0, %v7638
        %v7640 = vpop.f32.mrf.mxu0
        %v7641 = vpop.f32.mrf.mxu0
        %v7642 = vadd.f32 0.0, %v7641
        %v7643 = vpop.f32.mrf.mxu0
        %7644 = vdwg.mxu0
        %v7645 = vpack.c.bf16 %v7586, %v7583
        %v7646 = vpack.c.bf16 %v7594, %v7591
        %v7647 = vpack.c.bf16 %v7602, %v7599
        %v7648 = vpack.c.bf16 %v7610, %v7607
        %v7649 = vpack.c.bf16 %v7618, %v7615
        %v7650 = vpack.c.bf16 %v7626, %v7623
        %v7651 = vpack.c.bf16 %v7634, %v7631
        %v7652 = vpack.c.bf16 %v7642, %v7639
        %s7653 = scalar_lea.vmem %s9, 768
        %v7654 = vld [vmem:[%s7653] sm:$0xf]
        %v7655 = vld [vmem:[%s7653 + $0x4] sm:$0xf]
        %v7656 = vld [vmem:[%s7653 + $0x8] sm:$0xf]
        %v7657 = vld [vmem:[%s7653 + $0xc] sm:$0xf]
        %v7658 = vld [vmem:[%s7653 + $0x10] sm:$0xf]
        %v7659 = vld [vmem:[%s7653 + $0x14] sm:$0xf]
        %v7660 = vld [vmem:[%s7653 + $0x18] sm:$0xf]
        %v7661 = vld [vmem:[%s7653 + $0x1c] sm:$0xf]
        %v7662 = vld [vmem:[%s7653 + $0x20] sm:$0xf]
        %v7663 = vld [vmem:[%s7653 + $0x24] sm:$0xf]
        %v7664 = vld [vmem:[%s7653 + $0x28] sm:$0xf]
        %v7665 = vld [vmem:[%s7653 + $0x2c] sm:$0xf]
        %v7666 = vld [vmem:[%s7653 + $0x30] sm:$0xf]
        %v7667 = vld [vmem:[%s7653 + $0x34] sm:$0xf]
        %v7668 = vld [vmem:[%s7653 + $0x38] sm:$0xf]
        %v7669 = vld [vmem:[%s7653 + $0x3c] sm:$0xf]
        %v7670 = vld [vmem:[%s7653 + $0x40] sm:$0xf]
        %v7671 = vld [vmem:[%s7653 + $0x44] sm:$0xf]
        %v7672 = vld [vmem:[%s7653 + $0x48] sm:$0xf]
        %v7673 = vld [vmem:[%s7653 + $0x4c] sm:$0xf]
        %v7674 = vld [vmem:[%s7653 + $0x50] sm:$0xf]
        %v7675 = vld [vmem:[%s7653 + $0x54] sm:$0xf]
        %v7676 = vld [vmem:[%s7653 + $0x58] sm:$0xf]
        %v7677 = vld [vmem:[%s7653 + $0x5c] sm:$0xf]
        %v7678 = vld [vmem:[%s7653 + $0x60] sm:$0xf]
        %v7679 = vld [vmem:[%s7653 + $0x64] sm:$0xf]
        %v7680 = vld [vmem:[%s7653 + $0x68] sm:$0xf]
        %v7681 = vld [vmem:[%s7653 + $0x6c] sm:$0xf]
        %v7682 = vld [vmem:[%s7653 + $0x70] sm:$0xf]
        %v7683 = vld [vmem:[%s7653 + $0x74] sm:$0xf]
        %v7684 = vld [vmem:[%s7653 + $0x78] sm:$0xf]
        %v7685 = vld [vmem:[%s7653 + $0x7c] sm:$0xf]
        %v7718 = vunpack.c.l.b16 %v7654
        %v7719 = vunpack.c.l.b16 %v7655
        %v7720 = vunpack.c.l.b16 %v7656
        %v7721 = vunpack.c.l.b16 %v7657
        %v7722 = vunpack.c.l.b16 %v7658
        %v7723 = vunpack.c.l.b16 %v7659
        %v7724 = vunpack.c.l.b16 %v7660
        %v7725 = vunpack.c.l.b16 %v7661
        %v7726 = vunpack.c.l.b16 %v7662
        %v7727 = vunpack.c.l.b16 %v7663
        %v7728 = vunpack.c.l.b16 %v7664
        %v7729 = vunpack.c.l.b16 %v7665
        %v7730 = vunpack.c.l.b16 %v7666
        %v7731 = vunpack.c.l.b16 %v7667
        %v7732 = vunpack.c.l.b16 %v7668
        %v7733 = vunpack.c.l.b16 %v7669
        %v7734 = vunpack.c.l.b16 %v7670
        %v7735 = vunpack.c.l.b16 %v7671
        %v7736 = vunpack.c.l.b16 %v7672
        %v7737 = vunpack.c.l.b16 %v7673
        %v7738 = vunpack.c.l.b16 %v7674
        %v7739 = vunpack.c.l.b16 %v7675
        %v7740 = vunpack.c.l.b16 %v7676
        %v7741 = vunpack.c.l.b16 %v7677
        %v7742 = vunpack.c.l.b16 %v7678
        %v7743 = vunpack.c.l.b16 %v7679
        %v7744 = vunpack.c.l.b16 %v7680
        %v7745 = vunpack.c.l.b16 %v7681
        %v7746 = vunpack.c.l.b16 %v7682
        %v7747 = vunpack.c.l.b16 %v7683
        %v7748 = vunpack.c.l.b16 %v7684
        %v7749 = vunpack.c.l.b16 %v7685
        %v7750 = vpack.c.b16 %v7719, %v7718
        %v7751 = vpack.c.b16 %v7721, %v7720
        %v7752 = vpack.c.b16 %v7723, %v7722
        %v7753 = vpack.c.b16 %v7725, %v7724
        %v7754 = vpack.c.b16 %v7727, %v7726
        %v7755 = vpack.c.b16 %v7729, %v7728
        %v7756 = vpack.c.b16 %v7731, %v7730
        %v7757 = vpack.c.b16 %v7733, %v7732
        %v7758 = vpack.c.b16 %v7735, %v7734
        %v7759 = vpack.c.b16 %v7737, %v7736
        %v7760 = vpack.c.b16 %v7739, %v7738
        %v7761 = vpack.c.b16 %v7741, %v7740
        %v7762 = vpack.c.b16 %v7743, %v7742
        %v7763 = vpack.c.b16 %v7745, %v7744
        %v7764 = vpack.c.b16 %v7747, %v7746
        %v7765 = vpack.c.b16 %v7749, %v7748
        %7782 = vmatprep.subr.bf16.mxu0 0
        %7783 = vmatpush1.bf16.msra.mxu0 %v7652
        %7784 = vmatprep.subr.bf16.mxu0 0
        %7785 = vmatpush1.bf16.msra.mxu0 %v7651
        %7786 = vmatprep.subr.bf16.mxu0 0
        %7787 = vmatpush1.bf16.msra.mxu0 %v7650
        %7788 = vmatprep.subr.bf16.mxu0 0
        %7789 = vmatpush1.bf16.msra.mxu0 %v7649
        %7790 = vmatprep.subr.bf16.mxu0 0
        %7791 = vmatpush1.bf16.msra.mxu0 %v7648
        %7792 = vmatprep.subr.bf16.mxu0 0
        %7793 = vmatpush1.bf16.msra.mxu0 %v7647
        %7794 = vmatprep.subr.bf16.mxu0 0
        %7795 = vmatpush1.bf16.msra.mxu0 %v7646
        %7796 = vmatprep.subr.bf16.mxu0 0
        %7797 = vmatpush1.bf16.msra.mxu0 %v7645
        %7798 = vmatprep.subr.bf16.mxu0 0
        %7799 = vmatpush2.bf16.msra.mxu0 0
        %7800 = vmatprep.subr.bf16.mxu0 0
        %7801 = vmatpush2.bf16.msra.mxu0 0
        %7802 = vmatprep.subr.bf16.mxu0 0
        %7803 = vmatpush2.bf16.msra.mxu0 0
        %7804 = vmatprep.subr.bf16.mxu0 0
        %7805 = vmatpush2.bf16.msra.mxu0 0
        %7806 = vmatprep.subr.bf16.mxu0 0
        %7807 = vmatpush2.bf16.msra.mxu0 0
        %7808 = vmatprep.subr.bf16.mxu0 0
        %7809 = vmatpush2.bf16.msra.mxu0 0
        %7810 = vmatprep.subr.bf16.mxu0 0
        %7811 = vmatpush2.bf16.msra.mxu0 0
        %7812 = vmatprep.subr.bf16.mxu0 0
        %7813 = vmatpush2.bf16.msra.mxu0 0
        %7814 = vmatprep.mubr.bf16.mxu0 0
        %7815 = vmatmul.mubr.bf16.gmra.mxu0 %v7750
        %v7816 = vpop.f32.mrf.mxu0
        %v7817 = vadd.f32 0.0, %v7816
        %v7818 = vpop.f32.mrf.mxu0
        %v7819 = vpop.f32.mrf.mxu0
        %v7820 = vadd.f32 0.0, %v7819
        %v7821 = vpop.f32.mrf.mxu0
        %7822 = vmatprep.mubr.bf16.mxu0 0
        %7823 = vmatmul.mubr.bf16.gmra.mxu0 %v7751
        %v7824 = vpop.f32.mrf.mxu0
        %v7825 = vadd.f32 0.0, %v7824
        %v7826 = vpop.f32.mrf.mxu0
        %v7827 = vpop.f32.mrf.mxu0
        %v7828 = vadd.f32 0.0, %v7827
        %v7829 = vpop.f32.mrf.mxu0
        %7830 = vmatprep.mubr.bf16.mxu0 0
        %7831 = vmatmul.mubr.bf16.gmra.mxu0 %v7752
        %v7832 = vpop.f32.mrf.mxu0
        %v7833 = vadd.f32 0.0, %v7832
        %v7834 = vpop.f32.mrf.mxu0
        %v7835 = vpop.f32.mrf.mxu0
        %v7836 = vadd.f32 0.0, %v7835
        %v7837 = vpop.f32.mrf.mxu0
        %7838 = vmatprep.mubr.bf16.mxu0 0
        %7839 = vmatmul.mubr.bf16.gmra.mxu0 %v7753
        %v7840 = vpop.f32.mrf.mxu0
        %v7841 = vadd.f32 0.0, %v7840
        %v7842 = vpop.f32.mrf.mxu0
        %v7843 = vpop.f32.mrf.mxu0
        %v7844 = vadd.f32 0.0, %v7843
        %v7845 = vpop.f32.mrf.mxu0
        %7846 = vmatprep.mubr.bf16.mxu0 0
        %7847 = vmatmul.mubr.bf16.gmra.mxu0 %v7754
        %v7848 = vpop.f32.mrf.mxu0
        %v7849 = vadd.f32 0.0, %v7848
        %v7850 = vpop.f32.mrf.mxu0
        %v7851 = vpop.f32.mrf.mxu0
        %v7852 = vadd.f32 0.0, %v7851
        %v7853 = vpop.f32.mrf.mxu0
        %7854 = vmatprep.mubr.bf16.mxu0 0
        %7855 = vmatmul.mubr.bf16.gmra.mxu0 %v7755
        %v7856 = vpop.f32.mrf.mxu0
        %v7857 = vadd.f32 0.0, %v7856
        %v7858 = vpop.f32.mrf.mxu0
        %v7859 = vpop.f32.mrf.mxu0
        %v7860 = vadd.f32 0.0, %v7859
        %v7861 = vpop.f32.mrf.mxu0
        %7862 = vmatprep.mubr.bf16.mxu0 0
        %7863 = vmatmul.mubr.bf16.gmra.mxu0 %v7756
        %v7864 = vpop.f32.mrf.mxu0
        %v7865 = vadd.f32 0.0, %v7864
        %v7866 = vpop.f32.mrf.mxu0
        %v7867 = vpop.f32.mrf.mxu0
        %v7868 = vadd.f32 0.0, %v7867
        %v7869 = vpop.f32.mrf.mxu0
        %7870 = vmatprep.mubr.bf16.mxu0 0
        %7871 = vmatmul.mubr.bf16.gmra.mxu0 %v7757
        %v7872 = vpop.f32.mrf.mxu0
        %v7873 = vadd.f32 0.0, %v7872
        %v7874 = vpop.f32.mrf.mxu0
        %v7875 = vpop.f32.mrf.mxu0
        %v7876 = vadd.f32 0.0, %v7875
        %v7877 = vpop.f32.mrf.mxu0
        %7878 = vmatprep.mubr.bf16.mxu0 0
        %7879 = vmatmul.mubr.bf16.gmra.mxu0 %v7758
        %v7880 = vpop.f32.mrf.mxu0
        %v7881 = vadd.f32 0.0, %v7880
        %v7882 = vpop.f32.mrf.mxu0
        %v7883 = vpop.f32.mrf.mxu0
        %v7884 = vadd.f32 0.0, %v7883
        %v7885 = vpop.f32.mrf.mxu0
        %7886 = vmatprep.mubr.bf16.mxu0 0
        %7887 = vmatmul.mubr.bf16.gmra.mxu0 %v7759
        %v7888 = vpop.f32.mrf.mxu0
        %v7889 = vadd.f32 0.0, %v7888
        %v7890 = vpop.f32.mrf.mxu0
        %v7891 = vpop.f32.mrf.mxu0
        %v7892 = vadd.f32 0.0, %v7891
        %v7893 = vpop.f32.mrf.mxu0
        %7894 = vmatprep.mubr.bf16.mxu0 0
        %7895 = vmatmul.mubr.bf16.gmra.mxu0 %v7760
        %v7896 = vpop.f32.mrf.mxu0
        %v7897 = vadd.f32 0.0, %v7896
        %v7898 = vpop.f32.mrf.mxu0
        %v7899 = vpop.f32.mrf.mxu0
        %v7900 = vadd.f32 0.0, %v7899
        %v7901 = vpop.f32.mrf.mxu0
        %7902 = vmatprep.mubr.bf16.mxu0 0
        %7903 = vmatmul.mubr.bf16.gmra.mxu0 %v7761
        %v7904 = vpop.f32.mrf.mxu0
        %v7905 = vadd.f32 0.0, %v7904
        %v7906 = vpop.f32.mrf.mxu0
        %v7907 = vpop.f32.mrf.mxu0
        %v7908 = vadd.f32 0.0, %v7907
        %v7909 = vpop.f32.mrf.mxu0
        %7910 = vmatprep.mubr.bf16.mxu0 0
        %7911 = vmatmul.mubr.bf16.gmra.mxu0 %v7762
        %v7912 = vpop.f32.mrf.mxu0
        %v7913 = vadd.f32 0.0, %v7912
        %v7914 = vpop.f32.mrf.mxu0
        %v7915 = vpop.f32.mrf.mxu0
        %v7916 = vadd.f32 0.0, %v7915
        %v7917 = vpop.f32.mrf.mxu0
        %7918 = vmatprep.mubr.bf16.mxu0 0
        %7919 = vmatmul.mubr.bf16.gmra.mxu0 %v7763
        %v7920 = vpop.f32.mrf.mxu0
        %v7921 = vadd.f32 0.0, %v7920
        %v7922 = vpop.f32.mrf.mxu0
        %v7923 = vpop.f32.mrf.mxu0
        %v7924 = vadd.f32 0.0, %v7923
        %v7925 = vpop.f32.mrf.mxu0
        %7926 = vmatprep.mubr.bf16.mxu0 0
        %7927 = vmatmul.mubr.bf16.gmra.mxu0 %v7764
        %v7928 = vpop.f32.mrf.mxu0
        %v7929 = vadd.f32 0.0, %v7928
        %v7930 = vpop.f32.mrf.mxu0
        %v7931 = vpop.f32.mrf.mxu0
        %v7932 = vadd.f32 0.0, %v7931
        %v7933 = vpop.f32.mrf.mxu0
        %7934 = vmatprep.mubr.bf16.mxu0 0
        %7935 = vmatmul.mubr.bf16.gmra.mxu0 %v7765
        %v7936 = vpop.f32.mrf.mxu0
        %v7937 = vadd.f32 0.0, %v7936
        %v7938 = vpop.f32.mrf.mxu0
        %v7939 = vpop.f32.mrf.mxu0
        %v7940 = vadd.f32 0.0, %v7939
        %v7941 = vpop.f32.mrf.mxu0
        %7942 = vdwg.mxu0
        %v7943 = vadd.f32 %v7497, %v7817
        %v7944 = vadd.f32 %v7498, %v7820
        %v7945 = vadd.f32 %v7499, %v7825
        %v7946 = vadd.f32 %v7500, %v7828
        %v7947 = vadd.f32 %v7501, %v7833
        %v7948 = vadd.f32 %v7502, %v7836
        %v7949 = vadd.f32 %v7503, %v7841
        %v7950 = vadd.f32 %v7504, %v7844
        %v7951 = vadd.f32 %v7505, %v7849
        %v7952 = vadd.f32 %v7506, %v7852
        %v7953 = vadd.f32 %v7507, %v7857
        %v7954 = vadd.f32 %v7508, %v7860
        %v7955 = vadd.f32 %v7509, %v7865
        %v7956 = vadd.f32 %v7510, %v7868
        %v7957 = vadd.f32 %v7511, %v7873
        %v7958 = vadd.f32 %v7512, %v7876
        %v7959 = vadd.f32 %v7513, %v7881
        %v7960 = vadd.f32 %v7514, %v7884
        %v7961 = vadd.f32 %v7515, %v7889
        %v7962 = vadd.f32 %v7516, %v7892
        %v7963 = vadd.f32 %v7517, %v7897
        %v7964 = vadd.f32 %v7518, %v7900
        %v7965 = vadd.f32 %v7519, %v7905
        %v7966 = vadd.f32 %v7520, %v7908
        %v7967 = vadd.f32 %v7521, %v7913
        %v7968 = vadd.f32 %v7522, %v7916
        %v7969 = vadd.f32 %v7523, %v7921
        %v7970 = vadd.f32 %v7524, %v7924
        %v7971 = vadd.f32 %v7525, %v7929
        %v7972 = vadd.f32 %v7526, %v7932
        %v7973 = vadd.f32 %v7527, %v7937
        %v7974 = vadd.f32 %v7528, %v7940
        %s7975 = scalar_lea.vmem %s8, 112
        %v7976 = vld [vmem:[%s7975] sm:$0xf]
        %v7977 = vld [vmem:[%s7975 + $0x4] sm:$0xf]
        %v7978 = vld [vmem:[%s7975 + $0x8] sm:$0xf]
        %v7979 = vld [vmem:[%s7975 + $0xc] sm:$0x1]
        %v7984 = vunpack.c.l.b16 %v7976
        %v7985 = vunpack.c.l.b16 %v7977
        %v7986 = vunpack.c.l.b16 %v7978
        %v7987 = vunpack.c.l.b16 %v7979
        %v7988 = vpack.c.b16 %v7985, %v7984
        %v7989 = vpack.c.b16 %v7987, %v7986
        %v7992 = vand.u32 %v7989, %v4933
        %7994 = vmatprep.subr.bf16.mxu0 0
        %7995 = vmatpush1.bf16.msra.mxu0 0
        %7996 = vmatprep.subr.bf16.mxu0 0
        %7997 = vmatpush1.bf16.msra.mxu0 0
        %7998 = vmatprep.subr.bf16.mxu0 0
        %7999 = vmatpush1.bf16.msra.mxu0 0
        %8000 = vmatprep.subr.bf16.mxu0 0
        %8001 = vmatpush1.bf16.msra.mxu0 0
        %8002 = vmatprep.subr.bf16.mxu0 0
        %8003 = vmatpush1.bf16.msra.mxu0 0
        %8004 = vmatprep.subr.bf16.mxu0 0
        %8005 = vmatpush1.bf16.msra.mxu0 0
        %8006 = vmatprep.subr.bf16.mxu0 0
        %8007 = vmatpush1.bf16.msra.mxu0 %v7992
        %8008 = vmatprep.subr.bf16.mxu0 0
        %8009 = vmatpush1.bf16.msra.mxu0 %v7988
        %8010 = vmatprep.subr.bf16.mxu0 0
        %8011 = vmatpush2.bf16.msra.mxu0 0
        %8012 = vmatprep.subr.bf16.mxu0 0
        %8013 = vmatpush2.bf16.msra.mxu0 0
        %8014 = vmatprep.subr.bf16.mxu0 0
        %8015 = vmatpush2.bf16.msra.mxu0 0
        %8016 = vmatprep.subr.bf16.mxu0 0
        %8017 = vmatpush2.bf16.msra.mxu0 0
        %8018 = vmatprep.subr.bf16.mxu0 0
        %8019 = vmatpush2.bf16.msra.mxu0 0
        %8020 = vmatprep.subr.bf16.mxu0 0
        %8021 = vmatpush2.bf16.msra.mxu0 0
        %8022 = vmatprep.subr.bf16.mxu0 0
        %8023 = vmatpush2.bf16.msra.mxu0 0
        %8024 = vmatprep.subr.bf16.mxu0 0
        %8025 = vmatpush2.bf16.msra.mxu0 0
        %8026 = vmatprep.mubr.bf16.mxu0 0
        %8027 = vmatmul.mubr.bf16.gmra.mxu0 %v4907
        %v8028 = vpop.f32.mrf.mxu0
        %v8029 = vadd.f32 0.0, %v8028
        %v8030 = vpop.f32.mrf.mxu0
        %v8031 = vpop.f32.mrf.mxu0
        %v8032 = vadd.f32 0.0, %v8031
        %v8033 = vpop.f32.mrf.mxu0
        %8034 = vmatprep.mubr.bf16.mxu0 0
        %8035 = vmatmul.mubr.bf16.gmra.mxu0 %v4910
        %v8036 = vpop.f32.mrf.mxu0
        %v8037 = vadd.f32 0.0, %v8036
        %v8038 = vpop.f32.mrf.mxu0
        %v8039 = vpop.f32.mrf.mxu0
        %v8040 = vadd.f32 0.0, %v8039
        %v8041 = vpop.f32.mrf.mxu0
        %8042 = vmatprep.mubr.bf16.mxu0 0
        %8043 = vmatmul.mubr.bf16.gmra.mxu0 %v4913
        %v8044 = vpop.f32.mrf.mxu0
        %v8045 = vadd.f32 0.0, %v8044
        %v8046 = vpop.f32.mrf.mxu0
        %v8047 = vpop.f32.mrf.mxu0
        %v8048 = vadd.f32 0.0, %v8047
        %v8049 = vpop.f32.mrf.mxu0
        %8050 = vmatprep.mubr.bf16.mxu0 0
        %8051 = vmatmul.mubr.bf16.gmra.mxu0 %v4916
        %v8052 = vpop.f32.mrf.mxu0
        %v8053 = vadd.f32 0.0, %v8052
        %v8054 = vpop.f32.mrf.mxu0
        %v8055 = vpop.f32.mrf.mxu0
        %v8056 = vadd.f32 0.0, %v8055
        %v8057 = vpop.f32.mrf.mxu0
        %8058 = vmatprep.mubr.bf16.mxu0 0
        %8059 = vmatmul.mubr.bf16.gmra.mxu0 %v4919
        %v8060 = vpop.f32.mrf.mxu0
        %v8061 = vadd.f32 0.0, %v8060
        %v8062 = vpop.f32.mrf.mxu0
        %v8063 = vpop.f32.mrf.mxu0
        %v8064 = vadd.f32 0.0, %v8063
        %v8065 = vpop.f32.mrf.mxu0
        %8066 = vmatprep.mubr.bf16.mxu0 0
        %8067 = vmatmul.mubr.bf16.gmra.mxu0 %v4922
        %v8068 = vpop.f32.mrf.mxu0
        %v8069 = vadd.f32 0.0, %v8068
        %v8070 = vpop.f32.mrf.mxu0
        %v8071 = vpop.f32.mrf.mxu0
        %v8072 = vadd.f32 0.0, %v8071
        %v8073 = vpop.f32.mrf.mxu0
        %8074 = vmatprep.mubr.bf16.mxu0 0
        %8075 = vmatmul.mubr.bf16.gmra.mxu0 %v4925
        %v8076 = vpop.f32.mrf.mxu0
        %v8077 = vadd.f32 0.0, %v8076
        %v8078 = vpop.f32.mrf.mxu0
        %v8079 = vpop.f32.mrf.mxu0
        %v8080 = vadd.f32 0.0, %v8079
        %v8081 = vpop.f32.mrf.mxu0
        %8082 = vmatprep.mubr.bf16.mxu0 0
        %8083 = vmatmul.mubr.bf16.gmra.mxu0 %v4928
        %v8084 = vpop.f32.mrf.mxu0
        %v8085 = vadd.f32 0.0, %v8084
        %v8086 = vpop.f32.mrf.mxu0
        %v8087 = vpop.f32.mrf.mxu0
        %v8088 = vadd.f32 0.0, %v8087
        %v8089 = vpop.f32.mrf.mxu0
        %8090 = vdwg.mxu0
        %v8091 = vpack.c.bf16 %v8032, %v8029
        %v8092 = vpack.c.bf16 %v8040, %v8037
        %v8093 = vpack.c.bf16 %v8048, %v8045
        %v8094 = vpack.c.bf16 %v8056, %v8053
        %v8095 = vpack.c.bf16 %v8064, %v8061
        %v8096 = vpack.c.bf16 %v8072, %v8069
        %v8097 = vpack.c.bf16 %v8080, %v8077
        %v8098 = vpack.c.bf16 %v8088, %v8085
        %s8099 = scalar_lea.vmem %s9, 896
        %v8100 = vld [vmem:[%s8099] sm:$0xf]
        %v8101 = vld [vmem:[%s8099 + $0x4] sm:$0xf]
        %v8102 = vld [vmem:[%s8099 + $0x8] sm:$0xf]
        %v8103 = vld [vmem:[%s8099 + $0xc] sm:$0xf]
        %v8104 = vld [vmem:[%s8099 + $0x10] sm:$0xf]
        %v8105 = vld [vmem:[%s8099 + $0x14] sm:$0xf]
        %v8106 = vld [vmem:[%s8099 + $0x18] sm:$0xf]
        %v8107 = vld [vmem:[%s8099 + $0x1c] sm:$0xf]
        %v8108 = vld [vmem:[%s8099 + $0x20] sm:$0xf]
        %v8109 = vld [vmem:[%s8099 + $0x24] sm:$0xf]
        %v8110 = vld [vmem:[%s8099 + $0x28] sm:$0xf]
        %v8111 = vld [vmem:[%s8099 + $0x2c] sm:$0xf]
        %v8112 = vld [vmem:[%s8099 + $0x30] sm:$0xf]
        %v8113 = vld [vmem:[%s8099 + $0x34] sm:$0xf]
        %v8114 = vld [vmem:[%s8099 + $0x38] sm:$0xf]
        %v8115 = vld [vmem:[%s8099 + $0x3c] sm:$0xf]
        %v8116 = vld [vmem:[%s8099 + $0x40] sm:$0xf]
        %v8117 = vld [vmem:[%s8099 + $0x44] sm:$0xf]
        %v8118 = vld [vmem:[%s8099 + $0x48] sm:$0xf]
        %v8119 = vld [vmem:[%s8099 + $0x4c] sm:$0xf]
        %v8120 = vld [vmem:[%s8099 + $0x50] sm:$0xf]
        %v8121 = vld [vmem:[%s8099 + $0x54] sm:$0xf]
        %v8122 = vld [vmem:[%s8099 + $0x58] sm:$0xf]
        %v8123 = vld [vmem:[%s8099 + $0x5c] sm:$0xf]
        %v8124 = vld [vmem:[%s8099 + $0x60] sm:$0xf]
        %v8125 = vld [vmem:[%s8099 + $0x64] sm:$0xf]
        %v8126 = vld [vmem:[%s8099 + $0x68] sm:$0xf]
        %v8127 = vld [vmem:[%s8099 + $0x6c] sm:$0xf]
        %v8128 = vld [vmem:[%s8099 + $0x70] sm:$0xf]
        %v8129 = vld [vmem:[%s8099 + $0x74] sm:$0xf]
        %v8130 = vld [vmem:[%s8099 + $0x78] sm:$0xf]
        %v8131 = vld [vmem:[%s8099 + $0x7c] sm:$0xf]
        %v8164 = vunpack.c.l.b16 %v8100
        %v8165 = vunpack.c.l.b16 %v8101
        %v8166 = vunpack.c.l.b16 %v8102
        %v8167 = vunpack.c.l.b16 %v8103
        %v8168 = vunpack.c.l.b16 %v8104
        %v8169 = vunpack.c.l.b16 %v8105
        %v8170 = vunpack.c.l.b16 %v8106
        %v8171 = vunpack.c.l.b16 %v8107
        %v8172 = vunpack.c.l.b16 %v8108
        %v8173 = vunpack.c.l.b16 %v8109
        %v8174 = vunpack.c.l.b16 %v8110
        %v8175 = vunpack.c.l.b16 %v8111
        %v8176 = vunpack.c.l.b16 %v8112
        %v8177 = vunpack.c.l.b16 %v8113
        %v8178 = vunpack.c.l.b16 %v8114
        %v8179 = vunpack.c.l.b16 %v8115
        %v8180 = vunpack.c.l.b16 %v8116
        %v8181 = vunpack.c.l.b16 %v8117
        %v8182 = vunpack.c.l.b16 %v8118
        %v8183 = vunpack.c.l.b16 %v8119
        %v8184 = vunpack.c.l.b16 %v8120
        %v8185 = vunpack.c.l.b16 %v8121
        %v8186 = vunpack.c.l.b16 %v8122
        %v8187 = vunpack.c.l.b16 %v8123
        %v8188 = vunpack.c.l.b16 %v8124
        %v8189 = vunpack.c.l.b16 %v8125
        %v8190 = vunpack.c.l.b16 %v8126
        %v8191 = vunpack.c.l.b16 %v8127
        %v8192 = vunpack.c.l.b16 %v8128
        %v8193 = vunpack.c.l.b16 %v8129
        %v8194 = vunpack.c.l.b16 %v8130
        %v8195 = vunpack.c.l.b16 %v8131
        %v8196 = vpack.c.b16 %v8165, %v8164
        %v8197 = vpack.c.b16 %v8167, %v8166
        %v8198 = vpack.c.b16 %v8169, %v8168
        %v8199 = vpack.c.b16 %v8171, %v8170
        %v8200 = vpack.c.b16 %v8173, %v8172
        %v8201 = vpack.c.b16 %v8175, %v8174
        %v8202 = vpack.c.b16 %v8177, %v8176
        %v8203 = vpack.c.b16 %v8179, %v8178
        %v8204 = vpack.c.b16 %v8181, %v8180
        %v8205 = vpack.c.b16 %v8183, %v8182
        %v8206 = vpack.c.b16 %v8185, %v8184
        %v8207 = vpack.c.b16 %v8187, %v8186
        %v8208 = vpack.c.b16 %v8189, %v8188
        %v8209 = vpack.c.b16 %v8191, %v8190
        %v8210 = vpack.c.b16 %v8193, %v8192
        %v8211 = vpack.c.b16 %v8195, %v8194
        %8228 = vmatprep.subr.bf16.mxu0 0
        %8229 = vmatpush1.bf16.msra.mxu0 %v8098
        %8230 = vmatprep.subr.bf16.mxu0 0
        %8231 = vmatpush1.bf16.msra.mxu0 %v8097
        %8232 = vmatprep.subr.bf16.mxu0 0
        %8233 = vmatpush1.bf16.msra.mxu0 %v8096
        %8234 = vmatprep.subr.bf16.mxu0 0
        %8235 = vmatpush1.bf16.msra.mxu0 %v8095
        %8236 = vmatprep.subr.bf16.mxu0 0
        %8237 = vmatpush1.bf16.msra.mxu0 %v8094
        %8238 = vmatprep.subr.bf16.mxu0 0
        %8239 = vmatpush1.bf16.msra.mxu0 %v8093
        %8240 = vmatprep.subr.bf16.mxu0 0
        %8241 = vmatpush1.bf16.msra.mxu0 %v8092
        %8242 = vmatprep.subr.bf16.mxu0 0
        %8243 = vmatpush1.bf16.msra.mxu0 %v8091
        %8244 = vmatprep.subr.bf16.mxu0 0
        %8245 = vmatpush2.bf16.msra.mxu0 0
        %8246 = vmatprep.subr.bf16.mxu0 0
        %8247 = vmatpush2.bf16.msra.mxu0 0
        %8248 = vmatprep.subr.bf16.mxu0 0
        %8249 = vmatpush2.bf16.msra.mxu0 0
        %8250 = vmatprep.subr.bf16.mxu0 0
        %8251 = vmatpush2.bf16.msra.mxu0 0
        %8252 = vmatprep.subr.bf16.mxu0 0
        %8253 = vmatpush2.bf16.msra.mxu0 0
        %8254 = vmatprep.subr.bf16.mxu0 0
        %8255 = vmatpush2.bf16.msra.mxu0 0
        %8256 = vmatprep.subr.bf16.mxu0 0
        %8257 = vmatpush2.bf16.msra.mxu0 0
        %8258 = vmatprep.subr.bf16.mxu0 0
        %8259 = vmatpush2.bf16.msra.mxu0 0
        %8260 = vmatprep.mubr.bf16.mxu0 0
        %8261 = vmatmul.mubr.bf16.gmra.mxu0 %v8196
        %v8262 = vpop.f32.mrf.mxu0
        %v8263 = vadd.f32 0.0, %v8262
        %v8264 = vpop.f32.mrf.mxu0
        %v8265 = vpop.f32.mrf.mxu0
        %v8266 = vadd.f32 0.0, %v8265
        %v8267 = vpop.f32.mrf.mxu0
        %8268 = vmatprep.mubr.bf16.mxu0 0
        %8269 = vmatmul.mubr.bf16.gmra.mxu0 %v8197
        %v8270 = vpop.f32.mrf.mxu0
        %v8271 = vadd.f32 0.0, %v8270
        %v8272 = vpop.f32.mrf.mxu0
        %v8273 = vpop.f32.mrf.mxu0
        %v8274 = vadd.f32 0.0, %v8273
        %v8275 = vpop.f32.mrf.mxu0
        %8276 = vmatprep.mubr.bf16.mxu0 0
        %8277 = vmatmul.mubr.bf16.gmra.mxu0 %v8198
        %v8278 = vpop.f32.mrf.mxu0
        %v8279 = vadd.f32 0.0, %v8278
        %v8280 = vpop.f32.mrf.mxu0
        %v8281 = vpop.f32.mrf.mxu0
        %v8282 = vadd.f32 0.0, %v8281
        %v8283 = vpop.f32.mrf.mxu0
        %8284 = vmatprep.mubr.bf16.mxu0 0
        %8285 = vmatmul.mubr.bf16.gmra.mxu0 %v8199
        %v8286 = vpop.f32.mrf.mxu0
        %v8287 = vadd.f32 0.0, %v8286
        %v8288 = vpop.f32.mrf.mxu0
        %v8289 = vpop.f32.mrf.mxu0
        %v8290 = vadd.f32 0.0, %v8289
        %v8291 = vpop.f32.mrf.mxu0
        %8292 = vmatprep.mubr.bf16.mxu0 0
        %8293 = vmatmul.mubr.bf16.gmra.mxu0 %v8200
        %v8294 = vpop.f32.mrf.mxu0
        %v8295 = vadd.f32 0.0, %v8294
        %v8296 = vpop.f32.mrf.mxu0
        %v8297 = vpop.f32.mrf.mxu0
        %v8298 = vadd.f32 0.0, %v8297
        %v8299 = vpop.f32.mrf.mxu0
        %8300 = vmatprep.mubr.bf16.mxu0 0
        %8301 = vmatmul.mubr.bf16.gmra.mxu0 %v8201
        %v8302 = vpop.f32.mrf.mxu0
        %v8303 = vadd.f32 0.0, %v8302
        %v8304 = vpop.f32.mrf.mxu0
        %v8305 = vpop.f32.mrf.mxu0
        %v8306 = vadd.f32 0.0, %v8305
        %v8307 = vpop.f32.mrf.mxu0
        %8308 = vmatprep.mubr.bf16.mxu0 0
        %8309 = vmatmul.mubr.bf16.gmra.mxu0 %v8202
        %v8310 = vpop.f32.mrf.mxu0
        %v8311 = vadd.f32 0.0, %v8310
        %v8312 = vpop.f32.mrf.mxu0
        %v8313 = vpop.f32.mrf.mxu0
        %v8314 = vadd.f32 0.0, %v8313
        %v8315 = vpop.f32.mrf.mxu0
        %8316 = vmatprep.mubr.bf16.mxu0 0
        %8317 = vmatmul.mubr.bf16.gmra.mxu0 %v8203
        %v8318 = vpop.f32.mrf.mxu0
        %v8319 = vadd.f32 0.0, %v8318
        %v8320 = vpop.f32.mrf.mxu0
        %v8321 = vpop.f32.mrf.mxu0
        %v8322 = vadd.f32 0.0, %v8321
        %v8323 = vpop.f32.mrf.mxu0
        %8324 = vmatprep.mubr.bf16.mxu0 0
        %8325 = vmatmul.mubr.bf16.gmra.mxu0 %v8204
        %v8326 = vpop.f32.mrf.mxu0
        %v8327 = vadd.f32 0.0, %v8326
        %v8328 = vpop.f32.mrf.mxu0
        %v8329 = vpop.f32.mrf.mxu0
        %v8330 = vadd.f32 0.0, %v8329
        %v8331 = vpop.f32.mrf.mxu0
        %8332 = vmatprep.mubr.bf16.mxu0 0
        %8333 = vmatmul.mubr.bf16.gmra.mxu0 %v8205
        %v8334 = vpop.f32.mrf.mxu0
        %v8335 = vadd.f32 0.0, %v8334
        %v8336 = vpop.f32.mrf.mxu0
        %v8337 = vpop.f32.mrf.mxu0
        %v8338 = vadd.f32 0.0, %v8337
        %v8339 = vpop.f32.mrf.mxu0
        %8340 = vmatprep.mubr.bf16.mxu0 0
        %8341 = vmatmul.mubr.bf16.gmra.mxu0 %v8206
        %v8342 = vpop.f32.mrf.mxu0
        %v8343 = vadd.f32 0.0, %v8342
        %v8344 = vpop.f32.mrf.mxu0
        %v8345 = vpop.f32.mrf.mxu0
        %v8346 = vadd.f32 0.0, %v8345
        %v8347 = vpop.f32.mrf.mxu0
        %8348 = vmatprep.mubr.bf16.mxu0 0
        %8349 = vmatmul.mubr.bf16.gmra.mxu0 %v8207
        %v8350 = vpop.f32.mrf.mxu0
        %v8351 = vadd.f32 0.0, %v8350
        %v8352 = vpop.f32.mrf.mxu0
        %v8353 = vpop.f32.mrf.mxu0
        %v8354 = vadd.f32 0.0, %v8353
        %v8355 = vpop.f32.mrf.mxu0
        %8356 = vmatprep.mubr.bf16.mxu0 0
        %8357 = vmatmul.mubr.bf16.gmra.mxu0 %v8208
        %v8358 = vpop.f32.mrf.mxu0
        %v8359 = vadd.f32 0.0, %v8358
        %v8360 = vpop.f32.mrf.mxu0
        %v8361 = vpop.f32.mrf.mxu0
        %v8362 = vadd.f32 0.0, %v8361
        %v8363 = vpop.f32.mrf.mxu0
        %8364 = vmatprep.mubr.bf16.mxu0 0
        %8365 = vmatmul.mubr.bf16.gmra.mxu0 %v8209
        %v8366 = vpop.f32.mrf.mxu0
        %v8367 = vadd.f32 0.0, %v8366
        %v8368 = vpop.f32.mrf.mxu0
        %v8369 = vpop.f32.mrf.mxu0
        %v8370 = vadd.f32 0.0, %v8369
        %v8371 = vpop.f32.mrf.mxu0
        %8372 = vmatprep.mubr.bf16.mxu0 0
        %8373 = vmatmul.mubr.bf16.gmra.mxu0 %v8210
        %v8374 = vpop.f32.mrf.mxu0
        %v8375 = vadd.f32 0.0, %v8374
        %v8376 = vpop.f32.mrf.mxu0
        %v8377 = vpop.f32.mrf.mxu0
        %v8378 = vadd.f32 0.0, %v8377
        %v8379 = vpop.f32.mrf.mxu0
        %8380 = vmatprep.mubr.bf16.mxu0 0
        %8381 = vmatmul.mubr.bf16.gmra.mxu0 %v8211
        %v8382 = vpop.f32.mrf.mxu0
        %v8383 = vadd.f32 0.0, %v8382
        %v8384 = vpop.f32.mrf.mxu0
        %v8385 = vpop.f32.mrf.mxu0
        %v8386 = vadd.f32 0.0, %v8385
        %v8387 = vpop.f32.mrf.mxu0
        %8388 = vdwg.mxu0
        %v8389 = vadd.f32 %v7943, %v8263
        %v8390 = vadd.f32 %v7944, %v8266
        %v8391 = vadd.f32 %v7945, %v8271
        %v8392 = vadd.f32 %v7946, %v8274
        %v8393 = vadd.f32 %v7947, %v8279
        %v8394 = vadd.f32 %v7948, %v8282
        %v8395 = vadd.f32 %v7949, %v8287
        %v8396 = vadd.f32 %v7950, %v8290
        %v8397 = vadd.f32 %v7951, %v8295
        %v8398 = vadd.f32 %v7952, %v8298
        %v8399 = vadd.f32 %v7953, %v8303
        %v8400 = vadd.f32 %v7954, %v8306
        %v8401 = vadd.f32 %v7955, %v8311
        %v8402 = vadd.f32 %v7956, %v8314
        %v8403 = vadd.f32 %v7957, %v8319
        %v8404 = vadd.f32 %v7958, %v8322
        %v8405 = vadd.f32 %v7959, %v8327
        %v8406 = vadd.f32 %v7960, %v8330
        %v8407 = vadd.f32 %v7961, %v8335
        %v8408 = vadd.f32 %v7962, %v8338
        %v8409 = vadd.f32 %v7963, %v8343
        %v8410 = vadd.f32 %v7964, %v8346
        %v8411 = vadd.f32 %v7965, %v8351
        %v8412 = vadd.f32 %v7966, %v8354
        %v8413 = vadd.f32 %v7967, %v8359
        %v8414 = vadd.f32 %v7968, %v8362
        %v8415 = vadd.f32 %v7969, %v8367
        %v8416 = vadd.f32 %v7970, %v8370
        %v8417 = vadd.f32 %v7971, %v8375
        %v8418 = vadd.f32 %v7972, %v8378
        %v8419 = vadd.f32 %v7973, %v8383
        %v8420 = vadd.f32 %v7974, %v8386
        %s8421 = scalar_lea.vmem %s8, 128
        %v8422 = vld [vmem:[%s8421] sm:$0xf]
        %v8423 = vld [vmem:[%s8421 + $0x4] sm:$0xf]
        %v8424 = vld [vmem:[%s8421 + $0x8] sm:$0xf]
        %v8425 = vld [vmem:[%s8421 + $0xc] sm:$0x1]
        %v8430 = vunpack.c.l.b16 %v8422
        %v8431 = vunpack.c.l.b16 %v8423
        %v8432 = vunpack.c.l.b16 %v8424
        %v8433 = vunpack.c.l.b16 %v8425
        %v8434 = vpack.c.b16 %v8431, %v8430
        %v8435 = vpack.c.b16 %v8433, %v8432
        %v8438 = vand.u32 %v8435, %v4933
        %8440 = vmatprep.subr.bf16.mxu0 0
        %8441 = vmatpush1.bf16.msra.mxu0 0
        %8442 = vmatprep.subr.bf16.mxu0 0
        %8443 = vmatpush1.bf16.msra.mxu0 0
        %8444 = vmatprep.subr.bf16.mxu0 0
        %8445 = vmatpush1.bf16.msra.mxu0 0
        %8446 = vmatprep.subr.bf16.mxu0 0
        %8447 = vmatpush1.bf16.msra.mxu0 0
        %8448 = vmatprep.subr.bf16.mxu0 0
        %8449 = vmatpush1.bf16.msra.mxu0 0
        %8450 = vmatprep.subr.bf16.mxu0 0
        %8451 = vmatpush1.bf16.msra.mxu0 0
        %8452 = vmatprep.subr.bf16.mxu0 0
        %8453 = vmatpush1.bf16.msra.mxu0 %v8438
        %8454 = vmatprep.subr.bf16.mxu0 0
        %8455 = vmatpush1.bf16.msra.mxu0 %v8434
        %8456 = vmatprep.subr.bf16.mxu0 0
        %8457 = vmatpush2.bf16.msra.mxu0 0
        %8458 = vmatprep.subr.bf16.mxu0 0
        %8459 = vmatpush2.bf16.msra.mxu0 0
        %8460 = vmatprep.subr.bf16.mxu0 0
        %8461 = vmatpush2.bf16.msra.mxu0 0
        %8462 = vmatprep.subr.bf16.mxu0 0
        %8463 = vmatpush2.bf16.msra.mxu0 0
        %8464 = vmatprep.subr.bf16.mxu0 0
        %8465 = vmatpush2.bf16.msra.mxu0 0
        %8466 = vmatprep.subr.bf16.mxu0 0
        %8467 = vmatpush2.bf16.msra.mxu0 0
        %8468 = vmatprep.subr.bf16.mxu0 0
        %8469 = vmatpush2.bf16.msra.mxu0 0
        %8470 = vmatprep.subr.bf16.mxu0 0
        %8471 = vmatpush2.bf16.msra.mxu0 0
        %8472 = vmatprep.mubr.bf16.mxu0 0
        %8473 = vmatmul.mubr.bf16.gmra.mxu0 %v4907
        %v8474 = vpop.f32.mrf.mxu0
        %v8475 = vadd.f32 0.0, %v8474
        %v8476 = vpop.f32.mrf.mxu0
        %v8477 = vpop.f32.mrf.mxu0
        %v8478 = vadd.f32 0.0, %v8477
        %v8479 = vpop.f32.mrf.mxu0
        %8480 = vmatprep.mubr.bf16.mxu0 0
        %8481 = vmatmul.mubr.bf16.gmra.mxu0 %v4910
        %v8482 = vpop.f32.mrf.mxu0
        %v8483 = vadd.f32 0.0, %v8482
        %v8484 = vpop.f32.mrf.mxu0
        %v8485 = vpop.f32.mrf.mxu0
        %v8486 = vadd.f32 0.0, %v8485
        %v8487 = vpop.f32.mrf.mxu0
        %8488 = vmatprep.mubr.bf16.mxu0 0
        %8489 = vmatmul.mubr.bf16.gmra.mxu0 %v4913
        %v8490 = vpop.f32.mrf.mxu0
        %v8491 = vadd.f32 0.0, %v8490
        %v8492 = vpop.f32.mrf.mxu0
        %v8493 = vpop.f32.mrf.mxu0
        %v8494 = vadd.f32 0.0, %v8493
        %v8495 = vpop.f32.mrf.mxu0
        %8496 = vmatprep.mubr.bf16.mxu0 0
        %8497 = vmatmul.mubr.bf16.gmra.mxu0 %v4916
        %v8498 = vpop.f32.mrf.mxu0
        %v8499 = vadd.f32 0.0, %v8498
        %v8500 = vpop.f32.mrf.mxu0
        %v8501 = vpop.f32.mrf.mxu0
        %v8502 = vadd.f32 0.0, %v8501
        %v8503 = vpop.f32.mrf.mxu0
        %8504 = vmatprep.mubr.bf16.mxu0 0
        %8505 = vmatmul.mubr.bf16.gmra.mxu0 %v4919
        %v8506 = vpop.f32.mrf.mxu0
        %v8507 = vadd.f32 0.0, %v8506
        %v8508 = vpop.f32.mrf.mxu0
        %v8509 = vpop.f32.mrf.mxu0
        %v8510 = vadd.f32 0.0, %v8509
        %v8511 = vpop.f32.mrf.mxu0
        %8512 = vmatprep.mubr.bf16.mxu0 0
        %8513 = vmatmul.mubr.bf16.gmra.mxu0 %v4922
        %v8514 = vpop.f32.mrf.mxu0
        %v8515 = vadd.f32 0.0, %v8514
        %v8516 = vpop.f32.mrf.mxu0
        %v8517 = vpop.f32.mrf.mxu0
        %v8518 = vadd.f32 0.0, %v8517
        %v8519 = vpop.f32.mrf.mxu0
        %8520 = vmatprep.mubr.bf16.mxu0 0
        %8521 = vmatmul.mubr.bf16.gmra.mxu0 %v4925
        %v8522 = vpop.f32.mrf.mxu0
        %v8523 = vadd.f32 0.0, %v8522
        %v8524 = vpop.f32.mrf.mxu0
        %v8525 = vpop.f32.mrf.mxu0
        %v8526 = vadd.f32 0.0, %v8525
        %v8527 = vpop.f32.mrf.mxu0
        %8528 = vmatprep.mubr.bf16.mxu0 0
        %8529 = vmatmul.mubr.bf16.gmra.mxu0 %v4928
        %v8530 = vpop.f32.mrf.mxu0
        %v8531 = vadd.f32 0.0, %v8530
        %v8532 = vpop.f32.mrf.mxu0
        %v8533 = vpop.f32.mrf.mxu0
        %v8534 = vadd.f32 0.0, %v8533
        %v8535 = vpop.f32.mrf.mxu0
        %8536 = vdwg.mxu0
        %v8537 = vpack.c.bf16 %v8478, %v8475
        %v8538 = vpack.c.bf16 %v8486, %v8483
        %v8539 = vpack.c.bf16 %v8494, %v8491
        %v8540 = vpack.c.bf16 %v8502, %v8499
        %v8541 = vpack.c.bf16 %v8510, %v8507
        %v8542 = vpack.c.bf16 %v8518, %v8515
        %v8543 = vpack.c.bf16 %v8526, %v8523
        %v8544 = vpack.c.bf16 %v8534, %v8531
        %s8545 = scalar_lea.vmem %s9, 1024
        %v8546 = vld [vmem:[%s8545] sm:$0xf]
        %v8547 = vld [vmem:[%s8545 + $0x4] sm:$0xf]
        %v8548 = vld [vmem:[%s8545 + $0x8] sm:$0xf]
        %v8549 = vld [vmem:[%s8545 + $0xc] sm:$0xf]
        %v8550 = vld [vmem:[%s8545 + $0x10] sm:$0xf]
        %v8551 = vld [vmem:[%s8545 + $0x14] sm:$0xf]
        %v8552 = vld [vmem:[%s8545 + $0x18] sm:$0xf]
        %v8553 = vld [vmem:[%s8545 + $0x1c] sm:$0xf]
        %v8554 = vld [vmem:[%s8545 + $0x20] sm:$0xf]
        %v8555 = vld [vmem:[%s8545 + $0x24] sm:$0xf]
        %v8556 = vld [vmem:[%s8545 + $0x28] sm:$0xf]
        %v8557 = vld [vmem:[%s8545 + $0x2c] sm:$0xf]
        %v8558 = vld [vmem:[%s8545 + $0x30] sm:$0xf]
        %v8559 = vld [vmem:[%s8545 + $0x34] sm:$0xf]
        %v8560 = vld [vmem:[%s8545 + $0x38] sm:$0xf]
        %v8561 = vld [vmem:[%s8545 + $0x3c] sm:$0xf]
        %v8562 = vld [vmem:[%s8545 + $0x40] sm:$0xf]
        %v8563 = vld [vmem:[%s8545 + $0x44] sm:$0xf]
        %v8564 = vld [vmem:[%s8545 + $0x48] sm:$0xf]
        %v8565 = vld [vmem:[%s8545 + $0x4c] sm:$0xf]
        %v8566 = vld [vmem:[%s8545 + $0x50] sm:$0xf]
        %v8567 = vld [vmem:[%s8545 + $0x54] sm:$0xf]
        %v8568 = vld [vmem:[%s8545 + $0x58] sm:$0xf]
        %v8569 = vld [vmem:[%s8545 + $0x5c] sm:$0xf]
        %v8570 = vld [vmem:[%s8545 + $0x60] sm:$0xf]
        %v8571 = vld [vmem:[%s8545 + $0x64] sm:$0xf]
        %v8572 = vld [vmem:[%s8545 + $0x68] sm:$0xf]
        %v8573 = vld [vmem:[%s8545 + $0x6c] sm:$0xf]
        %v8574 = vld [vmem:[%s8545 + $0x70] sm:$0xf]
        %v8575 = vld [vmem:[%s8545 + $0x74] sm:$0xf]
        %v8576 = vld [vmem:[%s8545 + $0x78] sm:$0xf]
        %v8577 = vld [vmem:[%s8545 + $0x7c] sm:$0xf]
        %v8610 = vunpack.c.l.b16 %v8546
        %v8611 = vunpack.c.l.b16 %v8547
        %v8612 = vunpack.c.l.b16 %v8548
        %v8613 = vunpack.c.l.b16 %v8549
        %v8614 = vunpack.c.l.b16 %v8550
        %v8615 = vunpack.c.l.b16 %v8551
        %v8616 = vunpack.c.l.b16 %v8552
        %v8617 = vunpack.c.l.b16 %v8553
        %v8618 = vunpack.c.l.b16 %v8554
        %v8619 = vunpack.c.l.b16 %v8555
        %v8620 = vunpack.c.l.b16 %v8556
        %v8621 = vunpack.c.l.b16 %v8557
        %v8622 = vunpack.c.l.b16 %v8558
        %v8623 = vunpack.c.l.b16 %v8559
        %v8624 = vunpack.c.l.b16 %v8560
        %v8625 = vunpack.c.l.b16 %v8561
        %v8626 = vunpack.c.l.b16 %v8562
        %v8627 = vunpack.c.l.b16 %v8563
        %v8628 = vunpack.c.l.b16 %v8564
        %v8629 = vunpack.c.l.b16 %v8565
        %v8630 = vunpack.c.l.b16 %v8566
        %v8631 = vunpack.c.l.b16 %v8567
        %v8632 = vunpack.c.l.b16 %v8568
        %v8633 = vunpack.c.l.b16 %v8569
        %v8634 = vunpack.c.l.b16 %v8570
        %v8635 = vunpack.c.l.b16 %v8571
        %v8636 = vunpack.c.l.b16 %v8572
        %v8637 = vunpack.c.l.b16 %v8573
        %v8638 = vunpack.c.l.b16 %v8574
        %v8639 = vunpack.c.l.b16 %v8575
        %v8640 = vunpack.c.l.b16 %v8576
        %v8641 = vunpack.c.l.b16 %v8577
        %v8642 = vpack.c.b16 %v8611, %v8610
        %v8643 = vpack.c.b16 %v8613, %v8612
        %v8644 = vpack.c.b16 %v8615, %v8614
        %v8645 = vpack.c.b16 %v8617, %v8616
        %v8646 = vpack.c.b16 %v8619, %v8618
        %v8647 = vpack.c.b16 %v8621, %v8620
        %v8648 = vpack.c.b16 %v8623, %v8622
        %v8649 = vpack.c.b16 %v8625, %v8624
        %v8650 = vpack.c.b16 %v8627, %v8626
        %v8651 = vpack.c.b16 %v8629, %v8628
        %v8652 = vpack.c.b16 %v8631, %v8630
        %v8653 = vpack.c.b16 %v8633, %v8632
        %v8654 = vpack.c.b16 %v8635, %v8634
        %v8655 = vpack.c.b16 %v8637, %v8636
        %v8656 = vpack.c.b16 %v8639, %v8638
        %v8657 = vpack.c.b16 %v8641, %v8640
        %8674 = vmatprep.subr.bf16.mxu0 0
        %8675 = vmatpush1.bf16.msra.mxu0 %v8544
        %8676 = vmatprep.subr.bf16.mxu0 0
        %8677 = vmatpush1.bf16.msra.mxu0 %v8543
        %8678 = vmatprep.subr.bf16.mxu0 0
        %8679 = vmatpush1.bf16.msra.mxu0 %v8542
        %8680 = vmatprep.subr.bf16.mxu0 0
        %8681 = vmatpush1.bf16.msra.mxu0 %v8541
        %8682 = vmatprep.subr.bf16.mxu0 0
        %8683 = vmatpush1.bf16.msra.mxu0 %v8540
        %8684 = vmatprep.subr.bf16.mxu0 0
        %8685 = vmatpush1.bf16.msra.mxu0 %v8539
        %8686 = vmatprep.subr.bf16.mxu0 0
        %8687 = vmatpush1.bf16.msra.mxu0 %v8538
        %8688 = vmatprep.subr.bf16.mxu0 0
        %8689 = vmatpush1.bf16.msra.mxu0 %v8537
        %8690 = vmatprep.subr.bf16.mxu0 0
        %8691 = vmatpush2.bf16.msra.mxu0 0
        %8692 = vmatprep.subr.bf16.mxu0 0
        %8693 = vmatpush2.bf16.msra.mxu0 0
        %8694 = vmatprep.subr.bf16.mxu0 0
        %8695 = vmatpush2.bf16.msra.mxu0 0
        %8696 = vmatprep.subr.bf16.mxu0 0
        %8697 = vmatpush2.bf16.msra.mxu0 0
        %8698 = vmatprep.subr.bf16.mxu0 0
        %8699 = vmatpush2.bf16.msra.mxu0 0
        %8700 = vmatprep.subr.bf16.mxu0 0
        %8701 = vmatpush2.bf16.msra.mxu0 0
        %8702 = vmatprep.subr.bf16.mxu0 0
        %8703 = vmatpush2.bf16.msra.mxu0 0
        %8704 = vmatprep.subr.bf16.mxu0 0
        %8705 = vmatpush2.bf16.msra.mxu0 0
        %8706 = vmatprep.mubr.bf16.mxu0 0
        %8707 = vmatmul.mubr.bf16.gmra.mxu0 %v8642
        %v8708 = vpop.f32.mrf.mxu0
        %v8709 = vadd.f32 0.0, %v8708
        %v8710 = vpop.f32.mrf.mxu0
        %v8711 = vpop.f32.mrf.mxu0
        %v8712 = vadd.f32 0.0, %v8711
        %v8713 = vpop.f32.mrf.mxu0
        %8714 = vmatprep.mubr.bf16.mxu0 0
        %8715 = vmatmul.mubr.bf16.gmra.mxu0 %v8643
        %v8716 = vpop.f32.mrf.mxu0
        %v8717 = vadd.f32 0.0, %v8716
        %v8718 = vpop.f32.mrf.mxu0
        %v8719 = vpop.f32.mrf.mxu0
        %v8720 = vadd.f32 0.0, %v8719
        %v8721 = vpop.f32.mrf.mxu0
        %8722 = vmatprep.mubr.bf16.mxu0 0
        %8723 = vmatmul.mubr.bf16.gmra.mxu0 %v8644
        %v8724 = vpop.f32.mrf.mxu0
        %v8725 = vadd.f32 0.0, %v8724
        %v8726 = vpop.f32.mrf.mxu0
        %v8727 = vpop.f32.mrf.mxu0
        %v8728 = vadd.f32 0.0, %v8727
        %v8729 = vpop.f32.mrf.mxu0
        %8730 = vmatprep.mubr.bf16.mxu0 0
        %8731 = vmatmul.mubr.bf16.gmra.mxu0 %v8645
        %v8732 = vpop.f32.mrf.mxu0
        %v8733 = vadd.f32 0.0, %v8732
        %v8734 = vpop.f32.mrf.mxu0
        %v8735 = vpop.f32.mrf.mxu0
        %v8736 = vadd.f32 0.0, %v8735
        %v8737 = vpop.f32.mrf.mxu0
        %8738 = vmatprep.mubr.bf16.mxu0 0
        %8739 = vmatmul.mubr.bf16.gmra.mxu0 %v8646
        %v8740 = vpop.f32.mrf.mxu0
        %v8741 = vadd.f32 0.0, %v8740
        %v8742 = vpop.f32.mrf.mxu0
        %v8743 = vpop.f32.mrf.mxu0
        %v8744 = vadd.f32 0.0, %v8743
        %v8745 = vpop.f32.mrf.mxu0
        %8746 = vmatprep.mubr.bf16.mxu0 0
        %8747 = vmatmul.mubr.bf16.gmra.mxu0 %v8647
        %v8748 = vpop.f32.mrf.mxu0
        %v8749 = vadd.f32 0.0, %v8748
        %v8750 = vpop.f32.mrf.mxu0
        %v8751 = vpop.f32.mrf.mxu0
        %v8752 = vadd.f32 0.0, %v8751
        %v8753 = vpop.f32.mrf.mxu0
        %8754 = vmatprep.mubr.bf16.mxu0 0
        %8755 = vmatmul.mubr.bf16.gmra.mxu0 %v8648
        %v8756 = vpop.f32.mrf.mxu0
        %v8757 = vadd.f32 0.0, %v8756
        %v8758 = vpop.f32.mrf.mxu0
        %v8759 = vpop.f32.mrf.mxu0
        %v8760 = vadd.f32 0.0, %v8759
        %v8761 = vpop.f32.mrf.mxu0
        %8762 = vmatprep.mubr.bf16.mxu0 0
        %8763 = vmatmul.mubr.bf16.gmra.mxu0 %v8649
        %v8764 = vpop.f32.mrf.mxu0
        %v8765 = vadd.f32 0.0, %v8764
        %v8766 = vpop.f32.mrf.mxu0
        %v8767 = vpop.f32.mrf.mxu0
        %v8768 = vadd.f32 0.0, %v8767
        %v8769 = vpop.f32.mrf.mxu0
        %8770 = vmatprep.mubr.bf16.mxu0 0
        %8771 = vmatmul.mubr.bf16.gmra.mxu0 %v8650
        %v8772 = vpop.f32.mrf.mxu0
        %v8773 = vadd.f32 0.0, %v8772
        %v8774 = vpop.f32.mrf.mxu0
        %v8775 = vpop.f32.mrf.mxu0
        %v8776 = vadd.f32 0.0, %v8775
        %v8777 = vpop.f32.mrf.mxu0
        %8778 = vmatprep.mubr.bf16.mxu0 0
        %8779 = vmatmul.mubr.bf16.gmra.mxu0 %v8651
        %v8780 = vpop.f32.mrf.mxu0
        %v8781 = vadd.f32 0.0, %v8780
        %v8782 = vpop.f32.mrf.mxu0
        %v8783 = vpop.f32.mrf.mxu0
        %v8784 = vadd.f32 0.0, %v8783
        %v8785 = vpop.f32.mrf.mxu0
        %8786 = vmatprep.mubr.bf16.mxu0 0
        %8787 = vmatmul.mubr.bf16.gmra.mxu0 %v8652
        %v8788 = vpop.f32.mrf.mxu0
        %v8789 = vadd.f32 0.0, %v8788
        %v8790 = vpop.f32.mrf.mxu0
        %v8791 = vpop.f32.mrf.mxu0
        %v8792 = vadd.f32 0.0, %v8791
        %v8793 = vpop.f32.mrf.mxu0
        %8794 = vmatprep.mubr.bf16.mxu0 0
        %8795 = vmatmul.mubr.bf16.gmra.mxu0 %v8653
        %v8796 = vpop.f32.mrf.mxu0
        %v8797 = vadd.f32 0.0, %v8796
        %v8798 = vpop.f32.mrf.mxu0
        %v8799 = vpop.f32.mrf.mxu0
        %v8800 = vadd.f32 0.0, %v8799
        %v8801 = vpop.f32.mrf.mxu0
        %8802 = vmatprep.mubr.bf16.mxu0 0
        %8803 = vmatmul.mubr.bf16.gmra.mxu0 %v8654
        %v8804 = vpop.f32.mrf.mxu0
        %v8805 = vadd.f32 0.0, %v8804
        %v8806 = vpop.f32.mrf.mxu0
        %v8807 = vpop.f32.mrf.mxu0
        %v8808 = vadd.f32 0.0, %v8807
        %v8809 = vpop.f32.mrf.mxu0
        %8810 = vmatprep.mubr.bf16.mxu0 0
        %8811 = vmatmul.mubr.bf16.gmra.mxu0 %v8655
        %v8812 = vpop.f32.mrf.mxu0
        %v8813 = vadd.f32 0.0, %v8812
        %v8814 = vpop.f32.mrf.mxu0
        %v8815 = vpop.f32.mrf.mxu0
        %v8816 = vadd.f32 0.0, %v8815
        %v8817 = vpop.f32.mrf.mxu0
        %8818 = vmatprep.mubr.bf16.mxu0 0
        %8819 = vmatmul.mubr.bf16.gmra.mxu0 %v8656
        %v8820 = vpop.f32.mrf.mxu0
        %v8821 = vadd.f32 0.0, %v8820
        %v8822 = vpop.f32.mrf.mxu0
        %v8823 = vpop.f32.mrf.mxu0
        %v8824 = vadd.f32 0.0, %v8823
        %v8825 = vpop.f32.mrf.mxu0
        %8826 = vmatprep.mubr.bf16.mxu0 0
        %8827 = vmatmul.mubr.bf16.gmra.mxu0 %v8657
        %v8828 = vpop.f32.mrf.mxu0
        %v8829 = vadd.f32 0.0, %v8828
        %v8830 = vpop.f32.mrf.mxu0
        %v8831 = vpop.f32.mrf.mxu0
        %v8832 = vadd.f32 0.0, %v8831
        %v8833 = vpop.f32.mrf.mxu0
        %8834 = vdwg.mxu0
        %v8835 = vadd.f32 %v8389, %v8709
        %v8836 = vadd.f32 %v8390, %v8712
        %v8837 = vadd.f32 %v8391, %v8717
        %v8838 = vadd.f32 %v8392, %v8720
        %v8839 = vadd.f32 %v8393, %v8725
        %v8840 = vadd.f32 %v8394, %v8728
        %v8841 = vadd.f32 %v8395, %v8733
        %v8842 = vadd.f32 %v8396, %v8736
        %v8843 = vadd.f32 %v8397, %v8741
        %v8844 = vadd.f32 %v8398, %v8744
        %v8845 = vadd.f32 %v8399, %v8749
        %v8846 = vadd.f32 %v8400, %v8752
        %v8847 = vadd.f32 %v8401, %v8757
        %v8848 = vadd.f32 %v8402, %v8760
        %v8849 = vadd.f32 %v8403, %v8765
        %v8850 = vadd.f32 %v8404, %v8768
        %v8851 = vadd.f32 %v8405, %v8773
        %v8852 = vadd.f32 %v8406, %v8776
        %v8853 = vadd.f32 %v8407, %v8781
        %v8854 = vadd.f32 %v8408, %v8784
        %v8855 = vadd.f32 %v8409, %v8789
        %v8856 = vadd.f32 %v8410, %v8792
        %v8857 = vadd.f32 %v8411, %v8797
        %v8858 = vadd.f32 %v8412, %v8800
        %v8859 = vadd.f32 %v8413, %v8805
        %v8860 = vadd.f32 %v8414, %v8808
        %v8861 = vadd.f32 %v8415, %v8813
        %v8862 = vadd.f32 %v8416, %v8816
        %v8863 = vadd.f32 %v8417, %v8821
        %v8864 = vadd.f32 %v8418, %v8824
        %v8865 = vadd.f32 %v8419, %v8829
        %v8866 = vadd.f32 %v8420, %v8832
        %v8867 = vld [vmem:[%s10] sm:$0xff]
        %v8868 = vld [vmem:[%s10 + $0x8] sm:$0xff]
        %v8869 = vld [vmem:[%s10 + $0x10] sm:$0xff]
        %v8870 = vld [vmem:[%s10 + $0x18] sm:$0xff]
        %v8871 = vld [vmem:[%s10 + $0x20] sm:$0xff]
        %v8872 = vld [vmem:[%s10 + $0x28] sm:$0xff]
        %v8873 = vld [vmem:[%s10 + $0x30] sm:$0xff]
        %v8874 = vld [vmem:[%s10 + $0x38] sm:$0xff]
        %v8875 = vld [vmem:[%s10 + $0x40] sm:$0xff]
        %v8876 = vld [vmem:[%s10 + $0x48] sm:$0xff]
        %v8877 = vld [vmem:[%s10 + $0x50] sm:$0xff]
        %v8878 = vld [vmem:[%s10 + $0x58] sm:$0xff]
        %v8879 = vld [vmem:[%s10 + $0x60] sm:$0xff]
        %v8880 = vld [vmem:[%s10 + $0x68] sm:$0xff]
        %v8881 = vld [vmem:[%s10 + $0x70] sm:$0xff]
        %v8882 = vld [vmem:[%s10 + $0x78] sm:$0xff]
        %v8883 = vld [vmem:[%s10 + $0x80] sm:$0xff]
        %v8884 = vld [vmem:[%s10 + $0x88] sm:$0xff]
        %v8885 = vld [vmem:[%s10 + $0x90] sm:$0xff]
        %v8886 = vld [vmem:[%s10 + $0x98] sm:$0xff]
        %v8887 = vld [vmem:[%s10 + $0xa0] sm:$0xff]
        %v8888 = vld [vmem:[%s10 + $0xa8] sm:$0xff]
        %v8889 = vld [vmem:[%s10 + $0xb0] sm:$0xff]
        %v8890 = vld [vmem:[%s10 + $0xb8] sm:$0xff]
        %v8891 = vld [vmem:[%s10 + $0xc0] sm:$0xff]
        %v8892 = vld [vmem:[%s10 + $0xc8] sm:$0xff]
        %v8893 = vld [vmem:[%s10 + $0xd0] sm:$0xff]
        %v8894 = vld [vmem:[%s10 + $0xd8] sm:$0xff]
        %v8895 = vld [vmem:[%s10 + $0xe0] sm:$0xff]
        %v8896 = vld [vmem:[%s10 + $0xe8] sm:$0xff]
        %v8897 = vld [vmem:[%s10 + $0xf0] sm:$0xff]
        %v8898 = vld [vmem:[%s10 + $0xf8] sm:$0xff]
        %8900 = vset.pattern.permute.xlu0 0
        %8901 = vperm.xlu0 %8900, %v8867
        %v8902 = vpop.permute.xlu0 %8901
        %8905 = vset.pattern.permute.xlu0 0
        %8906 = vperm.xlu0 %8905, %v8868
        %v8907 = vpop.permute.xlu0 %8906
        %8910 = vset.pattern.permute.xlu0 0
        %8911 = vperm.xlu0 %8910, %v8869
        %v8912 = vpop.permute.xlu0 %8911
        %8915 = vset.pattern.permute.xlu0 0
        %8916 = vperm.xlu0 %8915, %v8870
        %v8917 = vpop.permute.xlu0 %8916
        %8920 = vset.pattern.permute.xlu0 0
        %8921 = vperm.xlu0 %8920, %v8871
        %v8922 = vpop.permute.xlu0 %8921
        %8925 = vset.pattern.permute.xlu0 0
        %8926 = vperm.xlu0 %8925, %v8872
        %v8927 = vpop.permute.xlu0 %8926
        %8930 = vset.pattern.permute.xlu0 0
        %8931 = vperm.xlu0 %8930, %v8873
        %v8932 = vpop.permute.xlu0 %8931
        %8935 = vset.pattern.permute.xlu0 0
        %8936 = vperm.xlu0 %8935, %v8874
        %v8937 = vpop.permute.xlu0 %8936
        %8940 = vset.pattern.permute.xlu0 0
        %8941 = vperm.xlu0 %8940, %v8875
        %v8942 = vpop.permute.xlu0 %8941
        %8945 = vset.pattern.permute.xlu0 0
        %8946 = vperm.xlu0 %8945, %v8876
        %v8947 = vpop.permute.xlu0 %8946
        %8950 = vset.pattern.permute.xlu0 0
        %8951 = vperm.xlu0 %8950, %v8877
        %v8952 = vpop.permute.xlu0 %8951
        %8955 = vset.pattern.permute.xlu0 0
        %8956 = vperm.xlu0 %8955, %v8878
        %v8957 = vpop.permute.xlu0 %8956
        %8960 = vset.pattern.permute.xlu0 0
        %8961 = vperm.xlu0 %8960, %v8879
        %v8962 = vpop.permute.xlu0 %8961
        %8965 = vset.pattern.permute.xlu0 0
        %8966 = vperm.xlu0 %8965, %v8880
        %v8967 = vpop.permute.xlu0 %8966
        %8970 = vset.pattern.permute.xlu0 0
        %8971 = vperm.xlu0 %8970, %v8881
        %v8972 = vpop.permute.xlu0 %8971
        %8975 = vset.pattern.permute.xlu0 0
        %8976 = vperm.xlu0 %8975, %v8882
        %v8977 = vpop.permute.xlu0 %8976
        %8980 = vset.pattern.permute.xlu0 0
        %8981 = vperm.xlu0 %8980, %v8883
        %v8982 = vpop.permute.xlu0 %8981
        %8985 = vset.pattern.permute.xlu0 0
        %8986 = vperm.xlu0 %8985, %v8884
        %v8987 = vpop.permute.xlu0 %8986
        %8990 = vset.pattern.permute.xlu0 0
        %8991 = vperm.xlu0 %8990, %v8885
        %v8992 = vpop.permute.xlu0 %8991
        %8995 = vset.pattern.permute.xlu0 0
        %8996 = vperm.xlu0 %8995, %v8886
        %v8997 = vpop.permute.xlu0 %8996
        %9000 = vset.pattern.permute.xlu0 0
        %9001 = vperm.xlu0 %9000, %v8887
        %v9002 = vpop.permute.xlu0 %9001
        %9005 = vset.pattern.permute.xlu0 0
        %9006 = vperm.xlu0 %9005, %v8888
        %v9007 = vpop.permute.xlu0 %9006
        %9010 = vset.pattern.permute.xlu0 0
        %9011 = vperm.xlu0 %9010, %v8889
        %v9012 = vpop.permute.xlu0 %9011
        %9015 = vset.pattern.permute.xlu0 0
        %9016 = vperm.xlu0 %9015, %v8890
        %v9017 = vpop.permute.xlu0 %9016
        %9020 = vset.pattern.permute.xlu0 0
        %9021 = vperm.xlu0 %9020, %v8891
        %v9022 = vpop.permute.xlu0 %9021
        %9025 = vset.pattern.permute.xlu0 0
        %9026 = vperm.xlu0 %9025, %v8892
        %v9027 = vpop.permute.xlu0 %9026
        %9030 = vset.pattern.permute.xlu0 0
        %9031 = vperm.xlu0 %9030, %v8893
        %v9032 = vpop.permute.xlu0 %9031
        %9035 = vset.pattern.permute.xlu0 0
        %9036 = vperm.xlu0 %9035, %v8894
        %v9037 = vpop.permute.xlu0 %9036
        %9040 = vset.pattern.permute.xlu0 0
        %9041 = vperm.xlu0 %9040, %v8895
        %v9042 = vpop.permute.xlu0 %9041
        %9045 = vset.pattern.permute.xlu0 0
        %9046 = vperm.xlu0 %9045, %v8896
        %v9047 = vpop.permute.xlu0 %9046
        %9050 = vset.pattern.permute.xlu0 0
        %9051 = vperm.xlu0 %9050, %v8897
        %v9052 = vpop.permute.xlu0 %9051
        %9055 = vset.pattern.permute.xlu0 0
        %9056 = vperm.xlu0 %9055, %v8898
        %v9057 = vpop.permute.xlu0 %9056
        %v9059 = vadd.f32 %v8835, %v8902
        %v9060 = vadd.f32 %v8836, %v8907
        %v9061 = vadd.f32 %v8837, %v8912
        %v9062 = vadd.f32 %v8838, %v8917
        %v9063 = vadd.f32 %v8839, %v8922
        %v9064 = vadd.f32 %v8840, %v8927
        %v9065 = vadd.f32 %v8841, %v8932
        %v9066 = vadd.f32 %v8842, %v8937
        %v9067 = vadd.f32 %v8843, %v8942
        %v9068 = vadd.f32 %v8844, %v8947
        %v9069 = vadd.f32 %v8845, %v8952
        %v9070 = vadd.f32 %v8846, %v8957
        %v9071 = vadd.f32 %v8847, %v8962
        %v9072 = vadd.f32 %v8848, %v8967
        %v9073 = vadd.f32 %v8849, %v8972
        %v9074 = vadd.f32 %v8850, %v8977
        %v9075 = vadd.f32 %v8851, %v8982
        %v9076 = vadd.f32 %v8852, %v8987
        %v9077 = vadd.f32 %v8853, %v8992
        %v9078 = vadd.f32 %v8854, %v8997
        %v9079 = vadd.f32 %v8855, %v9002
        %v9080 = vadd.f32 %v8856, %v9007
        %v9081 = vadd.f32 %v8857, %v9012
        %v9082 = vadd.f32 %v8858, %v9017
        %v9083 = vadd.f32 %v8859, %v9022
        %v9084 = vadd.f32 %v8860, %v9027
        %v9085 = vadd.f32 %v8861, %v9032
        %v9086 = vadd.f32 %v8862, %v9037
        %v9087 = vadd.f32 %v8863, %v9042
        %v9088 = vadd.f32 %v8864, %v9047
        %v9089 = vadd.f32 %v8865, %v9052
        %v9090 = vadd.f32 %v8866, %v9057
        %vm9091 = vcmp.ge.f32.partialorder %v9059, 0.0
        %vm9092 = vcmp.ge.f32.partialorder %v9060, 0.0
        %vm9093 = vcmp.ge.f32.partialorder %v9061, 0.0
        %vm9094 = vcmp.ge.f32.partialorder %v9062, 0.0
        %vm9095 = vcmp.ge.f32.partialorder %v9063, 0.0
        %vm9096 = vcmp.ge.f32.partialorder %v9064, 0.0
        %vm9097 = vcmp.ge.f32.partialorder %v9065, 0.0
        %vm9098 = vcmp.ge.f32.partialorder %v9066, 0.0
        %vm9099 = vcmp.ge.f32.partialorder %v9067, 0.0
        %vm9100 = vcmp.ge.f32.partialorder %v9068, 0.0
        %vm9101 = vcmp.ge.f32.partialorder %v9069, 0.0
        %vm9102 = vcmp.ge.f32.partialorder %v9070, 0.0
        %vm9103 = vcmp.ge.f32.partialorder %v9071, 0.0
        %vm9104 = vcmp.ge.f32.partialorder %v9072, 0.0
        %vm9105 = vcmp.ge.f32.partialorder %v9073, 0.0
        %vm9106 = vcmp.ge.f32.partialorder %v9074, 0.0
        %vm9107 = vcmp.ge.f32.partialorder %v9075, 0.0
        %vm9108 = vcmp.ge.f32.partialorder %v9076, 0.0
        %vm9109 = vcmp.ge.f32.partialorder %v9077, 0.0
        %vm9110 = vcmp.ge.f32.partialorder %v9078, 0.0
        %vm9111 = vcmp.ge.f32.partialorder %v9079, 0.0
        %vm9112 = vcmp.ge.f32.partialorder %v9080, 0.0
        %vm9113 = vcmp.ge.f32.partialorder %v9081, 0.0
        %vm9114 = vcmp.ge.f32.partialorder %v9082, 0.0
        %vm9115 = vcmp.ge.f32.partialorder %v9083, 0.0
        %vm9116 = vcmp.ge.f32.partialorder %v9084, 0.0
        %vm9117 = vcmp.ge.f32.partialorder %v9085, 0.0
        %vm9118 = vcmp.ge.f32.partialorder %v9086, 0.0
        %vm9119 = vcmp.ge.f32.partialorder %v9087, 0.0
        %vm9120 = vcmp.ge.f32.partialorder %v9088, 0.0
        %vm9121 = vcmp.ge.f32.partialorder %v9089, 0.0
        %vm9122 = vcmp.ge.f32.partialorder %v9090, 0.0
        %v9123 = vmul.f32 %v9059, 0.01
        %v9124 = vmul.f32 %v9060, 0.01
        %v9125 = vmul.f32 %v9061, 0.01
        %v9126 = vmul.f32 %v9062, 0.01
        %v9127 = vmul.f32 %v9063, 0.01
        %v9128 = vmul.f32 %v9064, 0.01
        %v9129 = vmul.f32 %v9065, 0.01
        %v9130 = vmul.f32 %v9066, 0.01
        %v9131 = vmul.f32 %v9067, 0.01
        %v9132 = vmul.f32 %v9068, 0.01
        %v9133 = vmul.f32 %v9069, 0.01
        %v9134 = vmul.f32 %v9070, 0.01
        %v9135 = vmul.f32 %v9071, 0.01
        %v9136 = vmul.f32 %v9072, 0.01
        %v9137 = vmul.f32 %v9073, 0.01
        %v9138 = vmul.f32 %v9074, 0.01
        %v9139 = vmul.f32 %v9075, 0.01
        %v9140 = vmul.f32 %v9076, 0.01
        %v9141 = vmul.f32 %v9077, 0.01
        %v9142 = vmul.f32 %v9078, 0.01
        %v9143 = vmul.f32 %v9079, 0.01
        %v9144 = vmul.f32 %v9080, 0.01
        %v9145 = vmul.f32 %v9081, 0.01
        %v9146 = vmul.f32 %v9082, 0.01
        %v9147 = vmul.f32 %v9083, 0.01
        %v9148 = vmul.f32 %v9084, 0.01
        %v9149 = vmul.f32 %v9085, 0.01
        %v9150 = vmul.f32 %v9086, 0.01
        %v9151 = vmul.f32 %v9087, 0.01
        %v9152 = vmul.f32 %v9088, 0.01
        %v9153 = vmul.f32 %v9089, 0.01
        %v9154 = vmul.f32 %v9090, 0.01
        %v9155 = vsel %vm9091, %v9059, %v9123
        %v9156 = vsel %vm9092, %v9060, %v9124
        %v9157 = vsel %vm9093, %v9061, %v9125
        %v9158 = vsel %vm9094, %v9062, %v9126
        %v9159 = vsel %vm9095, %v9063, %v9127
        %v9160 = vsel %vm9096, %v9064, %v9128
        %v9161 = vsel %vm9097, %v9065, %v9129
        %v9162 = vsel %vm9098, %v9066, %v9130
        %v9163 = vsel %vm9099, %v9067, %v9131
        %v9164 = vsel %vm9100, %v9068, %v9132
        %v9165 = vsel %vm9101, %v9069, %v9133
        %v9166 = vsel %vm9102, %v9070, %v9134
        %v9167 = vsel %vm9103, %v9071, %v9135
        %v9168 = vsel %vm9104, %v9072, %v9136
        %v9169 = vsel %vm9105, %v9073, %v9137
        %v9170 = vsel %vm9106, %v9074, %v9138
        %v9171 = vsel %vm9107, %v9075, %v9139
        %v9172 = vsel %vm9108, %v9076, %v9140
        %v9173 = vsel %vm9109, %v9077, %v9141
        %v9174 = vsel %vm9110, %v9078, %v9142
        %v9175 = vsel %vm9111, %v9079, %v9143
        %v9176 = vsel %vm9112, %v9080, %v9144
        %v9177 = vsel %vm9113, %v9081, %v9145
        %v9178 = vsel %vm9114, %v9082, %v9146
        %v9179 = vsel %vm9115, %v9083, %v9147
        %v9180 = vsel %vm9116, %v9084, %v9148
        %v9181 = vsel %vm9117, %v9085, %v9149
        %v9182 = vsel %vm9118, %v9086, %v9150
        %v9183 = vsel %vm9119, %v9087, %v9151
        %v9184 = vsel %vm9120, %v9088, %v9152
        %v9185 = vsel %vm9121, %v9089, %v9153
        %v9186 = vsel %vm9122, %v9090, %v9154
        %v9187 = vld [vmem:[%s11] sm:$0xff]
        %v9188 = vld [vmem:[%s11 + $0x8] sm:$0xff]
        %v9189 = vld [vmem:[%s11 + $0x10] sm:$0xff]
        %v9190 = vld [vmem:[%s11 + $0x18] sm:$0xff]
        %v9191 = vld [vmem:[%s11 + $0x20] sm:$0xff]
        %v9192 = vld [vmem:[%s11 + $0x28] sm:$0xff]
        %v9193 = vld [vmem:[%s11 + $0x30] sm:$0xff]
        %v9194 = vld [vmem:[%s11 + $0x38] sm:$0xff]
        %v9195 = vld [vmem:[%s11 + $0x40] sm:$0xff]
        %v9196 = vld [vmem:[%s11 + $0x48] sm:$0xff]
        %v9197 = vld [vmem:[%s11 + $0x50] sm:$0xff]
        %v9198 = vld [vmem:[%s11 + $0x58] sm:$0xff]
        %v9199 = vld [vmem:[%s11 + $0x60] sm:$0xff]
        %v9200 = vld [vmem:[%s11 + $0x68] sm:$0xff]
        %v9201 = vld [vmem:[%s11 + $0x70] sm:$0xff]
        %v9202 = vld [vmem:[%s11 + $0x78] sm:$0xff]
        %v9203 = vld [vmem:[%s11 + $0x80] sm:$0xff]
        %v9204 = vld [vmem:[%s11 + $0x88] sm:$0xff]
        %v9205 = vld [vmem:[%s11 + $0x90] sm:$0xff]
        %v9206 = vld [vmem:[%s11 + $0x98] sm:$0xff]
        %v9207 = vld [vmem:[%s11 + $0xa0] sm:$0xff]
        %v9208 = vld [vmem:[%s11 + $0xa8] sm:$0xff]
        %v9209 = vld [vmem:[%s11 + $0xb0] sm:$0xff]
        %v9210 = vld [vmem:[%s11 + $0xb8] sm:$0xff]
        %v9211 = vld [vmem:[%s11 + $0xc0] sm:$0xff]
        %v9212 = vld [vmem:[%s11 + $0xc8] sm:$0xff]
        %v9213 = vld [vmem:[%s11 + $0xd0] sm:$0xff]
        %v9214 = vld [vmem:[%s11 + $0xd8] sm:$0xff]
        %v9215 = vld [vmem:[%s11 + $0xe0] sm:$0xff]
        %v9216 = vld [vmem:[%s11 + $0xe8] sm:$0xff]
        %v9217 = vld [vmem:[%s11 + $0xf0] sm:$0xff]
        %v9218 = vld [vmem:[%s11 + $0xf8] sm:$0xff]
        %v9219 = vld [vmem:[%s11 + $0x100] sm:$0xff]
        %v9220 = vld [vmem:[%s11 + $0x108] sm:$0xff]
        %v9221 = vld [vmem:[%s11 + $0x110] sm:$0xff]
        %v9222 = vld [vmem:[%s11 + $0x118] sm:$0xff]
        %v9223 = vld [vmem:[%s11 + $0x120] sm:$0xff]
        %v9224 = vld [vmem:[%s11 + $0x128] sm:$0xff]
        %v9225 = vld [vmem:[%s11 + $0x130] sm:$0xff]
        %v9226 = vld [vmem:[%s11 + $0x138] sm:$0xff]
        %v9227 = vpack.c.bf16 %v9156, %v9155
        %v9228 = vpack.c.bf16 %v9158, %v9157
        %v9229 = vpack.c.bf16 %v9160, %v9159
        %v9230 = vpack.c.bf16 %v9162, %v9161
        %v9231 = vpack.c.bf16 %v9164, %v9163
        %v9232 = vpack.c.bf16 %v9166, %v9165
        %v9233 = vpack.c.bf16 %v9168, %v9167
        %v9234 = vpack.c.bf16 %v9170, %v9169
        %v9235 = vpack.c.bf16 %v9172, %v9171
        %v9236 = vpack.c.bf16 %v9174, %v9173
        %v9237 = vpack.c.bf16 %v9176, %v9175
        %v9238 = vpack.c.bf16 %v9178, %v9177
        %v9239 = vpack.c.bf16 %v9180, %v9179
        %v9240 = vpack.c.bf16 %v9182, %v9181
        %v9241 = vpack.c.bf16 %v9184, %v9183
        %v9242 = vpack.c.bf16 %v9186, %v9185
        %v9243 = vld [vmem:[%s12] sm:$0xff]
        %v9244 = vld [vmem:[%s12 + $0x8] sm:$0xff]
        %v9245 = vld [vmem:[%s12 + $0x10] sm:$0xff]
        %v9246 = vld [vmem:[%s12 + $0x18] sm:$0xff]
        %v9247 = vld [vmem:[%s12 + $0x20] sm:$0xff]
        %v9248 = vld [vmem:[%s12 + $0x28] sm:$0xff]
        %v9249 = vld [vmem:[%s12 + $0x30] sm:$0xff]
        %v9250 = vld [vmem:[%s12 + $0x38] sm:$0xff]
        %v9251 = vld [vmem:[%s12 + $0x40] sm:$0xff]
        %v9252 = vld [vmem:[%s12 + $0x48] sm:$0xff]
        %v9253 = vld [vmem:[%s12 + $0x50] sm:$0xff]
        %v9254 = vld [vmem:[%s12 + $0x58] sm:$0xff]
        %v9255 = vld [vmem:[%s12 + $0x60] sm:$0xff]
        %v9256 = vld [vmem:[%s12 + $0x68] sm:$0xff]
        %v9257 = vld [vmem:[%s12 + $0x70] sm:$0xff]
        %v9258 = vld [vmem:[%s12 + $0x78] sm:$0xff]
        %v9259 = vld [vmem:[%s12 + $0x80] sm:$0xff]
        %v9260 = vld [vmem:[%s12 + $0x88] sm:$0xff]
        %v9261 = vld [vmem:[%s12 + $0x90] sm:$0xff]
        %v9262 = vld [vmem:[%s12 + $0x98] sm:$0xff]
        %v9263 = vld [vmem:[%s12 + $0xa0] sm:$0xff]
        %v9264 = vld [vmem:[%s12 + $0xa8] sm:$0xff]
        %v9265 = vld [vmem:[%s12 + $0xb0] sm:$0xff]
        %v9266 = vld [vmem:[%s12 + $0xb8] sm:$0xff]
        %v9267 = vld [vmem:[%s12 + $0xc0] sm:$0xff]
        %v9268 = vld [vmem:[%s12 + $0xc8] sm:$0xff]
        %v9269 = vld [vmem:[%s12 + $0xd0] sm:$0xff]
        %v9270 = vld [vmem:[%s12 + $0xd8] sm:$0xff]
        %v9271 = vld [vmem:[%s12 + $0xe0] sm:$0xff]
        %v9272 = vld [vmem:[%s12 + $0xe8] sm:$0xff]
        %v9273 = vld [vmem:[%s12 + $0xf0] sm:$0xff]
        %v9274 = vld [vmem:[%s12 + $0xf8] sm:$0xff]
        %v9275 = vld [vmem:[%s12 + $0x100] sm:$0xff]
        %v9276 = vld [vmem:[%s12 + $0x108] sm:$0xff]
        %v9277 = vld [vmem:[%s12 + $0x110] sm:$0xff]
        %v9278 = vld [vmem:[%s12 + $0x118] sm:$0xff]
        %v9279 = vld [vmem:[%s12 + $0x120] sm:$0xff]
        %v9280 = vld [vmem:[%s12 + $0x128] sm:$0xff]
        %v9281 = vld [vmem:[%s12 + $0x130] sm:$0xff]
        %v9282 = vld [vmem:[%s12 + $0x138] sm:$0xff]
        %9284 = vset.pattern.permute.xlu0 0
        %9285 = vperm.xlu0 %9284, %v9243
        %v9286 = vpop.permute.xlu0 %9285
        %9289 = vset.pattern.permute.xlu0 0
        %9290 = vperm.xlu0 %9289, %v9244
        %v9291 = vpop.permute.xlu0 %9290
        %9294 = vset.pattern.permute.xlu0 0
        %9295 = vperm.xlu0 %9294, %v9245
        %v9296 = vpop.permute.xlu0 %9295
        %9299 = vset.pattern.permute.xlu0 0
        %9300 = vperm.xlu0 %9299, %v9246
        %v9301 = vpop.permute.xlu0 %9300
        %9304 = vset.pattern.permute.xlu0 0
        %9305 = vperm.xlu0 %9304, %v9247
        %v9306 = vpop.permute.xlu0 %9305
        %9309 = vset.pattern.permute.xlu0 0
        %9310 = vperm.xlu0 %9309, %v9248
        %v9311 = vpop.permute.xlu0 %9310
        %9314 = vset.pattern.permute.xlu0 0
        %9315 = vperm.xlu0 %9314, %v9249
        %v9316 = vpop.permute.xlu0 %9315
        %9319 = vset.pattern.permute.xlu0 0
        %9320 = vperm.xlu0 %9319, %v9250
        %v9321 = vpop.permute.xlu0 %9320
        %9324 = vset.pattern.permute.xlu0 0
        %9325 = vperm.xlu0 %9324, %v9251
        %v9326 = vpop.permute.xlu0 %9325
        %9329 = vset.pattern.permute.xlu0 0
        %9330 = vperm.xlu0 %9329, %v9252
        %v9331 = vpop.permute.xlu0 %9330
        %9334 = vset.pattern.permute.xlu0 0
        %9335 = vperm.xlu0 %9334, %v9253
        %v9336 = vpop.permute.xlu0 %9335
        %9339 = vset.pattern.permute.xlu0 0
        %9340 = vperm.xlu0 %9339, %v9254
        %v9341 = vpop.permute.xlu0 %9340
        %9344 = vset.pattern.permute.xlu0 0
        %9345 = vperm.xlu0 %9344, %v9255
        %v9346 = vpop.permute.xlu0 %9345
        %9349 = vset.pattern.permute.xlu0 0
        %9350 = vperm.xlu0 %9349, %v9256
        %v9351 = vpop.permute.xlu0 %9350
        %9354 = vset.pattern.permute.xlu0 0
        %9355 = vperm.xlu0 %9354, %v9257
        %v9356 = vpop.permute.xlu0 %9355
        %9359 = vset.pattern.permute.xlu0 0
        %9360 = vperm.xlu0 %9359, %v9258
        %v9361 = vpop.permute.xlu0 %9360
        %9364 = vset.pattern.permute.xlu0 0
        %9365 = vperm.xlu0 %9364, %v9259
        %v9366 = vpop.permute.xlu0 %9365
        %9369 = vset.pattern.permute.xlu0 0
        %9370 = vperm.xlu0 %9369, %v9260
        %v9371 = vpop.permute.xlu0 %9370
        %9374 = vset.pattern.permute.xlu0 0
        %9375 = vperm.xlu0 %9374, %v9261
        %v9376 = vpop.permute.xlu0 %9375
        %9379 = vset.pattern.permute.xlu0 0
        %9380 = vperm.xlu0 %9379, %v9262
        %v9381 = vpop.permute.xlu0 %9380
        %9384 = vset.pattern.permute.xlu0 0
        %9385 = vperm.xlu0 %9384, %v9263
        %v9386 = vpop.permute.xlu0 %9385
        %9389 = vset.pattern.permute.xlu0 0
        %9390 = vperm.xlu0 %9389, %v9264
        %v9391 = vpop.permute.xlu0 %9390
        %9394 = vset.pattern.permute.xlu0 0
        %9395 = vperm.xlu0 %9394, %v9265
        %v9396 = vpop.permute.xlu0 %9395
        %9399 = vset.pattern.permute.xlu0 0
        %9400 = vperm.xlu0 %9399, %v9266
        %v9401 = vpop.permute.xlu0 %9400
        %9404 = vset.pattern.permute.xlu0 0
        %9405 = vperm.xlu0 %9404, %v9267
        %v9406 = vpop.permute.xlu0 %9405
        %9409 = vset.pattern.permute.xlu0 0
        %9410 = vperm.xlu0 %9409, %v9268
        %v9411 = vpop.permute.xlu0 %9410
        %9414 = vset.pattern.permute.xlu0 0
        %9415 = vperm.xlu0 %9414, %v9269
        %v9416 = vpop.permute.xlu0 %9415
        %9419 = vset.pattern.permute.xlu0 0
        %9420 = vperm.xlu0 %9419, %v9270
        %v9421 = vpop.permute.xlu0 %9420
        %9424 = vset.pattern.permute.xlu0 0
        %9425 = vperm.xlu0 %9424, %v9271
        %v9426 = vpop.permute.xlu0 %9425
        %9429 = vset.pattern.permute.xlu0 0
        %9430 = vperm.xlu0 %9429, %v9272
        %v9431 = vpop.permute.xlu0 %9430
        %9434 = vset.pattern.permute.xlu0 0
        %9435 = vperm.xlu0 %9434, %v9273
        %v9436 = vpop.permute.xlu0 %9435
        %9439 = vset.pattern.permute.xlu0 0
        %9440 = vperm.xlu0 %9439, %v9274
        %v9441 = vpop.permute.xlu0 %9440
        %9444 = vset.pattern.permute.xlu0 0
        %9445 = vperm.xlu0 %9444, %v9275
        %v9446 = vpop.permute.xlu0 %9445
        %9449 = vset.pattern.permute.xlu0 0
        %9450 = vperm.xlu0 %9449, %v9276
        %v9451 = vpop.permute.xlu0 %9450
        %9454 = vset.pattern.permute.xlu0 0
        %9455 = vperm.xlu0 %9454, %v9277
        %v9456 = vpop.permute.xlu0 %9455
        %9459 = vset.pattern.permute.xlu0 0
        %9460 = vperm.xlu0 %9459, %v9278
        %v9461 = vpop.permute.xlu0 %9460
        %9464 = vset.pattern.permute.xlu0 0
        %9465 = vperm.xlu0 %9464, %v9279
        %v9466 = vpop.permute.xlu0 %9465
        %9469 = vset.pattern.permute.xlu0 0
        %9470 = vperm.xlu0 %9469, %v9280
        %v9471 = vpop.permute.xlu0 %9470
        %9474 = vset.pattern.permute.xlu0 0
        %9475 = vperm.xlu0 %9474, %v9281
        %v9476 = vpop.permute.xlu0 %9475
        %9479 = vset.pattern.permute.xlu0 0
        %9480 = vperm.xlu0 %9479, %v9282
        %v9481 = vpop.permute.xlu0 %9480
        %v9523 = vunpack.c.l.b16 %v9187
        %v9524 = vunpack.c.h.b16 %v9187
        %v9525 = vunpack.c.l.b16 %v9188
        %v9526 = vunpack.c.h.b16 %v9188
        %v9527 = vunpack.c.l.b16 %v9189
        %v9528 = vunpack.c.h.b16 %v9189
        %v9529 = vunpack.c.l.b16 %v9190
        %v9530 = vunpack.c.h.b16 %v9190
        %v9531 = vunpack.c.l.b16 %v9191
        %v9532 = vunpack.c.h.b16 %v9191
        %v9533 = vunpack.c.l.b16 %v9192
        %v9534 = vunpack.c.h.b16 %v9192
        %v9535 = vunpack.c.l.b16 %v9193
        %v9536 = vunpack.c.h.b16 %v9193
        %v9537 = vunpack.c.l.b16 %v9194
        %v9538 = vunpack.c.h.b16 %v9194
        %v9539 = vunpack.c.l.b16 %v9195
        %v9540 = vunpack.c.h.b16 %v9195
        %v9541 = vunpack.c.l.b16 %v9196
        %v9542 = vunpack.c.h.b16 %v9196
        %v9543 = vunpack.c.l.b16 %v9197
        %v9544 = vunpack.c.h.b16 %v9197
        %v9545 = vunpack.c.l.b16 %v9198
        %v9546 = vunpack.c.h.b16 %v9198
        %v9547 = vunpack.c.l.b16 %v9199
        %v9548 = vunpack.c.h.b16 %v9199
        %v9549 = vunpack.c.l.b16 %v9200
        %v9550 = vunpack.c.h.b16 %v9200
        %v9551 = vunpack.c.l.b16 %v9201
        %v9552 = vunpack.c.h.b16 %v9201
        %v9553 = vunpack.c.l.b16 %v9202
        %v9554 = vunpack.c.h.b16 %v9202
        %v9555 = vunpack.c.l.b16 %v9203
        %v9556 = vunpack.c.h.b16 %v9203
        %v9557 = vunpack.c.l.b16 %v9204
        %v9558 = vunpack.c.h.b16 %v9204
        %v9559 = vunpack.c.l.b16 %v9205
        %v9560 = vunpack.c.h.b16 %v9205
        %v9561 = vunpack.c.l.b16 %v9206
        %v9562 = vunpack.c.h.b16 %v9206
        %v9563 = vunpack.c.l.b16 %v9207
        %v9564 = vunpack.c.h.b16 %v9207
        %v9565 = vunpack.c.l.b16 %v9208
        %v9566 = vunpack.c.h.b16 %v9208
        %v9567 = vunpack.c.l.b16 %v9209
        %v9568 = vunpack.c.h.b16 %v9209
        %v9569 = vunpack.c.l.b16 %v9210
        %v9570 = vunpack.c.h.b16 %v9210
        %v9571 = vunpack.c.l.b16 %v9211
        %v9572 = vunpack.c.h.b16 %v9211
        %v9573 = vunpack.c.l.b16 %v9212
        %v9574 = vunpack.c.h.b16 %v9212
        %v9575 = vunpack.c.l.b16 %v9213
        %v9576 = vunpack.c.h.b16 %v9213
        %v9577 = vunpack.c.l.b16 %v9214
        %v9578 = vunpack.c.h.b16 %v9214
        %v9579 = vunpack.c.l.b16 %v9215
        %v9580 = vunpack.c.h.b16 %v9215
        %v9581 = vunpack.c.l.b16 %v9216
        %v9582 = vunpack.c.h.b16 %v9216
        %v9583 = vunpack.c.l.b16 %v9217
        %v9584 = vunpack.c.h.b16 %v9217
        %v9585 = vunpack.c.l.b16 %v9218
        %v9586 = vunpack.c.h.b16 %v9218
        %v9587 = vunpack.c.l.b16 %v9219
        %v9588 = vunpack.c.h.b16 %v9219
        %v9589 = vunpack.c.l.b16 %v9220
        %v9590 = vunpack.c.h.b16 %v9220
        %v9591 = vunpack.c.l.b16 %v9221
        %v9592 = vunpack.c.h.b16 %v9221
        %v9593 = vunpack.c.l.b16 %v9222
        %v9594 = vunpack.c.h.b16 %v9222
        %v9595 = vunpack.c.l.b16 %v9223
        %v9596 = vunpack.c.h.b16 %v9223
        %v9597 = vunpack.c.l.b16 %v9224
        %v9598 = vunpack.c.h.b16 %v9224
        %v9599 = vunpack.c.l.b16 %v9225
        %v9600 = vunpack.c.h.b16 %v9225
        %v9601 = vunpack.c.l.b16 %v9226
        %v9602 = vunpack.c.h.b16 %v9226
        %v9603 = vpack.c.b16 %v9525, %v9523
        %v9604 = vpack.c.b16 %v9526, %v9524
        %v9605 = vpack.c.b16 %v9529, %v9527
        %v9606 = vpack.c.b16 %v9530, %v9528
        %v9607 = vpack.c.b16 %v9533, %v9531
        %v9608 = vpack.c.b16 %v9534, %v9532
        %v9609 = vpack.c.b16 %v9537, %v9535
        %v9610 = vpack.c.b16 %v9538, %v9536
        %v9611 = vpack.c.b16 %v9541, %v9539
        %v9612 = vpack.c.b16 %v9542, %v9540
        %v9613 = vpack.c.b16 %v9545, %v9543
        %v9614 = vpack.c.b16 %v9546, %v9544
        %v9615 = vpack.c.b16 %v9549, %v9547
        %v9616 = vpack.c.b16 %v9550, %v9548
        %v9617 = vpack.c.b16 %v9553, %v9551
        %v9618 = vpack.c.b16 %v9554, %v9552
        %v9619 = vpack.c.b16 %v9557, %v9555
        %v9620 = vpack.c.b16 %v9558, %v9556
        %v9621 = vpack.c.b16 %v9561, %v9559
        %v9622 = vpack.c.b16 %v9562, %v9560
        %v9623 = vpack.c.b16 %v9565, %v9563
        %v9624 = vpack.c.b16 %v9566, %v9564
        %v9625 = vpack.c.b16 %v9569, %v9567
        %v9626 = vpack.c.b16 %v9570, %v9568
        %v9627 = vpack.c.b16 %v9573, %v9571
        %v9628 = vpack.c.b16 %v9574, %v9572
        %v9629 = vpack.c.b16 %v9577, %v9575
        %v9630 = vpack.c.b16 %v9578, %v9576
        %v9631 = vpack.c.b16 %v9581, %v9579
        %v9632 = vpack.c.b16 %v9582, %v9580
        %v9633 = vpack.c.b16 %v9585, %v9583
        %v9634 = vpack.c.b16 %v9586, %v9584
        %v9635 = vpack.c.b16 %v9589, %v9587
        %v9636 = vpack.c.b16 %v9590, %v9588
        %v9637 = vpack.c.b16 %v9593, %v9591
        %v9638 = vpack.c.b16 %v9594, %v9592
        %v9639 = vpack.c.b16 %v9597, %v9595
        %v9640 = vpack.c.b16 %v9598, %v9596
        %v9641 = vpack.c.b16 %v9601, %v9599
        %v9642 = vpack.c.b16 %v9602, %v9600
        %9683 = vmatprep.subr.bf16.mxu0 0
        %9684 = vmatpush1.bf16.msra.mxu0 %v9234
        %9685 = vmatprep.subr.bf16.mxu0 0
        %9686 = vmatpush1.bf16.msra.mxu0 %v9233
        %9687 = vmatprep.subr.bf16.mxu0 0
        %9688 = vmatpush1.bf16.msra.mxu0 %v9232
        %9689 = vmatprep.subr.bf16.mxu0 0
        %9690 = vmatpush1.bf16.msra.mxu0 %v9231
        %9691 = vmatprep.subr.bf16.mxu0 0
        %9692 = vmatpush1.bf16.msra.mxu0 %v9230
        %9693 = vmatprep.subr.bf16.mxu0 0
        %9694 = vmatpush1.bf16.msra.mxu0 %v9229
        %9695 = vmatprep.subr.bf16.mxu0 0
        %9696 = vmatpush1.bf16.msra.mxu0 %v9228
        %9697 = vmatprep.subr.bf16.mxu0 0
        %9698 = vmatpush1.bf16.msra.mxu0 %v9227
        %9699 = vmatprep.subr.bf16.mxu0 0
        %9700 = vmatpush2.bf16.msra.mxu0 %v9242
        %9701 = vmatprep.subr.bf16.mxu0 0
        %9702 = vmatpush2.bf16.msra.mxu0 %v9241
        %9703 = vmatprep.subr.bf16.mxu0 0
        %9704 = vmatpush2.bf16.msra.mxu0 %v9240
        %9705 = vmatprep.subr.bf16.mxu0 0
        %9706 = vmatpush2.bf16.msra.mxu0 %v9239
        %9707 = vmatprep.subr.bf16.mxu0 0
        %9708 = vmatpush2.bf16.msra.mxu0 %v9238
        %9709 = vmatprep.subr.bf16.mxu0 0
        %9710 = vmatpush2.bf16.msra.mxu0 %v9237
        %9711 = vmatprep.subr.bf16.mxu0 0
        %9712 = vmatpush2.bf16.msra.mxu0 %v9236
        %9713 = vmatprep.subr.bf16.mxu0 0
        %9714 = vmatpush2.bf16.msra.mxu0 %v9235
        %9715 = vmatprep.mubr.bf16.mxu0 %v9604
        %9716 = vmatmul.mubr.bf16.gmra.mxu0 %v9603
        %v9717 = vpop.f32.mrf.mxu0
        %v9718 = vadd.f32 %v9286, %v9717
        %v9719 = vpop.f32.mrf.mxu0
        %v9720 = vpop.f32.mrf.mxu0
        %v9721 = vadd.f32 %v9291, %v9720
        %v9722 = vpop.f32.mrf.mxu0
        %9723 = vmatprep.mubr.bf16.mxu0 %v9606
        %9724 = vmatmul.mubr.bf16.gmra.mxu0 %v9605
        %v9725 = vpop.f32.mrf.mxu0
        %v9726 = vadd.f32 %v9296, %v9725
        %v9727 = vpop.f32.mrf.mxu0
        %v9728 = vpop.f32.mrf.mxu0
        %v9729 = vadd.f32 %v9301, %v9728
        %v9730 = vpop.f32.mrf.mxu0
        %9731 = vmatprep.mubr.bf16.mxu0 %v9608
        %9732 = vmatmul.mubr.bf16.gmra.mxu0 %v9607
        %v9733 = vpop.f32.mrf.mxu0
        %v9734 = vadd.f32 %v9306, %v9733
        %v9735 = vpop.f32.mrf.mxu0
        %v9736 = vpop.f32.mrf.mxu0
        %v9737 = vadd.f32 %v9311, %v9736
        %v9738 = vpop.f32.mrf.mxu0
        %9739 = vmatprep.mubr.bf16.mxu0 %v9610
        %9740 = vmatmul.mubr.bf16.gmra.mxu0 %v9609
        %v9741 = vpop.f32.mrf.mxu0
        %v9742 = vadd.f32 %v9316, %v9741
        %v9743 = vpop.f32.mrf.mxu0
        %v9744 = vpop.f32.mrf.mxu0
        %v9745 = vadd.f32 %v9321, %v9744
        %v9746 = vpop.f32.mrf.mxu0
        %9747 = vmatprep.mubr.bf16.mxu0 %v9612
        %9748 = vmatmul.mubr.bf16.gmra.mxu0 %v9611
        %v9749 = vpop.f32.mrf.mxu0
        %v9750 = vadd.f32 %v9326, %v9749
        %v9751 = vpop.f32.mrf.mxu0
        %v9752 = vpop.f32.mrf.mxu0
        %v9753 = vadd.f32 %v9331, %v9752
        %v9754 = vpop.f32.mrf.mxu0
        %9755 = vmatprep.mubr.bf16.mxu0 %v9614
        %9756 = vmatmul.mubr.bf16.gmra.mxu0 %v9613
        %v9757 = vpop.f32.mrf.mxu0
        %v9758 = vadd.f32 %v9336, %v9757
        %v9759 = vpop.f32.mrf.mxu0
        %v9760 = vpop.f32.mrf.mxu0
        %v9761 = vadd.f32 %v9341, %v9760
        %v9762 = vpop.f32.mrf.mxu0
        %9763 = vmatprep.mubr.bf16.mxu0 %v9616
        %9764 = vmatmul.mubr.bf16.gmra.mxu0 %v9615
        %v9765 = vpop.f32.mrf.mxu0
        %v9766 = vadd.f32 %v9346, %v9765
        %v9767 = vpop.f32.mrf.mxu0
        %v9768 = vpop.f32.mrf.mxu0
        %v9769 = vadd.f32 %v9351, %v9768
        %v9770 = vpop.f32.mrf.mxu0
        %9771 = vmatprep.mubr.bf16.mxu0 %v9618
        %9772 = vmatmul.mubr.bf16.gmra.mxu0 %v9617
        %v9773 = vpop.f32.mrf.mxu0
        %v9774 = vadd.f32 %v9356, %v9773
        %v9775 = vpop.f32.mrf.mxu0
        %v9776 = vpop.f32.mrf.mxu0
        %v9777 = vadd.f32 %v9361, %v9776
        %v9778 = vpop.f32.mrf.mxu0
        %9779 = vmatprep.mubr.bf16.mxu0 %v9620
        %9780 = vmatmul.mubr.bf16.gmra.mxu0 %v9619
        %v9781 = vpop.f32.mrf.mxu0
        %v9782 = vadd.f32 %v9366, %v9781
        %v9783 = vpop.f32.mrf.mxu0
        %v9784 = vpop.f32.mrf.mxu0
        %v9785 = vadd.f32 %v9371, %v9784
        %v9786 = vpop.f32.mrf.mxu0
        %9787 = vmatprep.mubr.bf16.mxu0 %v9622
        %9788 = vmatmul.mubr.bf16.gmra.mxu0 %v9621
        %v9789 = vpop.f32.mrf.mxu0
        %v9790 = vadd.f32 %v9376, %v9789
        %v9791 = vpop.f32.mrf.mxu0
        %v9792 = vpop.f32.mrf.mxu0
        %v9793 = vadd.f32 %v9381, %v9792
        %v9794 = vpop.f32.mrf.mxu0
        %9795 = vmatprep.mubr.bf16.mxu0 %v9624
        %9796 = vmatmul.mubr.bf16.gmra.mxu0 %v9623
        %v9797 = vpop.f32.mrf.mxu0
        %v9798 = vadd.f32 %v9386, %v9797
        %v9799 = vpop.f32.mrf.mxu0
        %v9800 = vpop.f32.mrf.mxu0
        %v9801 = vadd.f32 %v9391, %v9800
        %v9802 = vpop.f32.mrf.mxu0
        %9803 = vmatprep.mubr.bf16.mxu0 %v9626
        %9804 = vmatmul.mubr.bf16.gmra.mxu0 %v9625
        %v9805 = vpop.f32.mrf.mxu0
        %v9806 = vadd.f32 %v9396, %v9805
        %v9807 = vpop.f32.mrf.mxu0
        %v9808 = vpop.f32.mrf.mxu0
        %v9809 = vadd.f32 %v9401, %v9808
        %v9810 = vpop.f32.mrf.mxu0
        %9811 = vmatprep.mubr.bf16.mxu0 %v9628
        %9812 = vmatmul.mubr.bf16.gmra.mxu0 %v9627
        %v9813 = vpop.f32.mrf.mxu0
        %v9814 = vadd.f32 %v9406, %v9813
        %v9815 = vpop.f32.mrf.mxu0
        %v9816 = vpop.f32.mrf.mxu0
        %v9817 = vadd.f32 %v9411, %v9816
        %v9818 = vpop.f32.mrf.mxu0
        %9819 = vmatprep.mubr.bf16.mxu0 %v9630
        %9820 = vmatmul.mubr.bf16.gmra.mxu0 %v9629
        %v9821 = vpop.f32.mrf.mxu0
        %v9822 = vadd.f32 %v9416, %v9821
        %v9823 = vpop.f32.mrf.mxu0
        %v9824 = vpop.f32.mrf.mxu0
        %v9825 = vadd.f32 %v9421, %v9824
        %v9826 = vpop.f32.mrf.mxu0
        %9827 = vmatprep.mubr.bf16.mxu0 %v9632
        %9828 = vmatmul.mubr.bf16.gmra.mxu0 %v9631
        %v9829 = vpop.f32.mrf.mxu0
        %v9830 = vadd.f32 %v9426, %v9829
        %v9831 = vpop.f32.mrf.mxu0
        %v9832 = vpop.f32.mrf.mxu0
        %v9833 = vadd.f32 %v9431, %v9832
        %v9834 = vpop.f32.mrf.mxu0
        %9835 = vmatprep.mubr.bf16.mxu0 %v9634
        %9836 = vmatmul.mubr.bf16.gmra.mxu0 %v9633
        %v9837 = vpop.f32.mrf.mxu0
        %v9838 = vadd.f32 %v9436, %v9837
        %v9839 = vpop.f32.mrf.mxu0
        %v9840 = vpop.f32.mrf.mxu0
        %v9841 = vadd.f32 %v9441, %v9840
        %v9842 = vpop.f32.mrf.mxu0
        %9843 = vmatprep.mubr.bf16.mxu0 %v9636
        %9844 = vmatmul.mubr.bf16.gmra.mxu0 %v9635
        %v9845 = vpop.f32.mrf.mxu0
        %v9846 = vadd.f32 %v9446, %v9845
        %v9847 = vpop.f32.mrf.mxu0
        %v9848 = vpop.f32.mrf.mxu0
        %v9849 = vadd.f32 %v9451, %v9848
        %v9850 = vpop.f32.mrf.mxu0
        %9851 = vmatprep.mubr.bf16.mxu0 %v9638
        %9852 = vmatmul.mubr.bf16.gmra.mxu0 %v9637
        %v9853 = vpop.f32.mrf.mxu0
        %v9854 = vadd.f32 %v9456, %v9853
        %v9855 = vpop.f32.mrf.mxu0
        %v9856 = vpop.f32.mrf.mxu0
        %v9857 = vadd.f32 %v9461, %v9856
        %v9858 = vpop.f32.mrf.mxu0
        %9859 = vmatprep.mubr.bf16.mxu0 %v9640
        %9860 = vmatmul.mubr.bf16.gmra.mxu0 %v9639
        %v9861 = vpop.f32.mrf.mxu0
        %v9862 = vadd.f32 %v9466, %v9861
        %v9863 = vpop.f32.mrf.mxu0
        %v9864 = vpop.f32.mrf.mxu0
        %v9865 = vadd.f32 %v9471, %v9864
        %v9866 = vpop.f32.mrf.mxu0
        %9867 = vmatprep.mubr.bf16.mxu0 %v9642
        %9868 = vmatmul.mubr.bf16.gmra.mxu0 %v9641
        %v9869 = vpop.f32.mrf.mxu0
        %v9870 = vadd.f32 %v9476, %v9869
        %v9871 = vpop.f32.mrf.mxu0
        %v9872 = vpop.f32.mrf.mxu0
        %v9873 = vadd.f32 %v9481, %v9872
        %v9874 = vpop.f32.mrf.mxu0
        %9875 = vdwg.mxu0
        %9876 = vxpose.xlu0.b32.start [1/16] %v9718, 128
        %9877 = vxpose.xlu0.b32.cont [2/16] %v9721, 128
        %9878 = vxpose.xlu0.b32.cont [3/16] %v9726, 128
        %9879 = vxpose.xlu0.b32.cont [4/16] %v9729, 128
        %9880 = vxpose.xlu0.b32.cont [5/16] 0.0, 128
        %9881 = vxpose.xlu0.b32.cont [6/16] 0.0, 128
        %9882 = vxpose.xlu0.b32.cont [7/16] 0.0, 128
        %9883 = vxpose.xlu0.b32.cont [8/16] 0.0, 128
        %9884 = vxpose.xlu0.b32.cont [9/16] 0.0, 128
        %9885 = vxpose.xlu0.b32.cont [10/16] 0.0, 128
        %9886 = vxpose.xlu0.b32.cont [11/16] 0.0, 128
        %9887 = vxpose.xlu0.b32.cont [12/16] 0.0, 128
        %9888 = vxpose.xlu0.b32.cont [13/16] 0.0, 128
        %9889 = vxpose.xlu0.b32.cont [14/16] 0.0, 128
        %9890 = vxpose.xlu0.b32.cont [15/16] 0.0, 128
        %9891 = vxpose.xlu0.b32.end [16/16] 0.0, 128
        %v9892 = vpop.trf.xlu0
        %v9893 = vpop.trf.xlu0
        %v9894 = vpop.trf.xlu0
        %v9895 = vpop.trf.xlu0
        %v9896 = vpop.trf.xlu0
        %v9897 = vpop.trf.xlu0
        %v9898 = vpop.trf.xlu0
        %v9899 = vpop.trf.xlu0
        %v9900 = vpop.trf.xlu0
        %v9901 = vpop.trf.xlu0
        %v9902 = vpop.trf.xlu0
        %v9903 = vpop.trf.xlu0
        %v9904 = vpop.trf.xlu0
        %v9905 = vpop.trf.xlu0
        %v9906 = vpop.trf.xlu0
        %v9907 = vpop.trf.xlu0
        %vm9908 = vcmask 261120
        %v9910 = vsel %vm9908, %v9892, 0
        %v9913 = vsel %vm9908, %v9893, 0
        %9915 = vmatprep.subr.mxu0 0.0
        %9916 = vmatpush1.msra.mxu0 0.0
        %9917 = vmatprep.subr.mxu0 0.0
        %9918 = vmatpush1.msra.mxu0 0.0
        %9919 = vmatprep.subr.mxu0 0.0
        %9920 = vmatpush1.msra.mxu0 0.0
        %9921 = vmatprep.subr.mxu0 0.0
        %9922 = vmatpush1.msra.mxu0 0.0
        %9923 = vmatprep.subr.mxu0 0.0
        %9924 = vmatpush1.msra.mxu0 0.0
        %9925 = vmatprep.subr.mxu0 0.0
        %9926 = vmatpush1.msra.mxu0 0.0
        %9927 = vmatprep.subr.mxu0 0.0
        %9928 = vmatpush1.msra.mxu0 0.0
        %9929 = vmatprep.subr.mxu0 0.0
        %9930 = vmatpush1.msra.mxu0 0.0
        %9931 = vmatprep.subr.mxu0 0.0
        %9932 = vmatpush1.msra.mxu0 0.0
        %9933 = vmatprep.subr.mxu0 0.0
        %9934 = vmatpush1.msra.mxu0 0.0
        %9935 = vmatprep.subr.mxu0 0.0
        %9936 = vmatpush1.msra.mxu0 0.0
        %9937 = vmatprep.subr.mxu0 0.0
        %9938 = vmatpush1.msra.mxu0 0.0
        %9939 = vmatprep.subr.mxu0 0.0
        %9940 = vmatpush1.msra.mxu0 %v9745
        %9941 = vmatprep.subr.mxu0 0.0
        %9942 = vmatpush1.msra.mxu0 %v9742
        %9943 = vmatprep.subr.mxu0 0.0
        %9944 = vmatpush1.msra.mxu0 %v9737
        %9945 = vmatprep.subr.mxu0 0.0
        %9946 = vmatpush1.msra.mxu0 %v9734
        %9947 = vmatprep.subr.mxu0 0.0
        %9948 = vmatpush2.msra.mxu0 0.0
        %9949 = vmatprep.subr.mxu0 0.0
        %9950 = vmatpush2.msra.mxu0 0.0
        %9951 = vmatprep.subr.mxu0 0.0
        %9952 = vmatpush2.msra.mxu0 0.0
        %9953 = vmatprep.subr.mxu0 0.0
        %9954 = vmatpush2.msra.mxu0 0.0
        %9955 = vmatprep.subr.mxu0 0.0
        %9956 = vmatpush2.msra.mxu0 0.0
        %9957 = vmatprep.subr.mxu0 0.0
        %9958 = vmatpush2.msra.mxu0 0.0
        %9959 = vmatprep.subr.mxu0 0.0
        %9960 = vmatpush2.msra.mxu0 0.0
        %9961 = vmatprep.subr.mxu0 0.0
        %9962 = vmatpush2.msra.mxu0 0.0
        %9963 = vmatprep.subr.mxu0 0.0
        %9964 = vmatpush2.msra.mxu0 0.0
        %9965 = vmatprep.subr.mxu0 0.0
        %9966 = vmatpush2.msra.mxu0 0.0
        %9967 = vmatprep.subr.mxu0 0.0
        %9968 = vmatpush2.msra.mxu0 0.0
        %9969 = vmatprep.subr.mxu0 0.0
        %9970 = vmatpush2.msra.mxu0 0.0
        %9971 = vmatprep.subr.mxu0 0.0
        %9972 = vmatpush2.msra.mxu0 0.0
        %9973 = vmatprep.subr.mxu0 0.0
        %9974 = vmatpush2.msra.mxu0 0.0
        %9975 = vmatprep.subr.mxu0 0.0
        %9976 = vmatpush2.msra.mxu0 0.0
        %9977 = vmatprep.subr.mxu0 0.0
        %9978 = vmatpush2.msra.mxu0 0.0
        %9979 = vmatprep.mubr.f32.mxu0 0.0
        %9980 = vmatmul.mubr.f32.gmra.mxu0 %v9910
        %v9981 = vpop.f32.mrf.mxu0
        %v9982 = vadd.f32 0.0, %v9981
        %v9983 = vpop.f32.mrf.mxu0
        %9984 = vmatprep.mubr.f32.mxu0 0.0
        %9985 = vmatmul.mubr.f32.gmra.mxu0 %v9913
        %v9986 = vpop.f32.mrf.mxu0
        %v9987 = vadd.f32 0.0, %v9986
        %v9988 = vpop.f32.mrf.mxu0
        %9989 = vdwg.mxu0
        %vm9990 = vcmask 130048
        %v9991 = vsel %vm9990, %v9982, -inf
        %9992 = vmax.xlane.f32.xlu0 %v9991
        %v9993 = vpop.xlane.xlu0 %9992
        %v9994 = vsel %vm9990, %v9987, -inf
        %9995 = vmax.xlane.f32.xlu0 %v9994
        %v9996 = vpop.xlane.xlu0 %9995
        %v9997 = vsub.f32 %v9982, %v9993
        %v9998 = vsub.f32 %v9987, %v9996
        %v9999 = vmul.f32 %v9997, 1.442695
        %v10000 = vpow.pop %v9999
        %v10001 = vmul.f32 %v9998, 1.442695
        %v10002 = vpow.pop %v10001
        %v10003 = vsel %vm9990, %v10000, 0.0
        %10004 = vadd.xlane.f32.xlu0 %v10003
        %v10005 = vpop.xlane.xlu0 %10004
        %v10006 = vsel %vm9990, %v10002, 0.0
        %10007 = vadd.xlane.f32.xlu0 %v10006
        %v10008 = vpop.xlane.xlu0 %10007
        %v10009 = vrcp.pop %v10005
        %v10010 = vmul.f32 %v10000, %v10009
        %v10011 = vrcp.pop %v10008
        %v10012 = vmul.f32 %v10002, %v10011
        %v10014 = vsel %vm9990, %v9750, 0
        %v10017 = vsel %vm9990, %v9753, 0
        %v10020 = vsel %vm9990, %v9758, 0
        %v10023 = vsel %vm9990, %v9761, 0
        %v10026 = vsel %vm9990, %v9766, 0
        %v10029 = vsel %vm9990, %v9769, 0
        %v10032 = vsel %vm9990, %v9774, 0
        %v10035 = vsel %vm9990, %v9777, 0
        %v10038 = vsel %vm9990, %v9782, 0
        %v10041 = vsel %vm9990, %v9785, 0
        %v10044 = vsel %vm9990, %v9790, 0
        %v10047 = vsel %vm9990, %v9793, 0
        %v10050 = vsel %vm9990, %v9798, 0
        %v10053 = vsel %vm9990, %v9801, 0
        %v10056 = vsel %vm9990, %v9806, 0
        %v10059 = vsel %vm9990, %v9809, 0
        %v10062 = vsel %vm9990, %v9814, 0
        %v10065 = vsel %vm9990, %v9817, 0
        %v10068 = vsel %vm9990, %v9822, 0
        %v10071 = vsel %vm9990, %v9825, 0
        %v10074 = vsel %vm9990, %v9830, 0
        %v10077 = vsel %vm9990, %v9833, 0
        %v10080 = vsel %vm9990, %v9838, 0
        %v10083 = vsel %vm9990, %v9841, 0
        %v10086 = vsel %vm9990, %v9846, 0
        %v10089 = vsel %vm9990, %v9849, 0
        %v10092 = vsel %vm9990, %v9854, 0
        %v10095 = vsel %vm9990, %v9857, 0
        %v10098 = vsel %vm9990, %v9862, 0
        %v10101 = vsel %vm9990, %v9865, 0
        %v10104 = vsel %vm9990, %v9870, 0
        %v10107 = vsel %vm9990, %v9873, 0
        %v10110 = vsel %vm9990, %v10010, 0
        %v10113 = vsel %vm9990, %v10012, 0
        %10115 = vmatprep.subr.mxu0 0.0
        %10116 = vmatpush1.xpose.msra.mxu0 0.0
        %10117 = vmatprep.subr.mxu0 0.0
        %10118 = vmatpush1.xpose.msra.mxu0 0.0
        %10119 = vmatprep.subr.mxu0 0.0
        %10120 = vmatpush1.xpose.msra.mxu0 0.0
        %10121 = vmatprep.subr.mxu0 0.0
        %10122 = vmatpush1.xpose.msra.mxu0 0.0
        %10123 = vmatprep.subr.mxu0 0.0
        %10124 = vmatpush1.xpose.msra.mxu0 0.0
        %10125 = vmatprep.subr.mxu0 0.0
        %10126 = vmatpush1.xpose.msra.mxu0 0.0
        %10127 = vmatprep.subr.mxu0 0.0
        %10128 = vmatpush1.xpose.msra.mxu0 0.0
        %10129 = vmatprep.subr.mxu0 0.0
        %10130 = vmatpush1.xpose.msra.mxu0 0.0
        %10131 = vmatprep.subr.mxu0 0.0
        %10132 = vmatpush1.xpose.msra.mxu0 0.0
        %10133 = vmatprep.subr.mxu0 0.0
        %10134 = vmatpush1.xpose.msra.mxu0 0.0
        %10135 = vmatprep.subr.mxu0 0.0
        %10136 = vmatpush1.xpose.msra.mxu0 0.0
        %10137 = vmatprep.subr.mxu0 0.0
        %10138 = vmatpush1.xpose.msra.mxu0 0.0
        %10139 = vmatprep.subr.mxu0 0.0
        %10140 = vmatpush1.xpose.msra.mxu0 0.0
        %10141 = vmatprep.subr.mxu0 0.0
        %10142 = vmatpush1.xpose.msra.mxu0 0.0
        %10143 = vmatprep.subr.mxu0 0.0
        %10144 = vmatpush1.xpose.msra.mxu0 %v10113
        %10145 = vmatprep.subr.mxu0 0.0
        %10146 = vmatpush1.xpose.msra.mxu0 %v10110
        %10147 = vmatprep.subr.mxu0 0.0
        %10148 = vmatpush2.xpose.msra.mxu0 0.0
        %10149 = vmatprep.subr.mxu0 0.0
        %10150 = vmatpush2.xpose.msra.mxu0 0.0
        %10151 = vmatprep.subr.mxu0 0.0
        %10152 = vmatpush2.xpose.msra.mxu0 0.0
        %10153 = vmatprep.subr.mxu0 0.0
        %10154 = vmatpush2.xpose.msra.mxu0 0.0
        %10155 = vmatprep.subr.mxu0 0.0
        %10156 = vmatpush2.xpose.msra.mxu0 0.0
        %10157 = vmatprep.subr.mxu0 0.0
        %10158 = vmatpush2.xpose.msra.mxu0 0.0
        %10159 = vmatprep.subr.mxu0 0.0
        %10160 = vmatpush2.xpose.msra.mxu0 0.0
        %10161 = vmatprep.subr.mxu0 0.0
        %10162 = vmatpush2.xpose.msra.mxu0 0.0
        %10163 = vmatprep.subr.mxu0 0.0
        %10164 = vmatpush2.xpose.msra.mxu0 0.0
        %10165 = vmatprep.subr.mxu0 0.0
        %10166 = vmatpush2.xpose.msra.mxu0 0.0
        %10167 = vmatprep.subr.mxu0 0.0
        %10168 = vmatpush2.xpose.msra.mxu0 0.0
        %10169 = vmatprep.subr.mxu0 0.0
        %10170 = vmatpush2.xpose.msra.mxu0 0.0
        %10171 = vmatprep.subr.mxu0 0.0
        %10172 = vmatpush2.xpose.msra.mxu0 0.0
        %10173 = vmatprep.subr.mxu0 0.0
        %10174 = vmatpush2.xpose.msra.mxu0 0.0
        %10175 = vmatprep.subr.mxu0 0.0
        %10176 = vmatpush2.xpose.msra.mxu0 0.0
        %10177 = vmatprep.subr.mxu0 0.0
        %10178 = vmatpush2.xpose.msra.mxu0 0.0
        %10179 = vmatprep.mubr.f32.mxu0 0.0
        %10180 = vmatmul.mubr.f32.gmra.mxu0 %v10014
        %v10181 = vpop.f32.mrf.mxu0
        %v10182 = vadd.f32 0.0, %v10181
        %v10183 = vpop.f32.mrf.mxu0
        %10184 = vmatprep.mubr.f32.mxu0 0.0
        %10185 = vmatmul.mubr.f32.gmra.mxu0 %v10017
        %v10186 = vpop.f32.mrf.mxu0
        %v10187 = vadd.f32 0.0, %v10186
        %v10188 = vpop.f32.mrf.mxu0
        %10189 = vmatprep.mubr.f32.mxu0 0.0
        %10190 = vmatmul.mubr.f32.gmra.mxu0 %v10020
        %v10191 = vpop.f32.mrf.mxu0
        %v10192 = vadd.f32 0.0, %v10191
        %v10193 = vpop.f32.mrf.mxu0
        %10194 = vmatprep.mubr.f32.mxu0 0.0
        %10195 = vmatmul.mubr.f32.gmra.mxu0 %v10023
        %v10196 = vpop.f32.mrf.mxu0
        %v10197 = vadd.f32 0.0, %v10196
        %v10198 = vpop.f32.mrf.mxu0
        %10199 = vmatprep.mubr.f32.mxu0 0.0
        %10200 = vmatmul.mubr.f32.gmra.mxu0 %v10026
        %v10201 = vpop.f32.mrf.mxu0
        %v10202 = vadd.f32 0.0, %v10201
        %v10203 = vpop.f32.mrf.mxu0
        %10204 = vmatprep.mubr.f32.mxu0 0.0
        %10205 = vmatmul.mubr.f32.gmra.mxu0 %v10029
        %v10206 = vpop.f32.mrf.mxu0
        %v10207 = vadd.f32 0.0, %v10206
        %v10208 = vpop.f32.mrf.mxu0
        %10209 = vmatprep.mubr.f32.mxu0 0.0
        %10210 = vmatmul.mubr.f32.gmra.mxu0 %v10032
        %v10211 = vpop.f32.mrf.mxu0
        %v10212 = vadd.f32 0.0, %v10211
        %v10213 = vpop.f32.mrf.mxu0
        %10214 = vmatprep.mubr.f32.mxu0 0.0
        %10215 = vmatmul.mubr.f32.gmra.mxu0 %v10035
        %v10216 = vpop.f32.mrf.mxu0
        %v10217 = vadd.f32 0.0, %v10216
        %v10218 = vpop.f32.mrf.mxu0
        %10219 = vmatprep.mubr.f32.mxu0 0.0
        %10220 = vmatmul.mubr.f32.gmra.mxu0 %v10038
        %v10221 = vpop.f32.mrf.mxu0
        %v10222 = vadd.f32 0.0, %v10221
        %v10223 = vpop.f32.mrf.mxu0
        %10224 = vmatprep.mubr.f32.mxu0 0.0
        %10225 = vmatmul.mubr.f32.gmra.mxu0 %v10041
        %v10226 = vpop.f32.mrf.mxu0
        %v10227 = vadd.f32 0.0, %v10226
        %v10228 = vpop.f32.mrf.mxu0
        %10229 = vmatprep.mubr.f32.mxu0 0.0
        %10230 = vmatmul.mubr.f32.gmra.mxu0 %v10044
        %v10231 = vpop.f32.mrf.mxu0
        %v10232 = vadd.f32 0.0, %v10231
        %v10233 = vpop.f32.mrf.mxu0
        %10234 = vmatprep.mubr.f32.mxu0 0.0
        %10235 = vmatmul.mubr.f32.gmra.mxu0 %v10047
        %v10236 = vpop.f32.mrf.mxu0
        %v10237 = vadd.f32 0.0, %v10236
        %v10238 = vpop.f32.mrf.mxu0
        %10239 = vmatprep.mubr.f32.mxu0 0.0
        %10240 = vmatmul.mubr.f32.gmra.mxu0 %v10050
        %v10241 = vpop.f32.mrf.mxu0
        %v10242 = vadd.f32 0.0, %v10241
        %v10243 = vpop.f32.mrf.mxu0
        %10244 = vmatprep.mubr.f32.mxu0 0.0
        %10245 = vmatmul.mubr.f32.gmra.mxu0 %v10053
        %v10246 = vpop.f32.mrf.mxu0
        %v10247 = vadd.f32 0.0, %v10246
        %v10248 = vpop.f32.mrf.mxu0
        %10249 = vmatprep.mubr.f32.mxu0 0.0
        %10250 = vmatmul.mubr.f32.gmra.mxu0 %v10056
        %v10251 = vpop.f32.mrf.mxu0
        %v10252 = vadd.f32 0.0, %v10251
        %v10253 = vpop.f32.mrf.mxu0
        %10254 = vmatprep.mubr.f32.mxu0 0.0
        %10255 = vmatmul.mubr.f32.gmra.mxu0 %v10059
        %v10256 = vpop.f32.mrf.mxu0
        %v10257 = vadd.f32 0.0, %v10256
        %v10258 = vpop.f32.mrf.mxu0
        %10259 = vmatprep.mubr.f32.mxu0 0.0
        %10260 = vmatmul.mubr.f32.gmra.mxu0 %v10062
        %v10261 = vpop.f32.mrf.mxu0
        %v10262 = vadd.f32 0.0, %v10261
        %v10263 = vpop.f32.mrf.mxu0
        %10264 = vmatprep.mubr.f32.mxu0 0.0
        %10265 = vmatmul.mubr.f32.gmra.mxu0 %v10065
        %v10266 = vpop.f32.mrf.mxu0
        %v10267 = vadd.f32 0.0, %v10266
        %v10268 = vpop.f32.mrf.mxu0
        %10269 = vmatprep.mubr.f32.mxu0 0.0
        %10270 = vmatmul.mubr.f32.gmra.mxu0 %v10068
        %v10271 = vpop.f32.mrf.mxu0
        %v10272 = vadd.f32 0.0, %v10271
        %v10273 = vpop.f32.mrf.mxu0
        %10274 = vmatprep.mubr.f32.mxu0 0.0
        %10275 = vmatmul.mubr.f32.gmra.mxu0 %v10071
        %v10276 = vpop.f32.mrf.mxu0
        %v10277 = vadd.f32 0.0, %v10276
        %v10278 = vpop.f32.mrf.mxu0
        %10279 = vmatprep.mubr.f32.mxu0 0.0
        %10280 = vmatmul.mubr.f32.gmra.mxu0 %v10074
        %v10281 = vpop.f32.mrf.mxu0
        %v10282 = vadd.f32 0.0, %v10281
        %v10283 = vpop.f32.mrf.mxu0
        %10284 = vmatprep.mubr.f32.mxu0 0.0
        %10285 = vmatmul.mubr.f32.gmra.mxu0 %v10077
        %v10286 = vpop.f32.mrf.mxu0
        %v10287 = vadd.f32 0.0, %v10286
        %v10288 = vpop.f32.mrf.mxu0
        %10289 = vmatprep.mubr.f32.mxu0 0.0
        %10290 = vmatmul.mubr.f32.gmra.mxu0 %v10080
        %v10291 = vpop.f32.mrf.mxu0
        %v10292 = vadd.f32 0.0, %v10291
        %v10293 = vpop.f32.mrf.mxu0
        %10294 = vmatprep.mubr.f32.mxu0 0.0
        %10295 = vmatmul.mubr.f32.gmra.mxu0 %v10083
        %v10296 = vpop.f32.mrf.mxu0
        %v10297 = vadd.f32 0.0, %v10296
        %v10298 = vpop.f32.mrf.mxu0
        %10299 = vmatprep.mubr.f32.mxu0 0.0
        %10300 = vmatmul.mubr.f32.gmra.mxu0 %v10086
        %v10301 = vpop.f32.mrf.mxu0
        %v10302 = vadd.f32 0.0, %v10301
        %v10303 = vpop.f32.mrf.mxu0
        %10304 = vmatprep.mubr.f32.mxu0 0.0
        %10305 = vmatmul.mubr.f32.gmra.mxu0 %v10089
        %v10306 = vpop.f32.mrf.mxu0
        %v10307 = vadd.f32 0.0, %v10306
        %v10308 = vpop.f32.mrf.mxu0
        %10309 = vmatprep.mubr.f32.mxu0 0.0
        %10310 = vmatmul.mubr.f32.gmra.mxu0 %v10092
        %v10311 = vpop.f32.mrf.mxu0
        %v10312 = vadd.f32 0.0, %v10311
        %v10313 = vpop.f32.mrf.mxu0
        %10314 = vmatprep.mubr.f32.mxu0 0.0
        %10315 = vmatmul.mubr.f32.gmra.mxu0 %v10095
        %v10316 = vpop.f32.mrf.mxu0
        %v10317 = vadd.f32 0.0, %v10316
        %v10318 = vpop.f32.mrf.mxu0
        %10319 = vmatprep.mubr.f32.mxu0 0.0
        %10320 = vmatmul.mubr.f32.gmra.mxu0 %v10098
        %v10321 = vpop.f32.mrf.mxu0
        %v10322 = vadd.f32 0.0, %v10321
        %v10323 = vpop.f32.mrf.mxu0
        %10324 = vmatprep.mubr.f32.mxu0 0.0
        %10325 = vmatmul.mubr.f32.gmra.mxu0 %v10101
        %v10326 = vpop.f32.mrf.mxu0
        %v10327 = vadd.f32 0.0, %v10326
        %v10328 = vpop.f32.mrf.mxu0
        %10329 = vmatprep.mubr.f32.mxu0 0.0
        %10330 = vmatmul.mubr.f32.gmra.mxu0 %v10104
        %v10331 = vpop.f32.mrf.mxu0
        %v10332 = vadd.f32 0.0, %v10331
        %v10333 = vpop.f32.mrf.mxu0
        %10334 = vmatprep.mubr.f32.mxu0 0.0
        %10335 = vmatmul.mubr.f32.gmra.mxu0 %v10107
        %v10336 = vpop.f32.mrf.mxu0
        %v10337 = vadd.f32 0.0, %v10336
        %v10338 = vpop.f32.mrf.mxu0
        %10339 = vdwg.mxu0
        %s10340 = sld [smem:[#allocation2]]
        %v10341 = vstv %s10340
        %v10342 = vmul.f32 %v10341, %v10182
        %v10343 = vmul.f32 %v10341, %v10187
        %v10344 = vmul.f32 %v10341, %v10192
        %v10345 = vmul.f32 %v10341, %v10197
        %v10346 = vmul.f32 %v10341, %v10202
        %v10347 = vmul.f32 %v10341, %v10207
        %v10348 = vmul.f32 %v10341, %v10212
        %v10349 = vmul.f32 %v10341, %v10217
        %v10350 = vmul.f32 %v10341, %v10222
        %v10351 = vmul.f32 %v10341, %v10227
        %v10352 = vmul.f32 %v10341, %v10232
        %v10353 = vmul.f32 %v10341, %v10237
        %v10354 = vmul.f32 %v10341, %v10242
        %v10355 = vmul.f32 %v10341, %v10247
        %v10356 = vmul.f32 %v10341, %v10252
        %v10357 = vmul.f32 %v10341, %v10257
        %v10358 = vmul.f32 %v10341, %v10262
        %v10359 = vmul.f32 %v10341, %v10267
        %v10360 = vmul.f32 %v10341, %v10272
        %v10361 = vmul.f32 %v10341, %v10277
        %v10362 = vmul.f32 %v10341, %v10282
        %v10363 = vmul.f32 %v10341, %v10287
        %v10364 = vmul.f32 %v10341, %v10292
        %v10365 = vmul.f32 %v10341, %v10297
        %v10366 = vmul.f32 %v10341, %v10302
        %v10367 = vmul.f32 %v10341, %v10307
        %v10368 = vmul.f32 %v10341, %v10312
        %v10369 = vmul.f32 %v10341, %v10317
        %v10370 = vmul.f32 %v10341, %v10322
        %v10371 = vmul.f32 %v10341, %v10327
        %v10372 = vmul.f32 %v10341, %v10332
        %v10373 = vmul.f32 %v10341, %v10337
        %v10374 = vadd.f32 %v10342, %v9155
        %v10375 = vadd.f32 %v10343, %v9156
        %v10376 = vadd.f32 %v10344, %v9157
        %v10377 = vadd.f32 %v10345, %v9158
        %v10378 = vadd.f32 %v10346, %v9159
        %v10379 = vadd.f32 %v10347, %v9160
        %v10380 = vadd.f32 %v10348, %v9161
        %v10381 = vadd.f32 %v10349, %v9162
        %v10382 = vadd.f32 %v10350, %v9163
        %v10383 = vadd.f32 %v10351, %v9164
        %v10384 = vadd.f32 %v10352, %v9165
        %v10385 = vadd.f32 %v10353, %v9166
        %v10386 = vadd.f32 %v10354, %v9167
        %v10387 = vadd.f32 %v10355, %v9168
        %v10388 = vadd.f32 %v10356, %v9169
        %v10389 = vadd.f32 %v10357, %v9170
        %v10390 = vadd.f32 %v10358, %v9171
        %v10391 = vadd.f32 %v10359, %v9172
        %v10392 = vadd.f32 %v10360, %v9173
        %v10393 = vadd.f32 %v10361, %v9174
        %v10394 = vadd.f32 %v10362, %v9175
        %v10395 = vadd.f32 %v10363, %v9176
        %v10396 = vadd.f32 %v10364, %v9177
        %v10397 = vadd.f32 %v10365, %v9178
        %v10398 = vadd.f32 %v10366, %v9179
        %v10399 = vadd.f32 %v10367, %v9180
        %v10400 = vadd.f32 %v10368, %v9181
        %v10401 = vadd.f32 %v10369, %v9182
        %v10402 = vadd.f32 %v10370, %v9183
        %v10403 = vadd.f32 %v10371, %v9184
        %v10404 = vadd.f32 %v10372, %v9185
        %v10405 = vadd.f32 %v10373, %v9186
        %v10406 = vld [vmem:[%s13] sm:$0xff]
        %v10407 = vld [vmem:[%s13 + $0x8] sm:$0xff]
        %v10408 = vld [vmem:[%s13 + $0x10] sm:$0xff]
        %v10409 = vld [vmem:[%s13 + $0x18] sm:$0xff]
        %v10410 = vld [vmem:[%s13 + $0x20] sm:$0xff]
        %v10411 = vld [vmem:[%s13 + $0x28] sm:$0xff]
        %v10412 = vld [vmem:[%s13 + $0x30] sm:$0xff]
        %v10413 = vld [vmem:[%s13 + $0x38] sm:$0xff]
        %v10414 = vld [vmem:[%s13 + $0x40] sm:$0xff]
        %v10415 = vld [vmem:[%s13 + $0x48] sm:$0xff]
        %v10416 = vld [vmem:[%s13 + $0x50] sm:$0xff]
        %v10417 = vld [vmem:[%s13 + $0x58] sm:$0xff]
        %v10418 = vld [vmem:[%s13 + $0x60] sm:$0xff]
        %v10419 = vld [vmem:[%s13 + $0x68] sm:$0xff]
        %v10420 = vld [vmem:[%s13 + $0x70] sm:$0xff]
        %v10421 = vld [vmem:[%s13 + $0x78] sm:$0xff]
        %v10422 = vld [vmem:[%s13 + $0x80] sm:$0xff]
        %v10423 = vld [vmem:[%s13 + $0x88] sm:$0xff]
        %v10424 = vld [vmem:[%s13 + $0x90] sm:$0xff]
        %v10425 = vld [vmem:[%s13 + $0x98] sm:$0xff]
        %v10426 = vld [vmem:[%s13 + $0xa0] sm:$0xff]
        %v10427 = vld [vmem:[%s13 + $0xa8] sm:$0xff]
        %v10428 = vld [vmem:[%s13 + $0xb0] sm:$0xff]
        %v10429 = vld [vmem:[%s13 + $0xb8] sm:$0xff]
        %v10430 = vld [vmem:[%s13 + $0xc0] sm:$0xff]
        %v10431 = vld [vmem:[%s13 + $0xc8] sm:$0xff]
        %v10432 = vld [vmem:[%s13 + $0xd0] sm:$0xff]
        %v10433 = vld [vmem:[%s13 + $0xd8] sm:$0xff]
        %v10434 = vld [vmem:[%s13 + $0xe0] sm:$0xff]
        %v10435 = vld [vmem:[%s13 + $0xe8] sm:$0xff]
        %v10436 = vld [vmem:[%s13 + $0xf0] sm:$0xff]
        %v10437 = vld [vmem:[%s13 + $0xf8] sm:$0xff]
        %v10438 = vmul.f32 %v10374, %v10406
        %v10439 = vmul.f32 %v10375, %v10407
        %v10440 = vmul.f32 %v10376, %v10408
        %v10441 = vmul.f32 %v10377, %v10409
        %v10442 = vmul.f32 %v10378, %v10410
        %v10443 = vmul.f32 %v10379, %v10411
        %v10444 = vmul.f32 %v10380, %v10412
        %v10445 = vmul.f32 %v10381, %v10413
        %v10446 = vmul.f32 %v10382, %v10414
        %v10447 = vmul.f32 %v10383, %v10415
        %v10448 = vmul.f32 %v10384, %v10416
        %v10449 = vmul.f32 %v10385, %v10417
        %v10450 = vmul.f32 %v10386, %v10418
        %v10451 = vmul.f32 %v10387, %v10419
        %v10452 = vmul.f32 %v10388, %v10420
        %v10453 = vmul.f32 %v10389, %v10421
        %v10454 = vmul.f32 %v10390, %v10422
        %v10455 = vmul.f32 %v10391, %v10423
        %v10456 = vmul.f32 %v10392, %v10424
        %v10457 = vmul.f32 %v10393, %v10425
        %v10458 = vmul.f32 %v10394, %v10426
        %v10459 = vmul.f32 %v10395, %v10427
        %v10460 = vmul.f32 %v10396, %v10428
        %v10461 = vmul.f32 %v10397, %v10429
        %v10462 = vmul.f32 %v10398, %v10430
        %v10463 = vmul.f32 %v10399, %v10431
        %v10464 = vmul.f32 %v10400, %v10432
        %v10465 = vmul.f32 %v10401, %v10433
        %v10466 = vmul.f32 %v10402, %v10434
        %v10467 = vmul.f32 %v10403, %v10435
        %v10468 = vmul.f32 %v10404, %v10436
        %v10469 = vmul.f32 %v10405, %v10437
        %v10470 = vsel %vm9990, %v10438, 0.0
        %10471 = vadd.xlane.f32.xlu0 %v10470
        %v10472 = vpop.xlane.xlu0 %10471
        %v10473 = vsel %vm9990, %v10439, 0.0
        %10474 = vadd.xlane.f32.xlu0 %v10473
        %v10475 = vpop.xlane.xlu0 %10474
        %v10476 = vsel %vm9990, %v10440, 0.0
        %10477 = vadd.xlane.f32.xlu0 %v10476
        %v10478 = vpop.xlane.xlu0 %10477
        %v10479 = vsel %vm9990, %v10441, 0.0
        %10480 = vadd.xlane.f32.xlu0 %v10479
        %v10481 = vpop.xlane.xlu0 %10480
        %v10482 = vsel %vm9990, %v10442, 0.0
        %10483 = vadd.xlane.f32.xlu0 %v10482
        %v10484 = vpop.xlane.xlu0 %10483
        %v10485 = vsel %vm9990, %v10443, 0.0
        %10486 = vadd.xlane.f32.xlu0 %v10485
        %v10487 = vpop.xlane.xlu0 %10486
        %v10488 = vsel %vm9990, %v10444, 0.0
        %10489 = vadd.xlane.f32.xlu0 %v10488
        %v10490 = vpop.xlane.xlu0 %10489
        %v10491 = vsel %vm9990, %v10445, 0.0
        %10492 = vadd.xlane.f32.xlu0 %v10491
        %v10493 = vpop.xlane.xlu0 %10492
        %v10494 = vsel %vm9990, %v10446, 0.0
        %10495 = vadd.xlane.f32.xlu0 %v10494
        %v10496 = vpop.xlane.xlu0 %10495
        %v10497 = vsel %vm9990, %v10447, 0.0
        %10498 = vadd.xlane.f32.xlu0 %v10497
        %v10499 = vpop.xlane.xlu0 %10498
        %v10500 = vsel %vm9990, %v10448, 0.0
        %10501 = vadd.xlane.f32.xlu0 %v10500
        %v10502 = vpop.xlane.xlu0 %10501
        %v10503 = vsel %vm9990, %v10449, 0.0
        %10504 = vadd.xlane.f32.xlu0 %v10503
        %v10505 = vpop.xlane.xlu0 %10504
        %v10506 = vsel %vm9990, %v10450, 0.0
        %10507 = vadd.xlane.f32.xlu0 %v10506
        %v10508 = vpop.xlane.xlu0 %10507
        %v10509 = vsel %vm9990, %v10451, 0.0
        %10510 = vadd.xlane.f32.xlu0 %v10509
        %v10511 = vpop.xlane.xlu0 %10510
        %v10512 = vsel %vm9990, %v10452, 0.0
        %10513 = vadd.xlane.f32.xlu0 %v10512
        %v10514 = vpop.xlane.xlu0 %10513
        %v10515 = vsel %vm9990, %v10453, 0.0
        %10516 = vadd.xlane.f32.xlu0 %v10515
        %v10517 = vpop.xlane.xlu0 %10516
        %v10518 = vsel %vm9990, %v10454, 0.0
        %10519 = vadd.xlane.f32.xlu0 %v10518
        %v10520 = vpop.xlane.xlu0 %10519
        %v10521 = vsel %vm9990, %v10455, 0.0
        %10522 = vadd.xlane.f32.xlu0 %v10521
        %v10523 = vpop.xlane.xlu0 %10522
        %v10524 = vsel %vm9990, %v10456, 0.0
        %10525 = vadd.xlane.f32.xlu0 %v10524
        %v10526 = vpop.xlane.xlu0 %10525
        %v10527 = vsel %vm9990, %v10457, 0.0
        %10528 = vadd.xlane.f32.xlu0 %v10527
        %v10529 = vpop.xlane.xlu0 %10528
        %v10530 = vsel %vm9990, %v10458, 0.0
        %10531 = vadd.xlane.f32.xlu0 %v10530
        %v10532 = vpop.xlane.xlu0 %10531
        %v10533 = vsel %vm9990, %v10459, 0.0
        %10534 = vadd.xlane.f32.xlu0 %v10533
        %v10535 = vpop.xlane.xlu0 %10534
        %v10536 = vsel %vm9990, %v10460, 0.0
        %10537 = vadd.xlane.f32.xlu0 %v10536
        %v10538 = vpop.xlane.xlu0 %10537
        %v10539 = vsel %vm9990, %v10461, 0.0
        %10540 = vadd.xlane.f32.xlu0 %v10539
        %v10541 = vpop.xlane.xlu0 %10540
        %v10542 = vsel %vm9990, %v10462, 0.0
        %10543 = vadd.xlane.f32.xlu0 %v10542
        %v10544 = vpop.xlane.xlu0 %10543
        %v10545 = vsel %vm9990, %v10463, 0.0
        %10546 = vadd.xlane.f32.xlu0 %v10545
        %v10547 = vpop.xlane.xlu0 %10546
        %v10548 = vsel %vm9990, %v10464, 0.0
        %10549 = vadd.xlane.f32.xlu0 %v10548
        %v10550 = vpop.xlane.xlu0 %10549
        %v10551 = vsel %vm9990, %v10465, 0.0
        %10552 = vadd.xlane.f32.xlu0 %v10551
        %v10553 = vpop.xlane.xlu0 %10552
        %v10554 = vsel %vm9990, %v10466, 0.0
        %10555 = vadd.xlane.f32.xlu0 %v10554
        %v10556 = vpop.xlane.xlu0 %10555
        %v10557 = vsel %vm9990, %v10467, 0.0
        %10558 = vadd.xlane.f32.xlu0 %v10557
        %v10559 = vpop.xlane.xlu0 %10558
        %v10560 = vsel %vm9990, %v10468, 0.0
        %10561 = vadd.xlane.f32.xlu0 %v10560
        %v10562 = vpop.xlane.xlu0 %10561
        %v10563 = vsel %vm9990, %v10469, 0.0
        %10564 = vadd.xlane.f32.xlu0 %v10563
        %v10565 = vpop.xlane.xlu0 %10564
        %v10566 = vadd.f32 %v10472, %v10475
        %v10567 = vadd.f32 %v10566, %v10478
        %v10568 = vadd.f32 %v10567, %v10481
        %v10569 = vadd.f32 %v10568, %v10484
        %v10570 = vadd.f32 %v10569, %v10487
        %v10571 = vadd.f32 %v10570, %v10490
        %v10572 = vadd.f32 %v10571, %v10493
        %v10573 = vadd.f32 %v10572, %v10496
        %v10574 = vadd.f32 %v10573, %v10499
        %v10575 = vadd.f32 %v10574, %v10502
        %v10576 = vadd.f32 %v10575, %v10505
        %v10577 = vadd.f32 %v10576, %v10508
        %v10578 = vadd.f32 %v10577, %v10511
        %v10579 = vadd.f32 %v10578, %v10514
        %v10580 = vadd.f32 %v10579, %v10517
        %v10581 = vadd.f32 %v10580, %v10520
        %v10582 = vadd.f32 %v10581, %v10523
        %v10583 = vadd.f32 %v10582, %v10526
        %v10584 = vadd.f32 %v10583, %v10529
        %v10585 = vadd.f32 %v10584, %v10532
        %v10586 = vadd.f32 %v10585, %v10535
        %v10587 = vadd.f32 %v10586, %v10538
        %v10588 = vadd.f32 %v10587, %v10541
        %v10589 = vadd.f32 %v10588, %v10544
        %v10590 = vadd.f32 %v10589, %v10547
        %v10591 = vadd.f32 %v10590, %v10550
        %v10592 = vadd.f32 %v10591, %v10553
        %v10593 = vadd.f32 %v10592, %v10556
        %v10594 = vadd.f32 %v10593, %v10559
        %v10595 = vadd.f32 %v10594, %v10562
        %v10596 = vadd.f32 %v10595, %v10565
        %v10597 = vrot.slane %v10596, 4
        %v10598 = vadd.f32 %v10596, %v10597
        %v10599 = vrot.slane %v10598, 2
        %v10600 = vadd.f32 %v10598, %v10599
        %v10601 = vrot.slane %v10600, 1
        %v10602 = vadd.f32 %v10600, %v10601
        %s10603 = sld [smem:[#allocation3]]
        %v10604 = vstv %s10603
        %v10605 = vadd.f32 %v10602, %v10604
        %vm10606 = vcmask 0
        %10607 = vst.msk [vmem:[%s551] sm:$0x1] %vm10606, %v10605
        %10608 = vst.msk [vmem:[%s545] sm:$0xff] %vm9990, %v10010
        %10609 = vst.msk [vmem:[%s545 + $0x8] sm:$0xff] %vm9990, %v10012
        %p10610 = scmp.lt.s32.totalorder %s34, 1
        %s10611 = scalar_select %p10610, %s34, 1
        %s10612 = scalar_lea.vmem %s16, %s10611
        %s10613 = sand.u32 %s409, 1
        %s10614 = scalar_lea.sflag [#allocation5], %s10613
        %s10615 = sand.u32 %s409, 1
        %s10616 = smul.addr %s10615, 16
        %s10617 = scalar_lea.vmem [#allocation4], %s10616
        // Predicated region
        $region85: #{disc_sagan_forward.1} parent=83 // pred_check
          %p10618 = pneg %p393
        $region86: #{disc_sagan_forward.1} parent=83 // pred_check_branch
          %10620 = sbr.rel (%p10618) target = $region88
        $region87: #{disc_sagan_forward.1} parent=83 // pred_region
          _
        $region88: #{disc_sagan_forward.1} parent=83 // pred_fallthru
          _
        // Predicated region
        $region89: #{disc_sagan_forward.1} parent=83 // pred_check
          %p10621 = pneg %p419
        $region90: #{disc_sagan_forward.1} parent=83 // pred_check_branch
          %10623 = sbr.rel (%p10621) target = $region92
        $region91: #{disc_sagan_forward.1} parent=83 // pred_region
          %s10625 = ssub.s32 256, 256
          %10626 = vsyncadd %s10614, %s10625
          %s10627 = smul.addr %s34, 2
          %s10628 = smul.addr %s10627, 128
          %s10629 = scalar_lea.hbm %s17, %s10628
          %s10630 = sshll.u32 %s10617, 4
          %s10631 = int_to_ptr.vmem [resolvable:$true] %s10630
          %10636 = dma.vmem_to_hbm [thread:$0]  %s10631, 256, %s10629, %s10614, 128, 128, 8
        $region92: #{disc_sagan_forward.1} parent=83 // pred_fallthru
          _
      $region84: #{disc_sagan_forward.1} parent=5 // pred_fallthru
        _
      %p10637 = scmp.le.s32.totalorder 2, %s29
      // Predicated region
      $region93: #{disc_sagan_forward.1} parent=5 // pred_check
        %p10638 = pneg %p10637
      $region94: #{disc_sagan_forward.1} parent=5 // pred_check_branch
        %10640 = sbr.rel (%p10638) target = $region96
      $region95: #{disc_sagan_forward.1} parent=5 // pred_region
        %s10641 = ssub.s32 %s29, 2
        // Predicated region
        $region97: #{disc_sagan_forward.1} parent=95 // pred_check
          %p10642 = pneg %p399
        $region98: #{disc_sagan_forward.1} parent=95 // pred_check_branch
          %10644 = sbr.rel (%p10642) target = $region100
        $region99: #{disc_sagan_forward.1} parent=95 // pred_region
          %p10645 = scmp.lt.s32.totalorder %s35, 1
          %s10646 = scalar_select %p10645, %s35, 1
          %s10647 = scalar_lea.vmem %s16, %s10646
        $region100: #{disc_sagan_forward.1} parent=95 // pred_fallthru
          _
        // Predicated region
        $region101: #{disc_sagan_forward.1} parent=95 // pred_check
          %p10648 = pneg %p425
        $region102: #{disc_sagan_forward.1} parent=95 // pred_check_branch
          %10650 = sbr.rel (%p10648) target = $region104
        $region103: #{disc_sagan_forward.1} parent=95 // pred_region
          %s10651 = sand.u32 %s410, 1
          %s10652 = scalar_lea.sflag [#allocation5], %s10651
          %s10653 = sand.u32 %s410, 1
          %s10654 = smul.addr %s10653, 16
          %s10655 = scalar_lea.vmem [#allocation4], %s10654
          %10656 = dma.done %s10652, 256
        $region104: #{disc_sagan_forward.1} parent=95 // pred_fallthru
          _
      $region96: #{disc_sagan_forward.1} parent=5 // pred_fallthru
        _
    $region6: #{disc_sagan_forward.1} parent=1 // loop_footer
      %s33 = sadd.s32 1, %s29
    $region7: #{disc_sagan_forward.1} parent=1 // loop_footer_branch
      %28 = sbr.rel target = $region3
    $region8: #{disc_sagan_forward.1} parent=1 // loop_exit
      _
    %10657 = vsyncpa [#allocation5], 1
    %s10658 = scalar_lea.sflag [#allocation5], 1
    %10659 = vsyncpa %s10658, 1

</llo_original>
